<compile_context>
chip_gen: v7x
topology: tpu7x:2x2x1
jax: 0.10.0
libtpu: 0.0.40
codegen_flags: <defaults>
</compile_context>

<pallas_src>
import functools

import jax
import jax.numpy as jnp
import numpy as np
from jax.experimental import pallas as pl
from jax.experimental.pallas import tpu as pltpu

NDF = 8          # cfg.GAN.DF_DIM (small synthetic value)
LEAKY = 0.2
BN_EPS = 1e-5


# ----------------------------------------------------------------------------
# In-kernel helpers
# ----------------------------------------------------------------------------
def _leaky(y):
    # For 0 < LEAKY < 1, max(y, LEAKY*y) == LeakyReLU(y); avoids compare+select.
    return jnp.maximum(y, LEAKY * y)


def _bn_leaky(y, gb_ref, m_rows):
    """Training-mode BatchNorm2d (batch stats, biased var, f32) + LeakyReLU."""
    inv_m = 1.0 / m_rows
    s1 = jnp.sum(y, axis=0, keepdims=True)
    s2 = jnp.sum(y * y, axis=0, keepdims=True)
    mean = s1 * inv_m
    var = jnp.maximum(s2 * inv_m - mean * mean, 0.0)   # clamp E[x^2]-E[x]^2 >= 0
    gb = gb_ref[...]                                   # (2, C) f32
    scale = gb[0:1, :] * jax.lax.rsqrt(var + BN_EPS)
    shift = gb[1:2, :] - mean * scale
    return _leaky(y * scale + shift)


def _write_padded(pad_ref, interior):
    """Write `interior` into pad_ref[1:-1, 1:-1] and zero only the 1-wide border."""
    Hp, Wp, B, C = pad_ref.shape
    zrow = jnp.zeros((1, Wp, B, C), pad_ref.dtype)
    pad_ref[0:1, :, :, :] = zrow
    pad_ref[Hp - 1:Hp, :, :, :] = zrow
    zcol = jnp.zeros((Hp - 2, 1, B, C), pad_ref.dtype)
    pad_ref[1:Hp - 1, 0:1, :, :] = zcol
    pad_ref[1:Hp - 1, Wp - 1:Wp, :, :] = zcol
    pad_ref[1:Hp - 1, 1:Wp - 1, :, :] = interior.astype(pad_ref.dtype)


def _conv_gemm(pad_ref, col_ref, w_ref, Ho, Wo, B, cin):
    """4x4 / stride-2 / pad-1 conv as ONE im2col GEMM.

    pad_ref: (2*Ho+2, 2*Wo+2, B, cin) f32 zero-padded activation slab.
    col_ref: (Ho*Wo*B, 16*cin) bf16 column scratch (filled here).
    w_ref:   (16*cin, cout) bf16, row order (kh*4+kw)*cin + c.
    Returns (Ho*Wo*B, cout) f32, rows ordered (ho, wo, b).
    """
    Wp = 2 * Wo + 2
    x = pad_ref[...]                                   # (Hp, Wp, B, cin) f32

    # Parity ("space-to-depth") decomposition: only layout-preserving
    # major-dim reshapes + static slices (no strided loads).
    phases = []
    for p in range(2):
        xp = x.reshape(Ho + 1, 2, Wp, B, cin)[:, p]              # rows 2i+p
        for q in range(2):
            phases.append(xp.reshape(Ho + 1, Wo + 1, 2, B, cin)[:, :, q])

    M = Ho * Wo * B
    for kh in range(4):
        for kw in range(4):
            ph = phases[(kh % 2) * 2 + (kw % 2)]
            tap = ph[kh // 2:kh // 2 + Ho, kw // 2:kw // 2 + Wo]  # (Ho,Wo,B,cin)
            t = kh * 4 + kw
            col_ref[:, t * cin:(t + 1) * cin] = (
                tap.reshape(M, cin).astype(jnp.bfloat16))

    # Single concat-K MXU matmul (K = 16*cin = 128 / 256 / 512 for layers 2/3/4).
    return jnp.dot(col_ref[...], w_ref[...], preferred_element_type=jnp.float32)


def _conv_bn_leaky(pad_ref, col_ref, w_ref, gb_ref, Ho, Wo, B, cin):
    y = _conv_gemm(pad_ref, col_ref, w_ref, Ho, Wo, B, cin)
    return _bn_leaky(y, gb_ref, Ho * Wo * B)


# ----------------------------------------------------------------------------
# The single fused kernel: conv1..conv4 + BN + LeakyReLU + temporal mean
# ----------------------------------------------------------------------------
def _fused_encoder_kernel(N, L, Ho1, Wo1, ndf,
                          p1_ref, w1_ref, w2_ref, w3_ref, w4_ref,
                          gb2_ref, gb3_ref, gb4_ref, out_ref,
                          pad2_ref, pad3_ref, pad4_ref,
                          col2_ref, col3_ref, col4_ref):
    B = N * L
    Ho2, Wo2 = Ho1 // 2, Wo1 // 2
    Ho3, Wo3 = Ho2 // 2, Wo2 // 2
    Ho4, Wo4 = Ho3 // 2, Wo3 // 2

    # ---- layer 1: single im2col GEMM (bf16 patches built in wrapper) + Leaky ----
    y1 = jnp.dot(p1_ref[...], w1_ref[...], preferred_element_type=jnp.float32)
    y1 = _leaky(y1)                                    # (Ho1*Wo1*B, ndf) f32
    _write_padded(pad2_ref, y1.reshape(Ho1, Wo1, B, ndf))

    # ---- layers 2..4: one concat-K GEMM + BN(batch stats) + LeakyReLU each ----
    y2 = _conv_bn_leaky(pad2_ref, col2_ref, w2_ref, gb2_ref, Ho2, Wo2, B, ndf)
    _write_padded(pad3_ref, y2.reshape(Ho2, Wo2, B, 2 * ndf))

    y3 = _conv_bn_leaky(pad3_ref, col3_ref, w3_ref, gb3_ref, Ho3, Wo3, B, 2 * ndf)
    _write_padded(pad4_ref, y3.reshape(Ho3, Wo3, B, 4 * ndf))

    y4 = _conv_bn_leaky(pad4_ref, col4_ref, w4_ref, gb4_ref, Ho4, Wo4, B, 4 * ndf)

    # ---- fused temporal mean over video_len (exact f32 VPU reduction) ----
    # y4 rows are (ho, wo, b) with b = n*L + l.  Split rows into (S4, B) with a
    # layout-preserving reshape (B = 8 = sublane tile), then average each
    # length-L sublane group; out[n] holds rows (ho, wo) for story n.
    S4 = Ho4 * Wo4
    C4 = 8 * ndf
    y4 = y4.reshape(S4, B, C4)
    inv_L = 1.0 / L
    for n in range(N):
        out_ref[n] = jnp.sum(y4[:, n * L:(n + 1) * L, :], axis=1) * inv_L


# ----------------------------------------------------------------------------
# One-time parameter preparation (hoisted out of the per-forward path)
# ----------------------------------------------------------------------------
def _flatten_conv_weight(w):
    """w: (Cout, Cin, 4, 4) -> (16*Cin, Cout), row order (kh*4+kw)*Cin + c."""
    cout, cin = w.shape[0], w.shape[1]
    return jnp.transpose(w, (2, 3, 1, 0)).reshape(16 * cin, cout)


def prepare_params(params):
    """Relayout + bf16-cast all weights and stack BN gamma/beta once."""
    return {
        "w1": _flatten_conv_weight(params["w1"]).astype(jnp.bfloat16),
        "w2": _flatten_conv_weight(params["w2"]).astype(jnp.bfloat16),
        "w3": _flatten_conv_weight(params["w3"]).astype(jnp.bfloat16),
        "w4": _flatten_conv_weight(params["w4"]).astype(jnp.bfloat16),
        "gb2": jnp.stack([params["g2"], params["b2"]], axis=0),
        "gb3": jnp.stack([params["g3"], params["b3"]], axis=0),
        "gb4": jnp.stack([params["g4"], params["b4"]], axis=0),
    }


def _im2col_4x4_s2_layer1(x):
    """x: (B, C, H, W) -> bf16 patches (Ho*Wo*B, 16*C), rows (ho, wo, b), cols (tap, c)."""
    B, C, H, W = x.shape
    Ho, Wo = H // 2, W // 2
    xp = jnp.pad(x, ((0, 0), (0, 0), (1, 1), (1, 1)))
    taps = [xp[:, :, kh:kh + 2 * Ho:2, kw:kw + 2 * Wo:2]
            for kh in range(4) for kw in range(4)]       # each (B, C, Ho, Wo)
    pat = jnp.stack(taps, axis=0)                        # (16, B, C, Ho, Wo)
    pat = pat.transpose(3, 4, 1, 0, 2)                   # (Ho, Wo, B, 16, C)
    return pat.reshape(Ho * Wo * B, 16 * C).astype(jnp.bfloat16), Ho, Wo


# ----------------------------------------------------------------------------
# STAGE1_D_STY_V2.forward
# ----------------------------------------------------------------------------
def stage1_d_sty_v2_forward(story, prep):
    """story: (N, C, video_len, W, H) float32 — mirrors the PyTorch input."""
    N, C, L, W, H = story.shape
    B = N * L
    ndf = prep["w1"].shape[1]

    # story.permute(0, 2, 1, 3, 4).contiguous().view(-1, C, W, H)
    x = jnp.transpose(story, (0, 2, 1, 3, 4)).reshape(B, C, W, H)
    p1, Ho1, Wo1 = _im2col_4x4_s2_layer1(x)              # (B*Ho1*Wo1, 16*C) bf16

    Ho2, Wo2 = Ho1 // 2, Wo1 // 2
    Ho3, Wo3 = Ho2 // 2, Wo2 // 2
    Ho4, Wo4 = Ho3 // 2, Wo3 // 2
    S4, C4 = Ho4 * Wo4, 8 * ndf

    kernel = functools.partial(_fused_encoder_kernel, N, L, Ho1, Wo1, ndf)

    out = pl.pallas_call(
        kernel,
        out_shape=jax.ShapeDtypeStruct((N, S4, C4), jnp.float32),
        grid=(1,),
        in_specs=[
            pl.BlockSpec(p1.shape, lambda i: (0, 0)),
            pl.BlockSpec(prep["w1"].shape, lambda i: (0, 0)),
            pl.BlockSpec(prep["w2"].shape, lambda i: (0, 0)),
            pl.BlockSpec(prep["w3"].shape, lambda i: (0, 0)),
            pl.BlockSpec(prep["w4"].shape, lambda i: (0, 0)),
            pl.BlockSpec(prep["gb2"].shape, lambda i: (0, 0)),
            pl.BlockSpec(prep["gb3"].shape, lambda i: (0, 0)),
            pl.BlockSpec(prep["gb4"].shape, lambda i: (0, 0)),
        ],
        out_specs=pl.BlockSpec((N, S4, C4), lambda i: (0, 0, 0)),
        scratch_shapes=[
            # zero-padded inter-layer activation slabs (f32: see header note)
            pltpu.VMEM((Ho1 + 2, Wo1 + 2, B, ndf), jnp.float32),
            pltpu.VMEM((Ho2 + 2, Wo2 + 2, B, 2 * ndf), jnp.float32),
            pltpu.VMEM((Ho3 + 2, Wo3 + 2, B, 4 * ndf), jnp.float32),
            # lane-dense bf16 im2col column scratches (concat-K GEMM lhs)
            pltpu.VMEM((Ho2 * Wo2 * B, 16 * ndf), jnp.bfloat16),
            pltpu.VMEM((Ho3 * Wo3 * B, 32 * ndf), jnp.bfloat16),
            pltpu.VMEM((Ho4 * Wo4 * B, 64 * ndf), jnp.bfloat16),
        ],
        compiler_params=pltpu.CompilerParams(
            dimension_semantics=("arbitrary",),
            vmem_limit_bytes=32 * 1024 * 1024,
        ),
    )(p1, prep["w1"], prep["w2"], prep["w3"], prep["w4"],
      prep["gb2"], prep["gb3"], prep["gb4"])

    # out[n, ho*Wo4+wo, c]  ->  (N, C4, W4, H4) to match PyTorch (N, C1, W1, H1).
    emb = out.reshape(N, Ho4, Wo4, C4).transpose(0, 3, 1, 2)
    # torch.squeeze(...) is a no-op for these (non-1) dims at this size.
    return jnp.squeeze(emb)


# ----------------------------------------------------------------------------
# Pure-JAX reference (for correctness checking)
# ----------------------------------------------------------------------------
def reference_forward(story, params):
    N, C, L, W, H = story.shape
    x = jnp.transpose(story, (0, 2, 1, 3, 4)).reshape(N * L, C, W, H)

    def conv(x, w):
        return jax.lax.conv_general_dilated(
            x, w, window_strides=(2, 2), padding=((1, 1), (1, 1)),
            dimension_numbers=("NCHW", "OIHW", "NCHW"))

    def bn(x, g, b):
        mean = jnp.mean(x, axis=(0, 2, 3), keepdims=True)
        var = jnp.mean(jnp.square(x - mean), axis=(0, 2, 3), keepdims=True)
        return ((x - mean) * jax.lax.rsqrt(var + BN_EPS)
                * g.reshape(1, -1, 1, 1) + b.reshape(1, -1, 1, 1))

    def leaky(x):
        return jnp.where(x >= 0, x, LEAKY * x)

    x = leaky(conv(x, params["w1"]))
    x = leaky(bn(conv(x, params["w2"]), params["g2"], params["b2"]))
    x = leaky(bn(conv(x, params["w3"]), params["g3"], params["b3"]))
    x = leaky(bn(conv(x, params["w4"]), params["g4"], params["b4"]))
    _, C1, W1, H1 = x.shape
    x = x.reshape(N, L, C1, W1, H1).mean(axis=1)
    return jnp.squeeze(x)


# ----------------------------------------------------------------------------
if __name__ == "__main__":
    key = jax.random.PRNGKey(0)
    ks = jax.random.split(key, 11)

    # N=2 stories, 3-channel frames, video_len=4, 32x32 spatial
    # (4 stride-2 convs -> 2x2 feature maps).
    N, C, L, W, H = 2, 3, 4, 32, 32
    ndf = NDF

    story = jax.random.normal(ks[0], (N, C, L, W, H), jnp.float32)

    params = {
        "w1": 0.1 * jax.random.normal(ks[1], (ndf, 3, 4, 4), jnp.float32),
        "w2": 0.1 * jax.random.normal(ks[2], (ndf * 2, ndf, 4, 4), jnp.float32),
        "w3": 0.1 * jax.random.normal(ks[3], (ndf * 4, ndf * 2, 4, 4), jnp.float32),
        "w4": 0.1 * jax.random.normal(ks[4], (ndf * 8, ndf * 4, 4, 4), jnp.float32),
        "g2": 1.0 + 0.1 * jax.random.normal(ks[5], (ndf * 2,), jnp.float32),
        "b2": 0.1 * jax.random.normal(ks[6], (ndf * 2,), jnp.float32),
        "g3": 1.0 + 0.1 * jax.random.normal(ks[7], (ndf * 4,), jnp.float32),
        "b3": 0.1 * jax.random.normal(ks[8], (ndf * 4,), jnp.float32),
        "g4": 1.0 + 0.1 * jax.random.normal(ks[9], (ndf * 8,), jnp.float32),
        "b4": 0.1 * jax.random.normal(ks[10], (ndf * 8,), jnp.float32),
    }

    # One-time weight relayout / bf16 cast (not part of the per-forward path).
    prep = jax.tree_util.tree_map(jax.block_until_ready, prepare_params(params))

    fwd = jax.jit(stage1_d_sty_v2_forward)
    out = jax.block_until_ready(fwd(story, prep))
    ref = jax.block_until_ready(jax.jit(reference_forward)(story, params))

    assert out.shape == (N, ndf * 8, 2, 2), out.shape
    # Tolerance 2e-2: MXU inputs are bf16 (accumulation and BN stats in f32).
    np.testing.assert_allclose(np.asarray(out), np.asarray(ref),
                               rtol=2e-2, atol=2e-2)
    print("KERNEL_OK")
</pallas_src>

<mosaic_0001>
module attributes {stable_mosaic.version = 11 : i64} {
  func.func @_fused_encoder_kernel(%arg0: i32, %arg1: memref<2048x48xbf16, #tpu.memory_space<vmem>>, %arg2: memref<48x8xbf16, #tpu.memory_space<vmem>>, %arg3: memref<128x16xbf16, #tpu.memory_space<vmem>>, %arg4: memref<256x32xbf16, #tpu.memory_space<vmem>>, %arg5: memref<512x64xbf16, #tpu.memory_space<vmem>>, %arg6: memref<2x16xf32, #tpu.memory_space<vmem>>, %arg7: memref<2x32xf32, #tpu.memory_space<vmem>>, %arg8: memref<2x64xf32, #tpu.memory_space<vmem>>, %arg9: memref<2x4x64xf32, #tpu.memory_space<vmem>>, %arg10: memref<18x18x8x8xf32, #tpu.memory_space<vmem>>, %arg11: memref<10x10x8x16xf32, #tpu.memory_space<vmem>>, %arg12: memref<6x6x8x32xf32, #tpu.memory_space<vmem>>, %arg13: memref<512x128xbf16, #tpu.memory_space<vmem>>, %arg14: memref<128x256xbf16, #tpu.memory_space<vmem>>, %arg15: memref<32x512xbf16, #tpu.memory_space<vmem>>) attributes {dimension_semantics = [#tpu.dimension_semantics<arbitrary>], iteration_bounds = array<i64: 1>, scalar_prefetch = 0 : i64, scratch_operands = 6 : i64, tpu.core_type = #tpu.core_type<tc>, window_params = [{pipeline_mode = #tpu.pipeline_mode<synchronous>, transform_indices = @transform_0, window_bounds = array<i64: 2048, 48>}, {pipeline_mode = #tpu.pipeline_mode<synchronous>, transform_indices = @transform_1, window_bounds = array<i64: 48, 8>}, {pipeline_mode = #tpu.pipeline_mode<synchronous>, transform_indices = @transform_2, window_bounds = array<i64: 128, 16>}, {pipeline_mode = #tpu.pipeline_mode<synchronous>, transform_indices = @transform_3, window_bounds = array<i64: 256, 32>}, {pipeline_mode = #tpu.pipeline_mode<synchronous>, transform_indices = @transform_4, window_bounds = array<i64: 512, 64>}, {pipeline_mode = #tpu.pipeline_mode<synchronous>, transform_indices = @transform_5, window_bounds = array<i64: 2, 16>}, {pipeline_mode = #tpu.pipeline_mode<synchronous>, transform_indices = @transform_6, window_bounds = array<i64: 2, 32>}, {pipeline_mode = #tpu.pipeline_mode<synchronous>, transform_indices = @transform_7, window_bounds = array<i64: 2, 64>}, {pipeline_mode = #tpu.pipeline_mode<synchronous>, transform_indices = @transform_8, window_bounds = array<i64: 2, 4, 64>}]} {
    %c0 = arith.constant 0 : index
    %c0_0 = arith.constant 0 : index
    %0 = vector.load %arg1[%c0, %c0_0] : memref<2048x48xbf16, #tpu.memory_space<vmem>>, vector<2048x48xbf16>
    %c0_1 = arith.constant 0 : index
    %c0_2 = arith.constant 0 : index
    %1 = vector.load %arg2[%c0_1, %c0_2] : memref<48x8xbf16, #tpu.memory_space<vmem>>, vector<48x8xbf16>
    %cst = arith.constant dense<0.000000e+00> : vector<2048x8xf32>
    %2 = tpu.matmul %0, %1, %cst {dimension_numbers = #tpu.dot_dimension_numbers<[1], [0], [0], [1], [0, 0, 1, 1], [], []>} : vector<2048x48xbf16>, vector<48x8xbf16>, vector<2048x8xf32> -> vector<2048x8xf32>
    %cst_3 = arith.constant 2.000000e-01 : f32
    %3 = vector.broadcast %cst_3 : f32 to vector<2048x8xf32>
    %4 = arith.mulf %3, %2 : vector<2048x8xf32>
    %5 = arith.maximumf %2, %4 : vector<2048x8xf32>
    %6 = vector.shape_cast %5 : vector<2048x8xf32> to vector<16x16x8x8xf32>
    %cst_4 = arith.constant 0.000000e+00 : f32
    %7 = vector.broadcast %cst_4 : f32 to vector<1x18x8x8xf32>
    %c0_5 = arith.constant 0 : index
    %c0_6 = arith.constant 0 : index
    %c0_7 = arith.constant 0 : index
    %c0_8 = arith.constant 0 : index
    %8 = vector.load %arg10[%c0_5, %c0_6, %c0_7, %c0_8] : memref<18x18x8x8xf32, #tpu.memory_space<vmem>>, vector<1x18x8x8xf32>
    tpu.vector_store %arg10[%c0_5, %c0_6, %c0_7, %c0_8], %7 {strides = array<i32>} : memref<18x18x8x8xf32, #tpu.memory_space<vmem>>, vector<1x18x8x8xf32>,
    %c17 = arith.constant 17 : index
    %c0_9 = arith.constant 0 : index
    %c0_10 = arith.constant 0 : index
    %c0_11 = arith.constant 0 : index
    %9 = vector.load %arg10[%c17, %c0_9, %c0_10, %c0_11] : memref<18x18x8x8xf32, #tpu.memory_space<vmem>>, vector<1x18x8x8xf32>
    tpu.vector_store %arg10[%c17, %c0_9, %c0_10, %c0_11], %7 {strides = array<i32>} : memref<18x18x8x8xf32, #tpu.memory_space<vmem>>, vector<1x18x8x8xf32>,
    %cst_12 = arith.constant 0.000000e+00 : f32
    %10 = vector.broadcast %cst_12 : f32 to vector<16x1x8x8xf32>
    %c1 = arith.constant 1 : index
    %c0_13 = arith.constant 0 : index
    %c0_14 = arith.constant 0 : index
    %c0_15 = arith.constant 0 : index
    %11 = vector.load %arg10[%c1, %c0_13, %c0_14, %c0_15] : memref<18x18x8x8xf32, #tpu.memory_space<vmem>>, vector<16x1x8x8xf32>
    tpu.vector_store %arg10[%c1, %c0_13, %c0_14, %c0_15], %10 {strides = array<i32>} : memref<18x18x8x8xf32, #tpu.memory_space<vmem>>, vector<16x1x8x8xf32>,
    %c1_16 = arith.constant 1 : index
    %c17_17 = arith.constant 17 : index
    %c0_18 = arith.constant 0 : index
    %c0_19 = arith.constant 0 : index
    %12 = vector.load %arg10[%c1_16, %c17_17, %c0_18, %c0_19] : memref<18x18x8x8xf32, #tpu.memory_space<vmem>>, vector<16x1x8x8xf32>
    tpu.vector_store %arg10[%c1_16, %c17_17, %c0_18, %c0_19], %10 {strides = array<i32>} : memref<18x18x8x8xf32, #tpu.memory_space<vmem>>, vector<16x1x8x8xf32>,
    %c1_20 = arith.constant 1 : index
    %c1_21 = arith.constant 1 : index
    %c0_22 = arith.constant 0 : index
    %c0_23 = arith.constant 0 : index
    %13 = vector.load %arg10[%c1_20, %c1_21, %c0_22, %c0_23] : memref<18x18x8x8xf32, #tpu.memory_space<vmem>>, vector<16x16x8x8xf32>
    tpu.vector_store %arg10[%c1_20, %c1_21, %c0_22, %c0_23], %6 {strides = array<i32>} : memref<18x18x8x8xf32, #tpu.memory_space<vmem>>, vector<16x16x8x8xf32>,
    %c0_24 = arith.constant 0 : index
    %c0_25 = arith.constant 0 : index
    %c0_26 = arith.constant 0 : index
    %c0_27 = arith.constant 0 : index
    %14 = vector.load %arg10[%c0_24, %c0_25, %c0_26, %c0_27] : memref<18x18x8x8xf32, #tpu.memory_space<vmem>>, vector<18x18x8x8xf32>
    %15 = vector.shape_cast %14 : vector<18x18x8x8xf32> to vector<9x2x18x8x8xf32>
    %16 = vector.extract_strided_slice %15 {offsets = [0, 0, 0, 0, 0], sizes = [9, 1, 18, 8, 8], strides = [1, 1, 1, 1, 1]} : vector<9x2x18x8x8xf32> to vector<9x1x18x8x8xf32>
    %17 = vector.shape_cast %16 : vector<9x1x18x8x8xf32> to vector<9x18x8x8xf32>
    %18 = vector.shape_cast %17 : vector<9x18x8x8xf32> to vector<9x9x2x8x8xf32>
    %19 = vector.extract_strided_slice %18 {offsets = [0, 0, 0, 0, 0], sizes = [9, 9, 1, 8, 8], strides = [1, 1, 1, 1, 1]} : vector<9x9x2x8x8xf32> to vector<9x9x1x8x8xf32>
    %20 = vector.shape_cast %19 : vector<9x9x1x8x8xf32> to vector<9x9x8x8xf32>
    %21 = vector.shape_cast %17 : vector<9x18x8x8xf32> to vector<9x9x2x8x8xf32>
    %22 = vector.extract_strided_slice %21 {offsets = [0, 0, 1, 0, 0], sizes = [9, 9, 1, 8, 8], strides = [1, 1, 1, 1, 1]} : vector<9x9x2x8x8xf32> to vector<9x9x1x8x8xf32>
    %23 = vector.shape_cast %22 : vector<9x9x1x8x8xf32> to vector<9x9x8x8xf32>
    %24 = vector.shape_cast %14 : vector<18x18x8x8xf32> to vector<9x2x18x8x8xf32>
    %25 = vector.extract_strided_slice %24 {offsets = [0, 1, 0, 0, 0], sizes = [9, 1, 18, 8, 8], strides = [1, 1, 1, 1, 1]} : vector<9x2x18x8x8xf32> to vector<9x1x18x8x8xf32>
    %26 = vector.shape_cast %25 : vector<9x1x18x8x8xf32> to vector<9x18x8x8xf32>
    %27 = vector.shape_cast %26 : vector<9x18x8x8xf32> to vector<9x9x2x8x8xf32>
    %28 = vector.extract_strided_slice %27 {offsets = [0, 0, 0, 0, 0], sizes = [9, 9, 1, 8, 8], strides = [1, 1, 1, 1, 1]} : vector<9x9x2x8x8xf32> to vector<9x9x1x8x8xf32>
    %29 = vector.shape_cast %28 : vector<9x9x1x8x8xf32> to vector<9x9x8x8xf32>
    %30 = vector.shape_cast %26 : vector<9x18x8x8xf32> to vector<9x9x2x8x8xf32>
    %31 = vector.extract_strided_slice %30 {offsets = [0, 0, 1, 0, 0], sizes = [9, 9, 1, 8, 8], strides = [1, 1, 1, 1, 1]} : vector<9x9x2x8x8xf32> to vector<9x9x1x8x8xf32>
    %32 = vector.shape_cast %31 : vector<9x9x1x8x8xf32> to vector<9x9x8x8xf32>
    %33 = vector.extract_strided_slice %20 {offsets = [0, 0, 0, 0], sizes = [8, 8, 8, 8], strides = [1, 1, 1, 1]} : vector<9x9x8x8xf32> to vector<8x8x8x8xf32>
    %34 = vector.shape_cast %33 : vector<8x8x8x8xf32> to vector<512x8xf32>
    %35 = arith.truncf %34 : vector<512x8xf32> to vector<512x8xbf16>
    %c0_28 = arith.constant 0 : index
    %c0_29 = arith.constant 0 : index
    %36 = vector.load %arg13[%c0_28, %c0_29] : memref<512x128xbf16, #tpu.memory_space<vmem>>, vector<512x8xbf16>
    tpu.vector_store %arg13[%c0_28, %c0_29], %35 {strides = array<i32>} : memref<512x128xbf16, #tpu.memory_space<vmem>>, vector<512x8xbf16>,
    %37 = vector.extract_strided_slice %23 {offsets = [0, 0, 0, 0], sizes = [8, 8, 8, 8], strides = [1, 1, 1, 1]} : vector<9x9x8x8xf32> to vector<8x8x8x8xf32>
    %38 = vector.shape_cast %37 : vector<8x8x8x8xf32> to vector<512x8xf32>
    %39 = arith.truncf %38 : vector<512x8xf32> to vector<512x8xbf16>
    %c0_30 = arith.constant 0 : index
    %c8 = arith.constant 8 : index
    %40 = vector.load %arg13[%c0_30, %c8] : memref<512x128xbf16, #tpu.memory_space<vmem>>, vector<512x8xbf16>
    tpu.vector_store %arg13[%c0_30, %c8], %39 {strides = array<i32>} : memref<512x128xbf16, #tpu.memory_space<vmem>>, vector<512x8xbf16>,
    %41 = vector.extract_strided_slice %20 {offsets = [0, 1, 0, 0], sizes = [8, 8, 8, 8], strides = [1, 1, 1, 1]} : vector<9x9x8x8xf32> to vector<8x8x8x8xf32>
    %42 = vector.shape_cast %41 : vector<8x8x8x8xf32> to vector<512x8xf32>
    %43 = arith.truncf %42 : vector<512x8xf32> to vector<512x8xbf16>
    %c0_31 = arith.constant 0 : index
    %c16 = arith.constant 16 : index
    %44 = vector.load %arg13[%c0_31, %c16] : memref<512x128xbf16, #tpu.memory_space<vmem>>, vector<512x8xbf16>
    tpu.vector_store %arg13[%c0_31, %c16], %43 {strides = array<i32>} : memref<512x128xbf16, #tpu.memory_space<vmem>>, vector<512x8xbf16>,
    %45 = vector.extract_strided_slice %23 {offsets = [0, 1, 0, 0], sizes = [8, 8, 8, 8], strides = [1, 1, 1, 1]} : vector<9x9x8x8xf32> to vector<8x8x8x8xf32>
    %46 = vector.shape_cast %45 : vector<8x8x8x8xf32> to vector<512x8xf32>
    %47 = arith.truncf %46 : vector<512x8xf32> to vector<512x8xbf16>
    %c0_32 = arith.constant 0 : index
    %c24 = arith.constant 24 : index
    %48 = vector.load %arg13[%c0_32, %c24] : memref<512x128xbf16, #tpu.memory_space<vmem>>, vector<512x8xbf16>
    tpu.vector_store %arg13[%c0_32, %c24], %47 {strides = array<i32>} : memref<512x128xbf16, #tpu.memory_space<vmem>>, vector<512x8xbf16>,
    %49 = vector.extract_strided_slice %29 {offsets = [0, 0, 0, 0], sizes = [8, 8, 8, 8], strides = [1, 1, 1, 1]} : vector<9x9x8x8xf32> to vector<8x8x8x8xf32>
    %50 = vector.shape_cast %49 : vector<8x8x8x8xf32> to vector<512x8xf32>
    %51 = arith.truncf %50 : vector<512x8xf32> to vector<512x8xbf16>
    %c0_33 = arith.constant 0 : index
    %c32 = arith.constant 32 : index
    %52 = vector.load %arg13[%c0_33, %c32] : memref<512x128xbf16, #tpu.memory_space<vmem>>, vector<512x8xbf16>
    tpu.vector_store %arg13[%c0_33, %c32], %51 {strides = array<i32>} : memref<512x128xbf16, #tpu.memory_space<vmem>>, vector<512x8xbf16>,
    %53 = vector.extract_strided_slice %32 {offsets = [0, 0, 0, 0], sizes = [8, 8, 8, 8], strides = [1, 1, 1, 1]} : vector<9x9x8x8xf32> to vector<8x8x8x8xf32>
    %54 = vector.shape_cast %53 : vector<8x8x8x8xf32> to vector<512x8xf32>
    %55 = arith.truncf %54 : vector<512x8xf32> to vector<512x8xbf16>
    %c0_34 = arith.constant 0 : index
    %c40 = arith.constant 40 : index
    %56 = vector.load %arg13[%c0_34, %c40] : memref<512x128xbf16, #tpu.memory_space<vmem>>, vector<512x8xbf16>
    tpu.vector_store %arg13[%c0_34, %c40], %55 {strides = array<i32>} : memref<512x128xbf16, #tpu.memory_space<vmem>>, vector<512x8xbf16>,
    %57 = vector.extract_strided_slice %29 {offsets = [0, 1, 0, 0], sizes = [8, 8, 8, 8], strides = [1, 1, 1, 1]} : vector<9x9x8x8xf32> to vector<8x8x8x8xf32>
    %58 = vector.shape_cast %57 : vector<8x8x8x8xf32> to vector<512x8xf32>
    %59 = arith.truncf %58 : vector<512x8xf32> to vector<512x8xbf16>
    %c0_35 = arith.constant 0 : index
    %c48 = arith.constant 48 : index
    %60 = vector.load %arg13[%c0_35, %c48] : memref<512x128xbf16, #tpu.memory_space<vmem>>, vector<512x8xbf16>
    tpu.vector_store %arg13[%c0_35, %c48], %59 {strides = array<i32>} : memref<512x128xbf16, #tpu.memory_space<vmem>>, vector<512x8xbf16>,
    %61 = vector.extract_strided_slice %32 {offsets = [0, 1, 0, 0], sizes = [8, 8, 8, 8], strides = [1, 1, 1, 1]} : vector<9x9x8x8xf32> to vector<8x8x8x8xf32>
    %62 = vector.shape_cast %61 : vector<8x8x8x8xf32> to vector<512x8xf32>
    %63 = arith.truncf %62 : vector<512x8xf32> to vector<512x8xbf16>
    %c0_36 = arith.constant 0 : index
    %c56 = arith.constant 56 : index
    %64 = vector.load %arg13[%c0_36, %c56] : memref<512x128xbf16, #tpu.memory_space<vmem>>, vector<512x8xbf16>
    tpu.vector_store %arg13[%c0_36, %c56], %63 {strides = array<i32>} : memref<512x128xbf16, #tpu.memory_space<vmem>>, vector<512x8xbf16>,
    %65 = vector.extract_strided_slice %20 {offsets = [1, 0, 0, 0], sizes = [8, 8, 8, 8], strides = [1, 1, 1, 1]} : vector<9x9x8x8xf32> to vector<8x8x8x8xf32>
    %66 = vector.shape_cast %65 : vector<8x8x8x8xf32> to vector<512x8xf32>
    %67 = arith.truncf %66 : vector<512x8xf32> to vector<512x8xbf16>
    %c0_37 = arith.constant 0 : index
    %c64 = arith.constant 64 : index
    %68 = vector.load %arg13[%c0_37, %c64] : memref<512x128xbf16, #tpu.memory_space<vmem>>, vector<512x8xbf16>
    tpu.vector_store %arg13[%c0_37, %c64], %67 {strides = array<i32>} : memref<512x128xbf16, #tpu.memory_space<vmem>>, vector<512x8xbf16>,
    %69 = vector.extract_strided_slice %23 {offsets = [1, 0, 0, 0], sizes = [8, 8, 8, 8], strides = [1, 1, 1, 1]} : vector<9x9x8x8xf32> to vector<8x8x8x8xf32>
    %70 = vector.shape_cast %69 : vector<8x8x8x8xf32> to vector<512x8xf32>
    %71 = arith.truncf %70 : vector<512x8xf32> to vector<512x8xbf16>
    %c0_38 = arith.constant 0 : index
    %c72 = arith.constant 72 : index
    %72 = vector.load %arg13[%c0_38, %c72] : memref<512x128xbf16, #tpu.memory_space<vmem>>, vector<512x8xbf16>
    tpu.vector_store %arg13[%c0_38, %c72], %71 {strides = array<i32>} : memref<512x128xbf16, #tpu.memory_space<vmem>>, vector<512x8xbf16>,
    %73 = vector.extract_strided_slice %20 {offsets = [1, 1, 0, 0], sizes = [8, 8, 8, 8], strides = [1, 1, 1, 1]} : vector<9x9x8x8xf32> to vector<8x8x8x8xf32>
    %74 = vector.shape_cast %73 : vector<8x8x8x8xf32> to vector<512x8xf32>
    %75 = arith.truncf %74 : vector<512x8xf32> to vector<512x8xbf16>
    %c0_39 = arith.constant 0 : index
    %c80 = arith.constant 80 : index
    %76 = vector.load %arg13[%c0_39, %c80] : memref<512x128xbf16, #tpu.memory_space<vmem>>, vector<512x8xbf16>
    tpu.vector_store %arg13[%c0_39, %c80], %75 {strides = array<i32>} : memref<512x128xbf16, #tpu.memory_space<vmem>>, vector<512x8xbf16>,
    %77 = vector.extract_strided_slice %23 {offsets = [1, 1, 0, 0], sizes = [8, 8, 8, 8], strides = [1, 1, 1, 1]} : vector<9x9x8x8xf32> to vector<8x8x8x8xf32>
    %78 = vector.shape_cast %77 : vector<8x8x8x8xf32> to vector<512x8xf32>
    %79 = arith.truncf %78 : vector<512x8xf32> to vector<512x8xbf16>
    %c0_40 = arith.constant 0 : index
    %c88 = arith.constant 88 : index
    %80 = vector.load %arg13[%c0_40, %c88] : memref<512x128xbf16, #tpu.memory_space<vmem>>, vector<512x8xbf16>
    tpu.vector_store %arg13[%c0_40, %c88], %79 {strides = array<i32>} : memref<512x128xbf16, #tpu.memory_space<vmem>>, vector<512x8xbf16>,
    %81 = vector.extract_strided_slice %29 {offsets = [1, 0, 0, 0], sizes = [8, 8, 8, 8], strides = [1, 1, 1, 1]} : vector<9x9x8x8xf32> to vector<8x8x8x8xf32>
    %82 = vector.shape_cast %81 : vector<8x8x8x8xf32> to vector<512x8xf32>
    %83 = arith.truncf %82 : vector<512x8xf32> to vector<512x8xbf16>
    %c0_41 = arith.constant 0 : index
    %c96 = arith.constant 96 : index
    %84 = vector.load %arg13[%c0_41, %c96] : memref<512x128xbf16, #tpu.memory_space<vmem>>, vector<512x8xbf16>
    tpu.vector_store %arg13[%c0_41, %c96], %83 {strides = array<i32>} : memref<512x128xbf16, #tpu.memory_space<vmem>>, vector<512x8xbf16>,
    %85 = vector.extract_strided_slice %32 {offsets = [1, 0, 0, 0], sizes = [8, 8, 8, 8], strides = [1, 1, 1, 1]} : vector<9x9x8x8xf32> to vector<8x8x8x8xf32>
    %86 = vector.shape_cast %85 : vector<8x8x8x8xf32> to vector<512x8xf32>
    %87 = arith.truncf %86 : vector<512x8xf32> to vector<512x8xbf16>
    %c0_42 = arith.constant 0 : index
    %c104 = arith.constant 104 : index
    %88 = vector.load %arg13[%c0_42, %c104] : memref<512x128xbf16, #tpu.memory_space<vmem>>, vector<512x8xbf16>
    tpu.vector_store %arg13[%c0_42, %c104], %87 {strides = array<i32>} : memref<512x128xbf16, #tpu.memory_space<vmem>>, vector<512x8xbf16>,
    %89 = vector.extract_strided_slice %29 {offsets = [1, 1, 0, 0], sizes = [8, 8, 8, 8], strides = [1, 1, 1, 1]} : vector<9x9x8x8xf32> to vector<8x8x8x8xf32>
    %90 = vector.shape_cast %89 : vector<8x8x8x8xf32> to vector<512x8xf32>
    %91 = arith.truncf %90 : vector<512x8xf32> to vector<512x8xbf16>
    %c0_43 = arith.constant 0 : index
    %c112 = arith.constant 112 : index
    %92 = vector.load %arg13[%c0_43, %c112] : memref<512x128xbf16, #tpu.memory_space<vmem>>, vector<512x8xbf16>
    tpu.vector_store %arg13[%c0_43, %c112], %91 {strides = array<i32>} : memref<512x128xbf16, #tpu.memory_space<vmem>>, vector<512x8xbf16>,
    %93 = vector.extract_strided_slice %32 {offsets = [1, 1, 0, 0], sizes = [8, 8, 8, 8], strides = [1, 1, 1, 1]} : vector<9x9x8x8xf32> to vector<8x8x8x8xf32>
    %94 = vector.shape_cast %93 : vector<8x8x8x8xf32> to vector<512x8xf32>
    %95 = arith.truncf %94 : vector<512x8xf32> to vector<512x8xbf16>
    %c0_44 = arith.constant 0 : index
    %c120 = arith.constant 120 : index
    %96 = vector.load %arg13[%c0_44, %c120] : memref<512x128xbf16, #tpu.memory_space<vmem>>, vector<512x8xbf16>
    tpu.vector_store %arg13[%c0_44, %c120], %95 {strides = array<i32>} : memref<512x128xbf16, #tpu.memory_space<vmem>>, vector<512x8xbf16>,
    %c0_45 = arith.constant 0 : index
    %c0_46 = arith.constant 0 : index
    %97 = vector.load %arg13[%c0_45, %c0_46] : memref<512x128xbf16, #tpu.memory_space<vmem>>, vector<512x128xbf16>
    %c0_47 = arith.constant 0 : index
    %c0_48 = arith.constant 0 : index
    %98 = vector.load %arg3[%c0_47, %c0_48] : memref<128x16xbf16, #tpu.memory_space<vmem>>, vector<128x16xbf16>
    %cst_49 = arith.constant dense<0.000000e+00> : vector<512x16xf32>
    %99 = tpu.matmul %97, %98, %cst_49 {dimension_numbers = #tpu.dot_dimension_numbers<[1], [0], [0], [1], [0, 0, 1, 1], [], []>} : vector<512x128xbf16>, vector<128x16xbf16>, vector<512x16xf32> -> vector<512x16xf32>
    %cst_50 = arith.constant dense<0.000000e+00> : vector<16xf32>
    %100 = vector.multi_reduction <add>, %99, %cst_50 [0] : vector<512x16xf32> to vector<16xf32>
    %101 = vector.shape_cast %100 : vector<16xf32> to vector<1x16xf32>
    %102 = arith.mulf %99, %99 : vector<512x16xf32>
    %cst_51 = arith.constant dense<0.000000e+00> : vector<16xf32>
    %103 = vector.multi_reduction <add>, %102, %cst_51 [0] : vector<512x16xf32> to vector<16xf32>
    %104 = vector.shape_cast %103 : vector<16xf32> to vector<1x16xf32>
    %cst_52 = arith.constant 0.001953125 : f32
    %105 = vector.broadcast %cst_52 : f32 to vector<1x16xf32>
    %106 = arith.mulf %101, %105 : vector<1x16xf32>
    %cst_53 = arith.constant 0.001953125 : f32
    %107 = vector.broadcast %cst_53 : f32 to vector<1x16xf32>
    %108 = arith.mulf %104, %107 : vector<1x16xf32>
    %109 = arith.mulf %106, %106 : vector<1x16xf32>
    %110 = arith.subf %108, %109 : vector<1x16xf32>
    %cst_54 = arith.constant 0.000000e+00 : f32
    %111 = vector.broadcast %cst_54 : f32 to vector<1x16xf32>
    %112 = arith.maximumf %110, %111 : vector<1x16xf32>
    %c0_55 = arith.constant 0 : index
    %c0_56 = arith.constant 0 : index
    %113 = vector.load %arg6[%c0_55, %c0_56] : memref<2x16xf32, #tpu.memory_space<vmem>>, vector<2x16xf32>
    %114 = vector.extract_strided_slice %113 {offsets = [0, 0], sizes = [1, 16], strides = [1, 1]} : vector<2x16xf32> to vector<1x16xf32>
    %cst_57 = arith.constant 9.99999974E-6 : f32
    %115 = vector.broadcast %cst_57 : f32 to vector<1x16xf32>
    %116 = arith.addf %112, %115 : vector<1x16xf32>
    %117 = math.rsqrt %116 : vector<1x16xf32>
    %118 = arith.mulf %114, %117 : vector<1x16xf32>
    %119 = vector.extract_strided_slice %113 {offsets = [1, 0], sizes = [1, 16], strides = [1, 1]} : vector<2x16xf32> to vector<1x16xf32>
    %120 = arith.mulf %106, %118 : vector<1x16xf32>
    %121 = arith.subf %119, %120 : vector<1x16xf32>
    %122 = vector.broadcast %118 : vector<1x16xf32> to vector<512x16xf32>
    %123 = arith.mulf %99, %122 : vector<512x16xf32>
    %124 = vector.broadcast %121 : vector<1x16xf32> to vector<512x16xf32>
    %125 = arith.addf %123, %124 : vector<512x16xf32>
    %cst_58 = arith.constant 2.000000e-01 : f32
    %126 = vector.broadcast %cst_58 : f32 to vector<512x16xf32>
    %127 = arith.mulf %126, %125 : vector<512x16xf32>
    %128 = arith.maximumf %125, %127 : vector<512x16xf32>
    %129 = vector.shape_cast %128 : vector<512x16xf32> to vector<8x8x8x16xf32>
    %cst_59 = arith.constant 0.000000e+00 : f32
    %130 = vector.broadcast %cst_59 : f32 to vector<1x10x8x16xf32>
    %c0_60 = arith.constant 0 : index
    %c0_61 = arith.constant 0 : index
    %c0_62 = arith.constant 0 : index
    %c0_63 = arith.constant 0 : index
    %131 = vector.load %arg11[%c0_60, %c0_61, %c0_62, %c0_63] : memref<10x10x8x16xf32, #tpu.memory_space<vmem>>, vector<1x10x8x16xf32>
    tpu.vector_store %arg11[%c0_60, %c0_61, %c0_62, %c0_63], %130 {strides = array<i32>} : memref<10x10x8x16xf32, #tpu.memory_space<vmem>>, vector<1x10x8x16xf32>,
    %c9 = arith.constant 9 : index
    %c0_64 = arith.constant 0 : index
    %c0_65 = arith.constant 0 : index
    %c0_66 = arith.constant 0 : index
    %132 = vector.load %arg11[%c9, %c0_64, %c0_65, %c0_66] : memref<10x10x8x16xf32, #tpu.memory_space<vmem>>, vector<1x10x8x16xf32>
    tpu.vector_store %arg11[%c9, %c0_64, %c0_65, %c0_66], %130 {strides = array<i32>} : memref<10x10x8x16xf32, #tpu.memory_space<vmem>>, vector<1x10x8x16xf32>,
    %cst_67 = arith.constant 0.000000e+00 : f32
    %133 = vector.broadcast %cst_67 : f32 to vector<8x1x8x16xf32>
    %c1_68 = arith.constant 1 : index
    %c0_69 = arith.constant 0 : index
    %c0_70 = arith.constant 0 : index
    %c0_71 = arith.constant 0 : index
    %134 = vector.load %arg11[%c1_68, %c0_69, %c0_70, %c0_71] : memref<10x10x8x16xf32, #tpu.memory_space<vmem>>, vector<8x1x8x16xf32>
    tpu.vector_store %arg11[%c1_68, %c0_69, %c0_70, %c0_71], %133 {strides = array<i32>} : memref<10x10x8x16xf32, #tpu.memory_space<vmem>>, vector<8x1x8x16xf32>,
    %c1_72 = arith.constant 1 : index
    %c9_73 = arith.constant 9 : index
    %c0_74 = arith.constant 0 : index
    %c0_75 = arith.constant 0 : index
    %135 = vector.load %arg11[%c1_72, %c9_73, %c0_74, %c0_75] : memref<10x10x8x16xf32, #tpu.memory_space<vmem>>, vector<8x1x8x16xf32>
    tpu.vector_store %arg11[%c1_72, %c9_73, %c0_74, %c0_75], %133 {strides = array<i32>} : memref<10x10x8x16xf32, #tpu.memory_space<vmem>>, vector<8x1x8x16xf32>,
    %c1_76 = arith.constant 1 : index
    %c1_77 = arith.constant 1 : index
    %c0_78 = arith.constant 0 : index
    %c0_79 = arith.constant 0 : index
    %136 = vector.load %arg11[%c1_76, %c1_77, %c0_78, %c0_79] : memref<10x10x8x16xf32, #tpu.memory_space<vmem>>, vector<8x8x8x16xf32>
    tpu.vector_store %arg11[%c1_76, %c1_77, %c0_78, %c0_79], %129 {strides = array<i32>} : memref<10x10x8x16xf32, #tpu.memory_space<vmem>>, vector<8x8x8x16xf32>,
    %c0_80 = arith.constant 0 : index
    %c0_81 = arith.constant 0 : index
    %c0_82 = arith.constant 0 : index
    %c0_83 = arith.constant 0 : index
    %137 = vector.load %arg11[%c0_80, %c0_81, %c0_82, %c0_83] : memref<10x10x8x16xf32, #tpu.memory_space<vmem>>, vector<10x10x8x16xf32>
    %138 = vector.shape_cast %137 : vector<10x10x8x16xf32> to vector<5x2x10x8x16xf32>
    %139 = vector.extract_strided_slice %138 {offsets = [0, 0, 0, 0, 0], sizes = [5, 1, 10, 8, 16], strides = [1, 1, 1, 1, 1]} : vector<5x2x10x8x16xf32> to vector<5x1x10x8x16xf32>
    %140 = vector.shape_cast %139 : vector<5x1x10x8x16xf32> to vector<5x10x8x16xf32>
    %141 = vector.shape_cast %140 : vector<5x10x8x16xf32> to vector<5x5x2x8x16xf32>
    %142 = vector.extract_strided_slice %141 {offsets = [0, 0, 0, 0, 0], sizes = [5, 5, 1, 8, 16], strides = [1, 1, 1, 1, 1]} : vector<5x5x2x8x16xf32> to vector<5x5x1x8x16xf32>
    %143 = vector.shape_cast %142 : vector<5x5x1x8x16xf32> to vector<5x5x8x16xf32>
    %144 = vector.shape_cast %140 : vector<5x10x8x16xf32> to vector<5x5x2x8x16xf32>
    %145 = vector.extract_strided_slice %144 {offsets = [0, 0, 1, 0, 0], sizes = [5, 5, 1, 8, 16], strides = [1, 1, 1, 1, 1]} : vector<5x5x2x8x16xf32> to vector<5x5x1x8x16xf32>
    %146 = vector.shape_cast %145 : vector<5x5x1x8x16xf32> to vector<5x5x8x16xf32>
    %147 = vector.shape_cast %137 : vector<10x10x8x16xf32> to vector<5x2x10x8x16xf32>
    %148 = vector.extract_strided_slice %147 {offsets = [0, 1, 0, 0, 0], sizes = [5, 1, 10, 8, 16], strides = [1, 1, 1, 1, 1]} : vector<5x2x10x8x16xf32> to vector<5x1x10x8x16xf32>
    %149 = vector.shape_cast %148 : vector<5x1x10x8x16xf32> to vector<5x10x8x16xf32>
    %150 = vector.shape_cast %149 : vector<5x10x8x16xf32> to vector<5x5x2x8x16xf32>
    %151 = vector.extract_strided_slice %150 {offsets = [0, 0, 0, 0, 0], sizes = [5, 5, 1, 8, 16], strides = [1, 1, 1, 1, 1]} : vector<5x5x2x8x16xf32> to vector<5x5x1x8x16xf32>
    %152 = vector.shape_cast %151 : vector<5x5x1x8x16xf32> to vector<5x5x8x16xf32>
    %153 = vector.shape_cast %149 : vector<5x10x8x16xf32> to vector<5x5x2x8x16xf32>
    %154 = vector.extract_strided_slice %153 {offsets = [0, 0, 1, 0, 0], sizes = [5, 5, 1, 8, 16], strides = [1, 1, 1, 1, 1]} : vector<5x5x2x8x16xf32> to vector<5x5x1x8x16xf32>
    %155 = vector.shape_cast %154 : vector<5x5x1x8x16xf32> to vector<5x5x8x16xf32>
    %156 = vector.extract_strided_slice %143 {offsets = [0, 0, 0, 0], sizes = [4, 4, 8, 16], strides = [1, 1, 1, 1]} : vector<5x5x8x16xf32> to vector<4x4x8x16xf32>
    %157 = vector.shape_cast %156 : vector<4x4x8x16xf32> to vector<128x16xf32>
    %158 = arith.truncf %157 : vector<128x16xf32> to vector<128x16xbf16>
    %c0_84 = arith.constant 0 : index
    %c0_85 = arith.constant 0 : index
    %159 = vector.load %arg14[%c0_84, %c0_85] : memref<128x256xbf16, #tpu.memory_space<vmem>>, vector<128x16xbf16>
    tpu.vector_store %arg14[%c0_84, %c0_85], %158 {strides = array<i32>} : memref<128x256xbf16, #tpu.memory_space<vmem>>, vector<128x16xbf16>,
    %160 = vector.extract_strided_slice %146 {offsets = [0, 0, 0, 0], sizes = [4, 4, 8, 16], strides = [1, 1, 1, 1]} : vector<5x5x8x16xf32> to vector<4x4x8x16xf32>
    %161 = vector.shape_cast %160 : vector<4x4x8x16xf32> to vector<128x16xf32>
    %162 = arith.truncf %161 : vector<128x16xf32> to vector<128x16xbf16>
    %c0_86 = arith.constant 0 : index
    %c16_87 = arith.constant 16 : index
    %163 = vector.load %arg14[%c0_86, %c16_87] : memref<128x256xbf16, #tpu.memory_space<vmem>>, vector<128x16xbf16>
    tpu.vector_store %arg14[%c0_86, %c16_87], %162 {strides = array<i32>} : memref<128x256xbf16, #tpu.memory_space<vmem>>, vector<128x16xbf16>,
    %164 = vector.extract_strided_slice %143 {offsets = [0, 1, 0, 0], sizes = [4, 4, 8, 16], strides = [1, 1, 1, 1]} : vector<5x5x8x16xf32> to vector<4x4x8x16xf32>
    %165 = vector.shape_cast %164 : vector<4x4x8x16xf32> to vector<128x16xf32>
    %166 = arith.truncf %165 : vector<128x16xf32> to vector<128x16xbf16>
    %c0_88 = arith.constant 0 : index
    %c32_89 = arith.constant 32 : index
    %167 = vector.load %arg14[%c0_88, %c32_89] : memref<128x256xbf16, #tpu.memory_space<vmem>>, vector<128x16xbf16>
    tpu.vector_store %arg14[%c0_88, %c32_89], %166 {strides = array<i32>} : memref<128x256xbf16, #tpu.memory_space<vmem>>, vector<128x16xbf16>,
    %168 = vector.extract_strided_slice %146 {offsets = [0, 1, 0, 0], sizes = [4, 4, 8, 16], strides = [1, 1, 1, 1]} : vector<5x5x8x16xf32> to vector<4x4x8x16xf32>
    %169 = vector.shape_cast %168 : vector<4x4x8x16xf32> to vector<128x16xf32>
    %170 = arith.truncf %169 : vector<128x16xf32> to vector<128x16xbf16>
    %c0_90 = arith.constant 0 : index
    %c48_91 = arith.constant 48 : index
    %171 = vector.load %arg14[%c0_90, %c48_91] : memref<128x256xbf16, #tpu.memory_space<vmem>>, vector<128x16xbf16>
    tpu.vector_store %arg14[%c0_90, %c48_91], %170 {strides = array<i32>} : memref<128x256xbf16, #tpu.memory_space<vmem>>, vector<128x16xbf16>,
    %172 = vector.extract_strided_slice %152 {offsets = [0, 0, 0, 0], sizes = [4, 4, 8, 16], strides = [1, 1, 1, 1]} : vector<5x5x8x16xf32> to vector<4x4x8x16xf32>
    %173 = vector.shape_cast %172 : vector<4x4x8x16xf32> to vector<128x16xf32>
    %174 = arith.truncf %173 : vector<128x16xf32> to vector<128x16xbf16>
    %c0_92 = arith.constant 0 : index
    %c64_93 = arith.constant 64 : index
    %175 = vector.load %arg14[%c0_92, %c64_93] : memref<128x256xbf16, #tpu.memory_space<vmem>>, vector<128x16xbf16>
    tpu.vector_store %arg14[%c0_92, %c64_93], %174 {strides = array<i32>} : memref<128x256xbf16, #tpu.memory_space<vmem>>, vector<128x16xbf16>,
    %176 = vector.extract_strided_slice %155 {offsets = [0, 0, 0, 0], sizes = [4, 4, 8, 16], strides = [1, 1, 1, 1]} : vector<5x5x8x16xf32> to vector<4x4x8x16xf32>
    %177 = vector.shape_cast %176 : vector<4x4x8x16xf32> to vector<128x16xf32>
    %178 = arith.truncf %177 : vector<128x16xf32> to vector<128x16xbf16>
    %c0_94 = arith.constant 0 : index
    %c80_95 = arith.constant 80 : index
    %179 = vector.load %arg14[%c0_94, %c80_95] : memref<128x256xbf16, #tpu.memory_space<vmem>>, vector<128x16xbf16>
    tpu.vector_store %arg14[%c0_94, %c80_95], %178 {strides = array<i32>} : memref<128x256xbf16, #tpu.memory_space<vmem>>, vector<128x16xbf16>,
    %180 = vector.extract_strided_slice %152 {offsets = [0, 1, 0, 0], sizes = [4, 4, 8, 16], strides = [1, 1, 1, 1]} : vector<5x5x8x16xf32> to vector<4x4x8x16xf32>
    %181 = vector.shape_cast %180 : vector<4x4x8x16xf32> to vector<128x16xf32>
    %182 = arith.truncf %181 : vector<128x16xf32> to vector<128x16xbf16>
    %c0_96 = arith.constant 0 : index
    %c96_97 = arith.constant 96 : index
    %183 = vector.load %arg14[%c0_96, %c96_97] : memref<128x256xbf16, #tpu.memory_space<vmem>>, vector<128x16xbf16>
    tpu.vector_store %arg14[%c0_96, %c96_97], %182 {strides = array<i32>} : memref<128x256xbf16, #tpu.memory_space<vmem>>, vector<128x16xbf16>,
    %184 = vector.extract_strided_slice %155 {offsets = [0, 1, 0, 0], sizes = [4, 4, 8, 16], strides = [1, 1, 1, 1]} : vector<5x5x8x16xf32> to vector<4x4x8x16xf32>
    %185 = vector.shape_cast %184 : vector<4x4x8x16xf32> to vector<128x16xf32>
    %186 = arith.truncf %185 : vector<128x16xf32> to vector<128x16xbf16>
    %c0_98 = arith.constant 0 : index
    %c112_99 = arith.constant 112 : index
    %187 = vector.load %arg14[%c0_98, %c112_99] : memref<128x256xbf16, #tpu.memory_space<vmem>>, vector<128x16xbf16>
    tpu.vector_store %arg14[%c0_98, %c112_99], %186 {strides = array<i32>} : memref<128x256xbf16, #tpu.memory_space<vmem>>, vector<128x16xbf16>,
    %188 = vector.extract_strided_slice %143 {offsets = [1, 0, 0, 0], sizes = [4, 4, 8, 16], strides = [1, 1, 1, 1]} : vector<5x5x8x16xf32> to vector<4x4x8x16xf32>
    %189 = vector.shape_cast %188 : vector<4x4x8x16xf32> to vector<128x16xf32>
    %190 = arith.truncf %189 : vector<128x16xf32> to vector<128x16xbf16>
    %c0_100 = arith.constant 0 : index
    %c128 = arith.constant 128 : index
    %191 = vector.load %arg14[%c0_100, %c128] : memref<128x256xbf16, #tpu.memory_space<vmem>>, vector<128x16xbf16>
    tpu.vector_store %arg14[%c0_100, %c128], %190 {strides = array<i32>} : memref<128x256xbf16, #tpu.memory_space<vmem>>, vector<128x16xbf16>,
    %192 = vector.extract_strided_slice %146 {offsets = [1, 0, 0, 0], sizes = [4, 4, 8, 16], strides = [1, 1, 1, 1]} : vector<5x5x8x16xf32> to vector<4x4x8x16xf32>
    %193 = vector.shape_cast %192 : vector<4x4x8x16xf32> to vector<128x16xf32>
    %194 = arith.truncf %193 : vector<128x16xf32> to vector<128x16xbf16>
    %c0_101 = arith.constant 0 : index
    %c144 = arith.constant 144 : index
    %195 = vector.load %arg14[%c0_101, %c144] : memref<128x256xbf16, #tpu.memory_space<vmem>>, vector<128x16xbf16>
    tpu.vector_store %arg14[%c0_101, %c144], %194 {strides = array<i32>} : memref<128x256xbf16, #tpu.memory_space<vmem>>, vector<128x16xbf16>,
    %196 = vector.extract_strided_slice %143 {offsets = [1, 1, 0, 0], sizes = [4, 4, 8, 16], strides = [1, 1, 1, 1]} : vector<5x5x8x16xf32> to vector<4x4x8x16xf32>
    %197 = vector.shape_cast %196 : vector<4x4x8x16xf32> to vector<128x16xf32>
    %198 = arith.truncf %197 : vector<128x16xf32> to vector<128x16xbf16>
    %c0_102 = arith.constant 0 : index
    %c160 = arith.constant 160 : index
    %199 = vector.load %arg14[%c0_102, %c160] : memref<128x256xbf16, #tpu.memory_space<vmem>>, vector<128x16xbf16>
    tpu.vector_store %arg14[%c0_102, %c160], %198 {strides = array<i32>} : memref<128x256xbf16, #tpu.memory_space<vmem>>, vector<128x16xbf16>,
    %200 = vector.extract_strided_slice %146 {offsets = [1, 1, 0, 0], sizes = [4, 4, 8, 16], strides = [1, 1, 1, 1]} : vector<5x5x8x16xf32> to vector<4x4x8x16xf32>
    %201 = vector.shape_cast %200 : vector<4x4x8x16xf32> to vector<128x16xf32>
    %202 = arith.truncf %201 : vector<128x16xf32> to vector<128x16xbf16>
    %c0_103 = arith.constant 0 : index
    %c176 = arith.constant 176 : index
    %203 = vector.load %arg14[%c0_103, %c176] : memref<128x256xbf16, #tpu.memory_space<vmem>>, vector<128x16xbf16>
    tpu.vector_store %arg14[%c0_103, %c176], %202 {strides = array<i32>} : memref<128x256xbf16, #tpu.memory_space<vmem>>, vector<128x16xbf16>,
    %204 = vector.extract_strided_slice %152 {offsets = [1, 0, 0, 0], sizes = [4, 4, 8, 16], strides = [1, 1, 1, 1]} : vector<5x5x8x16xf32> to vector<4x4x8x16xf32>
    %205 = vector.shape_cast %204 : vector<4x4x8x16xf32> to vector<128x16xf32>
    %206 = arith.truncf %205 : vector<128x16xf32> to vector<128x16xbf16>
    %c0_104 = arith.constant 0 : index
    %c192 = arith.constant 192 : index
    %207 = vector.load %arg14[%c0_104, %c192] : memref<128x256xbf16, #tpu.memory_space<vmem>>, vector<128x16xbf16>
    tpu.vector_store %arg14[%c0_104, %c192], %206 {strides = array<i32>} : memref<128x256xbf16, #tpu.memory_space<vmem>>, vector<128x16xbf16>,
    %208 = vector.extract_strided_slice %155 {offsets = [1, 0, 0, 0], sizes = [4, 4, 8, 16], strides = [1, 1, 1, 1]} : vector<5x5x8x16xf32> to vector<4x4x8x16xf32>
    %209 = vector.shape_cast %208 : vector<4x4x8x16xf32> to vector<128x16xf32>
    %210 = arith.truncf %209 : vector<128x16xf32> to vector<128x16xbf16>
    %c0_105 = arith.constant 0 : index
    %c208 = arith.constant 208 : index
    %211 = vector.load %arg14[%c0_105, %c208] : memref<128x256xbf16, #tpu.memory_space<vmem>>, vector<128x16xbf16>
    tpu.vector_store %arg14[%c0_105, %c208], %210 {strides = array<i32>} : memref<128x256xbf16, #tpu.memory_space<vmem>>, vector<128x16xbf16>,
    %212 = vector.extract_strided_slice %152 {offsets = [1, 1, 0, 0], sizes = [4, 4, 8, 16], strides = [1, 1, 1, 1]} : vector<5x5x8x16xf32> to vector<4x4x8x16xf32>
    %213 = vector.shape_cast %212 : vector<4x4x8x16xf32> to vector<128x16xf32>
    %214 = arith.truncf %213 : vector<128x16xf32> to vector<128x16xbf16>
    %c0_106 = arith.constant 0 : index
    %c224 = arith.constant 224 : index
    %215 = vector.load %arg14[%c0_106, %c224] : memref<128x256xbf16, #tpu.memory_space<vmem>>, vector<128x16xbf16>
    tpu.vector_store %arg14[%c0_106, %c224], %214 {strides = array<i32>} : memref<128x256xbf16, #tpu.memory_space<vmem>>, vector<128x16xbf16>,
    %216 = vector.extract_strided_slice %155 {offsets = [1, 1, 0, 0], sizes = [4, 4, 8, 16], strides = [1, 1, 1, 1]} : vector<5x5x8x16xf32> to vector<4x4x8x16xf32>
    %217 = vector.shape_cast %216 : vector<4x4x8x16xf32> to vector<128x16xf32>
    %218 = arith.truncf %217 : vector<128x16xf32> to vector<128x16xbf16>
    %c0_107 = arith.constant 0 : index
    %c240 = arith.constant 240 : index
    %219 = vector.load %arg14[%c0_107, %c240] : memref<128x256xbf16, #tpu.memory_space<vmem>>, vector<128x16xbf16>
    tpu.vector_store %arg14[%c0_107, %c240], %218 {strides = array<i32>} : memref<128x256xbf16, #tpu.memory_space<vmem>>, vector<128x16xbf16>,
    %c0_108 = arith.constant 0 : index
    %c0_109 = arith.constant 0 : index
    %220 = vector.load %arg14[%c0_108, %c0_109] : memref<128x256xbf16, #tpu.memory_space<vmem>>, vector<128x256xbf16>
    %c0_110 = arith.constant 0 : index
    %c0_111 = arith.constant 0 : index
    %221 = vector.load %arg4[%c0_110, %c0_111] : memref<256x32xbf16, #tpu.memory_space<vmem>>, vector<256x32xbf16>
    %cst_112 = arith.constant dense<0.000000e+00> : vector<128x32xf32>
    %222 = tpu.matmul %220, %221, %cst_112 {dimension_numbers = #tpu.dot_dimension_numbers<[1], [0], [0], [1], [0, 0, 1, 1], [], []>} : vector<128x256xbf16>, vector<256x32xbf16>, vector<128x32xf32> -> vector<128x32xf32>
    %cst_113 = arith.constant dense<0.000000e+00> : vector<32xf32>
    %223 = vector.multi_reduction <add>, %222, %cst_113 [0] : vector<128x32xf32> to vector<32xf32>
    %224 = vector.shape_cast %223 : vector<32xf32> to vector<1x32xf32>
    %225 = arith.mulf %222, %222 : vector<128x32xf32>
    %cst_114 = arith.constant dense<0.000000e+00> : vector<32xf32>
    %226 = vector.multi_reduction <add>, %225, %cst_114 [0] : vector<128x32xf32> to vector<32xf32>
    %227 = vector.shape_cast %226 : vector<32xf32> to vector<1x32xf32>
    %cst_115 = arith.constant 7.812500e-03 : f32
    %228 = vector.broadcast %cst_115 : f32 to vector<1x32xf32>
    %229 = arith.mulf %224, %228 : vector<1x32xf32>
    %cst_116 = arith.constant 7.812500e-03 : f32
    %230 = vector.broadcast %cst_116 : f32 to vector<1x32xf32>
    %231 = arith.mulf %227, %230 : vector<1x32xf32>
    %232 = arith.mulf %229, %229 : vector<1x32xf32>
    %233 = arith.subf %231, %232 : vector<1x32xf32>
    %cst_117 = arith.constant 0.000000e+00 : f32
    %234 = vector.broadcast %cst_117 : f32 to vector<1x32xf32>
    %235 = arith.maximumf %233, %234 : vector<1x32xf32>
    %c0_118 = arith.constant 0 : index
    %c0_119 = arith.constant 0 : index
    %236 = vector.load %arg7[%c0_118, %c0_119] : memref<2x32xf32, #tpu.memory_space<vmem>>, vector<2x32xf32>
    %237 = vector.extract_strided_slice %236 {offsets = [0, 0], sizes = [1, 32], strides = [1, 1]} : vector<2x32xf32> to vector<1x32xf32>
    %cst_120 = arith.constant 9.99999974E-6 : f32
    %238 = vector.broadcast %cst_120 : f32 to vector<1x32xf32>
    %239 = arith.addf %235, %238 : vector<1x32xf32>
    %240 = math.rsqrt %239 : vector<1x32xf32>
    %241 = arith.mulf %237, %240 : vector<1x32xf32>
    %242 = vector.extract_strided_slice %236 {offsets = [1, 0], sizes = [1, 32], strides = [1, 1]} : vector<2x32xf32> to vector<1x32xf32>
    %243 = arith.mulf %229, %241 : vector<1x32xf32>
    %244 = arith.subf %242, %243 : vector<1x32xf32>
    %245 = vector.broadcast %241 : vector<1x32xf32> to vector<128x32xf32>
    %246 = arith.mulf %222, %245 : vector<128x32xf32>
    %247 = vector.broadcast %244 : vector<1x32xf32> to vector<128x32xf32>
    %248 = arith.addf %246, %247 : vector<128x32xf32>
    %cst_121 = arith.constant 2.000000e-01 : f32
    %249 = vector.broadcast %cst_121 : f32 to vector<128x32xf32>
    %250 = arith.mulf %249, %248 : vector<128x32xf32>
    %251 = arith.maximumf %248, %250 : vector<128x32xf32>
    %252 = vector.shape_cast %251 : vector<128x32xf32> to vector<4x4x8x32xf32>
    %cst_122 = arith.constant 0.000000e+00 : f32
    %253 = vector.broadcast %cst_122 : f32 to vector<1x6x8x32xf32>
    %c0_123 = arith.constant 0 : index
    %c0_124 = arith.constant 0 : index
    %c0_125 = arith.constant 0 : index
    %c0_126 = arith.constant 0 : index
    %254 = vector.load %arg12[%c0_123, %c0_124, %c0_125, %c0_126] : memref<6x6x8x32xf32, #tpu.memory_space<vmem>>, vector<1x6x8x32xf32>
    tpu.vector_store %arg12[%c0_123, %c0_124, %c0_125, %c0_126], %253 {strides = array<i32>} : memref<6x6x8x32xf32, #tpu.memory_space<vmem>>, vector<1x6x8x32xf32>,
    %c5 = arith.constant 5 : index
    %c0_127 = arith.constant 0 : index
    %c0_128 = arith.constant 0 : index
    %c0_129 = arith.constant 0 : index
    %255 = vector.load %arg12[%c5, %c0_127, %c0_128, %c0_129] : memref<6x6x8x32xf32, #tpu.memory_space<vmem>>, vector<1x6x8x32xf32>
    tpu.vector_store %arg12[%c5, %c0_127, %c0_128, %c0_129], %253 {strides = array<i32>} : memref<6x6x8x32xf32, #tpu.memory_space<vmem>>, vector<1x6x8x32xf32>,
    %cst_130 = arith.constant 0.000000e+00 : f32
    %256 = vector.broadcast %cst_130 : f32 to vector<4x1x8x32xf32>
    %c1_131 = arith.constant 1 : index
    %c0_132 = arith.constant 0 : index
    %c0_133 = arith.constant 0 : index
    %c0_134 = arith.constant 0 : index
    %257 = vector.load %arg12[%c1_131, %c0_132, %c0_133, %c0_134] : memref<6x6x8x32xf32, #tpu.memory_space<vmem>>, vector<4x1x8x32xf32>
    tpu.vector_store %arg12[%c1_131, %c0_132, %c0_133, %c0_134], %256 {strides = array<i32>} : memref<6x6x8x32xf32, #tpu.memory_space<vmem>>, vector<4x1x8x32xf32>,
    %c1_135 = arith.constant 1 : index
    %c5_136 = arith.constant 5 : index
    %c0_137 = arith.constant 0 : index
    %c0_138 = arith.constant 0 : index
    %258 = vector.load %arg12[%c1_135, %c5_136, %c0_137, %c0_138] : memref<6x6x8x32xf32, #tpu.memory_space<vmem>>, vector<4x1x8x32xf32>
    tpu.vector_store %arg12[%c1_135, %c5_136, %c0_137, %c0_138], %256 {strides = array<i32>} : memref<6x6x8x32xf32, #tpu.memory_space<vmem>>, vector<4x1x8x32xf32>,
    %c1_139 = arith.constant 1 : index
    %c1_140 = arith.constant 1 : index
    %c0_141 = arith.constant 0 : index
    %c0_142 = arith.constant 0 : index
    %259 = vector.load %arg12[%c1_139, %c1_140, %c0_141, %c0_142] : memref<6x6x8x32xf32, #tpu.memory_space<vmem>>, vector<4x4x8x32xf32>
    tpu.vector_store %arg12[%c1_139, %c1_140, %c0_141, %c0_142], %252 {strides = array<i32>} : memref<6x6x8x32xf32, #tpu.memory_space<vmem>>, vector<4x4x8x32xf32>,
    %c0_143 = arith.constant 0 : index
    %c0_144 = arith.constant 0 : index
    %c0_145 = arith.constant 0 : index
    %c0_146 = arith.constant 0 : index
    %260 = vector.load %arg12[%c0_143, %c0_144, %c0_145, %c0_146] : memref<6x6x8x32xf32, #tpu.memory_space<vmem>>, vector<6x6x8x32xf32>
    %261 = vector.shape_cast %260 : vector<6x6x8x32xf32> to vector<3x2x6x8x32xf32>
    %262 = vector.extract_strided_slice %261 {offsets = [0, 0, 0, 0, 0], sizes = [3, 1, 6, 8, 32], strides = [1, 1, 1, 1, 1]} : vector<3x2x6x8x32xf32> to vector<3x1x6x8x32xf32>
    %263 = vector.shape_cast %262 : vector<3x1x6x8x32xf32> to vector<3x6x8x32xf32>
    %264 = vector.shape_cast %263 : vector<3x6x8x32xf32> to vector<3x3x2x8x32xf32>
    %265 = vector.extract_strided_slice %264 {offsets = [0, 0, 0, 0, 0], sizes = [3, 3, 1, 8, 32], strides = [1, 1, 1, 1, 1]} : vector<3x3x2x8x32xf32> to vector<3x3x1x8x32xf32>
    %266 = vector.shape_cast %265 : vector<3x3x1x8x32xf32> to vector<3x3x8x32xf32>
    %267 = vector.shape_cast %263 : vector<3x6x8x32xf32> to vector<3x3x2x8x32xf32>
    %268 = vector.extract_strided_slice %267 {offsets = [0, 0, 1, 0, 0], sizes = [3, 3, 1, 8, 32], strides = [1, 1, 1, 1, 1]} : vector<3x3x2x8x32xf32> to vector<3x3x1x8x32xf32>
    %269 = vector.shape_cast %268 : vector<3x3x1x8x32xf32> to vector<3x3x8x32xf32>
    %270 = vector.shape_cast %260 : vector<6x6x8x32xf32> to vector<3x2x6x8x32xf32>
    %271 = vector.extract_strided_slice %270 {offsets = [0, 1, 0, 0, 0], sizes = [3, 1, 6, 8, 32], strides = [1, 1, 1, 1, 1]} : vector<3x2x6x8x32xf32> to vector<3x1x6x8x32xf32>
    %272 = vector.shape_cast %271 : vector<3x1x6x8x32xf32> to vector<3x6x8x32xf32>
    %273 = vector.shape_cast %272 : vector<3x6x8x32xf32> to vector<3x3x2x8x32xf32>
    %274 = vector.extract_strided_slice %273 {offsets = [0, 0, 0, 0, 0], sizes = [3, 3, 1, 8, 32], strides = [1, 1, 1, 1, 1]} : vector<3x3x2x8x32xf32> to vector<3x3x1x8x32xf32>
    %275 = vector.shape_cast %274 : vector<3x3x1x8x32xf32> to vector<3x3x8x32xf32>
    %276 = vector.shape_cast %272 : vector<3x6x8x32xf32> to vector<3x3x2x8x32xf32>
    %277 = vector.extract_strided_slice %276 {offsets = [0, 0, 1, 0, 0], sizes = [3, 3, 1, 8, 32], strides = [1, 1, 1, 1, 1]} : vector<3x3x2x8x32xf32> to vector<3x3x1x8x32xf32>
    %278 = vector.shape_cast %277 : vector<3x3x1x8x32xf32> to vector<3x3x8x32xf32>
    %279 = vector.extract_strided_slice %266 {offsets = [0, 0, 0, 0], sizes = [2, 2, 8, 32], strides = [1, 1, 1, 1]} : vector<3x3x8x32xf32> to vector<2x2x8x32xf32>
    %280 = vector.shape_cast %279 : vector<2x2x8x32xf32> to vector<32x32xf32>
    %281 = arith.truncf %280 : vector<32x32xf32> to vector<32x32xbf16>
    %c0_147 = arith.constant 0 : index
    %c0_148 = arith.constant 0 : index
    %282 = vector.load %arg15[%c0_147, %c0_148] : memref<32x512xbf16, #tpu.memory_space<vmem>>, vector<32x32xbf16>
    tpu.vector_store %arg15[%c0_147, %c0_148], %281 {strides = array<i32>} : memref<32x512xbf16, #tpu.memory_space<vmem>>, vector<32x32xbf16>,
    %283 = vector.extract_strided_slice %269 {offsets = [0, 0, 0, 0], sizes = [2, 2, 8, 32], strides = [1, 1, 1, 1]} : vector<3x3x8x32xf32> to vector<2x2x8x32xf32>
    %284 = vector.shape_cast %283 : vector<2x2x8x32xf32> to vector<32x32xf32>
    %285 = arith.truncf %284 : vector<32x32xf32> to vector<32x32xbf16>
    %c0_149 = arith.constant 0 : index
    %c32_150 = arith.constant 32 : index
    %286 = vector.load %arg15[%c0_149, %c32_150] : memref<32x512xbf16, #tpu.memory_space<vmem>>, vector<32x32xbf16>
    tpu.vector_store %arg15[%c0_149, %c32_150], %285 {strides = array<i32>} : memref<32x512xbf16, #tpu.memory_space<vmem>>, vector<32x32xbf16>,
    %287 = vector.extract_strided_slice %266 {offsets = [0, 1, 0, 0], sizes = [2, 2, 8, 32], strides = [1, 1, 1, 1]} : vector<3x3x8x32xf32> to vector<2x2x8x32xf32>
    %288 = vector.shape_cast %287 : vector<2x2x8x32xf32> to vector<32x32xf32>
    %289 = arith.truncf %288 : vector<32x32xf32> to vector<32x32xbf16>
    %c0_151 = arith.constant 0 : index
    %c64_152 = arith.constant 64 : index
    %290 = vector.load %arg15[%c0_151, %c64_152] : memref<32x512xbf16, #tpu.memory_space<vmem>>, vector<32x32xbf16>
    tpu.vector_store %arg15[%c0_151, %c64_152], %289 {strides = array<i32>} : memref<32x512xbf16, #tpu.memory_space<vmem>>, vector<32x32xbf16>,
    %291 = vector.extract_strided_slice %269 {offsets = [0, 1, 0, 0], sizes = [2, 2, 8, 32], strides = [1, 1, 1, 1]} : vector<3x3x8x32xf32> to vector<2x2x8x32xf32>
    %292 = vector.shape_cast %291 : vector<2x2x8x32xf32> to vector<32x32xf32>
    %293 = arith.truncf %292 : vector<32x32xf32> to vector<32x32xbf16>
    %c0_153 = arith.constant 0 : index
    %c96_154 = arith.constant 96 : index
    %294 = vector.load %arg15[%c0_153, %c96_154] : memref<32x512xbf16, #tpu.memory_space<vmem>>, vector<32x32xbf16>
    tpu.vector_store %arg15[%c0_153, %c96_154], %293 {strides = array<i32>} : memref<32x512xbf16, #tpu.memory_space<vmem>>, vector<32x32xbf16>,
    %295 = vector.extract_strided_slice %275 {offsets = [0, 0, 0, 0], sizes = [2, 2, 8, 32], strides = [1, 1, 1, 1]} : vector<3x3x8x32xf32> to vector<2x2x8x32xf32>
    %296 = vector.shape_cast %295 : vector<2x2x8x32xf32> to vector<32x32xf32>
    %297 = arith.truncf %296 : vector<32x32xf32> to vector<32x32xbf16>
    %c0_155 = arith.constant 0 : index
    %c128_156 = arith.constant 128 : index
    %298 = vector.load %arg15[%c0_155, %c128_156] : memref<32x512xbf16, #tpu.memory_space<vmem>>, vector<32x32xbf16>
    tpu.vector_store %arg15[%c0_155, %c128_156], %297 {strides = array<i32>} : memref<32x512xbf16, #tpu.memory_space<vmem>>, vector<32x32xbf16>,
    %299 = vector.extract_strided_slice %278 {offsets = [0, 0, 0, 0], sizes = [2, 2, 8, 32], strides = [1, 1, 1, 1]} : vector<3x3x8x32xf32> to vector<2x2x8x32xf32>
    %300 = vector.shape_cast %299 : vector<2x2x8x32xf32> to vector<32x32xf32>
    %301 = arith.truncf %300 : vector<32x32xf32> to vector<32x32xbf16>
    %c0_157 = arith.constant 0 : index
    %c160_158 = arith.constant 160 : index
    %302 = vector.load %arg15[%c0_157, %c160_158] : memref<32x512xbf16, #tpu.memory_space<vmem>>, vector<32x32xbf16>
    tpu.vector_store %arg15[%c0_157, %c160_158], %301 {strides = array<i32>} : memref<32x512xbf16, #tpu.memory_space<vmem>>, vector<32x32xbf16>,
    %303 = vector.extract_strided_slice %275 {offsets = [0, 1, 0, 0], sizes = [2, 2, 8, 32], strides = [1, 1, 1, 1]} : vector<3x3x8x32xf32> to vector<2x2x8x32xf32>
    %304 = vector.shape_cast %303 : vector<2x2x8x32xf32> to vector<32x32xf32>
    %305 = arith.truncf %304 : vector<32x32xf32> to vector<32x32xbf16>
    %c0_159 = arith.constant 0 : index
    %c192_160 = arith.constant 192 : index
    %306 = vector.load %arg15[%c0_159, %c192_160] : memref<32x512xbf16, #tpu.memory_space<vmem>>, vector<32x32xbf16>
    tpu.vector_store %arg15[%c0_159, %c192_160], %305 {strides = array<i32>} : memref<32x512xbf16, #tpu.memory_space<vmem>>, vector<32x32xbf16>,
    %307 = vector.extract_strided_slice %278 {offsets = [0, 1, 0, 0], sizes = [2, 2, 8, 32], strides = [1, 1, 1, 1]} : vector<3x3x8x32xf32> to vector<2x2x8x32xf32>
    %308 = vector.shape_cast %307 : vector<2x2x8x32xf32> to vector<32x32xf32>
    %309 = arith.truncf %308 : vector<32x32xf32> to vector<32x32xbf16>
    %c0_161 = arith.constant 0 : index
    %c224_162 = arith.constant 224 : index
    %310 = vector.load %arg15[%c0_161, %c224_162] : memref<32x512xbf16, #tpu.memory_space<vmem>>, vector<32x32xbf16>
    tpu.vector_store %arg15[%c0_161, %c224_162], %309 {strides = array<i32>} : memref<32x512xbf16, #tpu.memory_space<vmem>>, vector<32x32xbf16>,
    %311 = vector.extract_strided_slice %266 {offsets = [1, 0, 0, 0], sizes = [2, 2, 8, 32], strides = [1, 1, 1, 1]} : vector<3x3x8x32xf32> to vector<2x2x8x32xf32>
    %312 = vector.shape_cast %311 : vector<2x2x8x32xf32> to vector<32x32xf32>
    %313 = arith.truncf %312 : vector<32x32xf32> to vector<32x32xbf16>
    %c0_163 = arith.constant 0 : index
    %c256 = arith.constant 256 : index
    %314 = vector.load %arg15[%c0_163, %c256] : memref<32x512xbf16, #tpu.memory_space<vmem>>, vector<32x32xbf16>
    tpu.vector_store %arg15[%c0_163, %c256], %313 {strides = array<i32>} : memref<32x512xbf16, #tpu.memory_space<vmem>>, vector<32x32xbf16>,
    %315 = vector.extract_strided_slice %269 {offsets = [1, 0, 0, 0], sizes = [2, 2, 8, 32], strides = [1, 1, 1, 1]} : vector<3x3x8x32xf32> to vector<2x2x8x32xf32>
    %316 = vector.shape_cast %315 : vector<2x2x8x32xf32> to vector<32x32xf32>
    %317 = arith.truncf %316 : vector<32x32xf32> to vector<32x32xbf16>
    %c0_164 = arith.constant 0 : index
    %c288 = arith.constant 288 : index
    %318 = vector.load %arg15[%c0_164, %c288] : memref<32x512xbf16, #tpu.memory_space<vmem>>, vector<32x32xbf16>
    tpu.vector_store %arg15[%c0_164, %c288], %317 {strides = array<i32>} : memref<32x512xbf16, #tpu.memory_space<vmem>>, vector<32x32xbf16>,
    %319 = vector.extract_strided_slice %266 {offsets = [1, 1, 0, 0], sizes = [2, 2, 8, 32], strides = [1, 1, 1, 1]} : vector<3x3x8x32xf32> to vector<2x2x8x32xf32>
    %320 = vector.shape_cast %319 : vector<2x2x8x32xf32> to vector<32x32xf32>
    %321 = arith.truncf %320 : vector<32x32xf32> to vector<32x32xbf16>
    %c0_165 = arith.constant 0 : index
    %c320 = arith.constant 320 : index
    %322 = vector.load %arg15[%c0_165, %c320] : memref<32x512xbf16, #tpu.memory_space<vmem>>, vector<32x32xbf16>
    tpu.vector_store %arg15[%c0_165, %c320], %321 {strides = array<i32>} : memref<32x512xbf16, #tpu.memory_space<vmem>>, vector<32x32xbf16>,
    %323 = vector.extract_strided_slice %269 {offsets = [1, 1, 0, 0], sizes = [2, 2, 8, 32], strides = [1, 1, 1, 1]} : vector<3x3x8x32xf32> to vector<2x2x8x32xf32>
    %324 = vector.shape_cast %323 : vector<2x2x8x32xf32> to vector<32x32xf32>
    %325 = arith.truncf %324 : vector<32x32xf32> to vector<32x32xbf16>
    %c0_166 = arith.constant 0 : index
    %c352 = arith.constant 352 : index
    %326 = vector.load %arg15[%c0_166, %c352] : memref<32x512xbf16, #tpu.memory_space<vmem>>, vector<32x32xbf16>
    tpu.vector_store %arg15[%c0_166, %c352], %325 {strides = array<i32>} : memref<32x512xbf16, #tpu.memory_space<vmem>>, vector<32x32xbf16>,
    %327 = vector.extract_strided_slice %275 {offsets = [1, 0, 0, 0], sizes = [2, 2, 8, 32], strides = [1, 1, 1, 1]} : vector<3x3x8x32xf32> to vector<2x2x8x32xf32>
    %328 = vector.shape_cast %327 : vector<2x2x8x32xf32> to vector<32x32xf32>
    %329 = arith.truncf %328 : vector<32x32xf32> to vector<32x32xbf16>
    %c0_167 = arith.constant 0 : index
    %c384 = arith.constant 384 : index
    %330 = vector.load %arg15[%c0_167, %c384] : memref<32x512xbf16, #tpu.memory_space<vmem>>, vector<32x32xbf16>
    tpu.vector_store %arg15[%c0_167, %c384], %329 {strides = array<i32>} : memref<32x512xbf16, #tpu.memory_space<vmem>>, vector<32x32xbf16>,
    %331 = vector.extract_strided_slice %278 {offsets = [1, 0, 0, 0], sizes = [2, 2, 8, 32], strides = [1, 1, 1, 1]} : vector<3x3x8x32xf32> to vector<2x2x8x32xf32>
    %332 = vector.shape_cast %331 : vector<2x2x8x32xf32> to vector<32x32xf32>
    %333 = arith.truncf %332 : vector<32x32xf32> to vector<32x32xbf16>
    %c0_168 = arith.constant 0 : index
    %c416 = arith.constant 416 : index
    %334 = vector.load %arg15[%c0_168, %c416] : memref<32x512xbf16, #tpu.memory_space<vmem>>, vector<32x32xbf16>
    tpu.vector_store %arg15[%c0_168, %c416], %333 {strides = array<i32>} : memref<32x512xbf16, #tpu.memory_space<vmem>>, vector<32x32xbf16>,
    %335 = vector.extract_strided_slice %275 {offsets = [1, 1, 0, 0], sizes = [2, 2, 8, 32], strides = [1, 1, 1, 1]} : vector<3x3x8x32xf32> to vector<2x2x8x32xf32>
    %336 = vector.shape_cast %335 : vector<2x2x8x32xf32> to vector<32x32xf32>
    %337 = arith.truncf %336 : vector<32x32xf32> to vector<32x32xbf16>
    %c0_169 = arith.constant 0 : index
    %c448 = arith.constant 448 : index
    %338 = vector.load %arg15[%c0_169, %c448] : memref<32x512xbf16, #tpu.memory_space<vmem>>, vector<32x32xbf16>
    tpu.vector_store %arg15[%c0_169, %c448], %337 {strides = array<i32>} : memref<32x512xbf16, #tpu.memory_space<vmem>>, vector<32x32xbf16>,
    %339 = vector.extract_strided_slice %278 {offsets = [1, 1, 0, 0], sizes = [2, 2, 8, 32], strides = [1, 1, 1, 1]} : vector<3x3x8x32xf32> to vector<2x2x8x32xf32>
    %340 = vector.shape_cast %339 : vector<2x2x8x32xf32> to vector<32x32xf32>
    %341 = arith.truncf %340 : vector<32x32xf32> to vector<32x32xbf16>
    %c0_170 = arith.constant 0 : index
    %c480 = arith.constant 480 : index
    %342 = vector.load %arg15[%c0_170, %c480] : memref<32x512xbf16, #tpu.memory_space<vmem>>, vector<32x32xbf16>
    tpu.vector_store %arg15[%c0_170, %c480], %341 {strides = array<i32>} : memref<32x512xbf16, #tpu.memory_space<vmem>>, vector<32x32xbf16>,
    %c0_171 = arith.constant 0 : index
    %c0_172 = arith.constant 0 : index
    %343 = vector.load %arg15[%c0_171, %c0_172] : memref<32x512xbf16, #tpu.memory_space<vmem>>, vector<32x512xbf16>
    %c0_173 = arith.constant 0 : index
    %c0_174 = arith.constant 0 : index
    %344 = vector.load %arg5[%c0_173, %c0_174] : memref<512x64xbf16, #tpu.memory_space<vmem>>, vector<512x64xbf16>
    %cst_175 = arith.constant dense<0.000000e+00> : vector<32x64xf32>
    %345 = tpu.matmul %343, %344, %cst_175 {dimension_numbers = #tpu.dot_dimension_numbers<[1], [0], [0], [1], [0, 0, 1, 1], [], []>} : vector<32x512xbf16>, vector<512x64xbf16>, vector<32x64xf32> -> vector<32x64xf32>
    %cst_176 = arith.constant dense<0.000000e+00> : vector<64xf32>
    %346 = vector.multi_reduction <add>, %345, %cst_176 [0] : vector<32x64xf32> to vector<64xf32>
    %347 = vector.shape_cast %346 : vector<64xf32> to vector<1x64xf32>
    %348 = arith.mulf %345, %345 : vector<32x64xf32>
    %cst_177 = arith.constant dense<0.000000e+00> : vector<64xf32>
    %349 = vector.multi_reduction <add>, %348, %cst_177 [0] : vector<32x64xf32> to vector<64xf32>
    %350 = vector.shape_cast %349 : vector<64xf32> to vector<1x64xf32>
    %cst_178 = arith.constant 3.125000e-02 : f32
    %351 = vector.broadcast %cst_178 : f32 to vector<1x64xf32>
    %352 = arith.mulf %347, %351 : vector<1x64xf32>
    %cst_179 = arith.constant 3.125000e-02 : f32
    %353 = vector.broadcast %cst_179 : f32 to vector<1x64xf32>
    %354 = arith.mulf %350, %353 : vector<1x64xf32>
    %355 = arith.mulf %352, %352 : vector<1x64xf32>
    %356 = arith.subf %354, %355 : vector<1x64xf32>
    %cst_180 = arith.constant 0.000000e+00 : f32
    %357 = vector.broadcast %cst_180 : f32 to vector<1x64xf32>
    %358 = arith.maximumf %356, %357 : vector<1x64xf32>
    %c0_181 = arith.constant 0 : index
    %c0_182 = arith.constant 0 : index
    %359 = vector.load %arg8[%c0_181, %c0_182] : memref<2x64xf32, #tpu.memory_space<vmem>>, vector<2x64xf32>
    %360 = vector.extract_strided_slice %359 {offsets = [0, 0], sizes = [1, 64], strides = [1, 1]} : vector<2x64xf32> to vector<1x64xf32>
    %cst_183 = arith.constant 9.99999974E-6 : f32
    %361 = vector.broadcast %cst_183 : f32 to vector<1x64xf32>
    %362 = arith.addf %358, %361 : vector<1x64xf32>
    %363 = math.rsqrt %362 : vector<1x64xf32>
    %364 = arith.mulf %360, %363 : vector<1x64xf32>
    %365 = vector.extract_strided_slice %359 {offsets = [1, 0], sizes = [1, 64], strides = [1, 1]} : vector<2x64xf32> to vector<1x64xf32>
    %366 = arith.mulf %352, %364 : vector<1x64xf32>
    %367 = arith.subf %365, %366 : vector<1x64xf32>
    %368 = vector.broadcast %364 : vector<1x64xf32> to vector<32x64xf32>
    %369 = arith.mulf %345, %368 : vector<32x64xf32>
    %370 = vector.broadcast %367 : vector<1x64xf32> to vector<32x64xf32>
    %371 = arith.addf %369, %370 : vector<32x64xf32>
    %cst_184 = arith.constant 2.000000e-01 : f32
    %372 = vector.broadcast %cst_184 : f32 to vector<32x64xf32>
    %373 = arith.mulf %372, %371 : vector<32x64xf32>
    %374 = arith.maximumf %371, %373 : vector<32x64xf32>
    %375 = vector.shape_cast %374 : vector<32x64xf32> to vector<4x8x64xf32>
    %376 = vector.extract_strided_slice %375 {offsets = [0, 0, 0], sizes = [4, 4, 64], strides = [1, 1, 1]} : vector<4x8x64xf32> to vector<4x4x64xf32>
    %cst_185 = arith.constant dense<0.000000e+00> : vector<4x64xf32>
    %377 = vector.multi_reduction <add>, %376, %cst_185 [1] : vector<4x4x64xf32> to vector<4x64xf32>
    %cst_186 = arith.constant 2.500000e-01 : f32
    %378 = vector.broadcast %cst_186 : f32 to vector<4x64xf32>
    %379 = arith.mulf %377, %378 : vector<4x64xf32>
    %c0_187 = arith.constant 0 : index
    %c0_188 = arith.constant 0 : index
    %c0_189 = arith.constant 0 : index
    %380 = vector.load %arg9[%c0_187, %c0_188, %c0_189] : memref<2x4x64xf32, #tpu.memory_space<vmem>>, vector<1x4x64xf32>
    %381 = vector.shape_cast %380 : vector<1x4x64xf32> to vector<4x64xf32>
    %382 = vector.shape_cast %379 : vector<4x64xf32> to vector<1x4x64xf32>
    tpu.vector_store %arg9[%c0_187, %c0_188, %c0_189], %382 {strides = array<i32>} : memref<2x4x64xf32, #tpu.memory_space<vmem>>, vector<1x4x64xf32>,
    %383 = vector.extract_strided_slice %375 {offsets = [0, 4, 0], sizes = [4, 4, 64], strides = [1, 1, 1]} : vector<4x8x64xf32> to vector<4x4x64xf32>
    %cst_190 = arith.constant dense<0.000000e+00> : vector<4x64xf32>
    %384 = vector.multi_reduction <add>, %383, %cst_190 [1] : vector<4x4x64xf32> to vector<4x64xf32>
    %cst_191 = arith.constant 2.500000e-01 : f32
    %385 = vector.broadcast %cst_191 : f32 to vector<4x64xf32>
    %386 = arith.mulf %384, %385 : vector<4x64xf32>
    %c1_192 = arith.constant 1 : index
    %c0_193 = arith.constant 0 : index
    %c0_194 = arith.constant 0 : index
    %387 = vector.load %arg9[%c1_192, %c0_193, %c0_194] : memref<2x4x64xf32, #tpu.memory_space<vmem>>, vector<1x4x64xf32>
    %388 = vector.shape_cast %387 : vector<1x4x64xf32> to vector<4x64xf32>
    %389 = vector.shape_cast %386 : vector<4x64xf32> to vector<1x4x64xf32>
    tpu.vector_store %arg9[%c1_192, %c0_193, %c0_194], %389 {strides = array<i32>} : memref<2x4x64xf32, #tpu.memory_space<vmem>>, vector<1x4x64xf32>,
    return
  }
  func.func @transform_0(%arg0: i32) -> (i32, i32) {
    %c0_i32 = arith.constant 0 : i32
    %c0_i32_0 = arith.constant 0 : i32
    %c0_i32_1 = arith.constant 0 : i32
    return %c0_i32, %c0_i32_0 : i32, i32
  }
  func.func @transform_1(%arg0: i32) -> (i32, i32) {
    %c0_i32 = arith.constant 0 : i32
    %c0_i32_0 = arith.constant 0 : i32
    %c0_i32_1 = arith.constant 0 : i32
    return %c0_i32, %c0_i32_0 : i32, i32
  }
  func.func @transform_2(%arg0: i32) -> (i32, i32) {
    %c0_i32 = arith.constant 0 : i32
    %c0_i32_0 = arith.constant 0 : i32
    %c0_i32_1 = arith.constant 0 : i32
    return %c0_i32, %c0_i32_0 : i32, i32
  }
  func.func @transform_3(%arg0: i32) -> (i32, i32) {
    %c0_i32 = arith.constant 0 : i32
    %c0_i32_0 = arith.constant 0 : i32
    %c0_i32_1 = arith.constant 0 : i32
    return %c0_i32, %c0_i32_0 : i32, i32
  }
  func.func @transform_4(%arg0: i32) -> (i32, i32) {
    %c0_i32 = arith.constant 0 : i32
    %c0_i32_0 = arith.constant 0 : i32
    %c0_i32_1 = arith.constant 0 : i32
    return %c0_i32, %c0_i32_0 : i32, i32
  }
  func.func @transform_5(%arg0: i32) -> (i32, i32) {
    %c0_i32 = arith.constant 0 : i32
    %c0_i32_0 = arith.constant 0 : i32
    %c0_i32_1 = arith.constant 0 : i32
    return %c0_i32, %c0_i32_0 : i32, i32
  }
  func.func @transform_6(%arg0: i32) -> (i32, i32) {
    %c0_i32 = arith.constant 0 : i32
    %c0_i32_0 = arith.constant 0 : i32
    %c0_i32_1 = arith.constant 0 : i32
    return %c0_i32, %c0_i32_0 : i32, i32
  }
  func.func @transform_7(%arg0: i32) -> (i32, i32) {
    %c0_i32 = arith.constant 0 : i32
    %c0_i32_0 = arith.constant 0 : i32
    %c0_i32_1 = arith.constant 0 : i32
    return %c0_i32, %c0_i32_0 : i32, i32
  }
  func.func @transform_8(%arg0: i32) -> (i32, i32, i32) {
    %c0_i32 = arith.constant 0 : i32
    %c0_i32_0 = arith.constant 0 : i32
    %c0_i32_1 = arith.constant 0 : i32
    %c0_i32_2 = arith.constant 0 : i32
    return %c0_i32, %c0_i32_0, %c0_i32_1 : i32, i32, i32
  }
}

</mosaic_0001>

<llo_original>
// kernel: stage1_d_sty_v2_forward.1
$region0: #{stage1_d_sty_v2_forward.1}
  #allocation0 [shape = 'u32[]', space=smem, size = 0x4, offset = 0x4, fixed_abs, tag = 'smem constant byte address 0x4 - core index']
  #allocation1 [shape = 'u32[144,128]{1,0:T(1,128)}', space=vmem, size = 0x12000, scoped, tag = 'internal scratch']
  #allocation2 [shape = 'f32[18,18,8,8]{3,2,1,0:T(8,128)}', space=vmem, size = 0x144000, scoped, tag = 'scratch operand']
  #allocation3 [shape = 'f32[10,10,8,16]{3,2,1,0:T(8,128)}', space=vmem, size = 0x64000, scoped, tag = 'scratch operand']
  #allocation4 [shape = 'f32[6,6,8,32]{3,2,1,0:T(8,128)}', space=vmem, size = 0x24000, scoped, tag = 'scratch operand']
  #allocation5 [shape = 'bf16[512,128]{1,0:T(16,128)(2,1)}', space=vmem, size = 0x20000, scoped, tag = 'scratch operand']
  #allocation6 [shape = 'bf16[128,256]{1,0:T(16,128)(2,1)}', space=vmem, size = 0x10000, scoped, tag = 'scratch operand']
  #allocation7 [shape = 'bf16[32,512]{1,0:T(16,128)(2,1)}', space=vmem, size = 0x8000, scoped, tag = 'scratch operand']
  %s0 = inlined_call_operand.vmem [shape: bf16[2048,48], index: 0, kind: input, shape index: {}]
  %s1 = inlined_call_operand.vmem [shape: bf16[48,8], index: 1, kind: input, shape index: {}]
  %s2 = inlined_call_operand.vmem [shape: bf16[128,16], index: 2, kind: input, shape index: {}]
  %s3 = inlined_call_operand.vmem [shape: bf16[256,32], index: 3, kind: input, shape index: {}]
  %s4 = inlined_call_operand.vmem [shape: bf16[512,64], index: 4, kind: input, shape index: {}]
  %s5 = inlined_call_operand.vmem [shape: f32[2,16], index: 5, kind: input, shape index: {}]
  %s6 = inlined_call_operand.vmem [shape: f32[2,32], index: 6, kind: input, shape index: {}]
  %s7 = inlined_call_operand.vmem [shape: f32[2,64], index: 7, kind: input, shape index: {}]
  %s8 = inlined_call_operand.hbm [shape: f32[2,4,64], index: 8, kind: output, shape index: {}]
  %s9 = sld [smem:[#allocation0]]
  $region42: #{stage1_d_sty_v2_forward.1} parent=0
    _
  %s11 = ssub.s32 1, %s9
  %s12 = scalar_select 0, %s11, %s9
  $region1: #{stage1_d_sty_v2_forward.1} parent=0
    #allocation8 [shape = 'u8[4096]{0}', space=vmem, size = 0x1000, scoped, tag = 'output window, operand 0, single buffered']
    #allocation9 [shape = 's32[1]{0}', space=sflag, size = 0x4, scoped, tag = 'scoped memory for stage1_d_sty_v2_forward.1']
    %13 = vsyncpa [#allocation9], 0
    // Predicated region
    $region2: #{stage1_d_sty_v2_forward.1} parent=1 // pred_check
      _
    $region3: #{stage1_d_sty_v2_forward.1} parent=1 // pred_check_branch
      %15 = sbr.rel (0) target = $region5
    $region4: #{stage1_d_sty_v2_forward.1} parent=1 // pred_region
      _
    $region5: #{stage1_d_sty_v2_forward.1} parent=1 // pred_fallthru
      _
    // Predicated region
    $region6: #{stage1_d_sty_v2_forward.1} parent=1 // pred_check
      _
    $region7: #{stage1_d_sty_v2_forward.1} parent=1 // pred_check_branch
      %17 = sbr.rel (0) target = $region9
    $region8: #{stage1_d_sty_v2_forward.1} parent=1 // pred_region
      _
    $region9: #{stage1_d_sty_v2_forward.1} parent=1 // pred_fallthru
      _
    // Predicated region
    $region10: #{stage1_d_sty_v2_forward.1} parent=1 // pred_check
      _
    $region11: #{stage1_d_sty_v2_forward.1} parent=1 // pred_check_branch
      %19 = sbr.rel (0) target = $region13
    $region12: #{stage1_d_sty_v2_forward.1} parent=1 // pred_region
      _
    $region13: #{stage1_d_sty_v2_forward.1} parent=1 // pred_fallthru
      _
    // Predicated region
    $region14: #{stage1_d_sty_v2_forward.1} parent=1 // pred_check
      _
    $region15: #{stage1_d_sty_v2_forward.1} parent=1 // pred_check_branch
      %21 = sbr.rel (0) target = $region17
    $region16: #{stage1_d_sty_v2_forward.1} parent=1 // pred_region
      _
    $region17: #{stage1_d_sty_v2_forward.1} parent=1 // pred_fallthru
      _
    // Predicated region
    $region18: #{stage1_d_sty_v2_forward.1} parent=1 // pred_check
      _
    $region19: #{stage1_d_sty_v2_forward.1} parent=1 // pred_check_branch
      %23 = sbr.rel (0) target = $region21
    $region20: #{stage1_d_sty_v2_forward.1} parent=1 // pred_region
      _
    $region21: #{stage1_d_sty_v2_forward.1} parent=1 // pred_fallthru
      _
    // Predicated region
    $region22: #{stage1_d_sty_v2_forward.1} parent=1 // pred_check
      _
    $region23: #{stage1_d_sty_v2_forward.1} parent=1 // pred_check_branch
      %25 = sbr.rel (0) target = $region25
    $region24: #{stage1_d_sty_v2_forward.1} parent=1 // pred_region
      _
    $region25: #{stage1_d_sty_v2_forward.1} parent=1 // pred_fallthru
      _
    // Predicated region
    $region26: #{stage1_d_sty_v2_forward.1} parent=1 // pred_check
      _
    $region27: #{stage1_d_sty_v2_forward.1} parent=1 // pred_check_branch
      %27 = sbr.rel (0) target = $region29
    $region28: #{stage1_d_sty_v2_forward.1} parent=1 // pred_region
      _
    $region29: #{stage1_d_sty_v2_forward.1} parent=1 // pred_fallthru
      _
    // Predicated region
    $region30: #{stage1_d_sty_v2_forward.1} parent=1 // pred_check
      _
    $region31: #{stage1_d_sty_v2_forward.1} parent=1 // pred_check_branch
      %29 = sbr.rel (0) target = $region33
    $region32: #{stage1_d_sty_v2_forward.1} parent=1 // pred_region
      _
    $region33: #{stage1_d_sty_v2_forward.1} parent=1 // pred_fallthru
      _
    %v31 = vld [vmem:[%s0] sm:$0xf]
    %v32 = vld [vmem:[%s0 + $0x4] sm:$0xf]
    %v33 = vld [vmem:[%s0 + $0x8] sm:$0xf]
    %v34 = vld [vmem:[%s0 + $0xc] sm:$0xf]
    %v35 = vld [vmem:[%s0 + $0x10] sm:$0xf]
    %v36 = vld [vmem:[%s0 + $0x14] sm:$0xf]
    %v37 = vld [vmem:[%s0 + $0x18] sm:$0xf]
    %v38 = vld [vmem:[%s0 + $0x1c] sm:$0xf]
    %v39 = vld [vmem:[%s0 + $0x20] sm:$0xf]
    %v40 = vld [vmem:[%s0 + $0x24] sm:$0xf]
    %v41 = vld [vmem:[%s0 + $0x28] sm:$0xf]
    %v42 = vld [vmem:[%s0 + $0x2c] sm:$0xf]
    %v43 = vld [vmem:[%s0 + $0x30] sm:$0xf]
    %v44 = vld [vmem:[%s0 + $0x34] sm:$0xf]
    %v45 = vld [vmem:[%s0 + $0x38] sm:$0xf]
    %v46 = vld [vmem:[%s0 + $0x3c] sm:$0xf]
    %v47 = vld [vmem:[%s0 + $0x40] sm:$0xf]
    %v48 = vld [vmem:[%s0 + $0x44] sm:$0xf]
    %v49 = vld [vmem:[%s0 + $0x48] sm:$0xf]
    %v50 = vld [vmem:[%s0 + $0x4c] sm:$0xf]
    %v51 = vld [vmem:[%s0 + $0x50] sm:$0xf]
    %v52 = vld [vmem:[%s0 + $0x54] sm:$0xf]
    %v53 = vld [vmem:[%s0 + $0x58] sm:$0xf]
    %v54 = vld [vmem:[%s0 + $0x5c] sm:$0xf]
    %v55 = vld [vmem:[%s0 + $0x60] sm:$0xf]
    %v56 = vld [vmem:[%s0 + $0x64] sm:$0xf]
    %v57 = vld [vmem:[%s0 + $0x68] sm:$0xf]
    %v58 = vld [vmem:[%s0 + $0x6c] sm:$0xf]
    %v59 = vld [vmem:[%s0 + $0x70] sm:$0xf]
    %v60 = vld [vmem:[%s0 + $0x74] sm:$0xf]
    %v61 = vld [vmem:[%s0 + $0x78] sm:$0xf]
    %v62 = vld [vmem:[%s0 + $0x7c] sm:$0xf]
    %v63 = vld [vmem:[%s0 + $0x80] sm:$0xf]
    %v64 = vld [vmem:[%s0 + $0x84] sm:$0xf]
    %v65 = vld [vmem:[%s0 + $0x88] sm:$0xf]
    %v66 = vld [vmem:[%s0 + $0x8c] sm:$0xf]
    %v67 = vld [vmem:[%s0 + $0x90] sm:$0xf]
    %v68 = vld [vmem:[%s0 + $0x94] sm:$0xf]
    %v69 = vld [vmem:[%s0 + $0x98] sm:$0xf]
    %v70 = vld [vmem:[%s0 + $0x9c] sm:$0xf]
    %v71 = vld [vmem:[%s0 + $0xa0] sm:$0xf]
    %v72 = vld [vmem:[%s0 + $0xa4] sm:$0xf]
    %v73 = vld [vmem:[%s0 + $0xa8] sm:$0xf]
    %v74 = vld [vmem:[%s0 + $0xac] sm:$0xf]
    %v75 = vld [vmem:[%s0 + $0xb0] sm:$0xf]
    %v76 = vld [vmem:[%s0 + $0xb4] sm:$0xf]
    %v77 = vld [vmem:[%s0 + $0xb8] sm:$0xf]
    %v78 = vld [vmem:[%s0 + $0xbc] sm:$0xf]
    %v79 = vld [vmem:[%s0 + $0xc0] sm:$0xf]
    %v80 = vld [vmem:[%s0 + $0xc4] sm:$0xf]
    %v81 = vld [vmem:[%s0 + $0xc8] sm:$0xf]
    %v82 = vld [vmem:[%s0 + $0xcc] sm:$0xf]
    %v83 = vld [vmem:[%s0 + $0xd0] sm:$0xf]
    %v84 = vld [vmem:[%s0 + $0xd4] sm:$0xf]
    %v85 = vld [vmem:[%s0 + $0xd8] sm:$0xf]
    %v86 = vld [vmem:[%s0 + $0xdc] sm:$0xf]
    %v87 = vld [vmem:[%s0 + $0xe0] sm:$0xf]
    %v88 = vld [vmem:[%s0 + $0xe4] sm:$0xf]
    %v89 = vld [vmem:[%s0 + $0xe8] sm:$0xf]
    %v90 = vld [vmem:[%s0 + $0xec] sm:$0xf]
    %v91 = vld [vmem:[%s0 + $0xf0] sm:$0xf]
    %v92 = vld [vmem:[%s0 + $0xf4] sm:$0xf]
    %v93 = vld [vmem:[%s0 + $0xf8] sm:$0xf]
    %v94 = vld [vmem:[%s0 + $0xfc] sm:$0xf]
    %v95 = vld [vmem:[%s0 + $0x100] sm:$0xf]
    %v96 = vld [vmem:[%s0 + $0x104] sm:$0xf]
    %v97 = vld [vmem:[%s0 + $0x108] sm:$0xf]
    %v98 = vld [vmem:[%s0 + $0x10c] sm:$0xf]
    %v99 = vld [vmem:[%s0 + $0x110] sm:$0xf]
    %v100 = vld [vmem:[%s0 + $0x114] sm:$0xf]
    %v101 = vld [vmem:[%s0 + $0x118] sm:$0xf]
    %v102 = vld [vmem:[%s0 + $0x11c] sm:$0xf]
    %v103 = vld [vmem:[%s0 + $0x120] sm:$0xf]
    %v104 = vld [vmem:[%s0 + $0x124] sm:$0xf]
    %v105 = vld [vmem:[%s0 + $0x128] sm:$0xf]
    %v106 = vld [vmem:[%s0 + $0x12c] sm:$0xf]
    %v107 = vld [vmem:[%s0 + $0x130] sm:$0xf]
    %v108 = vld [vmem:[%s0 + $0x134] sm:$0xf]
    %v109 = vld [vmem:[%s0 + $0x138] sm:$0xf]
    %v110 = vld [vmem:[%s0 + $0x13c] sm:$0xf]
    %v111 = vld [vmem:[%s0 + $0x140] sm:$0xf]
    %v112 = vld [vmem:[%s0 + $0x144] sm:$0xf]
    %v113 = vld [vmem:[%s0 + $0x148] sm:$0xf]
    %v114 = vld [vmem:[%s0 + $0x14c] sm:$0xf]
    %v115 = vld [vmem:[%s0 + $0x150] sm:$0xf]
    %v116 = vld [vmem:[%s0 + $0x154] sm:$0xf]
    %v117 = vld [vmem:[%s0 + $0x158] sm:$0xf]
    %v118 = vld [vmem:[%s0 + $0x15c] sm:$0xf]
    %v119 = vld [vmem:[%s0 + $0x160] sm:$0xf]
    %v120 = vld [vmem:[%s0 + $0x164] sm:$0xf]
    %v121 = vld [vmem:[%s0 + $0x168] sm:$0xf]
    %v122 = vld [vmem:[%s0 + $0x16c] sm:$0xf]
    %v123 = vld [vmem:[%s0 + $0x170] sm:$0xf]
    %v124 = vld [vmem:[%s0 + $0x174] sm:$0xf]
    %v125 = vld [vmem:[%s0 + $0x178] sm:$0xf]
    %v126 = vld [vmem:[%s0 + $0x17c] sm:$0xf]
    %v127 = vld [vmem:[%s0 + $0x180] sm:$0xf]
    %v128 = vld [vmem:[%s0 + $0x184] sm:$0xf]
    %v129 = vld [vmem:[%s0 + $0x188] sm:$0xf]
    %v130 = vld [vmem:[%s0 + $0x18c] sm:$0xf]
    %v131 = vld [vmem:[%s0 + $0x190] sm:$0xf]
    %v132 = vld [vmem:[%s0 + $0x194] sm:$0xf]
    %v133 = vld [vmem:[%s0 + $0x198] sm:$0xf]
    %v134 = vld [vmem:[%s0 + $0x19c] sm:$0xf]
    %v135 = vld [vmem:[%s0 + $0x1a0] sm:$0xf]
    %v136 = vld [vmem:[%s0 + $0x1a4] sm:$0xf]
    %v137 = vld [vmem:[%s0 + $0x1a8] sm:$0xf]
    %v138 = vld [vmem:[%s0 + $0x1ac] sm:$0xf]
    %v139 = vld [vmem:[%s0 + $0x1b0] sm:$0xf]
    %v140 = vld [vmem:[%s0 + $0x1b4] sm:$0xf]
    %v141 = vld [vmem:[%s0 + $0x1b8] sm:$0xf]
    %v142 = vld [vmem:[%s0 + $0x1bc] sm:$0xf]
    %v143 = vld [vmem:[%s0 + $0x1c0] sm:$0xf]
    %v144 = vld [vmem:[%s0 + $0x1c4] sm:$0xf]
    %v145 = vld [vmem:[%s0 + $0x1c8] sm:$0xf]
    %v146 = vld [vmem:[%s0 + $0x1cc] sm:$0xf]
    %v147 = vld [vmem:[%s0 + $0x1d0] sm:$0xf]
    %v148 = vld [vmem:[%s0 + $0x1d4] sm:$0xf]
    %v149 = vld [vmem:[%s0 + $0x1d8] sm:$0xf]
    %v150 = vld [vmem:[%s0 + $0x1dc] sm:$0xf]
    %v151 = vld [vmem:[%s0 + $0x1e0] sm:$0xf]
    %v152 = vld [vmem:[%s0 + $0x1e4] sm:$0xf]
    %v153 = vld [vmem:[%s0 + $0x1e8] sm:$0xf]
    %v154 = vld [vmem:[%s0 + $0x1ec] sm:$0xf]
    %v155 = vld [vmem:[%s0 + $0x1f0] sm:$0xf]
    %v156 = vld [vmem:[%s0 + $0x1f4] sm:$0xf]
    %v157 = vld [vmem:[%s0 + $0x1f8] sm:$0xf]
    %v158 = vld [vmem:[%s0 + $0x1fc] sm:$0xf]
    %v159 = vld [vmem:[%s0 + $0x200] sm:$0xf]
    %v160 = vld [vmem:[%s0 + $0x204] sm:$0xf]
    %v161 = vld [vmem:[%s0 + $0x208] sm:$0xf]
    %v162 = vld [vmem:[%s0 + $0x20c] sm:$0xf]
    %v163 = vld [vmem:[%s0 + $0x210] sm:$0xf]
    %v164 = vld [vmem:[%s0 + $0x214] sm:$0xf]
    %v165 = vld [vmem:[%s0 + $0x218] sm:$0xf]
    %v166 = vld [vmem:[%s0 + $0x21c] sm:$0xf]
    %v167 = vld [vmem:[%s0 + $0x220] sm:$0xf]
    %v168 = vld [vmem:[%s0 + $0x224] sm:$0xf]
    %v169 = vld [vmem:[%s0 + $0x228] sm:$0xf]
    %v170 = vld [vmem:[%s0 + $0x22c] sm:$0xf]
    %v171 = vld [vmem:[%s0 + $0x230] sm:$0xf]
    %v172 = vld [vmem:[%s0 + $0x234] sm:$0xf]
    %v173 = vld [vmem:[%s0 + $0x238] sm:$0xf]
    %v174 = vld [vmem:[%s0 + $0x23c] sm:$0xf]
    %v175 = vld [vmem:[%s0 + $0x240] sm:$0xf]
    %v176 = vld [vmem:[%s0 + $0x244] sm:$0xf]
    %v177 = vld [vmem:[%s0 + $0x248] sm:$0xf]
    %v178 = vld [vmem:[%s0 + $0x24c] sm:$0xf]
    %v179 = vld [vmem:[%s0 + $0x250] sm:$0xf]
    %v180 = vld [vmem:[%s0 + $0x254] sm:$0xf]
    %v181 = vld [vmem:[%s0 + $0x258] sm:$0xf]
    %v182 = vld [vmem:[%s0 + $0x25c] sm:$0xf]
    %v183 = vld [vmem:[%s0 + $0x260] sm:$0xf]
    %v184 = vld [vmem:[%s0 + $0x264] sm:$0xf]
    %v185 = vld [vmem:[%s0 + $0x268] sm:$0xf]
    %v186 = vld [vmem:[%s0 + $0x26c] sm:$0xf]
    %v187 = vld [vmem:[%s0 + $0x270] sm:$0xf]
    %v188 = vld [vmem:[%s0 + $0x274] sm:$0xf]
    %v189 = vld [vmem:[%s0 + $0x278] sm:$0xf]
    %v190 = vld [vmem:[%s0 + $0x27c] sm:$0xf]
    %v191 = vld [vmem:[%s0 + $0x280] sm:$0xf]
    %v192 = vld [vmem:[%s0 + $0x284] sm:$0xf]
    %v193 = vld [vmem:[%s0 + $0x288] sm:$0xf]
    %v194 = vld [vmem:[%s0 + $0x28c] sm:$0xf]
    %v195 = vld [vmem:[%s0 + $0x290] sm:$0xf]
    %v196 = vld [vmem:[%s0 + $0x294] sm:$0xf]
    %v197 = vld [vmem:[%s0 + $0x298] sm:$0xf]
    %v198 = vld [vmem:[%s0 + $0x29c] sm:$0xf]
    %v199 = vld [vmem:[%s0 + $0x2a0] sm:$0xf]
    %v200 = vld [vmem:[%s0 + $0x2a4] sm:$0xf]
    %v201 = vld [vmem:[%s0 + $0x2a8] sm:$0xf]
    %v202 = vld [vmem:[%s0 + $0x2ac] sm:$0xf]
    %v203 = vld [vmem:[%s0 + $0x2b0] sm:$0xf]
    %v204 = vld [vmem:[%s0 + $0x2b4] sm:$0xf]
    %v205 = vld [vmem:[%s0 + $0x2b8] sm:$0xf]
    %v206 = vld [vmem:[%s0 + $0x2bc] sm:$0xf]
    %v207 = vld [vmem:[%s0 + $0x2c0] sm:$0xf]
    %v208 = vld [vmem:[%s0 + $0x2c4] sm:$0xf]
    %v209 = vld [vmem:[%s0 + $0x2c8] sm:$0xf]
    %v210 = vld [vmem:[%s0 + $0x2cc] sm:$0xf]
    %v211 = vld [vmem:[%s0 + $0x2d0] sm:$0xf]
    %v212 = vld [vmem:[%s0 + $0x2d4] sm:$0xf]
    %v213 = vld [vmem:[%s0 + $0x2d8] sm:$0xf]
    %v214 = vld [vmem:[%s0 + $0x2dc] sm:$0xf]
    %v215 = vld [vmem:[%s0 + $0x2e0] sm:$0xf]
    %v216 = vld [vmem:[%s0 + $0x2e4] sm:$0xf]
    %v217 = vld [vmem:[%s0 + $0x2e8] sm:$0xf]
    %v218 = vld [vmem:[%s0 + $0x2ec] sm:$0xf]
    %v219 = vld [vmem:[%s0 + $0x2f0] sm:$0xf]
    %v220 = vld [vmem:[%s0 + $0x2f4] sm:$0xf]
    %v221 = vld [vmem:[%s0 + $0x2f8] sm:$0xf]
    %v222 = vld [vmem:[%s0 + $0x2fc] sm:$0xf]
    %v223 = vld [vmem:[%s0 + $0x300] sm:$0xf]
    %v224 = vld [vmem:[%s0 + $0x304] sm:$0xf]
    %v225 = vld [vmem:[%s0 + $0x308] sm:$0xf]
    %v226 = vld [vmem:[%s0 + $0x30c] sm:$0xf]
    %v227 = vld [vmem:[%s0 + $0x310] sm:$0xf]
    %v228 = vld [vmem:[%s0 + $0x314] sm:$0xf]
    %v229 = vld [vmem:[%s0 + $0x318] sm:$0xf]
    %v230 = vld [vmem:[%s0 + $0x31c] sm:$0xf]
    %v231 = vld [vmem:[%s0 + $0x320] sm:$0xf]
    %v232 = vld [vmem:[%s0 + $0x324] sm:$0xf]
    %v233 = vld [vmem:[%s0 + $0x328] sm:$0xf]
    %v234 = vld [vmem:[%s0 + $0x32c] sm:$0xf]
    %v235 = vld [vmem:[%s0 + $0x330] sm:$0xf]
    %v236 = vld [vmem:[%s0 + $0x334] sm:$0xf]
    %v237 = vld [vmem:[%s0 + $0x338] sm:$0xf]
    %v238 = vld [vmem:[%s0 + $0x33c] sm:$0xf]
    %v239 = vld [vmem:[%s0 + $0x340] sm:$0xf]
    %v240 = vld [vmem:[%s0 + $0x344] sm:$0xf]
    %v241 = vld [vmem:[%s0 + $0x348] sm:$0xf]
    %v242 = vld [vmem:[%s0 + $0x34c] sm:$0xf]
    %v243 = vld [vmem:[%s0 + $0x350] sm:$0xf]
    %v244 = vld [vmem:[%s0 + $0x354] sm:$0xf]
    %v245 = vld [vmem:[%s0 + $0x358] sm:$0xf]
    %v246 = vld [vmem:[%s0 + $0x35c] sm:$0xf]
    %v247 = vld [vmem:[%s0 + $0x360] sm:$0xf]
    %v248 = vld [vmem:[%s0 + $0x364] sm:$0xf]
    %v249 = vld [vmem:[%s0 + $0x368] sm:$0xf]
    %v250 = vld [vmem:[%s0 + $0x36c] sm:$0xf]
    %v251 = vld [vmem:[%s0 + $0x370] sm:$0xf]
    %v252 = vld [vmem:[%s0 + $0x374] sm:$0xf]
    %v253 = vld [vmem:[%s0 + $0x378] sm:$0xf]
    %v254 = vld [vmem:[%s0 + $0x37c] sm:$0xf]
    %v255 = vld [vmem:[%s0 + $0x380] sm:$0xf]
    %v256 = vld [vmem:[%s0 + $0x384] sm:$0xf]
    %v257 = vld [vmem:[%s0 + $0x388] sm:$0xf]
    %v258 = vld [vmem:[%s0 + $0x38c] sm:$0xf]
    %v259 = vld [vmem:[%s0 + $0x390] sm:$0xf]
    %v260 = vld [vmem:[%s0 + $0x394] sm:$0xf]
    %v261 = vld [vmem:[%s0 + $0x398] sm:$0xf]
    %v262 = vld [vmem:[%s0 + $0x39c] sm:$0xf]
    %v263 = vld [vmem:[%s0 + $0x3a0] sm:$0xf]
    %v264 = vld [vmem:[%s0 + $0x3a4] sm:$0xf]
    %v265 = vld [vmem:[%s0 + $0x3a8] sm:$0xf]
    %v266 = vld [vmem:[%s0 + $0x3ac] sm:$0xf]
    %v267 = vld [vmem:[%s0 + $0x3b0] sm:$0xf]
    %v268 = vld [vmem:[%s0 + $0x3b4] sm:$0xf]
    %v269 = vld [vmem:[%s0 + $0x3b8] sm:$0xf]
    %v270 = vld [vmem:[%s0 + $0x3bc] sm:$0xf]
    %v271 = vld [vmem:[%s0 + $0x3c0] sm:$0xf]
    %v272 = vld [vmem:[%s0 + $0x3c4] sm:$0xf]
    %v273 = vld [vmem:[%s0 + $0x3c8] sm:$0xf]
    %v274 = vld [vmem:[%s0 + $0x3cc] sm:$0xf]
    %v275 = vld [vmem:[%s0 + $0x3d0] sm:$0xf]
    %v276 = vld [vmem:[%s0 + $0x3d4] sm:$0xf]
    %v277 = vld [vmem:[%s0 + $0x3d8] sm:$0xf]
    %v278 = vld [vmem:[%s0 + $0x3dc] sm:$0xf]
    %v279 = vld [vmem:[%s0 + $0x3e0] sm:$0xf]
    %v280 = vld [vmem:[%s0 + $0x3e4] sm:$0xf]
    %v281 = vld [vmem:[%s0 + $0x3e8] sm:$0xf]
    %v282 = vld [vmem:[%s0 + $0x3ec] sm:$0xf]
    %v283 = vld [vmem:[%s0 + $0x3f0] sm:$0xf]
    %v284 = vld [vmem:[%s0 + $0x3f4] sm:$0xf]
    %v285 = vld [vmem:[%s0 + $0x3f8] sm:$0xf]
    %v286 = vld [vmem:[%s0 + $0x3fc] sm:$0xf]
    %v287 = vld [vmem:[%s1] sm:$0xf]
    %v288 = vld [vmem:[%s1 + $0x4] sm:$0xf]
    %v289 = vld [vmem:[%s1 + $0x8] sm:$0xf]
    %v290 = vld [vmem:[%s1 + $0xc] sm:$0xf]
    %v291 = vld [vmem:[%s1 + $0x10] sm:$0xf]
    %v292 = vld [vmem:[%s1 + $0x14] sm:$0xf]
    %v549 = vunpack.c.l.b16 %v31
    %v550 = vunpack.c.l.b16 %v32
    %v551 = vunpack.c.l.b16 %v33
    %v552 = vunpack.c.l.b16 %v34
    %v553 = vunpack.c.l.b16 %v35
    %v554 = vunpack.c.l.b16 %v36
    %v555 = vunpack.c.l.b16 %v37
    %v556 = vunpack.c.l.b16 %v38
    %v557 = vunpack.c.l.b16 %v39
    %v558 = vunpack.c.l.b16 %v40
    %v559 = vunpack.c.l.b16 %v41
    %v560 = vunpack.c.l.b16 %v42
    %v561 = vunpack.c.l.b16 %v43
    %v562 = vunpack.c.l.b16 %v44
    %v563 = vunpack.c.l.b16 %v45
    %v564 = vunpack.c.l.b16 %v46
    %v565 = vunpack.c.l.b16 %v47
    %v566 = vunpack.c.l.b16 %v48
    %v567 = vunpack.c.l.b16 %v49
    %v568 = vunpack.c.l.b16 %v50
    %v569 = vunpack.c.l.b16 %v51
    %v570 = vunpack.c.l.b16 %v52
    %v571 = vunpack.c.l.b16 %v53
    %v572 = vunpack.c.l.b16 %v54
    %v573 = vunpack.c.l.b16 %v55
    %v574 = vunpack.c.l.b16 %v56
    %v575 = vunpack.c.l.b16 %v57
    %v576 = vunpack.c.l.b16 %v58
    %v577 = vunpack.c.l.b16 %v59
    %v578 = vunpack.c.l.b16 %v60
    %v579 = vunpack.c.l.b16 %v61
    %v580 = vunpack.c.l.b16 %v62
    %v581 = vunpack.c.l.b16 %v63
    %v582 = vunpack.c.l.b16 %v64
    %v583 = vunpack.c.l.b16 %v65
    %v584 = vunpack.c.l.b16 %v66
    %v585 = vunpack.c.l.b16 %v67
    %v586 = vunpack.c.l.b16 %v68
    %v587 = vunpack.c.l.b16 %v69
    %v588 = vunpack.c.l.b16 %v70
    %v589 = vunpack.c.l.b16 %v71
    %v590 = vunpack.c.l.b16 %v72
    %v591 = vunpack.c.l.b16 %v73
    %v592 = vunpack.c.l.b16 %v74
    %v593 = vunpack.c.l.b16 %v75
    %v594 = vunpack.c.l.b16 %v76
    %v595 = vunpack.c.l.b16 %v77
    %v596 = vunpack.c.l.b16 %v78
    %v597 = vunpack.c.l.b16 %v79
    %v598 = vunpack.c.l.b16 %v80
    %v599 = vunpack.c.l.b16 %v81
    %v600 = vunpack.c.l.b16 %v82
    %v601 = vunpack.c.l.b16 %v83
    %v602 = vunpack.c.l.b16 %v84
    %v603 = vunpack.c.l.b16 %v85
    %v604 = vunpack.c.l.b16 %v86
    %v605 = vunpack.c.l.b16 %v87
    %v606 = vunpack.c.l.b16 %v88
    %v607 = vunpack.c.l.b16 %v89
    %v608 = vunpack.c.l.b16 %v90
    %v609 = vunpack.c.l.b16 %v91
    %v610 = vunpack.c.l.b16 %v92
    %v611 = vunpack.c.l.b16 %v93
    %v612 = vunpack.c.l.b16 %v94
    %v613 = vunpack.c.l.b16 %v95
    %v614 = vunpack.c.l.b16 %v96
    %v615 = vunpack.c.l.b16 %v97
    %v616 = vunpack.c.l.b16 %v98
    %v617 = vunpack.c.l.b16 %v99
    %v618 = vunpack.c.l.b16 %v100
    %v619 = vunpack.c.l.b16 %v101
    %v620 = vunpack.c.l.b16 %v102
    %v621 = vunpack.c.l.b16 %v103
    %v622 = vunpack.c.l.b16 %v104
    %v623 = vunpack.c.l.b16 %v105
    %v624 = vunpack.c.l.b16 %v106
    %v625 = vunpack.c.l.b16 %v107
    %v626 = vunpack.c.l.b16 %v108
    %v627 = vunpack.c.l.b16 %v109
    %v628 = vunpack.c.l.b16 %v110
    %v629 = vunpack.c.l.b16 %v111
    %v630 = vunpack.c.l.b16 %v112
    %v631 = vunpack.c.l.b16 %v113
    %v632 = vunpack.c.l.b16 %v114
    %v633 = vunpack.c.l.b16 %v115
    %v634 = vunpack.c.l.b16 %v116
    %v635 = vunpack.c.l.b16 %v117
    %v636 = vunpack.c.l.b16 %v118
    %v637 = vunpack.c.l.b16 %v119
    %v638 = vunpack.c.l.b16 %v120
    %v639 = vunpack.c.l.b16 %v121
    %v640 = vunpack.c.l.b16 %v122
    %v641 = vunpack.c.l.b16 %v123
    %v642 = vunpack.c.l.b16 %v124
    %v643 = vunpack.c.l.b16 %v125
    %v644 = vunpack.c.l.b16 %v126
    %v645 = vunpack.c.l.b16 %v127
    %v646 = vunpack.c.l.b16 %v128
    %v647 = vunpack.c.l.b16 %v129
    %v648 = vunpack.c.l.b16 %v130
    %v649 = vunpack.c.l.b16 %v131
    %v650 = vunpack.c.l.b16 %v132
    %v651 = vunpack.c.l.b16 %v133
    %v652 = vunpack.c.l.b16 %v134
    %v653 = vunpack.c.l.b16 %v135
    %v654 = vunpack.c.l.b16 %v136
    %v655 = vunpack.c.l.b16 %v137
    %v656 = vunpack.c.l.b16 %v138
    %v657 = vunpack.c.l.b16 %v139
    %v658 = vunpack.c.l.b16 %v140
    %v659 = vunpack.c.l.b16 %v141
    %v660 = vunpack.c.l.b16 %v142
    %v661 = vunpack.c.l.b16 %v143
    %v662 = vunpack.c.l.b16 %v144
    %v663 = vunpack.c.l.b16 %v145
    %v664 = vunpack.c.l.b16 %v146
    %v665 = vunpack.c.l.b16 %v147
    %v666 = vunpack.c.l.b16 %v148
    %v667 = vunpack.c.l.b16 %v149
    %v668 = vunpack.c.l.b16 %v150
    %v669 = vunpack.c.l.b16 %v151
    %v670 = vunpack.c.l.b16 %v152
    %v671 = vunpack.c.l.b16 %v153
    %v672 = vunpack.c.l.b16 %v154
    %v673 = vunpack.c.l.b16 %v155
    %v674 = vunpack.c.l.b16 %v156
    %v675 = vunpack.c.l.b16 %v157
    %v676 = vunpack.c.l.b16 %v158
    %v677 = vunpack.c.l.b16 %v159
    %v678 = vunpack.c.l.b16 %v160
    %v679 = vunpack.c.l.b16 %v161
    %v680 = vunpack.c.l.b16 %v162
    %v681 = vunpack.c.l.b16 %v163
    %v682 = vunpack.c.l.b16 %v164
    %v683 = vunpack.c.l.b16 %v165
    %v684 = vunpack.c.l.b16 %v166
    %v685 = vunpack.c.l.b16 %v167
    %v686 = vunpack.c.l.b16 %v168
    %v687 = vunpack.c.l.b16 %v169
    %v688 = vunpack.c.l.b16 %v170
    %v689 = vunpack.c.l.b16 %v171
    %v690 = vunpack.c.l.b16 %v172
    %v691 = vunpack.c.l.b16 %v173
    %v692 = vunpack.c.l.b16 %v174
    %v693 = vunpack.c.l.b16 %v175
    %v694 = vunpack.c.l.b16 %v176
    %v695 = vunpack.c.l.b16 %v177
    %v696 = vunpack.c.l.b16 %v178
    %v697 = vunpack.c.l.b16 %v179
    %v698 = vunpack.c.l.b16 %v180
    %v699 = vunpack.c.l.b16 %v181
    %v700 = vunpack.c.l.b16 %v182
    %v701 = vunpack.c.l.b16 %v183
    %v702 = vunpack.c.l.b16 %v184
    %v703 = vunpack.c.l.b16 %v185
    %v704 = vunpack.c.l.b16 %v186
    %v705 = vunpack.c.l.b16 %v187
    %v706 = vunpack.c.l.b16 %v188
    %v707 = vunpack.c.l.b16 %v189
    %v708 = vunpack.c.l.b16 %v190
    %v709 = vunpack.c.l.b16 %v191
    %v710 = vunpack.c.l.b16 %v192
    %v711 = vunpack.c.l.b16 %v193
    %v712 = vunpack.c.l.b16 %v194
    %v713 = vunpack.c.l.b16 %v195
    %v714 = vunpack.c.l.b16 %v196
    %v715 = vunpack.c.l.b16 %v197
    %v716 = vunpack.c.l.b16 %v198
    %v717 = vunpack.c.l.b16 %v199
    %v718 = vunpack.c.l.b16 %v200
    %v719 = vunpack.c.l.b16 %v201
    %v720 = vunpack.c.l.b16 %v202
    %v721 = vunpack.c.l.b16 %v203
    %v722 = vunpack.c.l.b16 %v204
    %v723 = vunpack.c.l.b16 %v205
    %v724 = vunpack.c.l.b16 %v206
    %v725 = vunpack.c.l.b16 %v207
    %v726 = vunpack.c.l.b16 %v208
    %v727 = vunpack.c.l.b16 %v209
    %v728 = vunpack.c.l.b16 %v210
    %v729 = vunpack.c.l.b16 %v211
    %v730 = vunpack.c.l.b16 %v212
    %v731 = vunpack.c.l.b16 %v213
    %v732 = vunpack.c.l.b16 %v214
    %v733 = vunpack.c.l.b16 %v215
    %v734 = vunpack.c.l.b16 %v216
    %v735 = vunpack.c.l.b16 %v217
    %v736 = vunpack.c.l.b16 %v218
    %v737 = vunpack.c.l.b16 %v219
    %v738 = vunpack.c.l.b16 %v220
    %v739 = vunpack.c.l.b16 %v221
    %v740 = vunpack.c.l.b16 %v222
    %v741 = vunpack.c.l.b16 %v223
    %v742 = vunpack.c.l.b16 %v224
    %v743 = vunpack.c.l.b16 %v225
    %v744 = vunpack.c.l.b16 %v226
    %v745 = vunpack.c.l.b16 %v227
    %v746 = vunpack.c.l.b16 %v228
    %v747 = vunpack.c.l.b16 %v229
    %v748 = vunpack.c.l.b16 %v230
    %v749 = vunpack.c.l.b16 %v231
    %v750 = vunpack.c.l.b16 %v232
    %v751 = vunpack.c.l.b16 %v233
    %v752 = vunpack.c.l.b16 %v234
    %v753 = vunpack.c.l.b16 %v235
    %v754 = vunpack.c.l.b16 %v236
    %v755 = vunpack.c.l.b16 %v237
    %v756 = vunpack.c.l.b16 %v238
    %v757 = vunpack.c.l.b16 %v239
    %v758 = vunpack.c.l.b16 %v240
    %v759 = vunpack.c.l.b16 %v241
    %v760 = vunpack.c.l.b16 %v242
    %v761 = vunpack.c.l.b16 %v243
    %v762 = vunpack.c.l.b16 %v244
    %v763 = vunpack.c.l.b16 %v245
    %v764 = vunpack.c.l.b16 %v246
    %v765 = vunpack.c.l.b16 %v247
    %v766 = vunpack.c.l.b16 %v248
    %v767 = vunpack.c.l.b16 %v249
    %v768 = vunpack.c.l.b16 %v250
    %v769 = vunpack.c.l.b16 %v251
    %v770 = vunpack.c.l.b16 %v252
    %v771 = vunpack.c.l.b16 %v253
    %v772 = vunpack.c.l.b16 %v254
    %v773 = vunpack.c.l.b16 %v255
    %v774 = vunpack.c.l.b16 %v256
    %v775 = vunpack.c.l.b16 %v257
    %v776 = vunpack.c.l.b16 %v258
    %v777 = vunpack.c.l.b16 %v259
    %v778 = vunpack.c.l.b16 %v260
    %v779 = vunpack.c.l.b16 %v261
    %v780 = vunpack.c.l.b16 %v262
    %v781 = vunpack.c.l.b16 %v263
    %v782 = vunpack.c.l.b16 %v264
    %v783 = vunpack.c.l.b16 %v265
    %v784 = vunpack.c.l.b16 %v266
    %v785 = vunpack.c.l.b16 %v267
    %v786 = vunpack.c.l.b16 %v268
    %v787 = vunpack.c.l.b16 %v269
    %v788 = vunpack.c.l.b16 %v270
    %v789 = vunpack.c.l.b16 %v271
    %v790 = vunpack.c.l.b16 %v272
    %v791 = vunpack.c.l.b16 %v273
    %v792 = vunpack.c.l.b16 %v274
    %v793 = vunpack.c.l.b16 %v275
    %v794 = vunpack.c.l.b16 %v276
    %v795 = vunpack.c.l.b16 %v277
    %v796 = vunpack.c.l.b16 %v278
    %v797 = vunpack.c.l.b16 %v279
    %v798 = vunpack.c.l.b16 %v280
    %v799 = vunpack.c.l.b16 %v281
    %v800 = vunpack.c.l.b16 %v282
    %v801 = vunpack.c.l.b16 %v283
    %v802 = vunpack.c.l.b16 %v284
    %v803 = vunpack.c.l.b16 %v285
    %v804 = vunpack.c.l.b16 %v286
    %v805 = vpack.c.b16 %v550, %v549
    %v806 = vpack.c.b16 %v552, %v551
    %v807 = vpack.c.b16 %v554, %v553
    %v808 = vpack.c.b16 %v556, %v555
    %v809 = vpack.c.b16 %v558, %v557
    %v810 = vpack.c.b16 %v560, %v559
    %v811 = vpack.c.b16 %v562, %v561
    %v812 = vpack.c.b16 %v564, %v563
    %v813 = vpack.c.b16 %v566, %v565
    %v814 = vpack.c.b16 %v568, %v567
    %v815 = vpack.c.b16 %v570, %v569
    %v816 = vpack.c.b16 %v572, %v571
    %v817 = vpack.c.b16 %v574, %v573
    %v818 = vpack.c.b16 %v576, %v575
    %v819 = vpack.c.b16 %v578, %v577
    %v820 = vpack.c.b16 %v580, %v579
    %v821 = vpack.c.b16 %v582, %v581
    %v822 = vpack.c.b16 %v584, %v583
    %v823 = vpack.c.b16 %v586, %v585
    %v824 = vpack.c.b16 %v588, %v587
    %v825 = vpack.c.b16 %v590, %v589
    %v826 = vpack.c.b16 %v592, %v591
    %v827 = vpack.c.b16 %v594, %v593
    %v828 = vpack.c.b16 %v596, %v595
    %v829 = vpack.c.b16 %v598, %v597
    %v830 = vpack.c.b16 %v600, %v599
    %v831 = vpack.c.b16 %v602, %v601
    %v832 = vpack.c.b16 %v604, %v603
    %v833 = vpack.c.b16 %v606, %v605
    %v834 = vpack.c.b16 %v608, %v607
    %v835 = vpack.c.b16 %v610, %v609
    %v836 = vpack.c.b16 %v612, %v611
    %v837 = vpack.c.b16 %v614, %v613
    %v838 = vpack.c.b16 %v616, %v615
    %v839 = vpack.c.b16 %v618, %v617
    %v840 = vpack.c.b16 %v620, %v619
    %v841 = vpack.c.b16 %v622, %v621
    %v842 = vpack.c.b16 %v624, %v623
    %v843 = vpack.c.b16 %v626, %v625
    %v844 = vpack.c.b16 %v628, %v627
    %v845 = vpack.c.b16 %v630, %v629
    %v846 = vpack.c.b16 %v632, %v631
    %v847 = vpack.c.b16 %v634, %v633
    %v848 = vpack.c.b16 %v636, %v635
    %v849 = vpack.c.b16 %v638, %v637
    %v850 = vpack.c.b16 %v640, %v639
    %v851 = vpack.c.b16 %v642, %v641
    %v852 = vpack.c.b16 %v644, %v643
    %v853 = vpack.c.b16 %v646, %v645
    %v854 = vpack.c.b16 %v648, %v647
    %v855 = vpack.c.b16 %v650, %v649
    %v856 = vpack.c.b16 %v652, %v651
    %v857 = vpack.c.b16 %v654, %v653
    %v858 = vpack.c.b16 %v656, %v655
    %v859 = vpack.c.b16 %v658, %v657
    %v860 = vpack.c.b16 %v660, %v659
    %v861 = vpack.c.b16 %v662, %v661
    %v862 = vpack.c.b16 %v664, %v663
    %v863 = vpack.c.b16 %v666, %v665
    %v864 = vpack.c.b16 %v668, %v667
    %v865 = vpack.c.b16 %v670, %v669
    %v866 = vpack.c.b16 %v672, %v671
    %v867 = vpack.c.b16 %v674, %v673
    %v868 = vpack.c.b16 %v676, %v675
    %v869 = vpack.c.b16 %v678, %v677
    %v870 = vpack.c.b16 %v680, %v679
    %v871 = vpack.c.b16 %v682, %v681
    %v872 = vpack.c.b16 %v684, %v683
    %v873 = vpack.c.b16 %v686, %v685
    %v874 = vpack.c.b16 %v688, %v687
    %v875 = vpack.c.b16 %v690, %v689
    %v876 = vpack.c.b16 %v692, %v691
    %v877 = vpack.c.b16 %v694, %v693
    %v878 = vpack.c.b16 %v696, %v695
    %v879 = vpack.c.b16 %v698, %v697
    %v880 = vpack.c.b16 %v700, %v699
    %v881 = vpack.c.b16 %v702, %v701
    %v882 = vpack.c.b16 %v704, %v703
    %v883 = vpack.c.b16 %v706, %v705
    %v884 = vpack.c.b16 %v708, %v707
    %v885 = vpack.c.b16 %v710, %v709
    %v886 = vpack.c.b16 %v712, %v711
    %v887 = vpack.c.b16 %v714, %v713
    %v888 = vpack.c.b16 %v716, %v715
    %v889 = vpack.c.b16 %v718, %v717
    %v890 = vpack.c.b16 %v720, %v719
    %v891 = vpack.c.b16 %v722, %v721
    %v892 = vpack.c.b16 %v724, %v723
    %v893 = vpack.c.b16 %v726, %v725
    %v894 = vpack.c.b16 %v728, %v727
    %v895 = vpack.c.b16 %v730, %v729
    %v896 = vpack.c.b16 %v732, %v731
    %v897 = vpack.c.b16 %v734, %v733
    %v898 = vpack.c.b16 %v736, %v735
    %v899 = vpack.c.b16 %v738, %v737
    %v900 = vpack.c.b16 %v740, %v739
    %v901 = vpack.c.b16 %v742, %v741
    %v902 = vpack.c.b16 %v744, %v743
    %v903 = vpack.c.b16 %v746, %v745
    %v904 = vpack.c.b16 %v748, %v747
    %v905 = vpack.c.b16 %v750, %v749
    %v906 = vpack.c.b16 %v752, %v751
    %v907 = vpack.c.b16 %v754, %v753
    %v908 = vpack.c.b16 %v756, %v755
    %v909 = vpack.c.b16 %v758, %v757
    %v910 = vpack.c.b16 %v760, %v759
    %v911 = vpack.c.b16 %v762, %v761
    %v912 = vpack.c.b16 %v764, %v763
    %v913 = vpack.c.b16 %v766, %v765
    %v914 = vpack.c.b16 %v768, %v767
    %v915 = vpack.c.b16 %v770, %v769
    %v916 = vpack.c.b16 %v772, %v771
    %v917 = vpack.c.b16 %v774, %v773
    %v918 = vpack.c.b16 %v776, %v775
    %v919 = vpack.c.b16 %v778, %v777
    %v920 = vpack.c.b16 %v780, %v779
    %v921 = vpack.c.b16 %v782, %v781
    %v922 = vpack.c.b16 %v784, %v783
    %v923 = vpack.c.b16 %v786, %v785
    %v924 = vpack.c.b16 %v788, %v787
    %v925 = vpack.c.b16 %v790, %v789
    %v926 = vpack.c.b16 %v792, %v791
    %v927 = vpack.c.b16 %v794, %v793
    %v928 = vpack.c.b16 %v796, %v795
    %v929 = vpack.c.b16 %v798, %v797
    %v930 = vpack.c.b16 %v800, %v799
    %v931 = vpack.c.b16 %v802, %v801
    %v932 = vpack.c.b16 %v804, %v803
    %v939 = vunpack.c.l.b16 %v287
    %v940 = vunpack.c.l.b16 %v288
    %v941 = vunpack.c.l.b16 %v289
    %v942 = vunpack.c.l.b16 %v290
    %v943 = vunpack.c.l.b16 %v291
    %v944 = vunpack.c.l.b16 %v292
    %v945 = vpack.c.b16 %v940, %v939
    %v946 = vpack.c.b16 %v942, %v941
    %v947 = vpack.c.b16 %v944, %v943
    %vm951 = vcmask 392192
    %v953 = vsel %vm951, %v805, 0
    %v956 = vsel %vm951, %v806, 0
    %v959 = vsel %vm951, %v807, 0
    %v962 = vsel %vm951, %v808, 0
    %v965 = vsel %vm951, %v809, 0
    %v968 = vsel %vm951, %v810, 0
    %v971 = vsel %vm951, %v811, 0
    %v974 = vsel %vm951, %v812, 0
    %v977 = vsel %vm951, %v813, 0
    %v980 = vsel %vm951, %v814, 0
    %v983 = vsel %vm951, %v815, 0
    %v986 = vsel %vm951, %v816, 0
    %v989 = vsel %vm951, %v817, 0
    %v992 = vsel %vm951, %v818, 0
    %v995 = vsel %vm951, %v819, 0
    %v998 = vsel %vm951, %v820, 0
    %v1001 = vsel %vm951, %v821, 0
    %v1004 = vsel %vm951, %v822, 0
    %v1007 = vsel %vm951, %v823, 0
    %v1010 = vsel %vm951, %v824, 0
    %v1013 = vsel %vm951, %v825, 0
    %v1016 = vsel %vm951, %v826, 0
    %v1019 = vsel %vm951, %v827, 0
    %v1022 = vsel %vm951, %v828, 0
    %v1025 = vsel %vm951, %v829, 0
    %v1028 = vsel %vm951, %v830, 0
    %v1031 = vsel %vm951, %v831, 0
    %v1034 = vsel %vm951, %v832, 0
    %v1037 = vsel %vm951, %v833, 0
    %v1040 = vsel %vm951, %v834, 0
    %v1043 = vsel %vm951, %v835, 0
    %v1046 = vsel %vm951, %v836, 0
    %v1049 = vsel %vm951, %v837, 0
    %v1052 = vsel %vm951, %v838, 0
    %v1055 = vsel %vm951, %v839, 0
    %v1058 = vsel %vm951, %v840, 0
    %v1061 = vsel %vm951, %v841, 0
    %v1064 = vsel %vm951, %v842, 0
    %v1067 = vsel %vm951, %v843, 0
    %v1070 = vsel %vm951, %v844, 0
    %v1073 = vsel %vm951, %v845, 0
    %v1076 = vsel %vm951, %v846, 0
    %v1079 = vsel %vm951, %v847, 0
    %v1082 = vsel %vm951, %v848, 0
    %v1085 = vsel %vm951, %v849, 0
    %v1088 = vsel %vm951, %v850, 0
    %v1091 = vsel %vm951, %v851, 0
    %v1094 = vsel %vm951, %v852, 0
    %v1097 = vsel %vm951, %v853, 0
    %v1100 = vsel %vm951, %v854, 0
    %v1103 = vsel %vm951, %v855, 0
    %v1106 = vsel %vm951, %v856, 0
    %v1109 = vsel %vm951, %v857, 0
    %v1112 = vsel %vm951, %v858, 0
    %v1115 = vsel %vm951, %v859, 0
    %v1118 = vsel %vm951, %v860, 0
    %v1121 = vsel %vm951, %v861, 0
    %v1124 = vsel %vm951, %v862, 0
    %v1127 = vsel %vm951, %v863, 0
    %v1130 = vsel %vm951, %v864, 0
    %v1133 = vsel %vm951, %v865, 0
    %v1136 = vsel %vm951, %v866, 0
    %v1139 = vsel %vm951, %v867, 0
    %v1142 = vsel %vm951, %v868, 0
    %v1145 = vsel %vm951, %v869, 0
    %v1148 = vsel %vm951, %v870, 0
    %v1151 = vsel %vm951, %v871, 0
    %v1154 = vsel %vm951, %v872, 0
    %v1157 = vsel %vm951, %v873, 0
    %v1160 = vsel %vm951, %v874, 0
    %v1163 = vsel %vm951, %v875, 0
    %v1166 = vsel %vm951, %v876, 0
    %v1169 = vsel %vm951, %v877, 0
    %v1172 = vsel %vm951, %v878, 0
    %v1175 = vsel %vm951, %v879, 0
    %v1178 = vsel %vm951, %v880, 0
    %v1181 = vsel %vm951, %v881, 0
    %v1184 = vsel %vm951, %v882, 0
    %v1187 = vsel %vm951, %v883, 0
    %v1190 = vsel %vm951, %v884, 0
    %v1193 = vsel %vm951, %v885, 0
    %v1196 = vsel %vm951, %v886, 0
    %v1199 = vsel %vm951, %v887, 0
    %v1202 = vsel %vm951, %v888, 0
    %v1205 = vsel %vm951, %v889, 0
    %v1208 = vsel %vm951, %v890, 0
    %v1211 = vsel %vm951, %v891, 0
    %v1214 = vsel %vm951, %v892, 0
    %v1217 = vsel %vm951, %v893, 0
    %v1220 = vsel %vm951, %v894, 0
    %v1223 = vsel %vm951, %v895, 0
    %v1226 = vsel %vm951, %v896, 0
    %v1229 = vsel %vm951, %v897, 0
    %v1232 = vsel %vm951, %v898, 0
    %v1235 = vsel %vm951, %v899, 0
    %v1238 = vsel %vm951, %v900, 0
    %v1241 = vsel %vm951, %v901, 0
    %v1244 = vsel %vm951, %v902, 0
    %v1247 = vsel %vm951, %v903, 0
    %v1250 = vsel %vm951, %v904, 0
    %v1253 = vsel %vm951, %v905, 0
    %v1256 = vsel %vm951, %v906, 0
    %v1259 = vsel %vm951, %v907, 0
    %v1262 = vsel %vm951, %v908, 0
    %v1265 = vsel %vm951, %v909, 0
    %v1268 = vsel %vm951, %v910, 0
    %v1271 = vsel %vm951, %v911, 0
    %v1274 = vsel %vm951, %v912, 0
    %v1277 = vsel %vm951, %v913, 0
    %v1280 = vsel %vm951, %v914, 0
    %v1283 = vsel %vm951, %v915, 0
    %v1286 = vsel %vm951, %v916, 0
    %v1289 = vsel %vm951, %v917, 0
    %v1292 = vsel %vm951, %v918, 0
    %v1295 = vsel %vm951, %v919, 0
    %v1298 = vsel %vm951, %v920, 0
    %v1301 = vsel %vm951, %v921, 0
    %v1304 = vsel %vm951, %v922, 0
    %v1307 = vsel %vm951, %v923, 0
    %v1310 = vsel %vm951, %v924, 0
    %v1313 = vsel %vm951, %v925, 0
    %v1316 = vsel %vm951, %v926, 0
    %v1319 = vsel %vm951, %v927, 0
    %v1322 = vsel %vm951, %v928, 0
    %v1325 = vsel %vm951, %v929, 0
    %v1328 = vsel %vm951, %v930, 0
    %v1331 = vsel %vm951, %v931, 0
    %v1334 = vsel %vm951, %v932, 0
    %1336 = vmatprep.subr.bf16.mxu0 0
    %1337 = vmatpush1.bf16.msra.mxu0 %v945
    %1338 = vmatprep.subr.bf16.mxu0 0
    %1339 = vmatpush1.bf16.msra.mxu0 %v946
    %1340 = vmatprep.subr.bf16.mxu0 0
    %1341 = vmatpush1.bf16.msra.mxu0 %v947
    %1342 = vmatprep.subr.bf16.mxu0 0
    %1343 = vmatpush1.bf16.msra.mxu0 0
    %1344 = vmatprep.subr.bf16.mxu0 0
    %1345 = vmatpush1.bf16.msra.mxu0 0
    %1346 = vmatprep.subr.bf16.mxu0 0
    %1347 = vmatpush1.bf16.msra.mxu0 0
    %1348 = vmatprep.subr.bf16.mxu0 0
    %1349 = vmatpush1.bf16.msra.mxu0 0
    %1350 = vmatprep.subr.bf16.mxu0 0
    %1351 = vmatpush1.bf16.msra.mxu0 0
    %1352 = vmatprep.subr.bf16.mxu0 0
    %1353 = vmatpush1.bf16.msra.mxu0 0
    %1354 = vmatprep.subr.bf16.mxu0 0
    %1355 = vmatpush1.bf16.msra.mxu0 0
    %1356 = vmatprep.subr.bf16.mxu0 0
    %1357 = vmatpush1.bf16.msra.mxu0 0
    %1358 = vmatprep.subr.bf16.mxu0 0
    %1359 = vmatpush1.bf16.msra.mxu0 0
    %1360 = vmatprep.subr.bf16.mxu0 0
    %1361 = vmatpush1.bf16.msra.mxu0 0
    %1362 = vmatprep.subr.bf16.mxu0 0
    %1363 = vmatpush1.bf16.msra.mxu0 0
    %1364 = vmatprep.subr.bf16.mxu0 0
    %1365 = vmatpush1.bf16.msra.mxu0 0
    %1366 = vmatprep.subr.bf16.mxu0 0
    %1367 = vmatpush1.bf16.msra.mxu0 0
    %1368 = vmatprep.mubr.bf16.mxu0 0
    %1369 = vmatmul.mubr.bf16.gmra.mrb[0].mxu0 %v953
    %v1370 = vpop.f32.mrb[0].mxu0
    %v1371 = vadd.f32 0.0, %v1370
    %v1372 = vpop.f32.mrb[0].mxu0
    %v1373 = vpop.f32.mrb[0].mxu0
    %v1374 = vadd.f32 0.0, %v1373
    %v1375 = vpop.f32.mrb[0].mxu0
    %1376 = vmatprep.mubr.bf16.mxu0 0
    %1377 = vmatmul.mubr.bf16.gmra.mrb[0].mxu0 %v956
    %v1378 = vpop.f32.mrb[0].mxu0
    %v1379 = vadd.f32 0.0, %v1378
    %v1380 = vpop.f32.mrb[0].mxu0
    %v1381 = vpop.f32.mrb[0].mxu0
    %v1382 = vadd.f32 0.0, %v1381
    %v1383 = vpop.f32.mrb[0].mxu0
    %1384 = vmatprep.mubr.bf16.mxu0 0
    %1385 = vmatmul.mubr.bf16.gmra.mrb[0].mxu0 %v959
    %v1386 = vpop.f32.mrb[0].mxu0
    %v1387 = vadd.f32 0.0, %v1386
    %v1388 = vpop.f32.mrb[0].mxu0
    %v1389 = vpop.f32.mrb[0].mxu0
    %v1390 = vadd.f32 0.0, %v1389
    %v1391 = vpop.f32.mrb[0].mxu0
    %1392 = vmatprep.mubr.bf16.mxu0 0
    %1393 = vmatmul.mubr.bf16.gmra.mrb[0].mxu0 %v962
    %v1394 = vpop.f32.mrb[0].mxu0
    %v1395 = vadd.f32 0.0, %v1394
    %v1396 = vpop.f32.mrb[0].mxu0
    %v1397 = vpop.f32.mrb[0].mxu0
    %v1398 = vadd.f32 0.0, %v1397
    %v1399 = vpop.f32.mrb[0].mxu0
    %1400 = vmatprep.mubr.bf16.mxu0 0
    %1401 = vmatmul.mubr.bf16.gmra.mrb[0].mxu0 %v965
    %v1402 = vpop.f32.mrb[0].mxu0
    %v1403 = vadd.f32 0.0, %v1402
    %v1404 = vpop.f32.mrb[0].mxu0
    %v1405 = vpop.f32.mrb[0].mxu0
    %v1406 = vadd.f32 0.0, %v1405
    %v1407 = vpop.f32.mrb[0].mxu0
    %1408 = vmatprep.mubr.bf16.mxu0 0
    %1409 = vmatmul.mubr.bf16.gmra.mrb[0].mxu0 %v968
    %v1410 = vpop.f32.mrb[0].mxu0
    %v1411 = vadd.f32 0.0, %v1410
    %v1412 = vpop.f32.mrb[0].mxu0
    %v1413 = vpop.f32.mrb[0].mxu0
    %v1414 = vadd.f32 0.0, %v1413
    %v1415 = vpop.f32.mrb[0].mxu0
    %1416 = vmatprep.mubr.bf16.mxu0 0
    %1417 = vmatmul.mubr.bf16.gmra.mrb[0].mxu0 %v971
    %v1418 = vpop.f32.mrb[0].mxu0
    %v1419 = vadd.f32 0.0, %v1418
    %v1420 = vpop.f32.mrb[0].mxu0
    %v1421 = vpop.f32.mrb[0].mxu0
    %v1422 = vadd.f32 0.0, %v1421
    %v1423 = vpop.f32.mrb[0].mxu0
    %1424 = vmatprep.mubr.bf16.mxu0 0
    %1425 = vmatmul.mubr.bf16.gmra.mrb[0].mxu0 %v974
    %v1426 = vpop.f32.mrb[0].mxu0
    %v1427 = vadd.f32 0.0, %v1426
    %v1428 = vpop.f32.mrb[0].mxu0
    %v1429 = vpop.f32.mrb[0].mxu0
    %v1430 = vadd.f32 0.0, %v1429
    %v1431 = vpop.f32.mrb[0].mxu0
    %1432 = vmatprep.mubr.bf16.mxu0 0
    %1433 = vmatmul.mubr.bf16.gmra.mrb[0].mxu0 %v977
    %v1434 = vpop.f32.mrb[0].mxu0
    %v1435 = vadd.f32 0.0, %v1434
    %v1436 = vpop.f32.mrb[0].mxu0
    %v1437 = vpop.f32.mrb[0].mxu0
    %v1438 = vadd.f32 0.0, %v1437
    %v1439 = vpop.f32.mrb[0].mxu0
    %1440 = vmatprep.mubr.bf16.mxu0 0
    %1441 = vmatmul.mubr.bf16.gmra.mrb[0].mxu0 %v980
    %v1442 = vpop.f32.mrb[0].mxu0
    %v1443 = vadd.f32 0.0, %v1442
    %v1444 = vpop.f32.mrb[0].mxu0
    %v1445 = vpop.f32.mrb[0].mxu0
    %v1446 = vadd.f32 0.0, %v1445
    %v1447 = vpop.f32.mrb[0].mxu0
    %1448 = vmatprep.mubr.bf16.mxu0 0
    %1449 = vmatmul.mubr.bf16.gmra.mrb[0].mxu0 %v983
    %v1450 = vpop.f32.mrb[0].mxu0
    %v1451 = vadd.f32 0.0, %v1450
    %v1452 = vpop.f32.mrb[0].mxu0
    %v1453 = vpop.f32.mrb[0].mxu0
    %v1454 = vadd.f32 0.0, %v1453
    %v1455 = vpop.f32.mrb[0].mxu0
    %1456 = vmatprep.mubr.bf16.mxu0 0
    %1457 = vmatmul.mubr.bf16.gmra.mrb[0].mxu0 %v986
    %v1458 = vpop.f32.mrb[0].mxu0
    %v1459 = vadd.f32 0.0, %v1458
    %v1460 = vpop.f32.mrb[0].mxu0
    %v1461 = vpop.f32.mrb[0].mxu0
    %v1462 = vadd.f32 0.0, %v1461
    %v1463 = vpop.f32.mrb[0].mxu0
    %1464 = vmatprep.mubr.bf16.mxu0 0
    %1465 = vmatmul.mubr.bf16.gmra.mrb[0].mxu0 %v989
    %v1466 = vpop.f32.mrb[0].mxu0
    %v1467 = vadd.f32 0.0, %v1466
    %v1468 = vpop.f32.mrb[0].mxu0
    %v1469 = vpop.f32.mrb[0].mxu0
    %v1470 = vadd.f32 0.0, %v1469
    %v1471 = vpop.f32.mrb[0].mxu0
    %1472 = vmatprep.mubr.bf16.mxu0 0
    %1473 = vmatmul.mubr.bf16.gmra.mrb[0].mxu0 %v992
    %v1474 = vpop.f32.mrb[0].mxu0
    %v1475 = vadd.f32 0.0, %v1474
    %v1476 = vpop.f32.mrb[0].mxu0
    %v1477 = vpop.f32.mrb[0].mxu0
    %v1478 = vadd.f32 0.0, %v1477
    %v1479 = vpop.f32.mrb[0].mxu0
    %1480 = vmatprep.mubr.bf16.mxu0 0
    %1481 = vmatmul.mubr.bf16.gmra.mrb[0].mxu0 %v995
    %v1482 = vpop.f32.mrb[0].mxu0
    %v1483 = vadd.f32 0.0, %v1482
    %v1484 = vpop.f32.mrb[0].mxu0
    %v1485 = vpop.f32.mrb[0].mxu0
    %v1486 = vadd.f32 0.0, %v1485
    %v1487 = vpop.f32.mrb[0].mxu0
    %1488 = vmatprep.mubr.bf16.mxu0 0
    %1489 = vmatmul.mubr.bf16.gmra.mrb[0].mxu0 %v998
    %v1490 = vpop.f32.mrb[0].mxu0
    %v1491 = vadd.f32 0.0, %v1490
    %v1492 = vpop.f32.mrb[0].mxu0
    %v1493 = vpop.f32.mrb[0].mxu0
    %v1494 = vadd.f32 0.0, %v1493
    %v1495 = vpop.f32.mrb[0].mxu0
    %1496 = vmatprep.mubr.bf16.mxu0 0
    %1497 = vmatmul.mubr.bf16.gmra.mrb[0].mxu0 %v1001
    %v1498 = vpop.f32.mrb[0].mxu0
    %v1499 = vadd.f32 0.0, %v1498
    %v1500 = vpop.f32.mrb[0].mxu0
    %v1501 = vpop.f32.mrb[0].mxu0
    %v1502 = vadd.f32 0.0, %v1501
    %v1503 = vpop.f32.mrb[0].mxu0
    %1504 = vmatprep.mubr.bf16.mxu0 0
    %1505 = vmatmul.mubr.bf16.gmra.mrb[0].mxu0 %v1004
    %v1506 = vpop.f32.mrb[0].mxu0
    %v1507 = vadd.f32 0.0, %v1506
    %v1508 = vpop.f32.mrb[0].mxu0
    %v1509 = vpop.f32.mrb[0].mxu0
    %v1510 = vadd.f32 0.0, %v1509
    %v1511 = vpop.f32.mrb[0].mxu0
    %1512 = vmatprep.mubr.bf16.mxu0 0
    %1513 = vmatmul.mubr.bf16.gmra.mrb[0].mxu0 %v1007
    %v1514 = vpop.f32.mrb[0].mxu0
    %v1515 = vadd.f32 0.0, %v1514
    %v1516 = vpop.f32.mrb[0].mxu0
    %v1517 = vpop.f32.mrb[0].mxu0
    %v1518 = vadd.f32 0.0, %v1517
    %v1519 = vpop.f32.mrb[0].mxu0
    %1520 = vmatprep.mubr.bf16.mxu0 0
    %1521 = vmatmul.mubr.bf16.gmra.mrb[0].mxu0 %v1010
    %v1522 = vpop.f32.mrb[0].mxu0
    %v1523 = vadd.f32 0.0, %v1522
    %v1524 = vpop.f32.mrb[0].mxu0
    %v1525 = vpop.f32.mrb[0].mxu0
    %v1526 = vadd.f32 0.0, %v1525
    %v1527 = vpop.f32.mrb[0].mxu0
    %1528 = vmatprep.mubr.bf16.mxu0 0
    %1529 = vmatmul.mubr.bf16.gmra.mrb[0].mxu0 %v1013
    %v1530 = vpop.f32.mrb[0].mxu0
    %v1531 = vadd.f32 0.0, %v1530
    %v1532 = vpop.f32.mrb[0].mxu0
    %v1533 = vpop.f32.mrb[0].mxu0
    %v1534 = vadd.f32 0.0, %v1533
    %v1535 = vpop.f32.mrb[0].mxu0
    %1536 = vmatprep.mubr.bf16.mxu0 0
    %1537 = vmatmul.mubr.bf16.gmra.mrb[0].mxu0 %v1016
    %v1538 = vpop.f32.mrb[0].mxu0
    %v1539 = vadd.f32 0.0, %v1538
    %v1540 = vpop.f32.mrb[0].mxu0
    %v1541 = vpop.f32.mrb[0].mxu0
    %v1542 = vadd.f32 0.0, %v1541
    %v1543 = vpop.f32.mrb[0].mxu0
    %1544 = vmatprep.mubr.bf16.mxu0 0
    %1545 = vmatmul.mubr.bf16.gmra.mrb[0].mxu0 %v1019
    %v1546 = vpop.f32.mrb[0].mxu0
    %v1547 = vadd.f32 0.0, %v1546
    %v1548 = vpop.f32.mrb[0].mxu0
    %v1549 = vpop.f32.mrb[0].mxu0
    %v1550 = vadd.f32 0.0, %v1549
    %v1551 = vpop.f32.mrb[0].mxu0
    %1552 = vmatprep.mubr.bf16.mxu0 0
    %1553 = vmatmul.mubr.bf16.gmra.mrb[0].mxu0 %v1022
    %v1554 = vpop.f32.mrb[0].mxu0
    %v1555 = vadd.f32 0.0, %v1554
    %v1556 = vpop.f32.mrb[0].mxu0
    %v1557 = vpop.f32.mrb[0].mxu0
    %v1558 = vadd.f32 0.0, %v1557
    %v1559 = vpop.f32.mrb[0].mxu0
    %1560 = vmatprep.mubr.bf16.mxu0 0
    %1561 = vmatmul.mubr.bf16.gmra.mrb[0].mxu0 %v1025
    %v1562 = vpop.f32.mrb[0].mxu0
    %v1563 = vadd.f32 0.0, %v1562
    %v1564 = vpop.f32.mrb[0].mxu0
    %v1565 = vpop.f32.mrb[0].mxu0
    %v1566 = vadd.f32 0.0, %v1565
    %v1567 = vpop.f32.mrb[0].mxu0
    %1568 = vmatprep.mubr.bf16.mxu0 0
    %1569 = vmatmul.mubr.bf16.gmra.mrb[0].mxu0 %v1028
    %v1570 = vpop.f32.mrb[0].mxu0
    %v1571 = vadd.f32 0.0, %v1570
    %v1572 = vpop.f32.mrb[0].mxu0
    %v1573 = vpop.f32.mrb[0].mxu0
    %v1574 = vadd.f32 0.0, %v1573
    %v1575 = vpop.f32.mrb[0].mxu0
    %1576 = vmatprep.mubr.bf16.mxu0 0
    %1577 = vmatmul.mubr.bf16.gmra.mrb[0].mxu0 %v1031
    %v1578 = vpop.f32.mrb[0].mxu0
    %v1579 = vadd.f32 0.0, %v1578
    %v1580 = vpop.f32.mrb[0].mxu0
    %v1581 = vpop.f32.mrb[0].mxu0
    %v1582 = vadd.f32 0.0, %v1581
    %v1583 = vpop.f32.mrb[0].mxu0
    %1584 = vmatprep.mubr.bf16.mxu0 0
    %1585 = vmatmul.mubr.bf16.gmra.mrb[0].mxu0 %v1034
    %v1586 = vpop.f32.mrb[0].mxu0
    %v1587 = vadd.f32 0.0, %v1586
    %v1588 = vpop.f32.mrb[0].mxu0
    %v1589 = vpop.f32.mrb[0].mxu0
    %v1590 = vadd.f32 0.0, %v1589
    %v1591 = vpop.f32.mrb[0].mxu0
    %1592 = vmatprep.mubr.bf16.mxu0 0
    %1593 = vmatmul.mubr.bf16.gmra.mrb[0].mxu0 %v1037
    %v1594 = vpop.f32.mrb[0].mxu0
    %v1595 = vadd.f32 0.0, %v1594
    %v1596 = vpop.f32.mrb[0].mxu0
    %v1597 = vpop.f32.mrb[0].mxu0
    %v1598 = vadd.f32 0.0, %v1597
    %v1599 = vpop.f32.mrb[0].mxu0
    %1600 = vmatprep.mubr.bf16.mxu0 0
    %1601 = vmatmul.mubr.bf16.gmra.mrb[0].mxu0 %v1040
    %v1602 = vpop.f32.mrb[0].mxu0
    %v1603 = vadd.f32 0.0, %v1602
    %v1604 = vpop.f32.mrb[0].mxu0
    %v1605 = vpop.f32.mrb[0].mxu0
    %v1606 = vadd.f32 0.0, %v1605
    %v1607 = vpop.f32.mrb[0].mxu0
    %1608 = vmatprep.mubr.bf16.mxu0 0
    %1609 = vmatmul.mubr.bf16.gmra.mrb[0].mxu0 %v1043
    %v1610 = vpop.f32.mrb[0].mxu0
    %v1611 = vadd.f32 0.0, %v1610
    %v1612 = vpop.f32.mrb[0].mxu0
    %v1613 = vpop.f32.mrb[0].mxu0
    %v1614 = vadd.f32 0.0, %v1613
    %v1615 = vpop.f32.mrb[0].mxu0
    %1616 = vmatprep.mubr.bf16.mxu0 0
    %1617 = vmatmul.mubr.bf16.gmra.mrb[0].mxu0 %v1046
    %v1618 = vpop.f32.mrb[0].mxu0
    %v1619 = vadd.f32 0.0, %v1618
    %v1620 = vpop.f32.mrb[0].mxu0
    %v1621 = vpop.f32.mrb[0].mxu0
    %v1622 = vadd.f32 0.0, %v1621
    %v1623 = vpop.f32.mrb[0].mxu0
    %1624 = vmatprep.mubr.bf16.mxu0 0
    %1625 = vmatmul.mubr.bf16.gmra.mrb[0].mxu0 %v1049
    %v1626 = vpop.f32.mrb[0].mxu0
    %v1627 = vadd.f32 0.0, %v1626
    %v1628 = vpop.f32.mrb[0].mxu0
    %v1629 = vpop.f32.mrb[0].mxu0
    %v1630 = vadd.f32 0.0, %v1629
    %v1631 = vpop.f32.mrb[0].mxu0
    %1632 = vmatprep.mubr.bf16.mxu0 0
    %1633 = vmatmul.mubr.bf16.gmra.mrb[0].mxu0 %v1052
    %v1634 = vpop.f32.mrb[0].mxu0
    %v1635 = vadd.f32 0.0, %v1634
    %v1636 = vpop.f32.mrb[0].mxu0
    %v1637 = vpop.f32.mrb[0].mxu0
    %v1638 = vadd.f32 0.0, %v1637
    %v1639 = vpop.f32.mrb[0].mxu0
    %1640 = vmatprep.mubr.bf16.mxu0 0
    %1641 = vmatmul.mubr.bf16.gmra.mrb[0].mxu0 %v1055
    %v1642 = vpop.f32.mrb[0].mxu0
    %v1643 = vadd.f32 0.0, %v1642
    %v1644 = vpop.f32.mrb[0].mxu0
    %v1645 = vpop.f32.mrb[0].mxu0
    %v1646 = vadd.f32 0.0, %v1645
    %v1647 = vpop.f32.mrb[0].mxu0
    %1648 = vmatprep.mubr.bf16.mxu0 0
    %1649 = vmatmul.mubr.bf16.gmra.mrb[0].mxu0 %v1058
    %v1650 = vpop.f32.mrb[0].mxu0
    %v1651 = vadd.f32 0.0, %v1650
    %v1652 = vpop.f32.mrb[0].mxu0
    %v1653 = vpop.f32.mrb[0].mxu0
    %v1654 = vadd.f32 0.0, %v1653
    %v1655 = vpop.f32.mrb[0].mxu0
    %1656 = vmatprep.mubr.bf16.mxu0 0
    %1657 = vmatmul.mubr.bf16.gmra.mrb[0].mxu0 %v1061
    %v1658 = vpop.f32.mrb[0].mxu0
    %v1659 = vadd.f32 0.0, %v1658
    %v1660 = vpop.f32.mrb[0].mxu0
    %v1661 = vpop.f32.mrb[0].mxu0
    %v1662 = vadd.f32 0.0, %v1661
    %v1663 = vpop.f32.mrb[0].mxu0
    %1664 = vmatprep.mubr.bf16.mxu0 0
    %1665 = vmatmul.mubr.bf16.gmra.mrb[0].mxu0 %v1064
    %v1666 = vpop.f32.mrb[0].mxu0
    %v1667 = vadd.f32 0.0, %v1666
    %v1668 = vpop.f32.mrb[0].mxu0
    %v1669 = vpop.f32.mrb[0].mxu0
    %v1670 = vadd.f32 0.0, %v1669
    %v1671 = vpop.f32.mrb[0].mxu0
    %1672 = vmatprep.mubr.bf16.mxu0 0
    %1673 = vmatmul.mubr.bf16.gmra.mrb[0].mxu0 %v1067
    %v1674 = vpop.f32.mrb[0].mxu0
    %v1675 = vadd.f32 0.0, %v1674
    %v1676 = vpop.f32.mrb[0].mxu0
    %v1677 = vpop.f32.mrb[0].mxu0
    %v1678 = vadd.f32 0.0, %v1677
    %v1679 = vpop.f32.mrb[0].mxu0
    %1680 = vmatprep.mubr.bf16.mxu0 0
    %1681 = vmatmul.mubr.bf16.gmra.mrb[0].mxu0 %v1070
    %v1682 = vpop.f32.mrb[0].mxu0
    %v1683 = vadd.f32 0.0, %v1682
    %v1684 = vpop.f32.mrb[0].mxu0
    %v1685 = vpop.f32.mrb[0].mxu0
    %v1686 = vadd.f32 0.0, %v1685
    %v1687 = vpop.f32.mrb[0].mxu0
    %1688 = vmatprep.mubr.bf16.mxu0 0
    %1689 = vmatmul.mubr.bf16.gmra.mrb[0].mxu0 %v1073
    %v1690 = vpop.f32.mrb[0].mxu0
    %v1691 = vadd.f32 0.0, %v1690
    %v1692 = vpop.f32.mrb[0].mxu0
    %v1693 = vpop.f32.mrb[0].mxu0
    %v1694 = vadd.f32 0.0, %v1693
    %v1695 = vpop.f32.mrb[0].mxu0
    %1696 = vmatprep.mubr.bf16.mxu0 0
    %1697 = vmatmul.mubr.bf16.gmra.mrb[0].mxu0 %v1076
    %v1698 = vpop.f32.mrb[0].mxu0
    %v1699 = vadd.f32 0.0, %v1698
    %v1700 = vpop.f32.mrb[0].mxu0
    %v1701 = vpop.f32.mrb[0].mxu0
    %v1702 = vadd.f32 0.0, %v1701
    %v1703 = vpop.f32.mrb[0].mxu0
    %1704 = vmatprep.mubr.bf16.mxu0 0
    %1705 = vmatmul.mubr.bf16.gmra.mrb[0].mxu0 %v1079
    %v1706 = vpop.f32.mrb[0].mxu0
    %v1707 = vadd.f32 0.0, %v1706
    %v1708 = vpop.f32.mrb[0].mxu0
    %v1709 = vpop.f32.mrb[0].mxu0
    %v1710 = vadd.f32 0.0, %v1709
    %v1711 = vpop.f32.mrb[0].mxu0
    %1712 = vmatprep.mubr.bf16.mxu0 0
    %1713 = vmatmul.mubr.bf16.gmra.mrb[0].mxu0 %v1082
    %v1714 = vpop.f32.mrb[0].mxu0
    %v1715 = vadd.f32 0.0, %v1714
    %v1716 = vpop.f32.mrb[0].mxu0
    %v1717 = vpop.f32.mrb[0].mxu0
    %v1718 = vadd.f32 0.0, %v1717
    %v1719 = vpop.f32.mrb[0].mxu0
    %1720 = vmatprep.mubr.bf16.mxu0 0
    %1721 = vmatmul.mubr.bf16.gmra.mrb[0].mxu0 %v1085
    %v1722 = vpop.f32.mrb[0].mxu0
    %v1723 = vadd.f32 0.0, %v1722
    %v1724 = vpop.f32.mrb[0].mxu0
    %v1725 = vpop.f32.mrb[0].mxu0
    %v1726 = vadd.f32 0.0, %v1725
    %v1727 = vpop.f32.mrb[0].mxu0
    %1728 = vmatprep.mubr.bf16.mxu0 0
    %1729 = vmatmul.mubr.bf16.gmra.mrb[0].mxu0 %v1088
    %v1730 = vpop.f32.mrb[0].mxu0
    %v1731 = vadd.f32 0.0, %v1730
    %v1732 = vpop.f32.mrb[0].mxu0
    %v1733 = vpop.f32.mrb[0].mxu0
    %v1734 = vadd.f32 0.0, %v1733
    %v1735 = vpop.f32.mrb[0].mxu0
    %1736 = vmatprep.mubr.bf16.mxu0 0
    %1737 = vmatmul.mubr.bf16.gmra.mrb[0].mxu0 %v1091
    %v1738 = vpop.f32.mrb[0].mxu0
    %v1739 = vadd.f32 0.0, %v1738
    %v1740 = vpop.f32.mrb[0].mxu0
    %v1741 = vpop.f32.mrb[0].mxu0
    %v1742 = vadd.f32 0.0, %v1741
    %v1743 = vpop.f32.mrb[0].mxu0
    %1744 = vmatprep.mubr.bf16.mxu0 0
    %1745 = vmatmul.mubr.bf16.gmra.mrb[0].mxu0 %v1094
    %v1746 = vpop.f32.mrb[0].mxu0
    %v1747 = vadd.f32 0.0, %v1746
    %v1748 = vpop.f32.mrb[0].mxu0
    %v1749 = vpop.f32.mrb[0].mxu0
    %v1750 = vadd.f32 0.0, %v1749
    %v1751 = vpop.f32.mrb[0].mxu0
    %1752 = vmatprep.mubr.bf16.mxu0 0
    %1753 = vmatmul.mubr.bf16.gmra.mrb[0].mxu0 %v1097
    %v1754 = vpop.f32.mrb[0].mxu0
    %v1755 = vadd.f32 0.0, %v1754
    %v1756 = vpop.f32.mrb[0].mxu0
    %v1757 = vpop.f32.mrb[0].mxu0
    %v1758 = vadd.f32 0.0, %v1757
    %v1759 = vpop.f32.mrb[0].mxu0
    %1760 = vmatprep.mubr.bf16.mxu0 0
    %1761 = vmatmul.mubr.bf16.gmra.mrb[0].mxu0 %v1100
    %v1762 = vpop.f32.mrb[0].mxu0
    %v1763 = vadd.f32 0.0, %v1762
    %v1764 = vpop.f32.mrb[0].mxu0
    %v1765 = vpop.f32.mrb[0].mxu0
    %v1766 = vadd.f32 0.0, %v1765
    %v1767 = vpop.f32.mrb[0].mxu0
    %1768 = vmatprep.mubr.bf16.mxu0 0
    %1769 = vmatmul.mubr.bf16.gmra.mrb[0].mxu0 %v1103
    %v1770 = vpop.f32.mrb[0].mxu0
    %v1771 = vadd.f32 0.0, %v1770
    %v1772 = vpop.f32.mrb[0].mxu0
    %v1773 = vpop.f32.mrb[0].mxu0
    %v1774 = vadd.f32 0.0, %v1773
    %v1775 = vpop.f32.mrb[0].mxu0
    %1776 = vmatprep.mubr.bf16.mxu0 0
    %1777 = vmatmul.mubr.bf16.gmra.mrb[0].mxu0 %v1106
    %v1778 = vpop.f32.mrb[0].mxu0
    %v1779 = vadd.f32 0.0, %v1778
    %v1780 = vpop.f32.mrb[0].mxu0
    %v1781 = vpop.f32.mrb[0].mxu0
    %v1782 = vadd.f32 0.0, %v1781
    %v1783 = vpop.f32.mrb[0].mxu0
    %1784 = vmatprep.mubr.bf16.mxu0 0
    %1785 = vmatmul.mubr.bf16.gmra.mrb[0].mxu0 %v1109
    %v1786 = vpop.f32.mrb[0].mxu0
    %v1787 = vadd.f32 0.0, %v1786
    %v1788 = vpop.f32.mrb[0].mxu0
    %v1789 = vpop.f32.mrb[0].mxu0
    %v1790 = vadd.f32 0.0, %v1789
    %v1791 = vpop.f32.mrb[0].mxu0
    %1792 = vmatprep.mubr.bf16.mxu0 0
    %1793 = vmatmul.mubr.bf16.gmra.mrb[0].mxu0 %v1112
    %v1794 = vpop.f32.mrb[0].mxu0
    %v1795 = vadd.f32 0.0, %v1794
    %v1796 = vpop.f32.mrb[0].mxu0
    %v1797 = vpop.f32.mrb[0].mxu0
    %v1798 = vadd.f32 0.0, %v1797
    %v1799 = vpop.f32.mrb[0].mxu0
    %1800 = vmatprep.mubr.bf16.mxu0 0
    %1801 = vmatmul.mubr.bf16.gmra.mrb[0].mxu0 %v1115
    %v1802 = vpop.f32.mrb[0].mxu0
    %v1803 = vadd.f32 0.0, %v1802
    %v1804 = vpop.f32.mrb[0].mxu0
    %v1805 = vpop.f32.mrb[0].mxu0
    %v1806 = vadd.f32 0.0, %v1805
    %v1807 = vpop.f32.mrb[0].mxu0
    %1808 = vmatprep.mubr.bf16.mxu0 0
    %1809 = vmatmul.mubr.bf16.gmra.mrb[0].mxu0 %v1118
    %v1810 = vpop.f32.mrb[0].mxu0
    %v1811 = vadd.f32 0.0, %v1810
    %v1812 = vpop.f32.mrb[0].mxu0
    %v1813 = vpop.f32.mrb[0].mxu0
    %v1814 = vadd.f32 0.0, %v1813
    %v1815 = vpop.f32.mrb[0].mxu0
    %1816 = vmatprep.mubr.bf16.mxu0 0
    %1817 = vmatmul.mubr.bf16.gmra.mrb[0].mxu0 %v1121
    %v1818 = vpop.f32.mrb[0].mxu0
    %v1819 = vadd.f32 0.0, %v1818
    %v1820 = vpop.f32.mrb[0].mxu0
    %v1821 = vpop.f32.mrb[0].mxu0
    %v1822 = vadd.f32 0.0, %v1821
    %v1823 = vpop.f32.mrb[0].mxu0
    %1824 = vmatprep.mubr.bf16.mxu0 0
    %1825 = vmatmul.mubr.bf16.gmra.mrb[0].mxu0 %v1124
    %v1826 = vpop.f32.mrb[0].mxu0
    %v1827 = vadd.f32 0.0, %v1826
    %v1828 = vpop.f32.mrb[0].mxu0
    %v1829 = vpop.f32.mrb[0].mxu0
    %v1830 = vadd.f32 0.0, %v1829
    %v1831 = vpop.f32.mrb[0].mxu0
    %1832 = vmatprep.mubr.bf16.mxu0 0
    %1833 = vmatmul.mubr.bf16.gmra.mrb[0].mxu0 %v1127
    %v1834 = vpop.f32.mrb[0].mxu0
    %v1835 = vadd.f32 0.0, %v1834
    %v1836 = vpop.f32.mrb[0].mxu0
    %v1837 = vpop.f32.mrb[0].mxu0
    %v1838 = vadd.f32 0.0, %v1837
    %v1839 = vpop.f32.mrb[0].mxu0
    %1840 = vmatprep.mubr.bf16.mxu0 0
    %1841 = vmatmul.mubr.bf16.gmra.mrb[0].mxu0 %v1130
    %v1842 = vpop.f32.mrb[0].mxu0
    %v1843 = vadd.f32 0.0, %v1842
    %v1844 = vpop.f32.mrb[0].mxu0
    %v1845 = vpop.f32.mrb[0].mxu0
    %v1846 = vadd.f32 0.0, %v1845
    %v1847 = vpop.f32.mrb[0].mxu0
    %1848 = vmatprep.mubr.bf16.mxu0 0
    %1849 = vmatmul.mubr.bf16.gmra.mrb[0].mxu0 %v1133
    %v1850 = vpop.f32.mrb[0].mxu0
    %v1851 = vadd.f32 0.0, %v1850
    %v1852 = vpop.f32.mrb[0].mxu0
    %v1853 = vpop.f32.mrb[0].mxu0
    %v1854 = vadd.f32 0.0, %v1853
    %v1855 = vpop.f32.mrb[0].mxu0
    %1856 = vmatprep.mubr.bf16.mxu0 0
    %1857 = vmatmul.mubr.bf16.gmra.mrb[0].mxu0 %v1136
    %v1858 = vpop.f32.mrb[0].mxu0
    %v1859 = vadd.f32 0.0, %v1858
    %v1860 = vpop.f32.mrb[0].mxu0
    %v1861 = vpop.f32.mrb[0].mxu0
    %v1862 = vadd.f32 0.0, %v1861
    %v1863 = vpop.f32.mrb[0].mxu0
    %1864 = vmatprep.mubr.bf16.mxu0 0
    %1865 = vmatmul.mubr.bf16.gmra.mrb[0].mxu0 %v1139
    %v1866 = vpop.f32.mrb[0].mxu0
    %v1867 = vadd.f32 0.0, %v1866
    %v1868 = vpop.f32.mrb[0].mxu0
    %v1869 = vpop.f32.mrb[0].mxu0
    %v1870 = vadd.f32 0.0, %v1869
    %v1871 = vpop.f32.mrb[0].mxu0
    %1872 = vmatprep.mubr.bf16.mxu0 0
    %1873 = vmatmul.mubr.bf16.gmra.mrb[0].mxu0 %v1142
    %v1874 = vpop.f32.mrb[0].mxu0
    %v1875 = vadd.f32 0.0, %v1874
    %v1876 = vpop.f32.mrb[0].mxu0
    %v1877 = vpop.f32.mrb[0].mxu0
    %v1878 = vadd.f32 0.0, %v1877
    %v1879 = vpop.f32.mrb[0].mxu0
    %1880 = vmatprep.mubr.bf16.mxu0 0
    %1881 = vmatmul.mubr.bf16.gmra.mrb[0].mxu0 %v1145
    %v1882 = vpop.f32.mrb[0].mxu0
    %v1883 = vadd.f32 0.0, %v1882
    %v1884 = vpop.f32.mrb[0].mxu0
    %v1885 = vpop.f32.mrb[0].mxu0
    %v1886 = vadd.f32 0.0, %v1885
    %v1887 = vpop.f32.mrb[0].mxu0
    %1888 = vmatprep.mubr.bf16.mxu0 0
    %1889 = vmatmul.mubr.bf16.gmra.mrb[0].mxu0 %v1148
    %v1890 = vpop.f32.mrb[0].mxu0
    %v1891 = vadd.f32 0.0, %v1890
    %v1892 = vpop.f32.mrb[0].mxu0
    %v1893 = vpop.f32.mrb[0].mxu0
    %v1894 = vadd.f32 0.0, %v1893
    %v1895 = vpop.f32.mrb[0].mxu0
    %1896 = vmatprep.mubr.bf16.mxu0 0
    %1897 = vmatmul.mubr.bf16.gmra.mrb[0].mxu0 %v1151
    %v1898 = vpop.f32.mrb[0].mxu0
    %v1899 = vadd.f32 0.0, %v1898
    %v1900 = vpop.f32.mrb[0].mxu0
    %v1901 = vpop.f32.mrb[0].mxu0
    %v1902 = vadd.f32 0.0, %v1901
    %v1903 = vpop.f32.mrb[0].mxu0
    %1904 = vmatprep.mubr.bf16.mxu0 0
    %1905 = vmatmul.mubr.bf16.gmra.mrb[0].mxu0 %v1154
    %v1906 = vpop.f32.mrb[0].mxu0
    %v1907 = vadd.f32 0.0, %v1906
    %v1908 = vpop.f32.mrb[0].mxu0
    %v1909 = vpop.f32.mrb[0].mxu0
    %v1910 = vadd.f32 0.0, %v1909
    %v1911 = vpop.f32.mrb[0].mxu0
    %1912 = vmatprep.mubr.bf16.mxu0 0
    %1913 = vmatmul.mubr.bf16.gmra.mrb[0].mxu0 %v1157
    %v1914 = vpop.f32.mrb[0].mxu0
    %v1915 = vadd.f32 0.0, %v1914
    %v1916 = vpop.f32.mrb[0].mxu0
    %v1917 = vpop.f32.mrb[0].mxu0
    %v1918 = vadd.f32 0.0, %v1917
    %v1919 = vpop.f32.mrb[0].mxu0
    %1920 = vmatprep.mubr.bf16.mxu0 0
    %1921 = vmatmul.mubr.bf16.gmra.mrb[0].mxu0 %v1160
    %v1922 = vpop.f32.mrb[0].mxu0
    %v1923 = vadd.f32 0.0, %v1922
    %v1924 = vpop.f32.mrb[0].mxu0
    %v1925 = vpop.f32.mrb[0].mxu0
    %v1926 = vadd.f32 0.0, %v1925
    %v1927 = vpop.f32.mrb[0].mxu0
    %1928 = vmatprep.mubr.bf16.mxu0 0
    %1929 = vmatmul.mubr.bf16.gmra.mrb[0].mxu0 %v1163
    %v1930 = vpop.f32.mrb[0].mxu0
    %v1931 = vadd.f32 0.0, %v1930
    %v1932 = vpop.f32.mrb[0].mxu0
    %v1933 = vpop.f32.mrb[0].mxu0
    %v1934 = vadd.f32 0.0, %v1933
    %v1935 = vpop.f32.mrb[0].mxu0
    %1936 = vmatprep.mubr.bf16.mxu0 0
    %1937 = vmatmul.mubr.bf16.gmra.mrb[0].mxu0 %v1166
    %v1938 = vpop.f32.mrb[0].mxu0
    %v1939 = vadd.f32 0.0, %v1938
    %v1940 = vpop.f32.mrb[0].mxu0
    %v1941 = vpop.f32.mrb[0].mxu0
    %v1942 = vadd.f32 0.0, %v1941
    %v1943 = vpop.f32.mrb[0].mxu0
    %1944 = vmatprep.mubr.bf16.mxu0 0
    %1945 = vmatmul.mubr.bf16.gmra.mrb[0].mxu0 %v1169
    %v1946 = vpop.f32.mrb[0].mxu0
    %v1947 = vadd.f32 0.0, %v1946
    %v1948 = vpop.f32.mrb[0].mxu0
    %v1949 = vpop.f32.mrb[0].mxu0
    %v1950 = vadd.f32 0.0, %v1949
    %v1951 = vpop.f32.mrb[0].mxu0
    %1952 = vmatprep.mubr.bf16.mxu0 0
    %1953 = vmatmul.mubr.bf16.gmra.mrb[0].mxu0 %v1172
    %v1954 = vpop.f32.mrb[0].mxu0
    %v1955 = vadd.f32 0.0, %v1954
    %v1956 = vpop.f32.mrb[0].mxu0
    %v1957 = vpop.f32.mrb[0].mxu0
    %v1958 = vadd.f32 0.0, %v1957
    %v1959 = vpop.f32.mrb[0].mxu0
    %1960 = vmatprep.mubr.bf16.mxu0 0
    %1961 = vmatmul.mubr.bf16.gmra.mrb[0].mxu0 %v1175
    %v1962 = vpop.f32.mrb[0].mxu0
    %v1963 = vadd.f32 0.0, %v1962
    %v1964 = vpop.f32.mrb[0].mxu0
    %v1965 = vpop.f32.mrb[0].mxu0
    %v1966 = vadd.f32 0.0, %v1965
    %v1967 = vpop.f32.mrb[0].mxu0
    %1968 = vmatprep.mubr.bf16.mxu0 0
    %1969 = vmatmul.mubr.bf16.gmra.mrb[0].mxu0 %v1178
    %v1970 = vpop.f32.mrb[0].mxu0
    %v1971 = vadd.f32 0.0, %v1970
    %v1972 = vpop.f32.mrb[0].mxu0
    %v1973 = vpop.f32.mrb[0].mxu0
    %v1974 = vadd.f32 0.0, %v1973
    %v1975 = vpop.f32.mrb[0].mxu0
    %1976 = vmatprep.mubr.bf16.mxu0 0
    %1977 = vmatmul.mubr.bf16.gmra.mrb[0].mxu0 %v1181
    %v1978 = vpop.f32.mrb[0].mxu0
    %v1979 = vadd.f32 0.0, %v1978
    %v1980 = vpop.f32.mrb[0].mxu0
    %v1981 = vpop.f32.mrb[0].mxu0
    %v1982 = vadd.f32 0.0, %v1981
    %v1983 = vpop.f32.mrb[0].mxu0
    %1984 = vmatprep.mubr.bf16.mxu0 0
    %1985 = vmatmul.mubr.bf16.gmra.mrb[0].mxu0 %v1184
    %v1986 = vpop.f32.mrb[0].mxu0
    %v1987 = vadd.f32 0.0, %v1986
    %v1988 = vpop.f32.mrb[0].mxu0
    %v1989 = vpop.f32.mrb[0].mxu0
    %v1990 = vadd.f32 0.0, %v1989
    %v1991 = vpop.f32.mrb[0].mxu0
    %1992 = vmatprep.mubr.bf16.mxu0 0
    %1993 = vmatmul.mubr.bf16.gmra.mrb[0].mxu0 %v1187
    %v1994 = vpop.f32.mrb[0].mxu0
    %v1995 = vadd.f32 0.0, %v1994
    %v1996 = vpop.f32.mrb[0].mxu0
    %v1997 = vpop.f32.mrb[0].mxu0
    %v1998 = vadd.f32 0.0, %v1997
    %v1999 = vpop.f32.mrb[0].mxu0
    %2000 = vmatprep.mubr.bf16.mxu0 0
    %2001 = vmatmul.mubr.bf16.gmra.mrb[0].mxu0 %v1190
    %v2002 = vpop.f32.mrb[0].mxu0
    %v2003 = vadd.f32 0.0, %v2002
    %v2004 = vpop.f32.mrb[0].mxu0
    %v2005 = vpop.f32.mrb[0].mxu0
    %v2006 = vadd.f32 0.0, %v2005
    %v2007 = vpop.f32.mrb[0].mxu0
    %2008 = vmatprep.mubr.bf16.mxu0 0
    %2009 = vmatmul.mubr.bf16.gmra.mrb[0].mxu0 %v1193
    %v2010 = vpop.f32.mrb[0].mxu0
    %v2011 = vadd.f32 0.0, %v2010
    %v2012 = vpop.f32.mrb[0].mxu0
    %v2013 = vpop.f32.mrb[0].mxu0
    %v2014 = vadd.f32 0.0, %v2013
    %v2015 = vpop.f32.mrb[0].mxu0
    %2016 = vmatprep.mubr.bf16.mxu0 0
    %2017 = vmatmul.mubr.bf16.gmra.mrb[0].mxu0 %v1196
    %v2018 = vpop.f32.mrb[0].mxu0
    %v2019 = vadd.f32 0.0, %v2018
    %v2020 = vpop.f32.mrb[0].mxu0
    %v2021 = vpop.f32.mrb[0].mxu0
    %v2022 = vadd.f32 0.0, %v2021
    %v2023 = vpop.f32.mrb[0].mxu0
    %2024 = vmatprep.mubr.bf16.mxu0 0
    %2025 = vmatmul.mubr.bf16.gmra.mrb[0].mxu0 %v1199
    %v2026 = vpop.f32.mrb[0].mxu0
    %v2027 = vadd.f32 0.0, %v2026
    %v2028 = vpop.f32.mrb[0].mxu0
    %v2029 = vpop.f32.mrb[0].mxu0
    %v2030 = vadd.f32 0.0, %v2029
    %v2031 = vpop.f32.mrb[0].mxu0
    %2032 = vmatprep.mubr.bf16.mxu0 0
    %2033 = vmatmul.mubr.bf16.gmra.mrb[0].mxu0 %v1202
    %v2034 = vpop.f32.mrb[0].mxu0
    %v2035 = vadd.f32 0.0, %v2034
    %v2036 = vpop.f32.mrb[0].mxu0
    %v2037 = vpop.f32.mrb[0].mxu0
    %v2038 = vadd.f32 0.0, %v2037
    %v2039 = vpop.f32.mrb[0].mxu0
    %2040 = vmatprep.mubr.bf16.mxu0 0
    %2041 = vmatmul.mubr.bf16.gmra.mrb[0].mxu0 %v1205
    %v2042 = vpop.f32.mrb[0].mxu0
    %v2043 = vadd.f32 0.0, %v2042
    %v2044 = vpop.f32.mrb[0].mxu0
    %v2045 = vpop.f32.mrb[0].mxu0
    %v2046 = vadd.f32 0.0, %v2045
    %v2047 = vpop.f32.mrb[0].mxu0
    %2048 = vmatprep.mubr.bf16.mxu0 0
    %2049 = vmatmul.mubr.bf16.gmra.mrb[0].mxu0 %v1208
    %v2050 = vpop.f32.mrb[0].mxu0
    %v2051 = vadd.f32 0.0, %v2050
    %v2052 = vpop.f32.mrb[0].mxu0
    %v2053 = vpop.f32.mrb[0].mxu0
    %v2054 = vadd.f32 0.0, %v2053
    %v2055 = vpop.f32.mrb[0].mxu0
    %2056 = vmatprep.mubr.bf16.mxu0 0
    %2057 = vmatmul.mubr.bf16.gmra.mrb[0].mxu0 %v1211
    %v2058 = vpop.f32.mrb[0].mxu0
    %v2059 = vadd.f32 0.0, %v2058
    %v2060 = vpop.f32.mrb[0].mxu0
    %v2061 = vpop.f32.mrb[0].mxu0
    %v2062 = vadd.f32 0.0, %v2061
    %v2063 = vpop.f32.mrb[0].mxu0
    %2064 = vmatprep.mubr.bf16.mxu0 0
    %2065 = vmatmul.mubr.bf16.gmra.mrb[0].mxu0 %v1214
    %v2066 = vpop.f32.mrb[0].mxu0
    %v2067 = vadd.f32 0.0, %v2066
    %v2068 = vpop.f32.mrb[0].mxu0
    %v2069 = vpop.f32.mrb[0].mxu0
    %v2070 = vadd.f32 0.0, %v2069
    %v2071 = vpop.f32.mrb[0].mxu0
    %2072 = vmatprep.mubr.bf16.mxu0 0
    %2073 = vmatmul.mubr.bf16.gmra.mrb[0].mxu0 %v1217
    %v2074 = vpop.f32.mrb[0].mxu0
    %v2075 = vadd.f32 0.0, %v2074
    %v2076 = vpop.f32.mrb[0].mxu0
    %v2077 = vpop.f32.mrb[0].mxu0
    %v2078 = vadd.f32 0.0, %v2077
    %v2079 = vpop.f32.mrb[0].mxu0
    %2080 = vmatprep.mubr.bf16.mxu0 0
    %2081 = vmatmul.mubr.bf16.gmra.mrb[0].mxu0 %v1220
    %v2082 = vpop.f32.mrb[0].mxu0
    %v2083 = vadd.f32 0.0, %v2082
    %v2084 = vpop.f32.mrb[0].mxu0
    %v2085 = vpop.f32.mrb[0].mxu0
    %v2086 = vadd.f32 0.0, %v2085
    %v2087 = vpop.f32.mrb[0].mxu0
    %2088 = vmatprep.mubr.bf16.mxu0 0
    %2089 = vmatmul.mubr.bf16.gmra.mrb[0].mxu0 %v1223
    %v2090 = vpop.f32.mrb[0].mxu0
    %v2091 = vadd.f32 0.0, %v2090
    %v2092 = vpop.f32.mrb[0].mxu0
    %v2093 = vpop.f32.mrb[0].mxu0
    %v2094 = vadd.f32 0.0, %v2093
    %v2095 = vpop.f32.mrb[0].mxu0
    %2096 = vmatprep.mubr.bf16.mxu0 0
    %2097 = vmatmul.mubr.bf16.gmra.mrb[0].mxu0 %v1226
    %v2098 = vpop.f32.mrb[0].mxu0
    %v2099 = vadd.f32 0.0, %v2098
    %v2100 = vpop.f32.mrb[0].mxu0
    %v2101 = vpop.f32.mrb[0].mxu0
    %v2102 = vadd.f32 0.0, %v2101
    %v2103 = vpop.f32.mrb[0].mxu0
    %2104 = vmatprep.mubr.bf16.mxu0 0
    %2105 = vmatmul.mubr.bf16.gmra.mrb[0].mxu0 %v1229
    %v2106 = vpop.f32.mrb[0].mxu0
    %v2107 = vadd.f32 0.0, %v2106
    %v2108 = vpop.f32.mrb[0].mxu0
    %v2109 = vpop.f32.mrb[0].mxu0
    %v2110 = vadd.f32 0.0, %v2109
    %v2111 = vpop.f32.mrb[0].mxu0
    %2112 = vmatprep.mubr.bf16.mxu0 0
    %2113 = vmatmul.mubr.bf16.gmra.mrb[0].mxu0 %v1232
    %v2114 = vpop.f32.mrb[0].mxu0
    %v2115 = vadd.f32 0.0, %v2114
    %v2116 = vpop.f32.mrb[0].mxu0
    %v2117 = vpop.f32.mrb[0].mxu0
    %v2118 = vadd.f32 0.0, %v2117
    %v2119 = vpop.f32.mrb[0].mxu0
    %2120 = vmatprep.mubr.bf16.mxu0 0
    %2121 = vmatmul.mubr.bf16.gmra.mrb[0].mxu0 %v1235
    %v2122 = vpop.f32.mrb[0].mxu0
    %v2123 = vadd.f32 0.0, %v2122
    %v2124 = vpop.f32.mrb[0].mxu0
    %v2125 = vpop.f32.mrb[0].mxu0
    %v2126 = vadd.f32 0.0, %v2125
    %v2127 = vpop.f32.mrb[0].mxu0
    %2128 = vmatprep.mubr.bf16.mxu0 0
    %2129 = vmatmul.mubr.bf16.gmra.mrb[0].mxu0 %v1238
    %v2130 = vpop.f32.mrb[0].mxu0
    %v2131 = vadd.f32 0.0, %v2130
    %v2132 = vpop.f32.mrb[0].mxu0
    %v2133 = vpop.f32.mrb[0].mxu0
    %v2134 = vadd.f32 0.0, %v2133
    %v2135 = vpop.f32.mrb[0].mxu0
    %2136 = vmatprep.mubr.bf16.mxu0 0
    %2137 = vmatmul.mubr.bf16.gmra.mrb[0].mxu0 %v1241
    %v2138 = vpop.f32.mrb[0].mxu0
    %v2139 = vadd.f32 0.0, %v2138
    %v2140 = vpop.f32.mrb[0].mxu0
    %v2141 = vpop.f32.mrb[0].mxu0
    %v2142 = vadd.f32 0.0, %v2141
    %v2143 = vpop.f32.mrb[0].mxu0
    %2144 = vmatprep.mubr.bf16.mxu0 0
    %2145 = vmatmul.mubr.bf16.gmra.mrb[0].mxu0 %v1244
    %v2146 = vpop.f32.mrb[0].mxu0
    %v2147 = vadd.f32 0.0, %v2146
    %v2148 = vpop.f32.mrb[0].mxu0
    %v2149 = vpop.f32.mrb[0].mxu0
    %v2150 = vadd.f32 0.0, %v2149
    %v2151 = vpop.f32.mrb[0].mxu0
    %2152 = vmatprep.mubr.bf16.mxu0 0
    %2153 = vmatmul.mubr.bf16.gmra.mrb[0].mxu0 %v1247
    %v2154 = vpop.f32.mrb[0].mxu0
    %v2155 = vadd.f32 0.0, %v2154
    %v2156 = vpop.f32.mrb[0].mxu0
    %v2157 = vpop.f32.mrb[0].mxu0
    %v2158 = vadd.f32 0.0, %v2157
    %v2159 = vpop.f32.mrb[0].mxu0
    %2160 = vmatprep.mubr.bf16.mxu0 0
    %2161 = vmatmul.mubr.bf16.gmra.mrb[0].mxu0 %v1250
    %v2162 = vpop.f32.mrb[0].mxu0
    %v2163 = vadd.f32 0.0, %v2162
    %v2164 = vpop.f32.mrb[0].mxu0
    %v2165 = vpop.f32.mrb[0].mxu0
    %v2166 = vadd.f32 0.0, %v2165
    %v2167 = vpop.f32.mrb[0].mxu0
    %2168 = vmatprep.mubr.bf16.mxu0 0
    %2169 = vmatmul.mubr.bf16.gmra.mrb[0].mxu0 %v1253
    %v2170 = vpop.f32.mrb[0].mxu0
    %v2171 = vadd.f32 0.0, %v2170
    %v2172 = vpop.f32.mrb[0].mxu0
    %v2173 = vpop.f32.mrb[0].mxu0
    %v2174 = vadd.f32 0.0, %v2173
    %v2175 = vpop.f32.mrb[0].mxu0
    %2176 = vmatprep.mubr.bf16.mxu0 0
    %2177 = vmatmul.mubr.bf16.gmra.mrb[0].mxu0 %v1256
    %v2178 = vpop.f32.mrb[0].mxu0
    %v2179 = vadd.f32 0.0, %v2178
    %v2180 = vpop.f32.mrb[0].mxu0
    %v2181 = vpop.f32.mrb[0].mxu0
    %v2182 = vadd.f32 0.0, %v2181
    %v2183 = vpop.f32.mrb[0].mxu0
    %2184 = vmatprep.mubr.bf16.mxu0 0
    %2185 = vmatmul.mubr.bf16.gmra.mrb[0].mxu0 %v1259
    %v2186 = vpop.f32.mrb[0].mxu0
    %v2187 = vadd.f32 0.0, %v2186
    %v2188 = vpop.f32.mrb[0].mxu0
    %v2189 = vpop.f32.mrb[0].mxu0
    %v2190 = vadd.f32 0.0, %v2189
    %v2191 = vpop.f32.mrb[0].mxu0
    %2192 = vmatprep.mubr.bf16.mxu0 0
    %2193 = vmatmul.mubr.bf16.gmra.mrb[0].mxu0 %v1262
    %v2194 = vpop.f32.mrb[0].mxu0
    %v2195 = vadd.f32 0.0, %v2194
    %v2196 = vpop.f32.mrb[0].mxu0
    %v2197 = vpop.f32.mrb[0].mxu0
    %v2198 = vadd.f32 0.0, %v2197
    %v2199 = vpop.f32.mrb[0].mxu0
    %2200 = vmatprep.mubr.bf16.mxu0 0
    %2201 = vmatmul.mubr.bf16.gmra.mrb[0].mxu0 %v1265
    %v2202 = vpop.f32.mrb[0].mxu0
    %v2203 = vadd.f32 0.0, %v2202
    %v2204 = vpop.f32.mrb[0].mxu0
    %v2205 = vpop.f32.mrb[0].mxu0
    %v2206 = vadd.f32 0.0, %v2205
    %v2207 = vpop.f32.mrb[0].mxu0
    %2208 = vmatprep.mubr.bf16.mxu0 0
    %2209 = vmatmul.mubr.bf16.gmra.mrb[0].mxu0 %v1268
    %v2210 = vpop.f32.mrb[0].mxu0
    %v2211 = vadd.f32 0.0, %v2210
    %v2212 = vpop.f32.mrb[0].mxu0
    %v2213 = vpop.f32.mrb[0].mxu0
    %v2214 = vadd.f32 0.0, %v2213
    %v2215 = vpop.f32.mrb[0].mxu0
    %2216 = vmatprep.mubr.bf16.mxu0 0
    %2217 = vmatmul.mubr.bf16.gmra.mrb[0].mxu0 %v1271
    %v2218 = vpop.f32.mrb[0].mxu0
    %v2219 = vadd.f32 0.0, %v2218
    %v2220 = vpop.f32.mrb[0].mxu0
    %v2221 = vpop.f32.mrb[0].mxu0
    %v2222 = vadd.f32 0.0, %v2221
    %v2223 = vpop.f32.mrb[0].mxu0
    %2224 = vmatprep.mubr.bf16.mxu0 0
    %2225 = vmatmul.mubr.bf16.gmra.mrb[0].mxu0 %v1274
    %v2226 = vpop.f32.mrb[0].mxu0
    %v2227 = vadd.f32 0.0, %v2226
    %v2228 = vpop.f32.mrb[0].mxu0
    %v2229 = vpop.f32.mrb[0].mxu0
    %v2230 = vadd.f32 0.0, %v2229
    %v2231 = vpop.f32.mrb[0].mxu0
    %2232 = vmatprep.mubr.bf16.mxu0 0
    %2233 = vmatmul.mubr.bf16.gmra.mrb[0].mxu0 %v1277
    %v2234 = vpop.f32.mrb[0].mxu0
    %v2235 = vadd.f32 0.0, %v2234
    %v2236 = vpop.f32.mrb[0].mxu0
    %v2237 = vpop.f32.mrb[0].mxu0
    %v2238 = vadd.f32 0.0, %v2237
    %v2239 = vpop.f32.mrb[0].mxu0
    %2240 = vmatprep.mubr.bf16.mxu0 0
    %2241 = vmatmul.mubr.bf16.gmra.mrb[0].mxu0 %v1280
    %v2242 = vpop.f32.mrb[0].mxu0
    %v2243 = vadd.f32 0.0, %v2242
    %v2244 = vpop.f32.mrb[0].mxu0
    %v2245 = vpop.f32.mrb[0].mxu0
    %v2246 = vadd.f32 0.0, %v2245
    %v2247 = vpop.f32.mrb[0].mxu0
    %2248 = vmatprep.mubr.bf16.mxu0 0
    %2249 = vmatmul.mubr.bf16.gmra.mrb[0].mxu0 %v1283
    %v2250 = vpop.f32.mrb[0].mxu0
    %v2251 = vadd.f32 0.0, %v2250
    %v2252 = vpop.f32.mrb[0].mxu0
    %v2253 = vpop.f32.mrb[0].mxu0
    %v2254 = vadd.f32 0.0, %v2253
    %v2255 = vpop.f32.mrb[0].mxu0
    %2256 = vmatprep.mubr.bf16.mxu0 0
    %2257 = vmatmul.mubr.bf16.gmra.mrb[0].mxu0 %v1286
    %v2258 = vpop.f32.mrb[0].mxu0
    %v2259 = vadd.f32 0.0, %v2258
    %v2260 = vpop.f32.mrb[0].mxu0
    %v2261 = vpop.f32.mrb[0].mxu0
    %v2262 = vadd.f32 0.0, %v2261
    %v2263 = vpop.f32.mrb[0].mxu0
    %2264 = vmatprep.mubr.bf16.mxu0 0
    %2265 = vmatmul.mubr.bf16.gmra.mrb[0].mxu0 %v1289
    %v2266 = vpop.f32.mrb[0].mxu0
    %v2267 = vadd.f32 0.0, %v2266
    %v2268 = vpop.f32.mrb[0].mxu0
    %v2269 = vpop.f32.mrb[0].mxu0
    %v2270 = vadd.f32 0.0, %v2269
    %v2271 = vpop.f32.mrb[0].mxu0
    %2272 = vmatprep.mubr.bf16.mxu0 0
    %2273 = vmatmul.mubr.bf16.gmra.mrb[0].mxu0 %v1292
    %v2274 = vpop.f32.mrb[0].mxu0
    %v2275 = vadd.f32 0.0, %v2274
    %v2276 = vpop.f32.mrb[0].mxu0
    %v2277 = vpop.f32.mrb[0].mxu0
    %v2278 = vadd.f32 0.0, %v2277
    %v2279 = vpop.f32.mrb[0].mxu0
    %2280 = vmatprep.mubr.bf16.mxu0 0
    %2281 = vmatmul.mubr.bf16.gmra.mrb[0].mxu0 %v1295
    %v2282 = vpop.f32.mrb[0].mxu0
    %v2283 = vadd.f32 0.0, %v2282
    %v2284 = vpop.f32.mrb[0].mxu0
    %v2285 = vpop.f32.mrb[0].mxu0
    %v2286 = vadd.f32 0.0, %v2285
    %v2287 = vpop.f32.mrb[0].mxu0
    %2288 = vmatprep.mubr.bf16.mxu0 0
    %2289 = vmatmul.mubr.bf16.gmra.mrb[0].mxu0 %v1298
    %v2290 = vpop.f32.mrb[0].mxu0
    %v2291 = vadd.f32 0.0, %v2290
    %v2292 = vpop.f32.mrb[0].mxu0
    %v2293 = vpop.f32.mrb[0].mxu0
    %v2294 = vadd.f32 0.0, %v2293
    %v2295 = vpop.f32.mrb[0].mxu0
    %2296 = vmatprep.mubr.bf16.mxu0 0
    %2297 = vmatmul.mubr.bf16.gmra.mrb[0].mxu0 %v1301
    %v2298 = vpop.f32.mrb[0].mxu0
    %v2299 = vadd.f32 0.0, %v2298
    %v2300 = vpop.f32.mrb[0].mxu0
    %v2301 = vpop.f32.mrb[0].mxu0
    %v2302 = vadd.f32 0.0, %v2301
    %v2303 = vpop.f32.mrb[0].mxu0
    %2304 = vmatprep.mubr.bf16.mxu0 0
    %2305 = vmatmul.mubr.bf16.gmra.mrb[0].mxu0 %v1304
    %v2306 = vpop.f32.mrb[0].mxu0
    %v2307 = vadd.f32 0.0, %v2306
    %v2308 = vpop.f32.mrb[0].mxu0
    %v2309 = vpop.f32.mrb[0].mxu0
    %v2310 = vadd.f32 0.0, %v2309
    %v2311 = vpop.f32.mrb[0].mxu0
    %2312 = vmatprep.mubr.bf16.mxu0 0
    %2313 = vmatmul.mubr.bf16.gmra.mrb[0].mxu0 %v1307
    %v2314 = vpop.f32.mrb[0].mxu0
    %v2315 = vadd.f32 0.0, %v2314
    %v2316 = vpop.f32.mrb[0].mxu0
    %v2317 = vpop.f32.mrb[0].mxu0
    %v2318 = vadd.f32 0.0, %v2317
    %v2319 = vpop.f32.mrb[0].mxu0
    %2320 = vmatprep.mubr.bf16.mxu0 0
    %2321 = vmatmul.mubr.bf16.gmra.mrb[0].mxu0 %v1310
    %v2322 = vpop.f32.mrb[0].mxu0
    %v2323 = vadd.f32 0.0, %v2322
    %v2324 = vpop.f32.mrb[0].mxu0
    %v2325 = vpop.f32.mrb[0].mxu0
    %v2326 = vadd.f32 0.0, %v2325
    %v2327 = vpop.f32.mrb[0].mxu0
    %2328 = vmatprep.mubr.bf16.mxu0 0
    %2329 = vmatmul.mubr.bf16.gmra.mrb[0].mxu0 %v1313
    %v2330 = vpop.f32.mrb[0].mxu0
    %v2331 = vadd.f32 0.0, %v2330
    %v2332 = vpop.f32.mrb[0].mxu0
    %v2333 = vpop.f32.mrb[0].mxu0
    %v2334 = vadd.f32 0.0, %v2333
    %v2335 = vpop.f32.mrb[0].mxu0
    %2336 = vmatprep.mubr.bf16.mxu0 0
    %2337 = vmatmul.mubr.bf16.gmra.mrb[0].mxu0 %v1316
    %v2338 = vpop.f32.mrb[0].mxu0
    %v2339 = vadd.f32 0.0, %v2338
    %v2340 = vpop.f32.mrb[0].mxu0
    %v2341 = vpop.f32.mrb[0].mxu0
    %v2342 = vadd.f32 0.0, %v2341
    %v2343 = vpop.f32.mrb[0].mxu0
    %2344 = vmatprep.mubr.bf16.mxu0 0
    %2345 = vmatmul.mubr.bf16.gmra.mrb[0].mxu0 %v1319
    %v2346 = vpop.f32.mrb[0].mxu0
    %v2347 = vadd.f32 0.0, %v2346
    %v2348 = vpop.f32.mrb[0].mxu0
    %v2349 = vpop.f32.mrb[0].mxu0
    %v2350 = vadd.f32 0.0, %v2349
    %v2351 = vpop.f32.mrb[0].mxu0
    %2352 = vmatprep.mubr.bf16.mxu0 0
    %2353 = vmatmul.mubr.bf16.gmra.mrb[0].mxu0 %v1322
    %v2354 = vpop.f32.mrb[0].mxu0
    %v2355 = vadd.f32 0.0, %v2354
    %v2356 = vpop.f32.mrb[0].mxu0
    %v2357 = vpop.f32.mrb[0].mxu0
    %v2358 = vadd.f32 0.0, %v2357
    %v2359 = vpop.f32.mrb[0].mxu0
    %2360 = vmatprep.mubr.bf16.mxu0 0
    %2361 = vmatmul.mubr.bf16.gmra.mrb[0].mxu0 %v1325
    %v2362 = vpop.f32.mrb[0].mxu0
    %v2363 = vadd.f32 0.0, %v2362
    %v2364 = vpop.f32.mrb[0].mxu0
    %v2365 = vpop.f32.mrb[0].mxu0
    %v2366 = vadd.f32 0.0, %v2365
    %v2367 = vpop.f32.mrb[0].mxu0
    %2368 = vmatprep.mubr.bf16.mxu0 0
    %2369 = vmatmul.mubr.bf16.gmra.mrb[0].mxu0 %v1328
    %v2370 = vpop.f32.mrb[0].mxu0
    %v2371 = vadd.f32 0.0, %v2370
    %v2372 = vpop.f32.mrb[0].mxu0
    %v2373 = vpop.f32.mrb[0].mxu0
    %v2374 = vadd.f32 0.0, %v2373
    %v2375 = vpop.f32.mrb[0].mxu0
    %2376 = vmatprep.mubr.bf16.mxu0 0
    %2377 = vmatmul.mubr.bf16.gmra.mrb[0].mxu0 %v1331
    %v2378 = vpop.f32.mrb[0].mxu0
    %v2379 = vadd.f32 0.0, %v2378
    %v2380 = vpop.f32.mrb[0].mxu0
    %v2381 = vpop.f32.mrb[0].mxu0
    %v2382 = vadd.f32 0.0, %v2381
    %v2383 = vpop.f32.mrb[0].mxu0
    %2384 = vmatprep.mubr.bf16.mxu0 0
    %2385 = vmatmul.mubr.bf16.gmra.mrb[0].mxu0 %v1334
    %v2386 = vpop.f32.mrb[0].mxu0
    %v2387 = vadd.f32 0.0, %v2386
    %v2388 = vpop.f32.mrb[0].mxu0
    %v2389 = vpop.f32.mrb[0].mxu0
    %v2390 = vadd.f32 0.0, %v2389
    %v2391 = vpop.f32.mrb[0].mxu0
    %2392 = vdwg.mxu0
    %v2393 = vmul.f32 %v1371, 0.2
    %v2394 = vmul.f32 %v1374, 0.2
    %v2395 = vmul.f32 %v1379, 0.2
    %v2396 = vmul.f32 %v1382, 0.2
    %v2397 = vmul.f32 %v1387, 0.2
    %v2398 = vmul.f32 %v1390, 0.2
    %v2399 = vmul.f32 %v1395, 0.2
    %v2400 = vmul.f32 %v1398, 0.2
    %v2401 = vmul.f32 %v1403, 0.2
    %v2402 = vmul.f32 %v1406, 0.2
    %v2403 = vmul.f32 %v1411, 0.2
    %v2404 = vmul.f32 %v1414, 0.2
    %v2405 = vmul.f32 %v1419, 0.2
    %v2406 = vmul.f32 %v1422, 0.2
    %v2407 = vmul.f32 %v1427, 0.2
    %v2408 = vmul.f32 %v1430, 0.2
    %v2409 = vmul.f32 %v1435, 0.2
    %v2410 = vmul.f32 %v1438, 0.2
    %v2411 = vmul.f32 %v1443, 0.2
    %v2412 = vmul.f32 %v1446, 0.2
    %v2413 = vmul.f32 %v1451, 0.2
    %v2414 = vmul.f32 %v1454, 0.2
    %v2415 = vmul.f32 %v1459, 0.2
    %v2416 = vmul.f32 %v1462, 0.2
    %v2417 = vmul.f32 %v1467, 0.2
    %v2418 = vmul.f32 %v1470, 0.2
    %v2419 = vmul.f32 %v1475, 0.2
    %v2420 = vmul.f32 %v1478, 0.2
    %v2421 = vmul.f32 %v1483, 0.2
    %v2422 = vmul.f32 %v1486, 0.2
    %v2423 = vmul.f32 %v1491, 0.2
    %v2424 = vmul.f32 %v1494, 0.2
    %v2425 = vmul.f32 %v1499, 0.2
    %v2426 = vmul.f32 %v1502, 0.2
    %v2427 = vmul.f32 %v1507, 0.2
    %v2428 = vmul.f32 %v1510, 0.2
    %v2429 = vmul.f32 %v1515, 0.2
    %v2430 = vmul.f32 %v1518, 0.2
    %v2431 = vmul.f32 %v1523, 0.2
    %v2432 = vmul.f32 %v1526, 0.2
    %v2433 = vmul.f32 %v1531, 0.2
    %v2434 = vmul.f32 %v1534, 0.2
    %v2435 = vmul.f32 %v1539, 0.2
    %v2436 = vmul.f32 %v1542, 0.2
    %v2437 = vmul.f32 %v1547, 0.2
    %v2438 = vmul.f32 %v1550, 0.2
    %v2439 = vmul.f32 %v1555, 0.2
    %v2440 = vmul.f32 %v1558, 0.2
    %v2441 = vmul.f32 %v1563, 0.2
    %v2442 = vmul.f32 %v1566, 0.2
    %v2443 = vmul.f32 %v1571, 0.2
    %v2444 = vmul.f32 %v1574, 0.2
    %v2445 = vmul.f32 %v1579, 0.2
    %v2446 = vmul.f32 %v1582, 0.2
    %v2447 = vmul.f32 %v1587, 0.2
    %v2448 = vmul.f32 %v1590, 0.2
    %v2449 = vmul.f32 %v1595, 0.2
    %v2450 = vmul.f32 %v1598, 0.2
    %v2451 = vmul.f32 %v1603, 0.2
    %v2452 = vmul.f32 %v1606, 0.2
    %v2453 = vmul.f32 %v1611, 0.2
    %v2454 = vmul.f32 %v1614, 0.2
    %v2455 = vmul.f32 %v1619, 0.2
    %v2456 = vmul.f32 %v1622, 0.2
    %v2457 = vmul.f32 %v1627, 0.2
    %v2458 = vmul.f32 %v1630, 0.2
    %v2459 = vmul.f32 %v1635, 0.2
    %v2460 = vmul.f32 %v1638, 0.2
    %v2461 = vmul.f32 %v1643, 0.2
    %v2462 = vmul.f32 %v1646, 0.2
    %v2463 = vmul.f32 %v1651, 0.2
    %v2464 = vmul.f32 %v1654, 0.2
    %v2465 = vmul.f32 %v1659, 0.2
    %v2466 = vmul.f32 %v1662, 0.2
    %v2467 = vmul.f32 %v1667, 0.2
    %v2468 = vmul.f32 %v1670, 0.2
    %v2469 = vmul.f32 %v1675, 0.2
    %v2470 = vmul.f32 %v1678, 0.2
    %v2471 = vmul.f32 %v1683, 0.2
    %v2472 = vmul.f32 %v1686, 0.2
    %v2473 = vmul.f32 %v1691, 0.2
    %v2474 = vmul.f32 %v1694, 0.2
    %v2475 = vmul.f32 %v1699, 0.2
    %v2476 = vmul.f32 %v1702, 0.2
    %v2477 = vmul.f32 %v1707, 0.2
    %v2478 = vmul.f32 %v1710, 0.2
    %v2479 = vmul.f32 %v1715, 0.2
    %v2480 = vmul.f32 %v1718, 0.2
    %v2481 = vmul.f32 %v1723, 0.2
    %v2482 = vmul.f32 %v1726, 0.2
    %v2483 = vmul.f32 %v1731, 0.2
    %v2484 = vmul.f32 %v1734, 0.2
    %v2485 = vmul.f32 %v1739, 0.2
    %v2486 = vmul.f32 %v1742, 0.2
    %v2487 = vmul.f32 %v1747, 0.2
    %v2488 = vmul.f32 %v1750, 0.2
    %v2489 = vmul.f32 %v1755, 0.2
    %v2490 = vmul.f32 %v1758, 0.2
    %v2491 = vmul.f32 %v1763, 0.2
    %v2492 = vmul.f32 %v1766, 0.2
    %v2493 = vmul.f32 %v1771, 0.2
    %v2494 = vmul.f32 %v1774, 0.2
    %v2495 = vmul.f32 %v1779, 0.2
    %v2496 = vmul.f32 %v1782, 0.2
    %v2497 = vmul.f32 %v1787, 0.2
    %v2498 = vmul.f32 %v1790, 0.2
    %v2499 = vmul.f32 %v1795, 0.2
    %v2500 = vmul.f32 %v1798, 0.2
    %v2501 = vmul.f32 %v1803, 0.2
    %v2502 = vmul.f32 %v1806, 0.2
    %v2503 = vmul.f32 %v1811, 0.2
    %v2504 = vmul.f32 %v1814, 0.2
    %v2505 = vmul.f32 %v1819, 0.2
    %v2506 = vmul.f32 %v1822, 0.2
    %v2507 = vmul.f32 %v1827, 0.2
    %v2508 = vmul.f32 %v1830, 0.2
    %v2509 = vmul.f32 %v1835, 0.2
    %v2510 = vmul.f32 %v1838, 0.2
    %v2511 = vmul.f32 %v1843, 0.2
    %v2512 = vmul.f32 %v1846, 0.2
    %v2513 = vmul.f32 %v1851, 0.2
    %v2514 = vmul.f32 %v1854, 0.2
    %v2515 = vmul.f32 %v1859, 0.2
    %v2516 = vmul.f32 %v1862, 0.2
    %v2517 = vmul.f32 %v1867, 0.2
    %v2518 = vmul.f32 %v1870, 0.2
    %v2519 = vmul.f32 %v1875, 0.2
    %v2520 = vmul.f32 %v1878, 0.2
    %v2521 = vmul.f32 %v1883, 0.2
    %v2522 = vmul.f32 %v1886, 0.2
    %v2523 = vmul.f32 %v1891, 0.2
    %v2524 = vmul.f32 %v1894, 0.2
    %v2525 = vmul.f32 %v1899, 0.2
    %v2526 = vmul.f32 %v1902, 0.2
    %v2527 = vmul.f32 %v1907, 0.2
    %v2528 = vmul.f32 %v1910, 0.2
    %v2529 = vmul.f32 %v1915, 0.2
    %v2530 = vmul.f32 %v1918, 0.2
    %v2531 = vmul.f32 %v1923, 0.2
    %v2532 = vmul.f32 %v1926, 0.2
    %v2533 = vmul.f32 %v1931, 0.2
    %v2534 = vmul.f32 %v1934, 0.2
    %v2535 = vmul.f32 %v1939, 0.2
    %v2536 = vmul.f32 %v1942, 0.2
    %v2537 = vmul.f32 %v1947, 0.2
    %v2538 = vmul.f32 %v1950, 0.2
    %v2539 = vmul.f32 %v1955, 0.2
    %v2540 = vmul.f32 %v1958, 0.2
    %v2541 = vmul.f32 %v1963, 0.2
    %v2542 = vmul.f32 %v1966, 0.2
    %v2543 = vmul.f32 %v1971, 0.2
    %v2544 = vmul.f32 %v1974, 0.2
    %v2545 = vmul.f32 %v1979, 0.2
    %v2546 = vmul.f32 %v1982, 0.2
    %v2547 = vmul.f32 %v1987, 0.2
    %v2548 = vmul.f32 %v1990, 0.2
    %v2549 = vmul.f32 %v1995, 0.2
    %v2550 = vmul.f32 %v1998, 0.2
    %v2551 = vmul.f32 %v2003, 0.2
    %v2552 = vmul.f32 %v2006, 0.2
    %v2553 = vmul.f32 %v2011, 0.2
    %v2554 = vmul.f32 %v2014, 0.2
    %v2555 = vmul.f32 %v2019, 0.2
    %v2556 = vmul.f32 %v2022, 0.2
    %v2557 = vmul.f32 %v2027, 0.2
    %v2558 = vmul.f32 %v2030, 0.2
    %v2559 = vmul.f32 %v2035, 0.2
    %v2560 = vmul.f32 %v2038, 0.2
    %v2561 = vmul.f32 %v2043, 0.2
    %v2562 = vmul.f32 %v2046, 0.2
    %v2563 = vmul.f32 %v2051, 0.2
    %v2564 = vmul.f32 %v2054, 0.2
    %v2565 = vmul.f32 %v2059, 0.2
    %v2566 = vmul.f32 %v2062, 0.2
    %v2567 = vmul.f32 %v2067, 0.2
    %v2568 = vmul.f32 %v2070, 0.2
    %v2569 = vmul.f32 %v2075, 0.2
    %v2570 = vmul.f32 %v2078, 0.2
    %v2571 = vmul.f32 %v2083, 0.2
    %v2572 = vmul.f32 %v2086, 0.2
    %v2573 = vmul.f32 %v2091, 0.2
    %v2574 = vmul.f32 %v2094, 0.2
    %v2575 = vmul.f32 %v2099, 0.2
    %v2576 = vmul.f32 %v2102, 0.2
    %v2577 = vmul.f32 %v2107, 0.2
    %v2578 = vmul.f32 %v2110, 0.2
    %v2579 = vmul.f32 %v2115, 0.2
    %v2580 = vmul.f32 %v2118, 0.2
    %v2581 = vmul.f32 %v2123, 0.2
    %v2582 = vmul.f32 %v2126, 0.2
    %v2583 = vmul.f32 %v2131, 0.2
    %v2584 = vmul.f32 %v2134, 0.2
    %v2585 = vmul.f32 %v2139, 0.2
    %v2586 = vmul.f32 %v2142, 0.2
    %v2587 = vmul.f32 %v2147, 0.2
    %v2588 = vmul.f32 %v2150, 0.2
    %v2589 = vmul.f32 %v2155, 0.2
    %v2590 = vmul.f32 %v2158, 0.2
    %v2591 = vmul.f32 %v2163, 0.2
    %v2592 = vmul.f32 %v2166, 0.2
    %v2593 = vmul.f32 %v2171, 0.2
    %v2594 = vmul.f32 %v2174, 0.2
    %v2595 = vmul.f32 %v2179, 0.2
    %v2596 = vmul.f32 %v2182, 0.2
    %v2597 = vmul.f32 %v2187, 0.2
    %v2598 = vmul.f32 %v2190, 0.2
    %v2599 = vmul.f32 %v2195, 0.2
    %v2600 = vmul.f32 %v2198, 0.2
    %v2601 = vmul.f32 %v2203, 0.2
    %v2602 = vmul.f32 %v2206, 0.2
    %v2603 = vmul.f32 %v2211, 0.2
    %v2604 = vmul.f32 %v2214, 0.2
    %v2605 = vmul.f32 %v2219, 0.2
    %v2606 = vmul.f32 %v2222, 0.2
    %v2607 = vmul.f32 %v2227, 0.2
    %v2608 = vmul.f32 %v2230, 0.2
    %v2609 = vmul.f32 %v2235, 0.2
    %v2610 = vmul.f32 %v2238, 0.2
    %v2611 = vmul.f32 %v2243, 0.2
    %v2612 = vmul.f32 %v2246, 0.2
    %v2613 = vmul.f32 %v2251, 0.2
    %v2614 = vmul.f32 %v2254, 0.2
    %v2615 = vmul.f32 %v2259, 0.2
    %v2616 = vmul.f32 %v2262, 0.2
    %v2617 = vmul.f32 %v2267, 0.2
    %v2618 = vmul.f32 %v2270, 0.2
    %v2619 = vmul.f32 %v2275, 0.2
    %v2620 = vmul.f32 %v2278, 0.2
    %v2621 = vmul.f32 %v2283, 0.2
    %v2622 = vmul.f32 %v2286, 0.2
    %v2623 = vmul.f32 %v2291, 0.2
    %v2624 = vmul.f32 %v2294, 0.2
    %v2625 = vmul.f32 %v2299, 0.2
    %v2626 = vmul.f32 %v2302, 0.2
    %v2627 = vmul.f32 %v2307, 0.2
    %v2628 = vmul.f32 %v2310, 0.2
    %v2629 = vmul.f32 %v2315, 0.2
    %v2630 = vmul.f32 %v2318, 0.2
    %v2631 = vmul.f32 %v2323, 0.2
    %v2632 = vmul.f32 %v2326, 0.2
    %v2633 = vmul.f32 %v2331, 0.2
    %v2634 = vmul.f32 %v2334, 0.2
    %v2635 = vmul.f32 %v2339, 0.2
    %v2636 = vmul.f32 %v2342, 0.2
    %v2637 = vmul.f32 %v2347, 0.2
    %v2638 = vmul.f32 %v2350, 0.2
    %v2639 = vmul.f32 %v2355, 0.2
    %v2640 = vmul.f32 %v2358, 0.2
    %v2641 = vmul.f32 %v2363, 0.2
    %v2642 = vmul.f32 %v2366, 0.2
    %v2643 = vmul.f32 %v2371, 0.2
    %v2644 = vmul.f32 %v2374, 0.2
    %v2645 = vmul.f32 %v2379, 0.2
    %v2646 = vmul.f32 %v2382, 0.2
    %v2647 = vmul.f32 %v2387, 0.2
    %v2648 = vmul.f32 %v2390, 0.2
    %v2649 = vmax.f32 %v1371, %v2393
    %v2650 = vmax.f32 %v1374, %v2394
    %v2651 = vmax.f32 %v1379, %v2395
    %v2652 = vmax.f32 %v1382, %v2396
    %v2653 = vmax.f32 %v1387, %v2397
    %v2654 = vmax.f32 %v1390, %v2398
    %v2655 = vmax.f32 %v1395, %v2399
    %v2656 = vmax.f32 %v1398, %v2400
    %v2657 = vmax.f32 %v1403, %v2401
    %v2658 = vmax.f32 %v1406, %v2402
    %v2659 = vmax.f32 %v1411, %v2403
    %v2660 = vmax.f32 %v1414, %v2404
    %v2661 = vmax.f32 %v1419, %v2405
    %v2662 = vmax.f32 %v1422, %v2406
    %v2663 = vmax.f32 %v1427, %v2407
    %v2664 = vmax.f32 %v1430, %v2408
    %v2665 = vmax.f32 %v1435, %v2409
    %v2666 = vmax.f32 %v1438, %v2410
    %v2667 = vmax.f32 %v1443, %v2411
    %v2668 = vmax.f32 %v1446, %v2412
    %v2669 = vmax.f32 %v1451, %v2413
    %v2670 = vmax.f32 %v1454, %v2414
    %v2671 = vmax.f32 %v1459, %v2415
    %v2672 = vmax.f32 %v1462, %v2416
    %v2673 = vmax.f32 %v1467, %v2417
    %v2674 = vmax.f32 %v1470, %v2418
    %v2675 = vmax.f32 %v1475, %v2419
    %v2676 = vmax.f32 %v1478, %v2420
    %v2677 = vmax.f32 %v1483, %v2421
    %v2678 = vmax.f32 %v1486, %v2422
    %v2679 = vmax.f32 %v1491, %v2423
    %v2680 = vmax.f32 %v1494, %v2424
    %v2681 = vmax.f32 %v1499, %v2425
    %v2682 = vmax.f32 %v1502, %v2426
    %v2683 = vmax.f32 %v1507, %v2427
    %v2684 = vmax.f32 %v1510, %v2428
    %v2685 = vmax.f32 %v1515, %v2429
    %v2686 = vmax.f32 %v1518, %v2430
    %v2687 = vmax.f32 %v1523, %v2431
    %v2688 = vmax.f32 %v1526, %v2432
    %v2689 = vmax.f32 %v1531, %v2433
    %v2690 = vmax.f32 %v1534, %v2434
    %v2691 = vmax.f32 %v1539, %v2435
    %v2692 = vmax.f32 %v1542, %v2436
    %v2693 = vmax.f32 %v1547, %v2437
    %v2694 = vmax.f32 %v1550, %v2438
    %v2695 = vmax.f32 %v1555, %v2439
    %v2696 = vmax.f32 %v1558, %v2440
    %v2697 = vmax.f32 %v1563, %v2441
    %v2698 = vmax.f32 %v1566, %v2442
    %v2699 = vmax.f32 %v1571, %v2443
    %v2700 = vmax.f32 %v1574, %v2444
    %v2701 = vmax.f32 %v1579, %v2445
    %v2702 = vmax.f32 %v1582, %v2446
    %v2703 = vmax.f32 %v1587, %v2447
    %v2704 = vmax.f32 %v1590, %v2448
    %v2705 = vmax.f32 %v1595, %v2449
    %v2706 = vmax.f32 %v1598, %v2450
    %v2707 = vmax.f32 %v1603, %v2451
    %v2708 = vmax.f32 %v1606, %v2452
    %v2709 = vmax.f32 %v1611, %v2453
    %v2710 = vmax.f32 %v1614, %v2454
    %v2711 = vmax.f32 %v1619, %v2455
    %v2712 = vmax.f32 %v1622, %v2456
    %v2713 = vmax.f32 %v1627, %v2457
    %v2714 = vmax.f32 %v1630, %v2458
    %v2715 = vmax.f32 %v1635, %v2459
    %v2716 = vmax.f32 %v1638, %v2460
    %v2717 = vmax.f32 %v1643, %v2461
    %v2718 = vmax.f32 %v1646, %v2462
    %v2719 = vmax.f32 %v1651, %v2463
    %v2720 = vmax.f32 %v1654, %v2464
    %v2721 = vmax.f32 %v1659, %v2465
    %v2722 = vmax.f32 %v1662, %v2466
    %v2723 = vmax.f32 %v1667, %v2467
    %v2724 = vmax.f32 %v1670, %v2468
    %v2725 = vmax.f32 %v1675, %v2469
    %v2726 = vmax.f32 %v1678, %v2470
    %v2727 = vmax.f32 %v1683, %v2471
    %v2728 = vmax.f32 %v1686, %v2472
    %v2729 = vmax.f32 %v1691, %v2473
    %v2730 = vmax.f32 %v1694, %v2474
    %v2731 = vmax.f32 %v1699, %v2475
    %v2732 = vmax.f32 %v1702, %v2476
    %v2733 = vmax.f32 %v1707, %v2477
    %v2734 = vmax.f32 %v1710, %v2478
    %v2735 = vmax.f32 %v1715, %v2479
    %v2736 = vmax.f32 %v1718, %v2480
    %v2737 = vmax.f32 %v1723, %v2481
    %v2738 = vmax.f32 %v1726, %v2482
    %v2739 = vmax.f32 %v1731, %v2483
    %v2740 = vmax.f32 %v1734, %v2484
    %v2741 = vmax.f32 %v1739, %v2485
    %v2742 = vmax.f32 %v1742, %v2486
    %v2743 = vmax.f32 %v1747, %v2487
    %v2744 = vmax.f32 %v1750, %v2488
    %v2745 = vmax.f32 %v1755, %v2489
    %v2746 = vmax.f32 %v1758, %v2490
    %v2747 = vmax.f32 %v1763, %v2491
    %v2748 = vmax.f32 %v1766, %v2492
    %v2749 = vmax.f32 %v1771, %v2493
    %v2750 = vmax.f32 %v1774, %v2494
    %v2751 = vmax.f32 %v1779, %v2495
    %v2752 = vmax.f32 %v1782, %v2496
    %v2753 = vmax.f32 %v1787, %v2497
    %v2754 = vmax.f32 %v1790, %v2498
    %v2755 = vmax.f32 %v1795, %v2499
    %v2756 = vmax.f32 %v1798, %v2500
    %v2757 = vmax.f32 %v1803, %v2501
    %v2758 = vmax.f32 %v1806, %v2502
    %v2759 = vmax.f32 %v1811, %v2503
    %v2760 = vmax.f32 %v1814, %v2504
    %v2761 = vmax.f32 %v1819, %v2505
    %v2762 = vmax.f32 %v1822, %v2506
    %v2763 = vmax.f32 %v1827, %v2507
    %v2764 = vmax.f32 %v1830, %v2508
    %v2765 = vmax.f32 %v1835, %v2509
    %v2766 = vmax.f32 %v1838, %v2510
    %v2767 = vmax.f32 %v1843, %v2511
    %v2768 = vmax.f32 %v1846, %v2512
    %v2769 = vmax.f32 %v1851, %v2513
    %v2770 = vmax.f32 %v1854, %v2514
    %v2771 = vmax.f32 %v1859, %v2515
    %v2772 = vmax.f32 %v1862, %v2516
    %v2773 = vmax.f32 %v1867, %v2517
    %v2774 = vmax.f32 %v1870, %v2518
    %v2775 = vmax.f32 %v1875, %v2519
    %v2776 = vmax.f32 %v1878, %v2520
    %v2777 = vmax.f32 %v1883, %v2521
    %v2778 = vmax.f32 %v1886, %v2522
    %v2779 = vmax.f32 %v1891, %v2523
    %v2780 = vmax.f32 %v1894, %v2524
    %v2781 = vmax.f32 %v1899, %v2525
    %v2782 = vmax.f32 %v1902, %v2526
    %v2783 = vmax.f32 %v1907, %v2527
    %v2784 = vmax.f32 %v1910, %v2528
    %v2785 = vmax.f32 %v1915, %v2529
    %v2786 = vmax.f32 %v1918, %v2530
    %v2787 = vmax.f32 %v1923, %v2531
    %v2788 = vmax.f32 %v1926, %v2532
    %v2789 = vmax.f32 %v1931, %v2533
    %v2790 = vmax.f32 %v1934, %v2534
    %v2791 = vmax.f32 %v1939, %v2535
    %v2792 = vmax.f32 %v1942, %v2536
    %v2793 = vmax.f32 %v1947, %v2537
    %v2794 = vmax.f32 %v1950, %v2538
    %v2795 = vmax.f32 %v1955, %v2539
    %v2796 = vmax.f32 %v1958, %v2540
    %v2797 = vmax.f32 %v1963, %v2541
    %v2798 = vmax.f32 %v1966, %v2542
    %v2799 = vmax.f32 %v1971, %v2543
    %v2800 = vmax.f32 %v1974, %v2544
    %v2801 = vmax.f32 %v1979, %v2545
    %v2802 = vmax.f32 %v1982, %v2546
    %v2803 = vmax.f32 %v1987, %v2547
    %v2804 = vmax.f32 %v1990, %v2548
    %v2805 = vmax.f32 %v1995, %v2549
    %v2806 = vmax.f32 %v1998, %v2550
    %v2807 = vmax.f32 %v2003, %v2551
    %v2808 = vmax.f32 %v2006, %v2552
    %v2809 = vmax.f32 %v2011, %v2553
    %v2810 = vmax.f32 %v2014, %v2554
    %v2811 = vmax.f32 %v2019, %v2555
    %v2812 = vmax.f32 %v2022, %v2556
    %v2813 = vmax.f32 %v2027, %v2557
    %v2814 = vmax.f32 %v2030, %v2558
    %v2815 = vmax.f32 %v2035, %v2559
    %v2816 = vmax.f32 %v2038, %v2560
    %v2817 = vmax.f32 %v2043, %v2561
    %v2818 = vmax.f32 %v2046, %v2562
    %v2819 = vmax.f32 %v2051, %v2563
    %v2820 = vmax.f32 %v2054, %v2564
    %v2821 = vmax.f32 %v2059, %v2565
    %v2822 = vmax.f32 %v2062, %v2566
    %v2823 = vmax.f32 %v2067, %v2567
    %v2824 = vmax.f32 %v2070, %v2568
    %v2825 = vmax.f32 %v2075, %v2569
    %v2826 = vmax.f32 %v2078, %v2570
    %v2827 = vmax.f32 %v2083, %v2571
    %v2828 = vmax.f32 %v2086, %v2572
    %v2829 = vmax.f32 %v2091, %v2573
    %v2830 = vmax.f32 %v2094, %v2574
    %v2831 = vmax.f32 %v2099, %v2575
    %v2832 = vmax.f32 %v2102, %v2576
    %v2833 = vmax.f32 %v2107, %v2577
    %v2834 = vmax.f32 %v2110, %v2578
    %v2835 = vmax.f32 %v2115, %v2579
    %v2836 = vmax.f32 %v2118, %v2580
    %v2837 = vmax.f32 %v2123, %v2581
    %v2838 = vmax.f32 %v2126, %v2582
    %v2839 = vmax.f32 %v2131, %v2583
    %v2840 = vmax.f32 %v2134, %v2584
    %v2841 = vmax.f32 %v2139, %v2585
    %v2842 = vmax.f32 %v2142, %v2586
    %v2843 = vmax.f32 %v2147, %v2587
    %v2844 = vmax.f32 %v2150, %v2588
    %v2845 = vmax.f32 %v2155, %v2589
    %v2846 = vmax.f32 %v2158, %v2590
    %v2847 = vmax.f32 %v2163, %v2591
    %v2848 = vmax.f32 %v2166, %v2592
    %v2849 = vmax.f32 %v2171, %v2593
    %v2850 = vmax.f32 %v2174, %v2594
    %v2851 = vmax.f32 %v2179, %v2595
    %v2852 = vmax.f32 %v2182, %v2596
    %v2853 = vmax.f32 %v2187, %v2597
    %v2854 = vmax.f32 %v2190, %v2598
    %v2855 = vmax.f32 %v2195, %v2599
    %v2856 = vmax.f32 %v2198, %v2600
    %v2857 = vmax.f32 %v2203, %v2601
    %v2858 = vmax.f32 %v2206, %v2602
    %v2859 = vmax.f32 %v2211, %v2603
    %v2860 = vmax.f32 %v2214, %v2604
    %v2861 = vmax.f32 %v2219, %v2605
    %v2862 = vmax.f32 %v2222, %v2606
    %v2863 = vmax.f32 %v2227, %v2607
    %v2864 = vmax.f32 %v2230, %v2608
    %v2865 = vmax.f32 %v2235, %v2609
    %v2866 = vmax.f32 %v2238, %v2610
    %v2867 = vmax.f32 %v2243, %v2611
    %v2868 = vmax.f32 %v2246, %v2612
    %v2869 = vmax.f32 %v2251, %v2613
    %v2870 = vmax.f32 %v2254, %v2614
    %v2871 = vmax.f32 %v2259, %v2615
    %v2872 = vmax.f32 %v2262, %v2616
    %v2873 = vmax.f32 %v2267, %v2617
    %v2874 = vmax.f32 %v2270, %v2618
    %v2875 = vmax.f32 %v2275, %v2619
    %v2876 = vmax.f32 %v2278, %v2620
    %v2877 = vmax.f32 %v2283, %v2621
    %v2878 = vmax.f32 %v2286, %v2622
    %v2879 = vmax.f32 %v2291, %v2623
    %v2880 = vmax.f32 %v2294, %v2624
    %v2881 = vmax.f32 %v2299, %v2625
    %v2882 = vmax.f32 %v2302, %v2626
    %v2883 = vmax.f32 %v2307, %v2627
    %v2884 = vmax.f32 %v2310, %v2628
    %v2885 = vmax.f32 %v2315, %v2629
    %v2886 = vmax.f32 %v2318, %v2630
    %v2887 = vmax.f32 %v2323, %v2631
    %v2888 = vmax.f32 %v2326, %v2632
    %v2889 = vmax.f32 %v2331, %v2633
    %v2890 = vmax.f32 %v2334, %v2634
    %v2891 = vmax.f32 %v2339, %v2635
    %v2892 = vmax.f32 %v2342, %v2636
    %v2893 = vmax.f32 %v2347, %v2637
    %v2894 = vmax.f32 %v2350, %v2638
    %v2895 = vmax.f32 %v2355, %v2639
    %v2896 = vmax.f32 %v2358, %v2640
    %v2897 = vmax.f32 %v2363, %v2641
    %v2898 = vmax.f32 %v2366, %v2642
    %v2899 = vmax.f32 %v2371, %v2643
    %v2900 = vmax.f32 %v2374, %v2644
    %v2901 = vmax.f32 %v2379, %v2645
    %v2902 = vmax.f32 %v2382, %v2646
    %v2903 = vmax.f32 %v2387, %v2647
    %v2904 = vmax.f32 %v2390, %v2648
    %vm2905 = vcmask 64512
    %2906 = vst.msk [vmem:[#allocation2] sm:$0xff] %vm2905, 0.0
    %2907 = vst.msk [vmem:[#allocation2 + $0x8] sm:$0xff] %vm2905, 0.0
    %2908 = vst.msk [vmem:[#allocation2 + $0x10] sm:$0xff] %vm2905, 0.0
    %2909 = vst.msk [vmem:[#allocation2 + $0x18] sm:$0xff] %vm2905, 0.0
    %2910 = vst.msk [vmem:[#allocation2 + $0x20] sm:$0xff] %vm2905, 0.0
    %2911 = vst.msk [vmem:[#allocation2 + $0x28] sm:$0xff] %vm2905, 0.0
    %2912 = vst.msk [vmem:[#allocation2 + $0x30] sm:$0xff] %vm2905, 0.0
    %2913 = vst.msk [vmem:[#allocation2 + $0x38] sm:$0xff] %vm2905, 0.0
    %2914 = vst.msk [vmem:[#allocation2 + $0x40] sm:$0xff] %vm2905, 0.0
    %2915 = vst.msk [vmem:[#allocation2 + $0x48] sm:$0xff] %vm2905, 0.0
    %2916 = vst.msk [vmem:[#allocation2 + $0x50] sm:$0xff] %vm2905, 0.0
    %2917 = vst.msk [vmem:[#allocation2 + $0x58] sm:$0xff] %vm2905, 0.0
    %2918 = vst.msk [vmem:[#allocation2 + $0x60] sm:$0xff] %vm2905, 0.0
    %2919 = vst.msk [vmem:[#allocation2 + $0x68] sm:$0xff] %vm2905, 0.0
    %2920 = vst.msk [vmem:[#allocation2 + $0x70] sm:$0xff] %vm2905, 0.0
    %2921 = vst.msk [vmem:[#allocation2 + $0x78] sm:$0xff] %vm2905, 0.0
    %2922 = vst.msk [vmem:[#allocation2 + $0x80] sm:$0xff] %vm2905, 0.0
    %2923 = vst.msk [vmem:[#allocation2 + $0x88] sm:$0xff] %vm2905, 0.0
    %s2924 = scalar_lea.vmem [#allocation2], 2448
    %2925 = vst.msk [vmem:[%s2924] sm:$0xff] %vm2905, 0.0
    %2926 = vst.msk [vmem:[%s2924 + $0x8] sm:$0xff] %vm2905, 0.0
    %2927 = vst.msk [vmem:[%s2924 + $0x10] sm:$0xff] %vm2905, 0.0
    %2928 = vst.msk [vmem:[%s2924 + $0x18] sm:$0xff] %vm2905, 0.0
    %2929 = vst.msk [vmem:[%s2924 + $0x20] sm:$0xff] %vm2905, 0.0
    %2930 = vst.msk [vmem:[%s2924 + $0x28] sm:$0xff] %vm2905, 0.0
    %2931 = vst.msk [vmem:[%s2924 + $0x30] sm:$0xff] %vm2905, 0.0
    %2932 = vst.msk [vmem:[%s2924 + $0x38] sm:$0xff] %vm2905, 0.0
    %2933 = vst.msk [vmem:[%s2924 + $0x40] sm:$0xff] %vm2905, 0.0
    %2934 = vst.msk [vmem:[%s2924 + $0x48] sm:$0xff] %vm2905, 0.0
    %2935 = vst.msk [vmem:[%s2924 + $0x50] sm:$0xff] %vm2905, 0.0
    %2936 = vst.msk [vmem:[%s2924 + $0x58] sm:$0xff] %vm2905, 0.0
    %2937 = vst.msk [vmem:[%s2924 + $0x60] sm:$0xff] %vm2905, 0.0
    %2938 = vst.msk [vmem:[%s2924 + $0x68] sm:$0xff] %vm2905, 0.0
    %2939 = vst.msk [vmem:[%s2924 + $0x70] sm:$0xff] %vm2905, 0.0
    %2940 = vst.msk [vmem:[%s2924 + $0x78] sm:$0xff] %vm2905, 0.0
    %2941 = vst.msk [vmem:[%s2924 + $0x80] sm:$0xff] %vm2905, 0.0
    %2942 = vst.msk [vmem:[%s2924 + $0x88] sm:$0xff] %vm2905, 0.0
    %s2943 = scalar_lea.vmem [#allocation2], 144
    %2944 = vst.msk [vmem:[%s2943] sm:$0xff] %vm2905, 0.0
    %2945 = vst.msk [vmem:[%s2943 + $0x90] sm:$0xff] %vm2905, 0.0
    %2946 = vst.msk [vmem:[%s2943 + $0x120] sm:$0xff] %vm2905, 0.0
    %2947 = vst.msk [vmem:[%s2943 + $0x1b0] sm:$0xff] %vm2905, 0.0
    %2948 = vst.msk [vmem:[%s2943 + $0x240] sm:$0xff] %vm2905, 0.0
    %2949 = vst.msk [vmem:[%s2943 + $0x2d0] sm:$0xff] %vm2905, 0.0
    %2950 = vst.msk [vmem:[%s2943 + $0x360] sm:$0xff] %vm2905, 0.0
    %2951 = vst.msk [vmem:[%s2943 + $0x3f0] sm:$0xff] %vm2905, 0.0
    %2952 = vst.msk [vmem:[%s2943 + $0x480] sm:$0xff] %vm2905, 0.0
    %2953 = vst.msk [vmem:[%s2943 + $0x510] sm:$0xff] %vm2905, 0.0
    %2954 = vst.msk [vmem:[%s2943 + $0x5a0] sm:$0xff] %vm2905, 0.0
    %2955 = vst.msk [vmem:[%s2943 + $0x630] sm:$0xff] %vm2905, 0.0
    %2956 = vst.msk [vmem:[%s2943 + $0x6c0] sm:$0xff] %vm2905, 0.0
    %2957 = vst.msk [vmem:[%s2943 + $0x750] sm:$0xff] %vm2905, 0.0
    %2958 = vst.msk [vmem:[%s2943 + $0x7e0] sm:$0xff] %vm2905, 0.0
    %2959 = vst.msk [vmem:[%s2943 + $0x870] sm:$0xff] %vm2905, 0.0
    %s2960 = scalar_lea.vmem [#allocation2], 280
    %2961 = vst.msk [vmem:[%s2960] sm:$0xff] %vm2905, 0.0
    %2962 = vst.msk [vmem:[%s2960 + $0x90] sm:$0xff] %vm2905, 0.0
    %2963 = vst.msk [vmem:[%s2960 + $0x120] sm:$0xff] %vm2905, 0.0
    %2964 = vst.msk [vmem:[%s2960 + $0x1b0] sm:$0xff] %vm2905, 0.0
    %2965 = vst.msk [vmem:[%s2960 + $0x240] sm:$0xff] %vm2905, 0.0
    %2966 = vst.msk [vmem:[%s2960 + $0x2d0] sm:$0xff] %vm2905, 0.0
    %2967 = vst.msk [vmem:[%s2960 + $0x360] sm:$0xff] %vm2905, 0.0
    %2968 = vst.msk [vmem:[%s2960 + $0x3f0] sm:$0xff] %vm2905, 0.0
    %2969 = vst.msk [vmem:[%s2960 + $0x480] sm:$0xff] %vm2905, 0.0
    %2970 = vst.msk [vmem:[%s2960 + $0x510] sm:$0xff] %vm2905, 0.0
    %2971 = vst.msk [vmem:[%s2960 + $0x5a0] sm:$0xff] %vm2905, 0.0
    %2972 = vst.msk [vmem:[%s2960 + $0x630] sm:$0xff] %vm2905, 0.0
    %2973 = vst.msk [vmem:[%s2960 + $0x6c0] sm:$0xff] %vm2905, 0.0
    %2974 = vst.msk [vmem:[%s2960 + $0x750] sm:$0xff] %vm2905, 0.0
    %2975 = vst.msk [vmem:[%s2960 + $0x7e0] sm:$0xff] %vm2905, 0.0
    %2976 = vst.msk [vmem:[%s2960 + $0x870] sm:$0xff] %vm2905, 0.0
    %s2977 = scalar_lea.vmem [#allocation2], 152
    %2978 = vst.msk [vmem:[%s2977] sm:$0xff] %vm2905, %v2649
    %2979 = vst.msk [vmem:[%s2977 + $0x8] sm:$0xff] %vm2905, %v2650
    %2980 = vst.msk [vmem:[%s2977 + $0x10] sm:$0xff] %vm2905, %v2651
    %2981 = vst.msk [vmem:[%s2977 + $0x18] sm:$0xff] %vm2905, %v2652
    %2982 = vst.msk [vmem:[%s2977 + $0x20] sm:$0xff] %vm2905, %v2653
    %2983 = vst.msk [vmem:[%s2977 + $0x28] sm:$0xff] %vm2905, %v2654
    %2984 = vst.msk [vmem:[%s2977 + $0x30] sm:$0xff] %vm2905, %v2655
    %2985 = vst.msk [vmem:[%s2977 + $0x38] sm:$0xff] %vm2905, %v2656
    %2986 = vst.msk [vmem:[%s2977 + $0x40] sm:$0xff] %vm2905, %v2657
    %2987 = vst.msk [vmem:[%s2977 + $0x48] sm:$0xff] %vm2905, %v2658
    %2988 = vst.msk [vmem:[%s2977 + $0x50] sm:$0xff] %vm2905, %v2659
    %2989 = vst.msk [vmem:[%s2977 + $0x58] sm:$0xff] %vm2905, %v2660
    %2990 = vst.msk [vmem:[%s2977 + $0x60] sm:$0xff] %vm2905, %v2661
    %2991 = vst.msk [vmem:[%s2977 + $0x68] sm:$0xff] %vm2905, %v2662
    %2992 = vst.msk [vmem:[%s2977 + $0x70] sm:$0xff] %vm2905, %v2663
    %2993 = vst.msk [vmem:[%s2977 + $0x78] sm:$0xff] %vm2905, %v2664
    %2994 = vst.msk [vmem:[%s2977 + $0x90] sm:$0xff] %vm2905, %v2665
    %2995 = vst.msk [vmem:[%s2977 + $0x98] sm:$0xff] %vm2905, %v2666
    %2996 = vst.msk [vmem:[%s2977 + $0xa0] sm:$0xff] %vm2905, %v2667
    %2997 = vst.msk [vmem:[%s2977 + $0xa8] sm:$0xff] %vm2905, %v2668
    %2998 = vst.msk [vmem:[%s2977 + $0xb0] sm:$0xff] %vm2905, %v2669
    %2999 = vst.msk [vmem:[%s2977 + $0xb8] sm:$0xff] %vm2905, %v2670
    %3000 = vst.msk [vmem:[%s2977 + $0xc0] sm:$0xff] %vm2905, %v2671
    %3001 = vst.msk [vmem:[%s2977 + $0xc8] sm:$0xff] %vm2905, %v2672
    %3002 = vst.msk [vmem:[%s2977 + $0xd0] sm:$0xff] %vm2905, %v2673
    %3003 = vst.msk [vmem:[%s2977 + $0xd8] sm:$0xff] %vm2905, %v2674
    %3004 = vst.msk [vmem:[%s2977 + $0xe0] sm:$0xff] %vm2905, %v2675
    %3005 = vst.msk [vmem:[%s2977 + $0xe8] sm:$0xff] %vm2905, %v2676
    %3006 = vst.msk [vmem:[%s2977 + $0xf0] sm:$0xff] %vm2905, %v2677
    %3007 = vst.msk [vmem:[%s2977 + $0xf8] sm:$0xff] %vm2905, %v2678
    %3008 = vst.msk [vmem:[%s2977 + $0x100] sm:$0xff] %vm2905, %v2679
    %3009 = vst.msk [vmem:[%s2977 + $0x108] sm:$0xff] %vm2905, %v2680
    %3010 = vst.msk [vmem:[%s2977 + $0x120] sm:$0xff] %vm2905, %v2681
    %3011 = vst.msk [vmem:[%s2977 + $0x128] sm:$0xff] %vm2905, %v2682
    %3012 = vst.msk [vmem:[%s2977 + $0x130] sm:$0xff] %vm2905, %v2683
    %3013 = vst.msk [vmem:[%s2977 + $0x138] sm:$0xff] %vm2905, %v2684
    %3014 = vst.msk [vmem:[%s2977 + $0x140] sm:$0xff] %vm2905, %v2685
    %3015 = vst.msk [vmem:[%s2977 + $0x148] sm:$0xff] %vm2905, %v2686
    %3016 = vst.msk [vmem:[%s2977 + $0x150] sm:$0xff] %vm2905, %v2687
    %3017 = vst.msk [vmem:[%s2977 + $0x158] sm:$0xff] %vm2905, %v2688
    %3018 = vst.msk [vmem:[%s2977 + $0x160] sm:$0xff] %vm2905, %v2689
    %3019 = vst.msk [vmem:[%s2977 + $0x168] sm:$0xff] %vm2905, %v2690
    %3020 = vst.msk [vmem:[%s2977 + $0x170] sm:$0xff] %vm2905, %v2691
    %3021 = vst.msk [vmem:[%s2977 + $0x178] sm:$0xff] %vm2905, %v2692
    %3022 = vst.msk [vmem:[%s2977 + $0x180] sm:$0xff] %vm2905, %v2693
    %3023 = vst.msk [vmem:[%s2977 + $0x188] sm:$0xff] %vm2905, %v2694
    %3024 = vst.msk [vmem:[%s2977 + $0x190] sm:$0xff] %vm2905, %v2695
    %3025 = vst.msk [vmem:[%s2977 + $0x198] sm:$0xff] %vm2905, %v2696
    %3026 = vst.msk [vmem:[%s2977 + $0x1b0] sm:$0xff] %vm2905, %v2697
    %3027 = vst.msk [vmem:[%s2977 + $0x1b8] sm:$0xff] %vm2905, %v2698
    %3028 = vst.msk [vmem:[%s2977 + $0x1c0] sm:$0xff] %vm2905, %v2699
    %3029 = vst.msk [vmem:[%s2977 + $0x1c8] sm:$0xff] %vm2905, %v2700
    %3030 = vst.msk [vmem:[%s2977 + $0x1d0] sm:$0xff] %vm2905, %v2701
    %3031 = vst.msk [vmem:[%s2977 + $0x1d8] sm:$0xff] %vm2905, %v2702
    %3032 = vst.msk [vmem:[%s2977 + $0x1e0] sm:$0xff] %vm2905, %v2703
    %3033 = vst.msk [vmem:[%s2977 + $0x1e8] sm:$0xff] %vm2905, %v2704
    %3034 = vst.msk [vmem:[%s2977 + $0x1f0] sm:$0xff] %vm2905, %v2705
    %3035 = vst.msk [vmem:[%s2977 + $0x1f8] sm:$0xff] %vm2905, %v2706
    %3036 = vst.msk [vmem:[%s2977 + $0x200] sm:$0xff] %vm2905, %v2707
    %3037 = vst.msk [vmem:[%s2977 + $0x208] sm:$0xff] %vm2905, %v2708
    %3038 = vst.msk [vmem:[%s2977 + $0x210] sm:$0xff] %vm2905, %v2709
    %3039 = vst.msk [vmem:[%s2977 + $0x218] sm:$0xff] %vm2905, %v2710
    %3040 = vst.msk [vmem:[%s2977 + $0x220] sm:$0xff] %vm2905, %v2711
    %3041 = vst.msk [vmem:[%s2977 + $0x228] sm:$0xff] %vm2905, %v2712
    %3042 = vst.msk [vmem:[%s2977 + $0x240] sm:$0xff] %vm2905, %v2713
    %3043 = vst.msk [vmem:[%s2977 + $0x248] sm:$0xff] %vm2905, %v2714
    %3044 = vst.msk [vmem:[%s2977 + $0x250] sm:$0xff] %vm2905, %v2715
    %3045 = vst.msk [vmem:[%s2977 + $0x258] sm:$0xff] %vm2905, %v2716
    %3046 = vst.msk [vmem:[%s2977 + $0x260] sm:$0xff] %vm2905, %v2717
    %3047 = vst.msk [vmem:[%s2977 + $0x268] sm:$0xff] %vm2905, %v2718
    %3048 = vst.msk [vmem:[%s2977 + $0x270] sm:$0xff] %vm2905, %v2719
    %3049 = vst.msk [vmem:[%s2977 + $0x278] sm:$0xff] %vm2905, %v2720
    %3050 = vst.msk [vmem:[%s2977 + $0x280] sm:$0xff] %vm2905, %v2721
    %3051 = vst.msk [vmem:[%s2977 + $0x288] sm:$0xff] %vm2905, %v2722
    %3052 = vst.msk [vmem:[%s2977 + $0x290] sm:$0xff] %vm2905, %v2723
    %3053 = vst.msk [vmem:[%s2977 + $0x298] sm:$0xff] %vm2905, %v2724
    %3054 = vst.msk [vmem:[%s2977 + $0x2a0] sm:$0xff] %vm2905, %v2725
    %3055 = vst.msk [vmem:[%s2977 + $0x2a8] sm:$0xff] %vm2905, %v2726
    %3056 = vst.msk [vmem:[%s2977 + $0x2b0] sm:$0xff] %vm2905, %v2727
    %3057 = vst.msk [vmem:[%s2977 + $0x2b8] sm:$0xff] %vm2905, %v2728
    %3058 = vst.msk [vmem:[%s2977 + $0x2d0] sm:$0xff] %vm2905, %v2729
    %3059 = vst.msk [vmem:[%s2977 + $0x2d8] sm:$0xff] %vm2905, %v2730
    %3060 = vst.msk [vmem:[%s2977 + $0x2e0] sm:$0xff] %vm2905, %v2731
    %3061 = vst.msk [vmem:[%s2977 + $0x2e8] sm:$0xff] %vm2905, %v2732
    %3062 = vst.msk [vmem:[%s2977 + $0x2f0] sm:$0xff] %vm2905, %v2733
    %3063 = vst.msk [vmem:[%s2977 + $0x2f8] sm:$0xff] %vm2905, %v2734
    %3064 = vst.msk [vmem:[%s2977 + $0x300] sm:$0xff] %vm2905, %v2735
    %3065 = vst.msk [vmem:[%s2977 + $0x308] sm:$0xff] %vm2905, %v2736
    %3066 = vst.msk [vmem:[%s2977 + $0x310] sm:$0xff] %vm2905, %v2737
    %3067 = vst.msk [vmem:[%s2977 + $0x318] sm:$0xff] %vm2905, %v2738
    %3068 = vst.msk [vmem:[%s2977 + $0x320] sm:$0xff] %vm2905, %v2739
    %3069 = vst.msk [vmem:[%s2977 + $0x328] sm:$0xff] %vm2905, %v2740
    %3070 = vst.msk [vmem:[%s2977 + $0x330] sm:$0xff] %vm2905, %v2741
    %3071 = vst.msk [vmem:[%s2977 + $0x338] sm:$0xff] %vm2905, %v2742
    %3072 = vst.msk [vmem:[%s2977 + $0x340] sm:$0xff] %vm2905, %v2743
    %3073 = vst.msk [vmem:[%s2977 + $0x348] sm:$0xff] %vm2905, %v2744
    %3074 = vst.msk [vmem:[%s2977 + $0x360] sm:$0xff] %vm2905, %v2745
    %3075 = vst.msk [vmem:[%s2977 + $0x368] sm:$0xff] %vm2905, %v2746
    %3076 = vst.msk [vmem:[%s2977 + $0x370] sm:$0xff] %vm2905, %v2747
    %3077 = vst.msk [vmem:[%s2977 + $0x378] sm:$0xff] %vm2905, %v2748
    %3078 = vst.msk [vmem:[%s2977 + $0x380] sm:$0xff] %vm2905, %v2749
    %3079 = vst.msk [vmem:[%s2977 + $0x388] sm:$0xff] %vm2905, %v2750
    %3080 = vst.msk [vmem:[%s2977 + $0x390] sm:$0xff] %vm2905, %v2751
    %3081 = vst.msk [vmem:[%s2977 + $0x398] sm:$0xff] %vm2905, %v2752
    %3082 = vst.msk [vmem:[%s2977 + $0x3a0] sm:$0xff] %vm2905, %v2753
    %3083 = vst.msk [vmem:[%s2977 + $0x3a8] sm:$0xff] %vm2905, %v2754
    %3084 = vst.msk [vmem:[%s2977 + $0x3b0] sm:$0xff] %vm2905, %v2755
    %3085 = vst.msk [vmem:[%s2977 + $0x3b8] sm:$0xff] %vm2905, %v2756
    %3086 = vst.msk [vmem:[%s2977 + $0x3c0] sm:$0xff] %vm2905, %v2757
    %3087 = vst.msk [vmem:[%s2977 + $0x3c8] sm:$0xff] %vm2905, %v2758
    %3088 = vst.msk [vmem:[%s2977 + $0x3d0] sm:$0xff] %vm2905, %v2759
    %3089 = vst.msk [vmem:[%s2977 + $0x3d8] sm:$0xff] %vm2905, %v2760
    %3090 = vst.msk [vmem:[%s2977 + $0x3f0] sm:$0xff] %vm2905, %v2761
    %3091 = vst.msk [vmem:[%s2977 + $0x3f8] sm:$0xff] %vm2905, %v2762
    %3092 = vst.msk [vmem:[%s2977 + $0x400] sm:$0xff] %vm2905, %v2763
    %3093 = vst.msk [vmem:[%s2977 + $0x408] sm:$0xff] %vm2905, %v2764
    %3094 = vst.msk [vmem:[%s2977 + $0x410] sm:$0xff] %vm2905, %v2765
    %3095 = vst.msk [vmem:[%s2977 + $0x418] sm:$0xff] %vm2905, %v2766
    %3096 = vst.msk [vmem:[%s2977 + $0x420] sm:$0xff] %vm2905, %v2767
    %3097 = vst.msk [vmem:[%s2977 + $0x428] sm:$0xff] %vm2905, %v2768
    %3098 = vst.msk [vmem:[%s2977 + $0x430] sm:$0xff] %vm2905, %v2769
    %3099 = vst.msk [vmem:[%s2977 + $0x438] sm:$0xff] %vm2905, %v2770
    %3100 = vst.msk [vmem:[%s2977 + $0x440] sm:$0xff] %vm2905, %v2771
    %3101 = vst.msk [vmem:[%s2977 + $0x448] sm:$0xff] %vm2905, %v2772
    %3102 = vst.msk [vmem:[%s2977 + $0x450] sm:$0xff] %vm2905, %v2773
    %3103 = vst.msk [vmem:[%s2977 + $0x458] sm:$0xff] %vm2905, %v2774
    %3104 = vst.msk [vmem:[%s2977 + $0x460] sm:$0xff] %vm2905, %v2775
    %3105 = vst.msk [vmem:[%s2977 + $0x468] sm:$0xff] %vm2905, %v2776
    %3106 = vst.msk [vmem:[%s2977 + $0x480] sm:$0xff] %vm2905, %v2777
    %3107 = vst.msk [vmem:[%s2977 + $0x488] sm:$0xff] %vm2905, %v2778
    %3108 = vst.msk [vmem:[%s2977 + $0x490] sm:$0xff] %vm2905, %v2779
    %3109 = vst.msk [vmem:[%s2977 + $0x498] sm:$0xff] %vm2905, %v2780
    %3110 = vst.msk [vmem:[%s2977 + $0x4a0] sm:$0xff] %vm2905, %v2781
    %3111 = vst.msk [vmem:[%s2977 + $0x4a8] sm:$0xff] %vm2905, %v2782
    %3112 = vst.msk [vmem:[%s2977 + $0x4b0] sm:$0xff] %vm2905, %v2783
    %3113 = vst.msk [vmem:[%s2977 + $0x4b8] sm:$0xff] %vm2905, %v2784
    %3114 = vst.msk [vmem:[%s2977 + $0x4c0] sm:$0xff] %vm2905, %v2785
    %3115 = vst.msk [vmem:[%s2977 + $0x4c8] sm:$0xff] %vm2905, %v2786
    %3116 = vst.msk [vmem:[%s2977 + $0x4d0] sm:$0xff] %vm2905, %v2787
    %3117 = vst.msk [vmem:[%s2977 + $0x4d8] sm:$0xff] %vm2905, %v2788
    %3118 = vst.msk [vmem:[%s2977 + $0x4e0] sm:$0xff] %vm2905, %v2789
    %3119 = vst.msk [vmem:[%s2977 + $0x4e8] sm:$0xff] %vm2905, %v2790
    %3120 = vst.msk [vmem:[%s2977 + $0x4f0] sm:$0xff] %vm2905, %v2791
    %3121 = vst.msk [vmem:[%s2977 + $0x4f8] sm:$0xff] %vm2905, %v2792
    %3122 = vst.msk [vmem:[%s2977 + $0x510] sm:$0xff] %vm2905, %v2793
    %3123 = vst.msk [vmem:[%s2977 + $0x518] sm:$0xff] %vm2905, %v2794
    %3124 = vst.msk [vmem:[%s2977 + $0x520] sm:$0xff] %vm2905, %v2795
    %3125 = vst.msk [vmem:[%s2977 + $0x528] sm:$0xff] %vm2905, %v2796
    %3126 = vst.msk [vmem:[%s2977 + $0x530] sm:$0xff] %vm2905, %v2797
    %3127 = vst.msk [vmem:[%s2977 + $0x538] sm:$0xff] %vm2905, %v2798
    %3128 = vst.msk [vmem:[%s2977 + $0x540] sm:$0xff] %vm2905, %v2799
    %3129 = vst.msk [vmem:[%s2977 + $0x548] sm:$0xff] %vm2905, %v2800
    %3130 = vst.msk [vmem:[%s2977 + $0x550] sm:$0xff] %vm2905, %v2801
    %3131 = vst.msk [vmem:[%s2977 + $0x558] sm:$0xff] %vm2905, %v2802
    %3132 = vst.msk [vmem:[%s2977 + $0x560] sm:$0xff] %vm2905, %v2803
    %3133 = vst.msk [vmem:[%s2977 + $0x568] sm:$0xff] %vm2905, %v2804
    %3134 = vst.msk [vmem:[%s2977 + $0x570] sm:$0xff] %vm2905, %v2805
    %3135 = vst.msk [vmem:[%s2977 + $0x578] sm:$0xff] %vm2905, %v2806
    %3136 = vst.msk [vmem:[%s2977 + $0x580] sm:$0xff] %vm2905, %v2807
    %3137 = vst.msk [vmem:[%s2977 + $0x588] sm:$0xff] %vm2905, %v2808
    %3138 = vst.msk [vmem:[%s2977 + $0x5a0] sm:$0xff] %vm2905, %v2809
    %3139 = vst.msk [vmem:[%s2977 + $0x5a8] sm:$0xff] %vm2905, %v2810
    %3140 = vst.msk [vmem:[%s2977 + $0x5b0] sm:$0xff] %vm2905, %v2811
    %3141 = vst.msk [vmem:[%s2977 + $0x5b8] sm:$0xff] %vm2905, %v2812
    %3142 = vst.msk [vmem:[%s2977 + $0x5c0] sm:$0xff] %vm2905, %v2813
    %3143 = vst.msk [vmem:[%s2977 + $0x5c8] sm:$0xff] %vm2905, %v2814
    %3144 = vst.msk [vmem:[%s2977 + $0x5d0] sm:$0xff] %vm2905, %v2815
    %3145 = vst.msk [vmem:[%s2977 + $0x5d8] sm:$0xff] %vm2905, %v2816
    %3146 = vst.msk [vmem:[%s2977 + $0x5e0] sm:$0xff] %vm2905, %v2817
    %3147 = vst.msk [vmem:[%s2977 + $0x5e8] sm:$0xff] %vm2905, %v2818
    %3148 = vst.msk [vmem:[%s2977 + $0x5f0] sm:$0xff] %vm2905, %v2819
    %3149 = vst.msk [vmem:[%s2977 + $0x5f8] sm:$0xff] %vm2905, %v2820
    %3150 = vst.msk [vmem:[%s2977 + $0x600] sm:$0xff] %vm2905, %v2821
    %3151 = vst.msk [vmem:[%s2977 + $0x608] sm:$0xff] %vm2905, %v2822
    %3152 = vst.msk [vmem:[%s2977 + $0x610] sm:$0xff] %vm2905, %v2823
    %3153 = vst.msk [vmem:[%s2977 + $0x618] sm:$0xff] %vm2905, %v2824
    %3154 = vst.msk [vmem:[%s2977 + $0x630] sm:$0xff] %vm2905, %v2825
    %3155 = vst.msk [vmem:[%s2977 + $0x638] sm:$0xff] %vm2905, %v2826
    %3156 = vst.msk [vmem:[%s2977 + $0x640] sm:$0xff] %vm2905, %v2827
    %3157 = vst.msk [vmem:[%s2977 + $0x648] sm:$0xff] %vm2905, %v2828
    %3158 = vst.msk [vmem:[%s2977 + $0x650] sm:$0xff] %vm2905, %v2829
    %3159 = vst.msk [vmem:[%s2977 + $0x658] sm:$0xff] %vm2905, %v2830
    %3160 = vst.msk [vmem:[%s2977 + $0x660] sm:$0xff] %vm2905, %v2831
    %3161 = vst.msk [vmem:[%s2977 + $0x668] sm:$0xff] %vm2905, %v2832
    %3162 = vst.msk [vmem:[%s2977 + $0x670] sm:$0xff] %vm2905, %v2833
    %3163 = vst.msk [vmem:[%s2977 + $0x678] sm:$0xff] %vm2905, %v2834
    %3164 = vst.msk [vmem:[%s2977 + $0x680] sm:$0xff] %vm2905, %v2835
    %3165 = vst.msk [vmem:[%s2977 + $0x688] sm:$0xff] %vm2905, %v2836
    %3166 = vst.msk [vmem:[%s2977 + $0x690] sm:$0xff] %vm2905, %v2837
    %3167 = vst.msk [vmem:[%s2977 + $0x698] sm:$0xff] %vm2905, %v2838
    %3168 = vst.msk [vmem:[%s2977 + $0x6a0] sm:$0xff] %vm2905, %v2839
    %3169 = vst.msk [vmem:[%s2977 + $0x6a8] sm:$0xff] %vm2905, %v2840
    %3170 = vst.msk [vmem:[%s2977 + $0x6c0] sm:$0xff] %vm2905, %v2841
    %3171 = vst.msk [vmem:[%s2977 + $0x6c8] sm:$0xff] %vm2905, %v2842
    %3172 = vst.msk [vmem:[%s2977 + $0x6d0] sm:$0xff] %vm2905, %v2843
    %3173 = vst.msk [vmem:[%s2977 + $0x6d8] sm:$0xff] %vm2905, %v2844
    %3174 = vst.msk [vmem:[%s2977 + $0x6e0] sm:$0xff] %vm2905, %v2845
    %3175 = vst.msk [vmem:[%s2977 + $0x6e8] sm:$0xff] %vm2905, %v2846
    %3176 = vst.msk [vmem:[%s2977 + $0x6f0] sm:$0xff] %vm2905, %v2847
    %3177 = vst.msk [vmem:[%s2977 + $0x6f8] sm:$0xff] %vm2905, %v2848
    %3178 = vst.msk [vmem:[%s2977 + $0x700] sm:$0xff] %vm2905, %v2849
    %3179 = vst.msk [vmem:[%s2977 + $0x708] sm:$0xff] %vm2905, %v2850
    %3180 = vst.msk [vmem:[%s2977 + $0x710] sm:$0xff] %vm2905, %v2851
    %3181 = vst.msk [vmem:[%s2977 + $0x718] sm:$0xff] %vm2905, %v2852
    %3182 = vst.msk [vmem:[%s2977 + $0x720] sm:$0xff] %vm2905, %v2853
    %3183 = vst.msk [vmem:[%s2977 + $0x728] sm:$0xff] %vm2905, %v2854
    %3184 = vst.msk [vmem:[%s2977 + $0x730] sm:$0xff] %vm2905, %v2855
    %3185 = vst.msk [vmem:[%s2977 + $0x738] sm:$0xff] %vm2905, %v2856
    %3186 = vst.msk [vmem:[%s2977 + $0x750] sm:$0xff] %vm2905, %v2857
    %3187 = vst.msk [vmem:[%s2977 + $0x758] sm:$0xff] %vm2905, %v2858
    %3188 = vst.msk [vmem:[%s2977 + $0x760] sm:$0xff] %vm2905, %v2859
    %3189 = vst.msk [vmem:[%s2977 + $0x768] sm:$0xff] %vm2905, %v2860
    %3190 = vst.msk [vmem:[%s2977 + $0x770] sm:$0xff] %vm2905, %v2861
    %3191 = vst.msk [vmem:[%s2977 + $0x778] sm:$0xff] %vm2905, %v2862
    %3192 = vst.msk [vmem:[%s2977 + $0x780] sm:$0xff] %vm2905, %v2863
    %3193 = vst.msk [vmem:[%s2977 + $0x788] sm:$0xff] %vm2905, %v2864
    %3194 = vst.msk [vmem:[%s2977 + $0x790] sm:$0xff] %vm2905, %v2865
    %3195 = vst.msk [vmem:[%s2977 + $0x798] sm:$0xff] %vm2905, %v2866
    %3196 = vst.msk [vmem:[%s2977 + $0x7a0] sm:$0xff] %vm2905, %v2867
    %3197 = vst.msk [vmem:[%s2977 + $0x7a8] sm:$0xff] %vm2905, %v2868
    %3198 = vst.msk [vmem:[%s2977 + $0x7b0] sm:$0xff] %vm2905, %v2869
    %3199 = vst.msk [vmem:[%s2977 + $0x7b8] sm:$0xff] %vm2905, %v2870
    %3200 = vst.msk [vmem:[%s2977 + $0x7c0] sm:$0xff] %vm2905, %v2871
    %3201 = vst.msk [vmem:[%s2977 + $0x7c8] sm:$0xff] %vm2905, %v2872
    %3202 = vst.msk [vmem:[%s2977 + $0x7e0] sm:$0xff] %vm2905, %v2873
    %3203 = vst.msk [vmem:[%s2977 + $0x7e8] sm:$0xff] %vm2905, %v2874
    %3204 = vst.msk [vmem:[%s2977 + $0x7f0] sm:$0xff] %vm2905, %v2875
    %3205 = vst.msk [vmem:[%s2977 + $0x7f8] sm:$0xff] %vm2905, %v2876
    %3206 = vst.msk [vmem:[%s2977 + $0x800] sm:$0xff] %vm2905, %v2877
    %3207 = vst.msk [vmem:[%s2977 + $0x808] sm:$0xff] %vm2905, %v2878
    %3208 = vst.msk [vmem:[%s2977 + $0x810] sm:$0xff] %vm2905, %v2879
    %3209 = vst.msk [vmem:[%s2977 + $0x818] sm:$0xff] %vm2905, %v2880
    %3210 = vst.msk [vmem:[%s2977 + $0x820] sm:$0xff] %vm2905, %v2881
    %3211 = vst.msk [vmem:[%s2977 + $0x828] sm:$0xff] %vm2905, %v2882
    %3212 = vst.msk [vmem:[%s2977 + $0x830] sm:$0xff] %vm2905, %v2883
    %3213 = vst.msk [vmem:[%s2977 + $0x838] sm:$0xff] %vm2905, %v2884
    %3214 = vst.msk [vmem:[%s2977 + $0x840] sm:$0xff] %vm2905, %v2885
    %3215 = vst.msk [vmem:[%s2977 + $0x848] sm:$0xff] %vm2905, %v2886
    %3216 = vst.msk [vmem:[%s2977 + $0x850] sm:$0xff] %vm2905, %v2887
    %3217 = vst.msk [vmem:[%s2977 + $0x858] sm:$0xff] %vm2905, %v2888
    %3218 = vst.msk [vmem:[%s2977 + $0x870] sm:$0xff] %vm2905, %v2889
    %3219 = vst.msk [vmem:[%s2977 + $0x878] sm:$0xff] %vm2905, %v2890
    %3220 = vst.msk [vmem:[%s2977 + $0x880] sm:$0xff] %vm2905, %v2891
    %3221 = vst.msk [vmem:[%s2977 + $0x888] sm:$0xff] %vm2905, %v2892
    %3222 = vst.msk [vmem:[%s2977 + $0x890] sm:$0xff] %vm2905, %v2893
    %3223 = vst.msk [vmem:[%s2977 + $0x898] sm:$0xff] %vm2905, %v2894
    %3224 = vst.msk [vmem:[%s2977 + $0x8a0] sm:$0xff] %vm2905, %v2895
    %3225 = vst.msk [vmem:[%s2977 + $0x8a8] sm:$0xff] %vm2905, %v2896
    %3226 = vst.msk [vmem:[%s2977 + $0x8b0] sm:$0xff] %vm2905, %v2897
    %3227 = vst.msk [vmem:[%s2977 + $0x8b8] sm:$0xff] %vm2905, %v2898
    %3228 = vst.msk [vmem:[%s2977 + $0x8c0] sm:$0xff] %vm2905, %v2899
    %3229 = vst.msk [vmem:[%s2977 + $0x8c8] sm:$0xff] %vm2905, %v2900
    %3230 = vst.msk [vmem:[%s2977 + $0x8d0] sm:$0xff] %vm2905, %v2901
    %3231 = vst.msk [vmem:[%s2977 + $0x8d8] sm:$0xff] %vm2905, %v2902
    %3232 = vst.msk [vmem:[%s2977 + $0x8e0] sm:$0xff] %vm2905, %v2903
    %3233 = vst.msk [vmem:[%s2977 + $0x8e8] sm:$0xff] %vm2905, %v2904
    %v3234 = vld [vmem:[#allocation2] sm:$0xff]
    %v3235 = vld [vmem:[#allocation2 + $0x8] sm:$0xff]
    %v3236 = vld [vmem:[#allocation2 + $0x10] sm:$0xff]
    %v3237 = vld [vmem:[#allocation2 + $0x18] sm:$0xff]
    %v3238 = vld [vmem:[#allocation2 + $0x20] sm:$0xff]
    %v3239 = vld [vmem:[#allocation2 + $0x28] sm:$0xff]
    %v3240 = vld [vmem:[#allocation2 + $0x30] sm:$0xff]
    %v3241 = vld [vmem:[#allocation2 + $0x38] sm:$0xff]
    %v3242 = vld [vmem:[#allocation2 + $0x40] sm:$0xff]
    %v3243 = vld [vmem:[#allocation2 + $0x48] sm:$0xff]
    %v3244 = vld [vmem:[#allocation2 + $0x50] sm:$0xff]
    %v3245 = vld [vmem:[#allocation2 + $0x58] sm:$0xff]
    %v3246 = vld [vmem:[#allocation2 + $0x60] sm:$0xff]
    %v3247 = vld [vmem:[#allocation2 + $0x68] sm:$0xff]
    %v3248 = vld [vmem:[#allocation2 + $0x70] sm:$0xff]
    %v3249 = vld [vmem:[#allocation2 + $0x78] sm:$0xff]
    %v3250 = vld [vmem:[#allocation2 + $0x80] sm:$0xff]
    %v3251 = vld [vmem:[#allocation2 + $0x88] sm:$0xff]
    %v3252 = vld [vmem:[#allocation2 + $0x90] sm:$0xff]
    %v3253 = vld [vmem:[#allocation2 + $0x98] sm:$0xff]
    %v3254 = vld [vmem:[#allocation2 + $0xa0] sm:$0xff]
    %v3255 = vld [vmem:[#allocation2 + $0xa8] sm:$0xff]
    %v3256 = vld [vmem:[#allocation2 + $0xb0] sm:$0xff]
    %v3257 = vld [vmem:[#allocation2 + $0xb8] sm:$0xff]
    %v3258 = vld [vmem:[#allocation2 + $0xc0] sm:$0xff]
    %v3259 = vld [vmem:[#allocation2 + $0xc8] sm:$0xff]
    %v3260 = vld [vmem:[#allocation2 + $0xd0] sm:$0xff]
    %v3261 = vld [vmem:[#allocation2 + $0xd8] sm:$0xff]
    %v3262 = vld [vmem:[#allocation2 + $0xe0] sm:$0xff]
    %v3263 = vld [vmem:[#allocation2 + $0xe8] sm:$0xff]
    %v3264 = vld [vmem:[#allocation2 + $0xf0] sm:$0xff]
    %v3265 = vld [vmem:[#allocation2 + $0xf8] sm:$0xff]
    %v3266 = vld [vmem:[#allocation2 + $0x100] sm:$0xff]
    %v3267 = vld [vmem:[#allocation2 + $0x108] sm:$0xff]
    %v3268 = vld [vmem:[#allocation2 + $0x110] sm:$0xff]
    %v3269 = vld [vmem:[#allocation2 + $0x118] sm:$0xff]
    %v3270 = vld [vmem:[#allocation2 + $0x120] sm:$0xff]
    %v3271 = vld [vmem:[#allocation2 + $0x128] sm:$0xff]
    %v3272 = vld [vmem:[#allocation2 + $0x130] sm:$0xff]
    %v3273 = vld [vmem:[#allocation2 + $0x138] sm:$0xff]
    %v3274 = vld [vmem:[#allocation2 + $0x140] sm:$0xff]
    %v3275 = vld [vmem:[#allocation2 + $0x148] sm:$0xff]
    %v3276 = vld [vmem:[#allocation2 + $0x150] sm:$0xff]
    %v3277 = vld [vmem:[#allocation2 + $0x158] sm:$0xff]
    %v3278 = vld [vmem:[#allocation2 + $0x160] sm:$0xff]
    %v3279 = vld [vmem:[#allocation2 + $0x168] sm:$0xff]
    %v3280 = vld [vmem:[#allocation2 + $0x170] sm:$0xff]
    %v3281 = vld [vmem:[#allocation2 + $0x178] sm:$0xff]
    %v3282 = vld [vmem:[#allocation2 + $0x180] sm:$0xff]
    %v3283 = vld [vmem:[#allocation2 + $0x188] sm:$0xff]
    %v3284 = vld [vmem:[#allocation2 + $0x190] sm:$0xff]
    %v3285 = vld [vmem:[#allocation2 + $0x198] sm:$0xff]
    %v3286 = vld [vmem:[#allocation2 + $0x1a0] sm:$0xff]
    %v3287 = vld [vmem:[#allocation2 + $0x1a8] sm:$0xff]
    %v3288 = vld [vmem:[#allocation2 + $0x1b0] sm:$0xff]
    %v3289 = vld [vmem:[#allocation2 + $0x1b8] sm:$0xff]
    %v3290 = vld [vmem:[#allocation2 + $0x1c0] sm:$0xff]
    %v3291 = vld [vmem:[#allocation2 + $0x1c8] sm:$0xff]
    %v3292 = vld [vmem:[#allocation2 + $0x1d0] sm:$0xff]
    %v3293 = vld [vmem:[#allocation2 + $0x1d8] sm:$0xff]
    %v3294 = vld [vmem:[#allocation2 + $0x1e0] sm:$0xff]
    %v3295 = vld [vmem:[#allocation2 + $0x1e8] sm:$0xff]
    %v3296 = vld [vmem:[#allocation2 + $0x1f0] sm:$0xff]
    %v3297 = vld [vmem:[#allocation2 + $0x1f8] sm:$0xff]
    %v3298 = vld [vmem:[#allocation2 + $0x200] sm:$0xff]
    %v3299 = vld [vmem:[#allocation2 + $0x208] sm:$0xff]
    %v3300 = vld [vmem:[#allocation2 + $0x210] sm:$0xff]
    %v3301 = vld [vmem:[#allocation2 + $0x218] sm:$0xff]
    %v3302 = vld [vmem:[#allocation2 + $0x220] sm:$0xff]
    %v3303 = vld [vmem:[#allocation2 + $0x228] sm:$0xff]
    %v3304 = vld [vmem:[#allocation2 + $0x230] sm:$0xff]
    %v3305 = vld [vmem:[#allocation2 + $0x238] sm:$0xff]
    %v3306 = vld [vmem:[#allocation2 + $0x240] sm:$0xff]
    %v3307 = vld [vmem:[#allocation2 + $0x248] sm:$0xff]
    %v3308 = vld [vmem:[#allocation2 + $0x250] sm:$0xff]
    %v3309 = vld [vmem:[#allocation2 + $0x258] sm:$0xff]
    %v3310 = vld [vmem:[#allocation2 + $0x260] sm:$0xff]
    %v3311 = vld [vmem:[#allocation2 + $0x268] sm:$0xff]
    %v3312 = vld [vmem:[#allocation2 + $0x270] sm:$0xff]
    %v3313 = vld [vmem:[#allocation2 + $0x278] sm:$0xff]
    %v3314 = vld [vmem:[#allocation2 + $0x280] sm:$0xff]
    %v3315 = vld [vmem:[#allocation2 + $0x288] sm:$0xff]
    %v3316 = vld [vmem:[#allocation2 + $0x290] sm:$0xff]
    %v3317 = vld [vmem:[#allocation2 + $0x298] sm:$0xff]
    %v3318 = vld [vmem:[#allocation2 + $0x2a0] sm:$0xff]
    %v3319 = vld [vmem:[#allocation2 + $0x2a8] sm:$0xff]
    %v3320 = vld [vmem:[#allocation2 + $0x2b0] sm:$0xff]
    %v3321 = vld [vmem:[#allocation2 + $0x2b8] sm:$0xff]
    %v3322 = vld [vmem:[#allocation2 + $0x2c0] sm:$0xff]
    %v3323 = vld [vmem:[#allocation2 + $0x2c8] sm:$0xff]
    %v3324 = vld [vmem:[#allocation2 + $0x2d0] sm:$0xff]
    %v3325 = vld [vmem:[#allocation2 + $0x2d8] sm:$0xff]
    %v3326 = vld [vmem:[#allocation2 + $0x2e0] sm:$0xff]
    %v3327 = vld [vmem:[#allocation2 + $0x2e8] sm:$0xff]
    %v3328 = vld [vmem:[#allocation2 + $0x2f0] sm:$0xff]
    %v3329 = vld [vmem:[#allocation2 + $0x2f8] sm:$0xff]
    %v3330 = vld [vmem:[#allocation2 + $0x300] sm:$0xff]
    %v3331 = vld [vmem:[#allocation2 + $0x308] sm:$0xff]
    %v3332 = vld [vmem:[#allocation2 + $0x310] sm:$0xff]
    %v3333 = vld [vmem:[#allocation2 + $0x318] sm:$0xff]
    %v3334 = vld [vmem:[#allocation2 + $0x320] sm:$0xff]
    %v3335 = vld [vmem:[#allocation2 + $0x328] sm:$0xff]
    %v3336 = vld [vmem:[#allocation2 + $0x330] sm:$0xff]
    %v3337 = vld [vmem:[#allocation2 + $0x338] sm:$0xff]
    %v3338 = vld [vmem:[#allocation2 + $0x340] sm:$0xff]
    %v3339 = vld [vmem:[#allocation2 + $0x348] sm:$0xff]
    %v3340 = vld [vmem:[#allocation2 + $0x350] sm:$0xff]
    %v3341 = vld [vmem:[#allocation2 + $0x358] sm:$0xff]
    %v3342 = vld [vmem:[#allocation2 + $0x360] sm:$0xff]
    %v3343 = vld [vmem:[#allocation2 + $0x368] sm:$0xff]
    %v3344 = vld [vmem:[#allocation2 + $0x370] sm:$0xff]
    %v3345 = vld [vmem:[#allocation2 + $0x378] sm:$0xff]
    %v3346 = vld [vmem:[#allocation2 + $0x380] sm:$0xff]
    %v3347 = vld [vmem:[#allocation2 + $0x388] sm:$0xff]
    %v3348 = vld [vmem:[#allocation2 + $0x390] sm:$0xff]
    %v3349 = vld [vmem:[#allocation2 + $0x398] sm:$0xff]
    %v3350 = vld [vmem:[#allocation2 + $0x3a0] sm:$0xff]
    %v3351 = vld [vmem:[#allocation2 + $0x3a8] sm:$0xff]
    %v3352 = vld [vmem:[#allocation2 + $0x3b0] sm:$0xff]
    %v3353 = vld [vmem:[#allocation2 + $0x3b8] sm:$0xff]
    %v3354 = vld [vmem:[#allocation2 + $0x3c0] sm:$0xff]
    %v3355 = vld [vmem:[#allocation2 + $0x3c8] sm:$0xff]
    %v3356 = vld [vmem:[#allocation2 + $0x3d0] sm:$0xff]
    %v3357 = vld [vmem:[#allocation2 + $0x3d8] sm:$0xff]
    %v3358 = vld [vmem:[#allocation2 + $0x3e0] sm:$0xff]
    %v3359 = vld [vmem:[#allocation2 + $0x3e8] sm:$0xff]
    %v3360 = vld [vmem:[#allocation2 + $0x3f0] sm:$0xff]
    %v3361 = vld [vmem:[#allocation2 + $0x3f8] sm:$0xff]
    %v3362 = vld [vmem:[#allocation2 + $0x400] sm:$0xff]
    %v3363 = vld [vmem:[#allocation2 + $0x408] sm:$0xff]
    %v3364 = vld [vmem:[#allocation2 + $0x410] sm:$0xff]
    %v3365 = vld [vmem:[#allocation2 + $0x418] sm:$0xff]
    %v3366 = vld [vmem:[#allocation2 + $0x420] sm:$0xff]
    %v3367 = vld [vmem:[#allocation2 + $0x428] sm:$0xff]
    %v3368 = vld [vmem:[#allocation2 + $0x430] sm:$0xff]
    %v3369 = vld [vmem:[#allocation2 + $0x438] sm:$0xff]
    %v3370 = vld [vmem:[#allocation2 + $0x440] sm:$0xff]
    %v3371 = vld [vmem:[#allocation2 + $0x448] sm:$0xff]
    %v3372 = vld [vmem:[#allocation2 + $0x450] sm:$0xff]
    %v3373 = vld [vmem:[#allocation2 + $0x458] sm:$0xff]
    %v3374 = vld [vmem:[#allocation2 + $0x460] sm:$0xff]
    %v3375 = vld [vmem:[#allocation2 + $0x468] sm:$0xff]
    %v3376 = vld [vmem:[#allocation2 + $0x470] sm:$0xff]
    %v3377 = vld [vmem:[#allocation2 + $0x478] sm:$0xff]
    %v3378 = vld [vmem:[#allocation2 + $0x480] sm:$0xff]
    %v3379 = vld [vmem:[#allocation2 + $0x488] sm:$0xff]
    %v3380 = vld [vmem:[#allocation2 + $0x490] sm:$0xff]
    %v3381 = vld [vmem:[#allocation2 + $0x498] sm:$0xff]
    %v3382 = vld [vmem:[#allocation2 + $0x4a0] sm:$0xff]
    %v3383 = vld [vmem:[#allocation2 + $0x4a8] sm:$0xff]
    %v3384 = vld [vmem:[#allocation2 + $0x4b0] sm:$0xff]
    %v3385 = vld [vmem:[#allocation2 + $0x4b8] sm:$0xff]
    %v3386 = vld [vmem:[#allocation2 + $0x4c0] sm:$0xff]
    %v3387 = vld [vmem:[#allocation2 + $0x4c8] sm:$0xff]
    %v3388 = vld [vmem:[#allocation2 + $0x4d0] sm:$0xff]
    %v3389 = vld [vmem:[#allocation2 + $0x4d8] sm:$0xff]
    %v3390 = vld [vmem:[#allocation2 + $0x4e0] sm:$0xff]
    %v3391 = vld [vmem:[#allocation2 + $0x4e8] sm:$0xff]
    %v3392 = vld [vmem:[#allocation2 + $0x4f0] sm:$0xff]
    %v3393 = vld [vmem:[#allocation2 + $0x4f8] sm:$0xff]
    %v3394 = vld [vmem:[#allocation2 + $0x500] sm:$0xff]
    %v3395 = vld [vmem:[#allocation2 + $0x508] sm:$0xff]
    %v3396 = vld [vmem:[#allocation2 + $0x510] sm:$0xff]
    %v3397 = vld [vmem:[#allocation2 + $0x518] sm:$0xff]
    %v3398 = vld [vmem:[#allocation2 + $0x520] sm:$0xff]
    %v3399 = vld [vmem:[#allocation2 + $0x528] sm:$0xff]
    %v3400 = vld [vmem:[#allocation2 + $0x530] sm:$0xff]
    %v3401 = vld [vmem:[#allocation2 + $0x538] sm:$0xff]
    %v3402 = vld [vmem:[#allocation2 + $0x540] sm:$0xff]
    %v3403 = vld [vmem:[#allocation2 + $0x548] sm:$0xff]
    %v3404 = vld [vmem:[#allocation2 + $0x550] sm:$0xff]
    %v3405 = vld [vmem:[#allocation2 + $0x558] sm:$0xff]
    %v3406 = vld [vmem:[#allocation2 + $0x560] sm:$0xff]
    %v3407 = vld [vmem:[#allocation2 + $0x568] sm:$0xff]
    %v3408 = vld [vmem:[#allocation2 + $0x570] sm:$0xff]
    %v3409 = vld [vmem:[#allocation2 + $0x578] sm:$0xff]
    %v3410 = vld [vmem:[#allocation2 + $0x580] sm:$0xff]
    %v3411 = vld [vmem:[#allocation2 + $0x588] sm:$0xff]
    %v3412 = vld [vmem:[#allocation2 + $0x590] sm:$0xff]
    %v3413 = vld [vmem:[#allocation2 + $0x598] sm:$0xff]
    %v3414 = vld [vmem:[#allocation2 + $0x5a0] sm:$0xff]
    %v3415 = vld [vmem:[#allocation2 + $0x5a8] sm:$0xff]
    %v3416 = vld [vmem:[#allocation2 + $0x5b0] sm:$0xff]
    %v3417 = vld [vmem:[#allocation2 + $0x5b8] sm:$0xff]
    %v3418 = vld [vmem:[#allocation2 + $0x5c0] sm:$0xff]
    %v3419 = vld [vmem:[#allocation2 + $0x5c8] sm:$0xff]
    %v3420 = vld [vmem:[#allocation2 + $0x5d0] sm:$0xff]
    %v3421 = vld [vmem:[#allocation2 + $0x5d8] sm:$0xff]
    %v3422 = vld [vmem:[#allocation2 + $0x5e0] sm:$0xff]
    %v3423 = vld [vmem:[#allocation2 + $0x5e8] sm:$0xff]
    %v3424 = vld [vmem:[#allocation2 + $0x5f0] sm:$0xff]
    %v3425 = vld [vmem:[#allocation2 + $0x5f8] sm:$0xff]
    %v3426 = vld [vmem:[#allocation2 + $0x600] sm:$0xff]
    %v3427 = vld [vmem:[#allocation2 + $0x608] sm:$0xff]
    %v3428 = vld [vmem:[#allocation2 + $0x610] sm:$0xff]
    %v3429 = vld [vmem:[#allocation2 + $0x618] sm:$0xff]
    %v3430 = vld [vmem:[#allocation2 + $0x620] sm:$0xff]
    %v3431 = vld [vmem:[#allocation2 + $0x628] sm:$0xff]
    %v3432 = vld [vmem:[#allocation2 + $0x630] sm:$0xff]
    %v3433 = vld [vmem:[#allocation2 + $0x638] sm:$0xff]
    %v3434 = vld [vmem:[#allocation2 + $0x640] sm:$0xff]
    %v3435 = vld [vmem:[#allocation2 + $0x648] sm:$0xff]
    %v3436 = vld [vmem:[#allocation2 + $0x650] sm:$0xff]
    %v3437 = vld [vmem:[#allocation2 + $0x658] sm:$0xff]
    %v3438 = vld [vmem:[#allocation2 + $0x660] sm:$0xff]
    %v3439 = vld [vmem:[#allocation2 + $0x668] sm:$0xff]
    %v3440 = vld [vmem:[#allocation2 + $0x670] sm:$0xff]
    %v3441 = vld [vmem:[#allocation2 + $0x678] sm:$0xff]
    %v3442 = vld [vmem:[#allocation2 + $0x680] sm:$0xff]
    %v3443 = vld [vmem:[#allocation2 + $0x688] sm:$0xff]
    %v3444 = vld [vmem:[#allocation2 + $0x690] sm:$0xff]
    %v3445 = vld [vmem:[#allocation2 + $0x698] sm:$0xff]
    %v3446 = vld [vmem:[#allocation2 + $0x6a0] sm:$0xff]
    %v3447 = vld [vmem:[#allocation2 + $0x6a8] sm:$0xff]
    %v3448 = vld [vmem:[#allocation2 + $0x6b0] sm:$0xff]
    %v3449 = vld [vmem:[#allocation2 + $0x6b8] sm:$0xff]
    %v3450 = vld [vmem:[#allocation2 + $0x6c0] sm:$0xff]
    %v3451 = vld [vmem:[#allocation2 + $0x6c8] sm:$0xff]
    %v3452 = vld [vmem:[#allocation2 + $0x6d0] sm:$0xff]
    %v3453 = vld [vmem:[#allocation2 + $0x6d8] sm:$0xff]
    %v3454 = vld [vmem:[#allocation2 + $0x6e0] sm:$0xff]
    %v3455 = vld [vmem:[#allocation2 + $0x6e8] sm:$0xff]
    %v3456 = vld [vmem:[#allocation2 + $0x6f0] sm:$0xff]
    %v3457 = vld [vmem:[#allocation2 + $0x6f8] sm:$0xff]
    %v3458 = vld [vmem:[#allocation2 + $0x700] sm:$0xff]
    %v3459 = vld [vmem:[#allocation2 + $0x708] sm:$0xff]
    %v3460 = vld [vmem:[#allocation2 + $0x710] sm:$0xff]
    %v3461 = vld [vmem:[#allocation2 + $0x718] sm:$0xff]
    %v3462 = vld [vmem:[#allocation2 + $0x720] sm:$0xff]
    %v3463 = vld [vmem:[#allocation2 + $0x728] sm:$0xff]
    %v3464 = vld [vmem:[#allocation2 + $0x730] sm:$0xff]
    %v3465 = vld [vmem:[#allocation2 + $0x738] sm:$0xff]
    %v3466 = vld [vmem:[#allocation2 + $0x740] sm:$0xff]
    %v3467 = vld [vmem:[#allocation2 + $0x748] sm:$0xff]
    %v3468 = vld [vmem:[#allocation2 + $0x750] sm:$0xff]
    %v3469 = vld [vmem:[#allocation2 + $0x758] sm:$0xff]
    %v3470 = vld [vmem:[#allocation2 + $0x760] sm:$0xff]
    %v3471 = vld [vmem:[#allocation2 + $0x768] sm:$0xff]
    %v3472 = vld [vmem:[#allocation2 + $0x770] sm:$0xff]
    %v3473 = vld [vmem:[#allocation2 + $0x778] sm:$0xff]
    %v3474 = vld [vmem:[#allocation2 + $0x780] sm:$0xff]
    %v3475 = vld [vmem:[#allocation2 + $0x788] sm:$0xff]
    %v3476 = vld [vmem:[#allocation2 + $0x790] sm:$0xff]
    %v3477 = vld [vmem:[#allocation2 + $0x798] sm:$0xff]
    %v3478 = vld [vmem:[#allocation2 + $0x7a0] sm:$0xff]
    %v3479 = vld [vmem:[#allocation2 + $0x7a8] sm:$0xff]
    %v3480 = vld [vmem:[#allocation2 + $0x7b0] sm:$0xff]
    %v3481 = vld [vmem:[#allocation2 + $0x7b8] sm:$0xff]
    %v3482 = vld [vmem:[#allocation2 + $0x7c0] sm:$0xff]
    %v3483 = vld [vmem:[#allocation2 + $0x7c8] sm:$0xff]
    %v3484 = vld [vmem:[#allocation2 + $0x7d0] sm:$0xff]
    %v3485 = vld [vmem:[#allocation2 + $0x7d8] sm:$0xff]
    %v3486 = vld [vmem:[#allocation2 + $0x7e0] sm:$0xff]
    %v3487 = vld [vmem:[#allocation2 + $0x7e8] sm:$0xff]
    %v3488 = vld [vmem:[#allocation2 + $0x7f0] sm:$0xff]
    %v3489 = vld [vmem:[#allocation2 + $0x7f8] sm:$0xff]
    %v3490 = vld [vmem:[#allocation2 + $0x800] sm:$0xff]
    %v3491 = vld [vmem:[#allocation2 + $0x808] sm:$0xff]
    %v3492 = vld [vmem:[#allocation2 + $0x810] sm:$0xff]
    %v3493 = vld [vmem:[#allocation2 + $0x818] sm:$0xff]
    %v3494 = vld [vmem:[#allocation2 + $0x820] sm:$0xff]
    %v3495 = vld [vmem:[#allocation2 + $0x828] sm:$0xff]
    %v3496 = vld [vmem:[#allocation2 + $0x830] sm:$0xff]
    %v3497 = vld [vmem:[#allocation2 + $0x838] sm:$0xff]
    %v3498 = vld [vmem:[#allocation2 + $0x840] sm:$0xff]
    %v3499 = vld [vmem:[#allocation2 + $0x848] sm:$0xff]
    %v3500 = vld [vmem:[#allocation2 + $0x850] sm:$0xff]
    %v3501 = vld [vmem:[#allocation2 + $0x858] sm:$0xff]
    %v3502 = vld [vmem:[#allocation2 + $0x860] sm:$0xff]
    %v3503 = vld [vmem:[#allocation2 + $0x868] sm:$0xff]
    %v3504 = vld [vmem:[#allocation2 + $0x870] sm:$0xff]
    %v3505 = vld [vmem:[#allocation2 + $0x878] sm:$0xff]
    %v3506 = vld [vmem:[#allocation2 + $0x880] sm:$0xff]
    %v3507 = vld [vmem:[#allocation2 + $0x888] sm:$0xff]
    %v3508 = vld [vmem:[#allocation2 + $0x890] sm:$0xff]
    %v3509 = vld [vmem:[#allocation2 + $0x898] sm:$0xff]
    %v3510 = vld [vmem:[#allocation2 + $0x8a0] sm:$0xff]
    %v3511 = vld [vmem:[#allocation2 + $0x8a8] sm:$0xff]
    %v3512 = vld [vmem:[#allocation2 + $0x8b0] sm:$0xff]
    %v3513 = vld [vmem:[#allocation2 + $0x8b8] sm:$0xff]
    %v3514 = vld [vmem:[#allocation2 + $0x8c0] sm:$0xff]
    %v3515 = vld [vmem:[#allocation2 + $0x8c8] sm:$0xff]
    %v3516 = vld [vmem:[#allocation2 + $0x8d0] sm:$0xff]
    %v3517 = vld [vmem:[#allocation2 + $0x8d8] sm:$0xff]
    %v3518 = vld [vmem:[#allocation2 + $0x8e0] sm:$0xff]
    %v3519 = vld [vmem:[#allocation2 + $0x8e8] sm:$0xff]
    %v3520 = vld [vmem:[#allocation2 + $0x8f0] sm:$0xff]
    %v3521 = vld [vmem:[#allocation2 + $0x8f8] sm:$0xff]
    %v3522 = vld [vmem:[#allocation2 + $0x900] sm:$0xff]
    %v3523 = vld [vmem:[#allocation2 + $0x908] sm:$0xff]
    %v3524 = vld [vmem:[#allocation2 + $0x910] sm:$0xff]
    %v3525 = vld [vmem:[#allocation2 + $0x918] sm:$0xff]
    %v3526 = vld [vmem:[#allocation2 + $0x920] sm:$0xff]
    %v3527 = vld [vmem:[#allocation2 + $0x928] sm:$0xff]
    %v3528 = vld [vmem:[#allocation2 + $0x930] sm:$0xff]
    %v3529 = vld [vmem:[#allocation2 + $0x938] sm:$0xff]
    %v3530 = vld [vmem:[#allocation2 + $0x940] sm:$0xff]
    %v3531 = vld [vmem:[#allocation2 + $0x948] sm:$0xff]
    %v3532 = vld [vmem:[#allocation2 + $0x950] sm:$0xff]
    %v3533 = vld [vmem:[#allocation2 + $0x958] sm:$0xff]
    %v3534 = vld [vmem:[#allocation2 + $0x960] sm:$0xff]
    %v3535 = vld [vmem:[#allocation2 + $0x968] sm:$0xff]
    %v3536 = vld [vmem:[#allocation2 + $0x970] sm:$0xff]
    %v3537 = vld [vmem:[#allocation2 + $0x978] sm:$0xff]
    %v3538 = vld [vmem:[#allocation2 + $0x980] sm:$0xff]
    %v3539 = vld [vmem:[#allocation2 + $0x988] sm:$0xff]
    %v3540 = vld [vmem:[#allocation2 + $0x990] sm:$0xff]
    %v3541 = vld [vmem:[#allocation2 + $0x998] sm:$0xff]
    %v3542 = vld [vmem:[#allocation2 + $0x9a0] sm:$0xff]
    %v3543 = vld [vmem:[#allocation2 + $0x9a8] sm:$0xff]
    %v3544 = vld [vmem:[#allocation2 + $0x9b0] sm:$0xff]
    %v3545 = vld [vmem:[#allocation2 + $0x9b8] sm:$0xff]
    %v3546 = vld [vmem:[#allocation2 + $0x9c0] sm:$0xff]
    %v3547 = vld [vmem:[#allocation2 + $0x9c8] sm:$0xff]
    %v3548 = vld [vmem:[#allocation2 + $0x9d0] sm:$0xff]
    %v3549 = vld [vmem:[#allocation2 + $0x9d8] sm:$0xff]
    %v3550 = vld [vmem:[#allocation2 + $0x9e0] sm:$0xff]
    %v3551 = vld [vmem:[#allocation2 + $0x9e8] sm:$0xff]
    %v3552 = vld [vmem:[#allocation2 + $0x9f0] sm:$0xff]
    %v3553 = vld [vmem:[#allocation2 + $0x9f8] sm:$0xff]
    %v3554 = vld [vmem:[#allocation2 + $0xa00] sm:$0xff]
    %v3555 = vld [vmem:[#allocation2 + $0xa08] sm:$0xff]
    %v3556 = vld [vmem:[#allocation2 + $0xa10] sm:$0xff]
    %v3557 = vld [vmem:[#allocation2 + $0xa18] sm:$0xff]
    %v3558 = vpack.c.bf16 %v3236, %v3234
    %v3559 = vpack.c.bf16 %v3240, %v3238
    %v3560 = vpack.c.bf16 %v3244, %v3242
    %v3561 = vpack.c.bf16 %v3248, %v3246
    %v3562 = vpack.c.bf16 %v3272, %v3270
    %v3563 = vpack.c.bf16 %v3276, %v3274
    %v3564 = vpack.c.bf16 %v3280, %v3278
    %v3565 = vpack.c.bf16 %v3284, %v3282
    %v3566 = vpack.c.bf16 %v3308, %v3306
    %v3567 = vpack.c.bf16 %v3312, %v3310
    %v3568 = vpack.c.bf16 %v3316, %v3314
    %v3569 = vpack.c.bf16 %v3320, %v3318
    %v3570 = vpack.c.bf16 %v3344, %v3342
    %v3571 = vpack.c.bf16 %v3348, %v3346
    %v3572 = vpack.c.bf16 %v3352, %v3350
    %v3573 = vpack.c.bf16 %v3356, %v3354
    %v3574 = vpack.c.bf16 %v3380, %v3378
    %v3575 = vpack.c.bf16 %v3384, %v3382
    %v3576 = vpack.c.bf16 %v3388, %v3386
    %v3577 = vpack.c.bf16 %v3392, %v3390
    %v3578 = vpack.c.bf16 %v3416, %v3414
    %v3579 = vpack.c.bf16 %v3420, %v3418
    %v3580 = vpack.c.bf16 %v3424, %v3422
    %v3581 = vpack.c.bf16 %v3428, %v3426
    %v3582 = vpack.c.bf16 %v3452, %v3450
    %v3583 = vpack.c.bf16 %v3456, %v3454
    %v3584 = vpack.c.bf16 %v3460, %v3458
    %v3585 = vpack.c.bf16 %v3464, %v3462
    %v3586 = vpack.c.bf16 %v3488, %v3486
    %v3587 = vpack.c.bf16 %v3492, %v3490
    %v3588 = vpack.c.bf16 %v3496, %v3494
    %v3589 = vpack.c.bf16 %v3500, %v3498
    %3590 = vst.msk [vmem:[#allocation5] sm:$0xff] %vm2905, %v3558
    %3591 = vst.msk [vmem:[#allocation5 + $0x8] sm:$0xff] %vm2905, %v3559
    %3592 = vst.msk [vmem:[#allocation5 + $0x10] sm:$0xff] %vm2905, %v3560
    %3593 = vst.msk [vmem:[#allocation5 + $0x18] sm:$0xff] %vm2905, %v3561
    %3594 = vst.msk [vmem:[#allocation5 + $0x20] sm:$0xff] %vm2905, %v3562
    %3595 = vst.msk [vmem:[#allocation5 + $0x28] sm:$0xff] %vm2905, %v3563
    %3596 = vst.msk [vmem:[#allocation5 + $0x30] sm:$0xff] %vm2905, %v3564
    %3597 = vst.msk [vmem:[#allocation5 + $0x38] sm:$0xff] %vm2905, %v3565
    %3598 = vst.msk [vmem:[#allocation5 + $0x40] sm:$0xff] %vm2905, %v3566
    %3599 = vst.msk [vmem:[#allocation5 + $0x48] sm:$0xff] %vm2905, %v3567
    %3600 = vst.msk [vmem:[#allocation5 + $0x50] sm:$0xff] %vm2905, %v3568
    %3601 = vst.msk [vmem:[#allocation5 + $0x58] sm:$0xff] %vm2905, %v3569
    %3602 = vst.msk [vmem:[#allocation5 + $0x60] sm:$0xff] %vm2905, %v3570
    %3603 = vst.msk [vmem:[#allocation5 + $0x68] sm:$0xff] %vm2905, %v3571
    %3604 = vst.msk [vmem:[#allocation5 + $0x70] sm:$0xff] %vm2905, %v3572
    %3605 = vst.msk [vmem:[#allocation5 + $0x78] sm:$0xff] %vm2905, %v3573
    %3606 = vst.msk [vmem:[#allocation5 + $0x80] sm:$0xff] %vm2905, %v3574
    %3607 = vst.msk [vmem:[#allocation5 + $0x88] sm:$0xff] %vm2905, %v3575
    %3608 = vst.msk [vmem:[#allocation5 + $0x90] sm:$0xff] %vm2905, %v3576
    %3609 = vst.msk [vmem:[#allocation5 + $0x98] sm:$0xff] %vm2905, %v3577
    %3610 = vst.msk [vmem:[#allocation5 + $0xa0] sm:$0xff] %vm2905, %v3578
    %3611 = vst.msk [vmem:[#allocation5 + $0xa8] sm:$0xff] %vm2905, %v3579
    %3612 = vst.msk [vmem:[#allocation5 + $0xb0] sm:$0xff] %vm2905, %v3580
    %3613 = vst.msk [vmem:[#allocation5 + $0xb8] sm:$0xff] %vm2905, %v3581
    %3614 = vst.msk [vmem:[#allocation5 + $0xc0] sm:$0xff] %vm2905, %v3582
    %3615 = vst.msk [vmem:[#allocation5 + $0xc8] sm:$0xff] %vm2905, %v3583
    %3616 = vst.msk [vmem:[#allocation5 + $0xd0] sm:$0xff] %vm2905, %v3584
    %3617 = vst.msk [vmem:[#allocation5 + $0xd8] sm:$0xff] %vm2905, %v3585
    %3618 = vst.msk [vmem:[#allocation5 + $0xe0] sm:$0xff] %vm2905, %v3586
    %3619 = vst.msk [vmem:[#allocation5 + $0xe8] sm:$0xff] %vm2905, %v3587
    %3620 = vst.msk [vmem:[#allocation5 + $0xf0] sm:$0xff] %vm2905, %v3588
    %3621 = vst.msk [vmem:[#allocation5 + $0xf8] sm:$0xff] %vm2905, %v3589
    %v3622 = vpack.c.bf16 %v3237, %v3235
    %v3623 = vpack.c.bf16 %v3241, %v3239
    %v3624 = vpack.c.bf16 %v3245, %v3243
    %v3625 = vpack.c.bf16 %v3249, %v3247
    %v3626 = vpack.c.bf16 %v3273, %v3271
    %v3627 = vpack.c.bf16 %v3277, %v3275
    %v3628 = vpack.c.bf16 %v3281, %v3279
    %v3629 = vpack.c.bf16 %v3285, %v3283
    %v3630 = vpack.c.bf16 %v3309, %v3307
    %v3631 = vpack.c.bf16 %v3313, %v3311
    %v3632 = vpack.c.bf16 %v3317, %v3315
    %v3633 = vpack.c.bf16 %v3321, %v3319
    %v3634 = vpack.c.bf16 %v3345, %v3343
    %v3635 = vpack.c.bf16 %v3349, %v3347
    %v3636 = vpack.c.bf16 %v3353, %v3351
    %v3637 = vpack.c.bf16 %v3357, %v3355
    %v3638 = vpack.c.bf16 %v3381, %v3379
    %v3639 = vpack.c.bf16 %v3385, %v3383
    %v3640 = vpack.c.bf16 %v3389, %v3387
    %v3641 = vpack.c.bf16 %v3393, %v3391
    %v3642 = vpack.c.bf16 %v3417, %v3415
    %v3643 = vpack.c.bf16 %v3421, %v3419
    %v3644 = vpack.c.bf16 %v3425, %v3423
    %v3645 = vpack.c.bf16 %v3429, %v3427
    %v3646 = vpack.c.bf16 %v3453, %v3451
    %v3647 = vpack.c.bf16 %v3457, %v3455
    %v3648 = vpack.c.bf16 %v3461, %v3459
    %v3649 = vpack.c.bf16 %v3465, %v3463
    %v3650 = vpack.c.bf16 %v3489, %v3487
    %v3651 = vpack.c.bf16 %v3493, %v3491
    %v3652 = vpack.c.bf16 %v3497, %v3495
    %v3653 = vpack.c.bf16 %v3501, %v3499
    %3686 = vrot.lane.b32.xlu0 %v3622, 8
    %v3687 = vpop.permute.xlu0 %3686
    %3688 = vrot.lane.b32.xlu0 %v3623, 8
    %v3689 = vpop.permute.xlu0 %3688
    %3690 = vrot.lane.b32.xlu0 %v3624, 8
    %v3691 = vpop.permute.xlu0 %3690
    %3692 = vrot.lane.b32.xlu0 %v3625, 8
    %v3693 = vpop.permute.xlu0 %3692
    %3694 = vrot.lane.b32.xlu0 %v3626, 8
    %v3695 = vpop.permute.xlu0 %3694
    %3696 = vrot.lane.b32.xlu0 %v3627, 8
    %v3697 = vpop.permute.xlu0 %3696
    %3698 = vrot.lane.b32.xlu0 %v3628, 8
    %v3699 = vpop.permute.xlu0 %3698
    %3700 = vrot.lane.b32.xlu0 %v3629, 8
    %v3701 = vpop.permute.xlu0 %3700
    %3702 = vrot.lane.b32.xlu0 %v3630, 8
    %v3703 = vpop.permute.xlu0 %3702
    %3704 = vrot.lane.b32.xlu0 %v3631, 8
    %v3705 = vpop.permute.xlu0 %3704
    %3706 = vrot.lane.b32.xlu0 %v3632, 8
    %v3707 = vpop.permute.xlu0 %3706
    %3708 = vrot.lane.b32.xlu0 %v3633, 8
    %v3709 = vpop.permute.xlu0 %3708
    %3710 = vrot.lane.b32.xlu0 %v3634, 8
    %v3711 = vpop.permute.xlu0 %3710
    %3712 = vrot.lane.b32.xlu0 %v3635, 8
    %v3713 = vpop.permute.xlu0 %3712
    %3714 = vrot.lane.b32.xlu0 %v3636, 8
    %v3715 = vpop.permute.xlu0 %3714
    %3716 = vrot.lane.b32.xlu0 %v3637, 8
    %v3717 = vpop.permute.xlu0 %3716
    %3718 = vrot.lane.b32.xlu0 %v3638, 8
    %v3719 = vpop.permute.xlu0 %3718
    %3720 = vrot.lane.b32.xlu0 %v3639, 8
    %v3721 = vpop.permute.xlu0 %3720
    %3722 = vrot.lane.b32.xlu0 %v3640, 8
    %v3723 = vpop.permute.xlu0 %3722
    %3724 = vrot.lane.b32.xlu0 %v3641, 8
    %v3725 = vpop.permute.xlu0 %3724
    %3726 = vrot.lane.b32.xlu0 %v3642, 8
    %v3727 = vpop.permute.xlu0 %3726
    %3728 = vrot.lane.b32.xlu0 %v3643, 8
    %v3729 = vpop.permute.xlu0 %3728
    %3730 = vrot.lane.b32.xlu0 %v3644, 8
    %v3731 = vpop.permute.xlu0 %3730
    %3732 = vrot.lane.b32.xlu0 %v3645, 8
    %v3733 = vpop.permute.xlu0 %3732
    %3734 = vrot.lane.b32.xlu0 %v3646, 8
    %v3735 = vpop.permute.xlu0 %3734
    %3736 = vrot.lane.b32.xlu0 %v3647, 8
    %v3737 = vpop.permute.xlu0 %3736
    %3738 = vrot.lane.b32.xlu0 %v3648, 8
    %v3739 = vpop.permute.xlu0 %3738
    %3740 = vrot.lane.b32.xlu0 %v3649, 8
    %v3741 = vpop.permute.xlu0 %3740
    %3742 = vrot.lane.b32.xlu0 %v3650, 8
    %v3743 = vpop.permute.xlu0 %3742
    %3744 = vrot.lane.b32.xlu0 %v3651, 8
    %v3745 = vpop.permute.xlu0 %3744
    %3746 = vrot.lane.b32.xlu0 %v3652, 8
    %v3747 = vpop.permute.xlu0 %3746
    %3748 = vrot.lane.b32.xlu0 %v3653, 8
    %v3749 = vpop.permute.xlu0 %3748
    %vm3782 = vcmask 130112
    %3783 = vst.msk [vmem:[#allocation5] sm:$0xff] %vm3782, %v3687
    %3784 = vst.msk [vmem:[#allocation5 + $0x8] sm:$0xff] %vm3782, %v3689
    %3785 = vst.msk [vmem:[#allocation5 + $0x10] sm:$0xff] %vm3782, %v3691
    %3786 = vst.msk [vmem:[#allocation5 + $0x18] sm:$0xff] %vm3782, %v3693
    %3787 = vst.msk [vmem:[#allocation5 + $0x20] sm:$0xff] %vm3782, %v3695
    %3788 = vst.msk [vmem:[#allocation5 + $0x28] sm:$0xff] %vm3782, %v3697
    %3789 = vst.msk [vmem:[#allocation5 + $0x30] sm:$0xff] %vm3782, %v3699
    %3790 = vst.msk [vmem:[#allocation5 + $0x38] sm:$0xff] %vm3782, %v3701
    %3791 = vst.msk [vmem:[#allocation5 + $0x40] sm:$0xff] %vm3782, %v3703
    %3792 = vst.msk [vmem:[#allocation5 + $0x48] sm:$0xff] %vm3782, %v3705
    %3793 = vst.msk [vmem:[#allocation5 + $0x50] sm:$0xff] %vm3782, %v3707
    %3794 = vst.msk [vmem:[#allocation5 + $0x58] sm:$0xff] %vm3782, %v3709
    %3795 = vst.msk [vmem:[#allocation5 + $0x60] sm:$0xff] %vm3782, %v3711
    %3796 = vst.msk [vmem:[#allocation5 + $0x68] sm:$0xff] %vm3782, %v3713
    %3797 = vst.msk [vmem:[#allocation5 + $0x70] sm:$0xff] %vm3782, %v3715
    %3798 = vst.msk [vmem:[#allocation5 + $0x78] sm:$0xff] %vm3782, %v3717
    %3799 = vst.msk [vmem:[#allocation5 + $0x80] sm:$0xff] %vm3782, %v3719
    %3800 = vst.msk [vmem:[#allocation5 + $0x88] sm:$0xff] %vm3782, %v3721
    %3801 = vst.msk [vmem:[#allocation5 + $0x90] sm:$0xff] %vm3782, %v3723
    %3802 = vst.msk [vmem:[#allocation5 + $0x98] sm:$0xff] %vm3782, %v3725
    %3803 = vst.msk [vmem:[#allocation5 + $0xa0] sm:$0xff] %vm3782, %v3727
    %3804 = vst.msk [vmem:[#allocation5 + $0xa8] sm:$0xff] %vm3782, %v3729
    %3805 = vst.msk [vmem:[#allocation5 + $0xb0] sm:$0xff] %vm3782, %v3731
    %3806 = vst.msk [vmem:[#allocation5 + $0xb8] sm:$0xff] %vm3782, %v3733
    %3807 = vst.msk [vmem:[#allocation5 + $0xc0] sm:$0xff] %vm3782, %v3735
    %3808 = vst.msk [vmem:[#allocation5 + $0xc8] sm:$0xff] %vm3782, %v3737
    %3809 = vst.msk [vmem:[#allocation5 + $0xd0] sm:$0xff] %vm3782, %v3739
    %3810 = vst.msk [vmem:[#allocation5 + $0xd8] sm:$0xff] %vm3782, %v3741
    %3811 = vst.msk [vmem:[#allocation5 + $0xe0] sm:$0xff] %vm3782, %v3743
    %3812 = vst.msk [vmem:[#allocation5 + $0xe8] sm:$0xff] %vm3782, %v3745
    %3813 = vst.msk [vmem:[#allocation5 + $0xf0] sm:$0xff] %vm3782, %v3747
    %3814 = vst.msk [vmem:[#allocation5 + $0xf8] sm:$0xff] %vm3782, %v3749
    %v3815 = vpack.c.bf16 %v3238, %v3236
    %v3816 = vpack.c.bf16 %v3242, %v3240
    %v3817 = vpack.c.bf16 %v3246, %v3244
    %v3818 = vpack.c.bf16 %v3250, %v3248
    %v3819 = vpack.c.bf16 %v3274, %v3272
    %v3820 = vpack.c.bf16 %v3278, %v3276
    %v3821 = vpack.c.bf16 %v3282, %v3280
    %v3822 = vpack.c.bf16 %v3286, %v3284
    %v3823 = vpack.c.bf16 %v3310, %v3308
    %v3824 = vpack.c.bf16 %v3314, %v3312
    %v3825 = vpack.c.bf16 %v3318, %v3316
    %v3826 = vpack.c.bf16 %v3322, %v3320
    %v3827 = vpack.c.bf16 %v3346, %v3344
    %v3828 = vpack.c.bf16 %v3350, %v3348
    %v3829 = vpack.c.bf16 %v3354, %v3352
    %v3830 = vpack.c.bf16 %v3358, %v3356
    %v3831 = vpack.c.bf16 %v3382, %v3380
    %v3832 = vpack.c.bf16 %v3386, %v3384
    %v3833 = vpack.c.bf16 %v3390, %v3388
    %v3834 = vpack.c.bf16 %v3394, %v3392
    %v3835 = vpack.c.bf16 %v3418, %v3416
    %v3836 = vpack.c.bf16 %v3422, %v3420
    %v3837 = vpack.c.bf16 %v3426, %v3424
    %v3838 = vpack.c.bf16 %v3430, %v3428
    %v3839 = vpack.c.bf16 %v3454, %v3452
    %v3840 = vpack.c.bf16 %v3458, %v3456
    %v3841 = vpack.c.bf16 %v3462, %v3460
    %v3842 = vpack.c.bf16 %v3466, %v3464
    %v3843 = vpack.c.bf16 %v3490, %v3488
    %v3844 = vpack.c.bf16 %v3494, %v3492
    %v3845 = vpack.c.bf16 %v3498, %v3496
    %v3846 = vpack.c.bf16 %v3502, %v3500
    %3879 = vrot.lane.b32.xlu0 %v3815, 16
    %v3880 = vpop.permute.xlu0 %3879
    %3881 = vrot.lane.b32.xlu0 %v3816, 16
    %v3882 = vpop.permute.xlu0 %3881
    %3883 = vrot.lane.b32.xlu0 %v3817, 16
    %v3884 = vpop.permute.xlu0 %3883
    %3885 = vrot.lane.b32.xlu0 %v3818, 16
    %v3886 = vpop.permute.xlu0 %3885
    %3887 = vrot.lane.b32.xlu0 %v3819, 16
    %v3888 = vpop.permute.xlu0 %3887
    %3889 = vrot.lane.b32.xlu0 %v3820, 16
    %v3890 = vpop.permute.xlu0 %3889
    %3891 = vrot.lane.b32.xlu0 %v3821, 16
    %v3892 = vpop.permute.xlu0 %3891
    %3893 = vrot.lane.b32.xlu0 %v3822, 16
    %v3894 = vpop.permute.xlu0 %3893
    %3895 = vrot.lane.b32.xlu0 %v3823, 16
    %v3896 = vpop.permute.xlu0 %3895
    %3897 = vrot.lane.b32.xlu0 %v3824, 16
    %v3898 = vpop.permute.xlu0 %3897
    %3899 = vrot.lane.b32.xlu0 %v3825, 16
    %v3900 = vpop.permute.xlu0 %3899
    %3901 = vrot.lane.b32.xlu0 %v3826, 16
    %v3902 = vpop.permute.xlu0 %3901
    %3903 = vrot.lane.b32.xlu0 %v3827, 16
    %v3904 = vpop.permute.xlu0 %3903
    %3905 = vrot.lane.b32.xlu0 %v3828, 16
    %v3906 = vpop.permute.xlu0 %3905
    %3907 = vrot.lane.b32.xlu0 %v3829, 16
    %v3908 = vpop.permute.xlu0 %3907
    %3909 = vrot.lane.b32.xlu0 %v3830, 16
    %v3910 = vpop.permute.xlu0 %3909
    %3911 = vrot.lane.b32.xlu0 %v3831, 16
    %v3912 = vpop.permute.xlu0 %3911
    %3913 = vrot.lane.b32.xlu0 %v3832, 16
    %v3914 = vpop.permute.xlu0 %3913
    %3915 = vrot.lane.b32.xlu0 %v3833, 16
    %v3916 = vpop.permute.xlu0 %3915
    %3917 = vrot.lane.b32.xlu0 %v3834, 16
    %v3918 = vpop.permute.xlu0 %3917
    %3919 = vrot.lane.b32.xlu0 %v3835, 16
    %v3920 = vpop.permute.xlu0 %3919
    %3921 = vrot.lane.b32.xlu0 %v3836, 16
    %v3922 = vpop.permute.xlu0 %3921
    %3923 = vrot.lane.b32.xlu0 %v3837, 16
    %v3924 = vpop.permute.xlu0 %3923
    %3925 = vrot.lane.b32.xlu0 %v3838, 16
    %v3926 = vpop.permute.xlu0 %3925
    %3927 = vrot.lane.b32.xlu0 %v3839, 16
    %v3928 = vpop.permute.xlu0 %3927
    %3929 = vrot.lane.b32.xlu0 %v3840, 16
    %v3930 = vpop.permute.xlu0 %3929
    %3931 = vrot.lane.b32.xlu0 %v3841, 16
    %v3932 = vpop.permute.xlu0 %3931
    %3933 = vrot.lane.b32.xlu0 %v3842, 16
    %v3934 = vpop.permute.xlu0 %3933
    %3935 = vrot.lane.b32.xlu0 %v3843, 16
    %v3936 = vpop.permute.xlu0 %3935
    %3937 = vrot.lane.b32.xlu0 %v3844, 16
    %v3938 = vpop.permute.xlu0 %3937
    %3939 = vrot.lane.b32.xlu0 %v3845, 16
    %v3940 = vpop.permute.xlu0 %3939
    %3941 = vrot.lane.b32.xlu0 %v3846, 16
    %v3942 = vpop.permute.xlu0 %3941
    %vm3975 = vcmask 195712
    %3976 = vst.msk [vmem:[#allocation5] sm:$0xff] %vm3975, %v3880
    %3977 = vst.msk [vmem:[#allocation5 + $0x8] sm:$0xff] %vm3975, %v3882
    %3978 = vst.msk [vmem:[#allocation5 + $0x10] sm:$0xff] %vm3975, %v3884
    %3979 = vst.msk [vmem:[#allocation5 + $0x18] sm:$0xff] %vm3975, %v3886
    %3980 = vst.msk [vmem:[#allocation5 + $0x20] sm:$0xff] %vm3975, %v3888
    %3981 = vst.msk [vmem:[#allocation5 + $0x28] sm:$0xff] %vm3975, %v3890
    %3982 = vst.msk [vmem:[#allocation5 + $0x30] sm:$0xff] %vm3975, %v3892
    %3983 = vst.msk [vmem:[#allocation5 + $0x38] sm:$0xff] %vm3975, %v3894
    %3984 = vst.msk [vmem:[#allocation5 + $0x40] sm:$0xff] %vm3975, %v3896
    %3985 = vst.msk [vmem:[#allocation5 + $0x48] sm:$0xff] %vm3975, %v3898
    %3986 = vst.msk [vmem:[#allocation5 + $0x50] sm:$0xff] %vm3975, %v3900
    %3987 = vst.msk [vmem:[#allocation5 + $0x58] sm:$0xff] %vm3975, %v3902
    %3988 = vst.msk [vmem:[#allocation5 + $0x60] sm:$0xff] %vm3975, %v3904
    %3989 = vst.msk [vmem:[#allocation5 + $0x68] sm:$0xff] %vm3975, %v3906
    %3990 = vst.msk [vmem:[#allocation5 + $0x70] sm:$0xff] %vm3975, %v3908
    %3991 = vst.msk [vmem:[#allocation5 + $0x78] sm:$0xff] %vm3975, %v3910
    %3992 = vst.msk [vmem:[#allocation5 + $0x80] sm:$0xff] %vm3975, %v3912
    %3993 = vst.msk [vmem:[#allocation5 + $0x88] sm:$0xff] %vm3975, %v3914
    %3994 = vst.msk [vmem:[#allocation5 + $0x90] sm:$0xff] %vm3975, %v3916
    %3995 = vst.msk [vmem:[#allocation5 + $0x98] sm:$0xff] %vm3975, %v3918
    %3996 = vst.msk [vmem:[#allocation5 + $0xa0] sm:$0xff] %vm3975, %v3920
    %3997 = vst.msk [vmem:[#allocation5 + $0xa8] sm:$0xff] %vm3975, %v3922
    %3998 = vst.msk [vmem:[#allocation5 + $0xb0] sm:$0xff] %vm3975, %v3924
    %3999 = vst.msk [vmem:[#allocation5 + $0xb8] sm:$0xff] %vm3975, %v3926
    %4000 = vst.msk [vmem:[#allocation5 + $0xc0] sm:$0xff] %vm3975, %v3928
    %4001 = vst.msk [vmem:[#allocation5 + $0xc8] sm:$0xff] %vm3975, %v3930
    %4002 = vst.msk [vmem:[#allocation5 + $0xd0] sm:$0xff] %vm3975, %v3932
    %4003 = vst.msk [vmem:[#allocation5 + $0xd8] sm:$0xff] %vm3975, %v3934
    %4004 = vst.msk [vmem:[#allocation5 + $0xe0] sm:$0xff] %vm3975, %v3936
    %4005 = vst.msk [vmem:[#allocation5 + $0xe8] sm:$0xff] %vm3975, %v3938
    %4006 = vst.msk [vmem:[#allocation5 + $0xf0] sm:$0xff] %vm3975, %v3940
    %4007 = vst.msk [vmem:[#allocation5 + $0xf8] sm:$0xff] %vm3975, %v3942
    %v4008 = vpack.c.bf16 %v3239, %v3237
    %v4009 = vpack.c.bf16 %v3243, %v3241
    %v4010 = vpack.c.bf16 %v3247, %v3245
    %v4011 = vpack.c.bf16 %v3251, %v3249
    %v4012 = vpack.c.bf16 %v3275, %v3273
    %v4013 = vpack.c.bf16 %v3279, %v3277
    %v4014 = vpack.c.bf16 %v3283, %v3281
    %v4015 = vpack.c.bf16 %v3287, %v3285
    %v4016 = vpack.c.bf16 %v3311, %v3309
    %v4017 = vpack.c.bf16 %v3315, %v3313
    %v4018 = vpack.c.bf16 %v3319, %v3317
    %v4019 = vpack.c.bf16 %v3323, %v3321
    %v4020 = vpack.c.bf16 %v3347, %v3345
    %v4021 = vpack.c.bf16 %v3351, %v3349
    %v4022 = vpack.c.bf16 %v3355, %v3353
    %v4023 = vpack.c.bf16 %v3359, %v3357
    %v4024 = vpack.c.bf16 %v3383, %v3381
    %v4025 = vpack.c.bf16 %v3387, %v3385
    %v4026 = vpack.c.bf16 %v3391, %v3389
    %v4027 = vpack.c.bf16 %v3395, %v3393
    %v4028 = vpack.c.bf16 %v3419, %v3417
    %v4029 = vpack.c.bf16 %v3423, %v3421
    %v4030 = vpack.c.bf16 %v3427, %v3425
    %v4031 = vpack.c.bf16 %v3431, %v3429
    %v4032 = vpack.c.bf16 %v3455, %v3453
    %v4033 = vpack.c.bf16 %v3459, %v3457
    %v4034 = vpack.c.bf16 %v3463, %v3461
    %v4035 = vpack.c.bf16 %v3467, %v3465
    %v4036 = vpack.c.bf16 %v3491, %v3489
    %v4037 = vpack.c.bf16 %v3495, %v3493
    %v4038 = vpack.c.bf16 %v3499, %v3497
    %v4039 = vpack.c.bf16 %v3503, %v3501
    %4072 = vrot.lane.b32.xlu0 %v4008, 24
    %v4073 = vpop.permute.xlu0 %4072
    %4074 = vrot.lane.b32.xlu0 %v4009, 24
    %v4075 = vpop.permute.xlu0 %4074
    %4076 = vrot.lane.b32.xlu0 %v4010, 24
    %v4077 = vpop.permute.xlu0 %4076
    %4078 = vrot.lane.b32.xlu0 %v4011, 24
    %v4079 = vpop.permute.xlu0 %4078
    %4080 = vrot.lane.b32.xlu0 %v4012, 24
    %v4081 = vpop.permute.xlu0 %4080
    %4082 = vrot.lane.b32.xlu0 %v4013, 24
    %v4083 = vpop.permute.xlu0 %4082
    %4084 = vrot.lane.b32.xlu0 %v4014, 24
    %v4085 = vpop.permute.xlu0 %4084
    %4086 = vrot.lane.b32.xlu0 %v4015, 24
    %v4087 = vpop.permute.xlu0 %4086
    %4088 = vrot.lane.b32.xlu0 %v4016, 24
    %v4089 = vpop.permute.xlu0 %4088
    %4090 = vrot.lane.b32.xlu0 %v4017, 24
    %v4091 = vpop.permute.xlu0 %4090
    %4092 = vrot.lane.b32.xlu0 %v4018, 24
    %v4093 = vpop.permute.xlu0 %4092
    %4094 = vrot.lane.b32.xlu0 %v4019, 24
    %v4095 = vpop.permute.xlu0 %4094
    %4096 = vrot.lane.b32.xlu0 %v4020, 24
    %v4097 = vpop.permute.xlu0 %4096
    %4098 = vrot.lane.b32.xlu0 %v4021, 24
    %v4099 = vpop.permute.xlu0 %4098
    %4100 = vrot.lane.b32.xlu0 %v4022, 24
    %v4101 = vpop.permute.xlu0 %4100
    %4102 = vrot.lane.b32.xlu0 %v4023, 24
    %v4103 = vpop.permute.xlu0 %4102
    %4104 = vrot.lane.b32.xlu0 %v4024, 24
    %v4105 = vpop.permute.xlu0 %4104
    %4106 = vrot.lane.b32.xlu0 %v4025, 24
    %v4107 = vpop.permute.xlu0 %4106
    %4108 = vrot.lane.b32.xlu0 %v4026, 24
    %v4109 = vpop.permute.xlu0 %4108
    %4110 = vrot.lane.b32.xlu0 %v4027, 24
    %v4111 = vpop.permute.xlu0 %4110
    %4112 = vrot.lane.b32.xlu0 %v4028, 24
    %v4113 = vpop.permute.xlu0 %4112
    %4114 = vrot.lane.b32.xlu0 %v4029, 24
    %v4115 = vpop.permute.xlu0 %4114
    %4116 = vrot.lane.b32.xlu0 %v4030, 24
    %v4117 = vpop.permute.xlu0 %4116
    %4118 = vrot.lane.b32.xlu0 %v4031, 24
    %v4119 = vpop.permute.xlu0 %4118
    %4120 = vrot.lane.b32.xlu0 %v4032, 24
    %v4121 = vpop.permute.xlu0 %4120
    %4122 = vrot.lane.b32.xlu0 %v4033, 24
    %v4123 = vpop.permute.xlu0 %4122
    %4124 = vrot.lane.b32.xlu0 %v4034, 24
    %v4125 = vpop.permute.xlu0 %4124
    %4126 = vrot.lane.b32.xlu0 %v4035, 24
    %v4127 = vpop.permute.xlu0 %4126
    %4128 = vrot.lane.b32.xlu0 %v4036, 24
    %v4129 = vpop.permute.xlu0 %4128
    %4130 = vrot.lane.b32.xlu0 %v4037, 24
    %v4131 = vpop.permute.xlu0 %4130
    %4132 = vrot.lane.b32.xlu0 %v4038, 24
    %v4133 = vpop.permute.xlu0 %4132
    %4134 = vrot.lane.b32.xlu0 %v4039, 24
    %v4135 = vpop.permute.xlu0 %4134
    %vm4168 = vcmask 261312
    %4169 = vst.msk [vmem:[#allocation5] sm:$0xff] %vm4168, %v4073
    %4170 = vst.msk [vmem:[#allocation5 + $0x8] sm:$0xff] %vm4168, %v4075
    %4171 = vst.msk [vmem:[#allocation5 + $0x10] sm:$0xff] %vm4168, %v4077
    %4172 = vst.msk [vmem:[#allocation5 + $0x18] sm:$0xff] %vm4168, %v4079
    %4173 = vst.msk [vmem:[#allocation5 + $0x20] sm:$0xff] %vm4168, %v4081
    %4174 = vst.msk [vmem:[#allocation5 + $0x28] sm:$0xff] %vm4168, %v4083
    %4175 = vst.msk [vmem:[#allocation5 + $0x30] sm:$0xff] %vm4168, %v4085
    %4176 = vst.msk [vmem:[#allocation5 + $0x38] sm:$0xff] %vm4168, %v4087
    %4177 = vst.msk [vmem:[#allocation5 + $0x40] sm:$0xff] %vm4168, %v4089
    %4178 = vst.msk [vmem:[#allocation5 + $0x48] sm:$0xff] %vm4168, %v4091
    %4179 = vst.msk [vmem:[#allocation5 + $0x50] sm:$0xff] %vm4168, %v4093
    %4180 = vst.msk [vmem:[#allocation5 + $0x58] sm:$0xff] %vm4168, %v4095
    %4181 = vst.msk [vmem:[#allocation5 + $0x60] sm:$0xff] %vm4168, %v4097
    %4182 = vst.msk [vmem:[#allocation5 + $0x68] sm:$0xff] %vm4168, %v4099
    %4183 = vst.msk [vmem:[#allocation5 + $0x70] sm:$0xff] %vm4168, %v4101
    %4184 = vst.msk [vmem:[#allocation5 + $0x78] sm:$0xff] %vm4168, %v4103
    %4185 = vst.msk [vmem:[#allocation5 + $0x80] sm:$0xff] %vm4168, %v4105
    %4186 = vst.msk [vmem:[#allocation5 + $0x88] sm:$0xff] %vm4168, %v4107
    %4187 = vst.msk [vmem:[#allocation5 + $0x90] sm:$0xff] %vm4168, %v4109
    %4188 = vst.msk [vmem:[#allocation5 + $0x98] sm:$0xff] %vm4168, %v4111
    %4189 = vst.msk [vmem:[#allocation5 + $0xa0] sm:$0xff] %vm4168, %v4113
    %4190 = vst.msk [vmem:[#allocation5 + $0xa8] sm:$0xff] %vm4168, %v4115
    %4191 = vst.msk [vmem:[#allocation5 + $0xb0] sm:$0xff] %vm4168, %v4117
    %4192 = vst.msk [vmem:[#allocation5 + $0xb8] sm:$0xff] %vm4168, %v4119
    %4193 = vst.msk [vmem:[#allocation5 + $0xc0] sm:$0xff] %vm4168, %v4121
    %4194 = vst.msk [vmem:[#allocation5 + $0xc8] sm:$0xff] %vm4168, %v4123
    %4195 = vst.msk [vmem:[#allocation5 + $0xd0] sm:$0xff] %vm4168, %v4125
    %4196 = vst.msk [vmem:[#allocation5 + $0xd8] sm:$0xff] %vm4168, %v4127
    %4197 = vst.msk [vmem:[#allocation5 + $0xe0] sm:$0xff] %vm4168, %v4129
    %4198 = vst.msk [vmem:[#allocation5 + $0xe8] sm:$0xff] %vm4168, %v4131
    %4199 = vst.msk [vmem:[#allocation5 + $0xf0] sm:$0xff] %vm4168, %v4133
    %4200 = vst.msk [vmem:[#allocation5 + $0xf8] sm:$0xff] %vm4168, %v4135
    %v4201 = vpack.c.bf16 %v3254, %v3252
    %v4202 = vpack.c.bf16 %v3258, %v3256
    %v4203 = vpack.c.bf16 %v3262, %v3260
    %v4204 = vpack.c.bf16 %v3266, %v3264
    %v4205 = vpack.c.bf16 %v3290, %v3288
    %v4206 = vpack.c.bf16 %v3294, %v3292
    %v4207 = vpack.c.bf16 %v3298, %v3296
    %v4208 = vpack.c.bf16 %v3302, %v3300
    %v4209 = vpack.c.bf16 %v3326, %v3324
    %v4210 = vpack.c.bf16 %v3330, %v3328
    %v4211 = vpack.c.bf16 %v3334, %v3332
    %v4212 = vpack.c.bf16 %v3338, %v3336
    %v4213 = vpack.c.bf16 %v3362, %v3360
    %v4214 = vpack.c.bf16 %v3366, %v3364
    %v4215 = vpack.c.bf16 %v3370, %v3368
    %v4216 = vpack.c.bf16 %v3374, %v3372
    %v4217 = vpack.c.bf16 %v3398, %v3396
    %v4218 = vpack.c.bf16 %v3402, %v3400
    %v4219 = vpack.c.bf16 %v3406, %v3404
    %v4220 = vpack.c.bf16 %v3410, %v3408
    %v4221 = vpack.c.bf16 %v3434, %v3432
    %v4222 = vpack.c.bf16 %v3438, %v3436
    %v4223 = vpack.c.bf16 %v3442, %v3440
    %v4224 = vpack.c.bf16 %v3446, %v3444
    %v4225 = vpack.c.bf16 %v3470, %v3468
    %v4226 = vpack.c.bf16 %v3474, %v3472
    %v4227 = vpack.c.bf16 %v3478, %v3476
    %v4228 = vpack.c.bf16 %v3482, %v3480
    %v4229 = vpack.c.bf16 %v3506, %v3504
    %v4230 = vpack.c.bf16 %v3510, %v3508
    %v4231 = vpack.c.bf16 %v3514, %v3512
    %v4232 = vpack.c.bf16 %v3518, %v3516
    %4265 = vrot.lane.b32.xlu0 %v4201, 32
    %v4266 = vpop.permute.xlu0 %4265
    %4267 = vrot.lane.b32.xlu0 %v4202, 32
    %v4268 = vpop.permute.xlu0 %4267
    %4269 = vrot.lane.b32.xlu0 %v4203, 32
    %v4270 = vpop.permute.xlu0 %4269
    %4271 = vrot.lane.b32.xlu0 %v4204, 32
    %v4272 = vpop.permute.xlu0 %4271
    %4273 = vrot.lane.b32.xlu0 %v4205, 32
    %v4274 = vpop.permute.xlu0 %4273
    %4275 = vrot.lane.b32.xlu0 %v4206, 32
    %v4276 = vpop.permute.xlu0 %4275
    %4277 = vrot.lane.b32.xlu0 %v4207, 32
    %v4278 = vpop.permute.xlu0 %4277
    %4279 = vrot.lane.b32.xlu0 %v4208, 32
    %v4280 = vpop.permute.xlu0 %4279
    %4281 = vrot.lane.b32.xlu0 %v4209, 32
    %v4282 = vpop.permute.xlu0 %4281
    %4283 = vrot.lane.b32.xlu0 %v4210, 32
    %v4284 = vpop.permute.xlu0 %4283
    %4285 = vrot.lane.b32.xlu0 %v4211, 32
    %v4286 = vpop.permute.xlu0 %4285
    %4287 = vrot.lane.b32.xlu0 %v4212, 32
    %v4288 = vpop.permute.xlu0 %4287
    %4289 = vrot.lane.b32.xlu0 %v4213, 32
    %v4290 = vpop.permute.xlu0 %4289
    %4291 = vrot.lane.b32.xlu0 %v4214, 32
    %v4292 = vpop.permute.xlu0 %4291
    %4293 = vrot.lane.b32.xlu0 %v4215, 32
    %v4294 = vpop.permute.xlu0 %4293
    %4295 = vrot.lane.b32.xlu0 %v4216, 32
    %v4296 = vpop.permute.xlu0 %4295
    %4297 = vrot.lane.b32.xlu0 %v4217, 32
    %v4298 = vpop.permute.xlu0 %4297
    %4299 = vrot.lane.b32.xlu0 %v4218, 32
    %v4300 = vpop.permute.xlu0 %4299
    %4301 = vrot.lane.b32.xlu0 %v4219, 32
    %v4302 = vpop.permute.xlu0 %4301
    %4303 = vrot.lane.b32.xlu0 %v4220, 32
    %v4304 = vpop.permute.xlu0 %4303
    %4305 = vrot.lane.b32.xlu0 %v4221, 32
    %v4306 = vpop.permute.xlu0 %4305
    %4307 = vrot.lane.b32.xlu0 %v4222, 32
    %v4308 = vpop.permute.xlu0 %4307
    %4309 = vrot.lane.b32.xlu0 %v4223, 32
    %v4310 = vpop.permute.xlu0 %4309
    %4311 = vrot.lane.b32.xlu0 %v4224, 32
    %v4312 = vpop.permute.xlu0 %4311
    %4313 = vrot.lane.b32.xlu0 %v4225, 32
    %v4314 = vpop.permute.xlu0 %4313
    %4315 = vrot.lane.b32.xlu0 %v4226, 32
    %v4316 = vpop.permute.xlu0 %4315
    %4317 = vrot.lane.b32.xlu0 %v4227, 32
    %v4318 = vpop.permute.xlu0 %4317
    %4319 = vrot.lane.b32.xlu0 %v4228, 32
    %v4320 = vpop.permute.xlu0 %4319
    %4321 = vrot.lane.b32.xlu0 %v4229, 32
    %v4322 = vpop.permute.xlu0 %4321
    %4323 = vrot.lane.b32.xlu0 %v4230, 32
    %v4324 = vpop.permute.xlu0 %4323
    %4325 = vrot.lane.b32.xlu0 %v4231, 32
    %v4326 = vpop.permute.xlu0 %4325
    %4327 = vrot.lane.b32.xlu0 %v4232, 32
    %v4328 = vpop.permute.xlu0 %4327
    %vm4361 = vcmask 326912
    %4362 = vst.msk [vmem:[#allocation5] sm:$0xff] %vm4361, %v4266
    %4363 = vst.msk [vmem:[#allocation5 + $0x8] sm:$0xff] %vm4361, %v4268
    %4364 = vst.msk [vmem:[#allocation5 + $0x10] sm:$0xff] %vm4361, %v4270
    %4365 = vst.msk [vmem:[#allocation5 + $0x18] sm:$0xff] %vm4361, %v4272
    %4366 = vst.msk [vmem:[#allocation5 + $0x20] sm:$0xff] %vm4361, %v4274
    %4367 = vst.msk [vmem:[#allocation5 + $0x28] sm:$0xff] %vm4361, %v4276
    %4368 = vst.msk [vmem:[#allocation5 + $0x30] sm:$0xff] %vm4361, %v4278
    %4369 = vst.msk [vmem:[#allocation5 + $0x38] sm:$0xff] %vm4361, %v4280
    %4370 = vst.msk [vmem:[#allocation5 + $0x40] sm:$0xff] %vm4361, %v4282
    %4371 = vst.msk [vmem:[#allocation5 + $0x48] sm:$0xff] %vm4361, %v4284
    %4372 = vst.msk [vmem:[#allocation5 + $0x50] sm:$0xff] %vm4361, %v4286
    %4373 = vst.msk [vmem:[#allocation5 + $0x58] sm:$0xff] %vm4361, %v4288
    %4374 = vst.msk [vmem:[#allocation5 + $0x60] sm:$0xff] %vm4361, %v4290
    %4375 = vst.msk [vmem:[#allocation5 + $0x68] sm:$0xff] %vm4361, %v4292
    %4376 = vst.msk [vmem:[#allocation5 + $0x70] sm:$0xff] %vm4361, %v4294
    %4377 = vst.msk [vmem:[#allocation5 + $0x78] sm:$0xff] %vm4361, %v4296
    %4378 = vst.msk [vmem:[#allocation5 + $0x80] sm:$0xff] %vm4361, %v4298
    %4379 = vst.msk [vmem:[#allocation5 + $0x88] sm:$0xff] %vm4361, %v4300
    %4380 = vst.msk [vmem:[#allocation5 + $0x90] sm:$0xff] %vm4361, %v4302
    %4381 = vst.msk [vmem:[#allocation5 + $0x98] sm:$0xff] %vm4361, %v4304
    %4382 = vst.msk [vmem:[#allocation5 + $0xa0] sm:$0xff] %vm4361, %v4306
    %4383 = vst.msk [vmem:[#allocation5 + $0xa8] sm:$0xff] %vm4361, %v4308
    %4384 = vst.msk [vmem:[#allocation5 + $0xb0] sm:$0xff] %vm4361, %v4310
    %4385 = vst.msk [vmem:[#allocation5 + $0xb8] sm:$0xff] %vm4361, %v4312
    %4386 = vst.msk [vmem:[#allocation5 + $0xc0] sm:$0xff] %vm4361, %v4314
    %4387 = vst.msk [vmem:[#allocation5 + $0xc8] sm:$0xff] %vm4361, %v4316
    %4388 = vst.msk [vmem:[#allocation5 + $0xd0] sm:$0xff] %vm4361, %v4318
    %4389 = vst.msk [vmem:[#allocation5 + $0xd8] sm:$0xff] %vm4361, %v4320
    %4390 = vst.msk [vmem:[#allocation5 + $0xe0] sm:$0xff] %vm4361, %v4322
    %4391 = vst.msk [vmem:[#allocation5 + $0xe8] sm:$0xff] %vm4361, %v4324
    %4392 = vst.msk [vmem:[#allocation5 + $0xf0] sm:$0xff] %vm4361, %v4326
    %4393 = vst.msk [vmem:[#allocation5 + $0xf8] sm:$0xff] %vm4361, %v4328
    %v4394 = vpack.c.bf16 %v3255, %v3253
    %v4395 = vpack.c.bf16 %v3259, %v3257
    %v4396 = vpack.c.bf16 %v3263, %v3261
    %v4397 = vpack.c.bf16 %v3267, %v3265
    %v4398 = vpack.c.bf16 %v3291, %v3289
    %v4399 = vpack.c.bf16 %v3295, %v3293
    %v4400 = vpack.c.bf16 %v3299, %v3297
    %v4401 = vpack.c.bf16 %v3303, %v3301
    %v4402 = vpack.c.bf16 %v3327, %v3325
    %v4403 = vpack.c.bf16 %v3331, %v3329
    %v4404 = vpack.c.bf16 %v3335, %v3333
    %v4405 = vpack.c.bf16 %v3339, %v3337
    %v4406 = vpack.c.bf16 %v3363, %v3361
    %v4407 = vpack.c.bf16 %v3367, %v3365
    %v4408 = vpack.c.bf16 %v3371, %v3369
    %v4409 = vpack.c.bf16 %v3375, %v3373
    %v4410 = vpack.c.bf16 %v3399, %v3397
    %v4411 = vpack.c.bf16 %v3403, %v3401
    %v4412 = vpack.c.bf16 %v3407, %v3405
    %v4413 = vpack.c.bf16 %v3411, %v3409
    %v4414 = vpack.c.bf16 %v3435, %v3433
    %v4415 = vpack.c.bf16 %v3439, %v3437
    %v4416 = vpack.c.bf16 %v3443, %v3441
    %v4417 = vpack.c.bf16 %v3447, %v3445
    %v4418 = vpack.c.bf16 %v3471, %v3469
    %v4419 = vpack.c.bf16 %v3475, %v3473
    %v4420 = vpack.c.bf16 %v3479, %v3477
    %v4421 = vpack.c.bf16 %v3483, %v3481
    %v4422 = vpack.c.bf16 %v3507, %v3505
    %v4423 = vpack.c.bf16 %v3511, %v3509
    %v4424 = vpack.c.bf16 %v3515, %v3513
    %v4425 = vpack.c.bf16 %v3519, %v3517
    %4458 = vrot.lane.b32.xlu0 %v4394, 40
    %v4459 = vpop.permute.xlu0 %4458
    %4460 = vrot.lane.b32.xlu0 %v4395, 40
    %v4461 = vpop.permute.xlu0 %4460
    %4462 = vrot.lane.b32.xlu0 %v4396, 40
    %v4463 = vpop.permute.xlu0 %4462
    %4464 = vrot.lane.b32.xlu0 %v4397, 40
    %v4465 = vpop.permute.xlu0 %4464
    %4466 = vrot.lane.b32.xlu0 %v4398, 40
    %v4467 = vpop.permute.xlu0 %4466
    %4468 = vrot.lane.b32.xlu0 %v4399, 40
    %v4469 = vpop.permute.xlu0 %4468
    %4470 = vrot.lane.b32.xlu0 %v4400, 40
    %v4471 = vpop.permute.xlu0 %4470
    %4472 = vrot.lane.b32.xlu0 %v4401, 40
    %v4473 = vpop.permute.xlu0 %4472
    %4474 = vrot.lane.b32.xlu0 %v4402, 40
    %v4475 = vpop.permute.xlu0 %4474
    %4476 = vrot.lane.b32.xlu0 %v4403, 40
    %v4477 = vpop.permute.xlu0 %4476
    %4478 = vrot.lane.b32.xlu0 %v4404, 40
    %v4479 = vpop.permute.xlu0 %4478
    %4480 = vrot.lane.b32.xlu0 %v4405, 40
    %v4481 = vpop.permute.xlu0 %4480
    %4482 = vrot.lane.b32.xlu0 %v4406, 40
    %v4483 = vpop.permute.xlu0 %4482
    %4484 = vrot.lane.b32.xlu0 %v4407, 40
    %v4485 = vpop.permute.xlu0 %4484
    %4486 = vrot.lane.b32.xlu0 %v4408, 40
    %v4487 = vpop.permute.xlu0 %4486
    %4488 = vrot.lane.b32.xlu0 %v4409, 40
    %v4489 = vpop.permute.xlu0 %4488
    %4490 = vrot.lane.b32.xlu0 %v4410, 40
    %v4491 = vpop.permute.xlu0 %4490
    %4492 = vrot.lane.b32.xlu0 %v4411, 40
    %v4493 = vpop.permute.xlu0 %4492
    %4494 = vrot.lane.b32.xlu0 %v4412, 40
    %v4495 = vpop.permute.xlu0 %4494
    %4496 = vrot.lane.b32.xlu0 %v4413, 40
    %v4497 = vpop.permute.xlu0 %4496
    %4498 = vrot.lane.b32.xlu0 %v4414, 40
    %v4499 = vpop.permute.xlu0 %4498
    %4500 = vrot.lane.b32.xlu0 %v4415, 40
    %v4501 = vpop.permute.xlu0 %4500
    %4502 = vrot.lane.b32.xlu0 %v4416, 40
    %v4503 = vpop.permute.xlu0 %4502
    %4504 = vrot.lane.b32.xlu0 %v4417, 40
    %v4505 = vpop.permute.xlu0 %4504
    %4506 = vrot.lane.b32.xlu0 %v4418, 40
    %v4507 = vpop.permute.xlu0 %4506
    %4508 = vrot.lane.b32.xlu0 %v4419, 40
    %v4509 = vpop.permute.xlu0 %4508
    %4510 = vrot.lane.b32.xlu0 %v4420, 40
    %v4511 = vpop.permute.xlu0 %4510
    %4512 = vrot.lane.b32.xlu0 %v4421, 40
    %v4513 = vpop.permute.xlu0 %4512
    %4514 = vrot.lane.b32.xlu0 %v4422, 40
    %v4515 = vpop.permute.xlu0 %4514
    %4516 = vrot.lane.b32.xlu0 %v4423, 40
    %v4517 = vpop.permute.xlu0 %4516
    %4518 = vrot.lane.b32.xlu0 %v4424, 40
    %v4519 = vpop.permute.xlu0 %4518
    %4520 = vrot.lane.b32.xlu0 %v4425, 40
    %v4521 = vpop.permute.xlu0 %4520
    %vm4554 = vcmask 392512
    %4555 = vst.msk [vmem:[#allocation5] sm:$0xff] %vm4554, %v4459
    %4556 = vst.msk [vmem:[#allocation5 + $0x8] sm:$0xff] %vm4554, %v4461
    %4557 = vst.msk [vmem:[#allocation5 + $0x10] sm:$0xff] %vm4554, %v4463
    %4558 = vst.msk [vmem:[#allocation5 + $0x18] sm:$0xff] %vm4554, %v4465
    %4559 = vst.msk [vmem:[#allocation5 + $0x20] sm:$0xff] %vm4554, %v4467
    %4560 = vst.msk [vmem:[#allocation5 + $0x28] sm:$0xff] %vm4554, %v4469
    %4561 = vst.msk [vmem:[#allocation5 + $0x30] sm:$0xff] %vm4554, %v4471
    %4562 = vst.msk [vmem:[#allocation5 + $0x38] sm:$0xff] %vm4554, %v4473
    %4563 = vst.msk [vmem:[#allocation5 + $0x40] sm:$0xff] %vm4554, %v4475
    %4564 = vst.msk [vmem:[#allocation5 + $0x48] sm:$0xff] %vm4554, %v4477
    %4565 = vst.msk [vmem:[#allocation5 + $0x50] sm:$0xff] %vm4554, %v4479
    %4566 = vst.msk [vmem:[#allocation5 + $0x58] sm:$0xff] %vm4554, %v4481
    %4567 = vst.msk [vmem:[#allocation5 + $0x60] sm:$0xff] %vm4554, %v4483
    %4568 = vst.msk [vmem:[#allocation5 + $0x68] sm:$0xff] %vm4554, %v4485
    %4569 = vst.msk [vmem:[#allocation5 + $0x70] sm:$0xff] %vm4554, %v4487
    %4570 = vst.msk [vmem:[#allocation5 + $0x78] sm:$0xff] %vm4554, %v4489
    %4571 = vst.msk [vmem:[#allocation5 + $0x80] sm:$0xff] %vm4554, %v4491
    %4572 = vst.msk [vmem:[#allocation5 + $0x88] sm:$0xff] %vm4554, %v4493
    %4573 = vst.msk [vmem:[#allocation5 + $0x90] sm:$0xff] %vm4554, %v4495
    %4574 = vst.msk [vmem:[#allocation5 + $0x98] sm:$0xff] %vm4554, %v4497
    %4575 = vst.msk [vmem:[#allocation5 + $0xa0] sm:$0xff] %vm4554, %v4499
    %4576 = vst.msk [vmem:[#allocation5 + $0xa8] sm:$0xff] %vm4554, %v4501
    %4577 = vst.msk [vmem:[#allocation5 + $0xb0] sm:$0xff] %vm4554, %v4503
    %4578 = vst.msk [vmem:[#allocation5 + $0xb8] sm:$0xff] %vm4554, %v4505
    %4579 = vst.msk [vmem:[#allocation5 + $0xc0] sm:$0xff] %vm4554, %v4507
    %4580 = vst.msk [vmem:[#allocation5 + $0xc8] sm:$0xff] %vm4554, %v4509
    %4581 = vst.msk [vmem:[#allocation5 + $0xd0] sm:$0xff] %vm4554, %v4511
    %4582 = vst.msk [vmem:[#allocation5 + $0xd8] sm:$0xff] %vm4554, %v4513
    %4583 = vst.msk [vmem:[#allocation5 + $0xe0] sm:$0xff] %vm4554, %v4515
    %4584 = vst.msk [vmem:[#allocation5 + $0xe8] sm:$0xff] %vm4554, %v4517
    %4585 = vst.msk [vmem:[#allocation5 + $0xf0] sm:$0xff] %vm4554, %v4519
    %4586 = vst.msk [vmem:[#allocation5 + $0xf8] sm:$0xff] %vm4554, %v4521
    %v4587 = vpack.c.bf16 %v3256, %v3254
    %v4588 = vpack.c.bf16 %v3260, %v3258
    %v4589 = vpack.c.bf16 %v3264, %v3262
    %v4590 = vpack.c.bf16 %v3268, %v3266
    %v4591 = vpack.c.bf16 %v3292, %v3290
    %v4592 = vpack.c.bf16 %v3296, %v3294
    %v4593 = vpack.c.bf16 %v3300, %v3298
    %v4594 = vpack.c.bf16 %v3304, %v3302
    %v4595 = vpack.c.bf16 %v3328, %v3326
    %v4596 = vpack.c.bf16 %v3332, %v3330
    %v4597 = vpack.c.bf16 %v3336, %v3334
    %v4598 = vpack.c.bf16 %v3340, %v3338
    %v4599 = vpack.c.bf16 %v3364, %v3362
    %v4600 = vpack.c.bf16 %v3368, %v3366
    %v4601 = vpack.c.bf16 %v3372, %v3370
    %v4602 = vpack.c.bf16 %v3376, %v3374
    %v4603 = vpack.c.bf16 %v3400, %v3398
    %v4604 = vpack.c.bf16 %v3404, %v3402
    %v4605 = vpack.c.bf16 %v3408, %v3406
    %v4606 = vpack.c.bf16 %v3412, %v3410
    %v4607 = vpack.c.bf16 %v3436, %v3434
    %v4608 = vpack.c.bf16 %v3440, %v3438
    %v4609 = vpack.c.bf16 %v3444, %v3442
    %v4610 = vpack.c.bf16 %v3448, %v3446
    %v4611 = vpack.c.bf16 %v3472, %v3470
    %v4612 = vpack.c.bf16 %v3476, %v3474
    %v4613 = vpack.c.bf16 %v3480, %v3478
    %v4614 = vpack.c.bf16 %v3484, %v3482
    %v4615 = vpack.c.bf16 %v3508, %v3506
    %v4616 = vpack.c.bf16 %v3512, %v3510
    %v4617 = vpack.c.bf16 %v3516, %v3514
    %v4618 = vpack.c.bf16 %v3520, %v3518
    %4651 = vrot.lane.b32.xlu0 %v4587, 48
    %v4652 = vpop.permute.xlu0 %4651
    %4653 = vrot.lane.b32.xlu0 %v4588, 48
    %v4654 = vpop.permute.xlu0 %4653
    %4655 = vrot.lane.b32.xlu0 %v4589, 48
    %v4656 = vpop.permute.xlu0 %4655
    %4657 = vrot.lane.b32.xlu0 %v4590, 48
    %v4658 = vpop.permute.xlu0 %4657
    %4659 = vrot.lane.b32.xlu0 %v4591, 48
    %v4660 = vpop.permute.xlu0 %4659
    %4661 = vrot.lane.b32.xlu0 %v4592, 48
    %v4662 = vpop.permute.xlu0 %4661
    %4663 = vrot.lane.b32.xlu0 %v4593, 48
    %v4664 = vpop.permute.xlu0 %4663
    %4665 = vrot.lane.b32.xlu0 %v4594, 48
    %v4666 = vpop.permute.xlu0 %4665
    %4667 = vrot.lane.b32.xlu0 %v4595, 48
    %v4668 = vpop.permute.xlu0 %4667
    %4669 = vrot.lane.b32.xlu0 %v4596, 48
    %v4670 = vpop.permute.xlu0 %4669
    %4671 = vrot.lane.b32.xlu0 %v4597, 48
    %v4672 = vpop.permute.xlu0 %4671
    %4673 = vrot.lane.b32.xlu0 %v4598, 48
    %v4674 = vpop.permute.xlu0 %4673
    %4675 = vrot.lane.b32.xlu0 %v4599, 48
    %v4676 = vpop.permute.xlu0 %4675
    %4677 = vrot.lane.b32.xlu0 %v4600, 48
    %v4678 = vpop.permute.xlu0 %4677
    %4679 = vrot.lane.b32.xlu0 %v4601, 48
    %v4680 = vpop.permute.xlu0 %4679
    %4681 = vrot.lane.b32.xlu0 %v4602, 48
    %v4682 = vpop.permute.xlu0 %4681
    %4683 = vrot.lane.b32.xlu0 %v4603, 48
    %v4684 = vpop.permute.xlu0 %4683
    %4685 = vrot.lane.b32.xlu0 %v4604, 48
    %v4686 = vpop.permute.xlu0 %4685
    %4687 = vrot.lane.b32.xlu0 %v4605, 48
    %v4688 = vpop.permute.xlu0 %4687
    %4689 = vrot.lane.b32.xlu0 %v4606, 48
    %v4690 = vpop.permute.xlu0 %4689
    %4691 = vrot.lane.b32.xlu0 %v4607, 48
    %v4692 = vpop.permute.xlu0 %4691
    %4693 = vrot.lane.b32.xlu0 %v4608, 48
    %v4694 = vpop.permute.xlu0 %4693
    %4695 = vrot.lane.b32.xlu0 %v4609, 48
    %v4696 = vpop.permute.xlu0 %4695
    %4697 = vrot.lane.b32.xlu0 %v4610, 48
    %v4698 = vpop.permute.xlu0 %4697
    %4699 = vrot.lane.b32.xlu0 %v4611, 48
    %v4700 = vpop.permute.xlu0 %4699
    %4701 = vrot.lane.b32.xlu0 %v4612, 48
    %v4702 = vpop.permute.xlu0 %4701
    %4703 = vrot.lane.b32.xlu0 %v4613, 48
    %v4704 = vpop.permute.xlu0 %4703
    %4705 = vrot.lane.b32.xlu0 %v4614, 48
    %v4706 = vpop.permute.xlu0 %4705
    %4707 = vrot.lane.b32.xlu0 %v4615, 48
    %v4708 = vpop.permute.xlu0 %4707
    %4709 = vrot.lane.b32.xlu0 %v4616, 48
    %v4710 = vpop.permute.xlu0 %4709
    %4711 = vrot.lane.b32.xlu0 %v4617, 48
    %v4712 = vpop.permute.xlu0 %4711
    %4713 = vrot.lane.b32.xlu0 %v4618, 48
    %v4714 = vpop.permute.xlu0 %4713
    %vm4747 = vcmask 458112
    %4748 = vst.msk [vmem:[#allocation5] sm:$0xff] %vm4747, %v4652
    %4749 = vst.msk [vmem:[#allocation5 + $0x8] sm:$0xff] %vm4747, %v4654
    %4750 = vst.msk [vmem:[#allocation5 + $0x10] sm:$0xff] %vm4747, %v4656
    %4751 = vst.msk [vmem:[#allocation5 + $0x18] sm:$0xff] %vm4747, %v4658
    %4752 = vst.msk [vmem:[#allocation5 + $0x20] sm:$0xff] %vm4747, %v4660
    %4753 = vst.msk [vmem:[#allocation5 + $0x28] sm:$0xff] %vm4747, %v4662
    %4754 = vst.msk [vmem:[#allocation5 + $0x30] sm:$0xff] %vm4747, %v4664
    %4755 = vst.msk [vmem:[#allocation5 + $0x38] sm:$0xff] %vm4747, %v4666
    %4756 = vst.msk [vmem:[#allocation5 + $0x40] sm:$0xff] %vm4747, %v4668
    %4757 = vst.msk [vmem:[#allocation5 + $0x48] sm:$0xff] %vm4747, %v4670
    %4758 = vst.msk [vmem:[#allocation5 + $0x50] sm:$0xff] %vm4747, %v4672
    %4759 = vst.msk [vmem:[#allocation5 + $0x58] sm:$0xff] %vm4747, %v4674
    %4760 = vst.msk [vmem:[#allocation5 + $0x60] sm:$0xff] %vm4747, %v4676
    %4761 = vst.msk [vmem:[#allocation5 + $0x68] sm:$0xff] %vm4747, %v4678
    %4762 = vst.msk [vmem:[#allocation5 + $0x70] sm:$0xff] %vm4747, %v4680
    %4763 = vst.msk [vmem:[#allocation5 + $0x78] sm:$0xff] %vm4747, %v4682
    %4764 = vst.msk [vmem:[#allocation5 + $0x80] sm:$0xff] %vm4747, %v4684
    %4765 = vst.msk [vmem:[#allocation5 + $0x88] sm:$0xff] %vm4747, %v4686
    %4766 = vst.msk [vmem:[#allocation5 + $0x90] sm:$0xff] %vm4747, %v4688
    %4767 = vst.msk [vmem:[#allocation5 + $0x98] sm:$0xff] %vm4747, %v4690
    %4768 = vst.msk [vmem:[#allocation5 + $0xa0] sm:$0xff] %vm4747, %v4692
    %4769 = vst.msk [vmem:[#allocation5 + $0xa8] sm:$0xff] %vm4747, %v4694
    %4770 = vst.msk [vmem:[#allocation5 + $0xb0] sm:$0xff] %vm4747, %v4696
    %4771 = vst.msk [vmem:[#allocation5 + $0xb8] sm:$0xff] %vm4747, %v4698
    %4772 = vst.msk [vmem:[#allocation5 + $0xc0] sm:$0xff] %vm4747, %v4700
    %4773 = vst.msk [vmem:[#allocation5 + $0xc8] sm:$0xff] %vm4747, %v4702
    %4774 = vst.msk [vmem:[#allocation5 + $0xd0] sm:$0xff] %vm4747, %v4704
    %4775 = vst.msk [vmem:[#allocation5 + $0xd8] sm:$0xff] %vm4747, %v4706
    %4776 = vst.msk [vmem:[#allocation5 + $0xe0] sm:$0xff] %vm4747, %v4708
    %4777 = vst.msk [vmem:[#allocation5 + $0xe8] sm:$0xff] %vm4747, %v4710
    %4778 = vst.msk [vmem:[#allocation5 + $0xf0] sm:$0xff] %vm4747, %v4712
    %4779 = vst.msk [vmem:[#allocation5 + $0xf8] sm:$0xff] %vm4747, %v4714
    %v4780 = vpack.c.bf16 %v3257, %v3255
    %v4781 = vpack.c.bf16 %v3261, %v3259
    %v4782 = vpack.c.bf16 %v3265, %v3263
    %v4783 = vpack.c.bf16 %v3269, %v3267
    %v4784 = vpack.c.bf16 %v3293, %v3291
    %v4785 = vpack.c.bf16 %v3297, %v3295
    %v4786 = vpack.c.bf16 %v3301, %v3299
    %v4787 = vpack.c.bf16 %v3305, %v3303
    %v4788 = vpack.c.bf16 %v3329, %v3327
    %v4789 = vpack.c.bf16 %v3333, %v3331
    %v4790 = vpack.c.bf16 %v3337, %v3335
    %v4791 = vpack.c.bf16 %v3341, %v3339
    %v4792 = vpack.c.bf16 %v3365, %v3363
    %v4793 = vpack.c.bf16 %v3369, %v3367
    %v4794 = vpack.c.bf16 %v3373, %v3371
    %v4795 = vpack.c.bf16 %v3377, %v3375
    %v4796 = vpack.c.bf16 %v3401, %v3399
    %v4797 = vpack.c.bf16 %v3405, %v3403
    %v4798 = vpack.c.bf16 %v3409, %v3407
    %v4799 = vpack.c.bf16 %v3413, %v3411
    %v4800 = vpack.c.bf16 %v3437, %v3435
    %v4801 = vpack.c.bf16 %v3441, %v3439
    %v4802 = vpack.c.bf16 %v3445, %v3443
    %v4803 = vpack.c.bf16 %v3449, %v3447
    %v4804 = vpack.c.bf16 %v3473, %v3471
    %v4805 = vpack.c.bf16 %v3477, %v3475
    %v4806 = vpack.c.bf16 %v3481, %v3479
    %v4807 = vpack.c.bf16 %v3485, %v3483
    %v4808 = vpack.c.bf16 %v3509, %v3507
    %v4809 = vpack.c.bf16 %v3513, %v3511
    %v4810 = vpack.c.bf16 %v3517, %v3515
    %v4811 = vpack.c.bf16 %v3521, %v3519
    %4844 = vrot.lane.b32.xlu0 %v4780, 56
    %v4845 = vpop.permute.xlu0 %4844
    %4846 = vrot.lane.b32.xlu0 %v4781, 56
    %v4847 = vpop.permute.xlu0 %4846
    %4848 = vrot.lane.b32.xlu0 %v4782, 56
    %v4849 = vpop.permute.xlu0 %4848
    %4850 = vrot.lane.b32.xlu0 %v4783, 56
    %v4851 = vpop.permute.xlu0 %4850
    %4852 = vrot.lane.b32.xlu0 %v4784, 56
    %v4853 = vpop.permute.xlu0 %4852
    %4854 = vrot.lane.b32.xlu0 %v4785, 56
    %v4855 = vpop.permute.xlu0 %4854
    %4856 = vrot.lane.b32.xlu0 %v4786, 56
    %v4857 = vpop.permute.xlu0 %4856
    %4858 = vrot.lane.b32.xlu0 %v4787, 56
    %v4859 = vpop.permute.xlu0 %4858
    %4860 = vrot.lane.b32.xlu0 %v4788, 56
    %v4861 = vpop.permute.xlu0 %4860
    %4862 = vrot.lane.b32.xlu0 %v4789, 56
    %v4863 = vpop.permute.xlu0 %4862
    %4864 = vrot.lane.b32.xlu0 %v4790, 56
    %v4865 = vpop.permute.xlu0 %4864
    %4866 = vrot.lane.b32.xlu0 %v4791, 56
    %v4867 = vpop.permute.xlu0 %4866
    %4868 = vrot.lane.b32.xlu0 %v4792, 56
    %v4869 = vpop.permute.xlu0 %4868
    %4870 = vrot.lane.b32.xlu0 %v4793, 56
    %v4871 = vpop.permute.xlu0 %4870
    %4872 = vrot.lane.b32.xlu0 %v4794, 56
    %v4873 = vpop.permute.xlu0 %4872
    %4874 = vrot.lane.b32.xlu0 %v4795, 56
    %v4875 = vpop.permute.xlu0 %4874
    %4876 = vrot.lane.b32.xlu0 %v4796, 56
    %v4877 = vpop.permute.xlu0 %4876
    %4878 = vrot.lane.b32.xlu0 %v4797, 56
    %v4879 = vpop.permute.xlu0 %4878
    %4880 = vrot.lane.b32.xlu0 %v4798, 56
    %v4881 = vpop.permute.xlu0 %4880
    %4882 = vrot.lane.b32.xlu0 %v4799, 56
    %v4883 = vpop.permute.xlu0 %4882
    %4884 = vrot.lane.b32.xlu0 %v4800, 56
    %v4885 = vpop.permute.xlu0 %4884
    %4886 = vrot.lane.b32.xlu0 %v4801, 56
    %v4887 = vpop.permute.xlu0 %4886
    %4888 = vrot.lane.b32.xlu0 %v4802, 56
    %v4889 = vpop.permute.xlu0 %4888
    %4890 = vrot.lane.b32.xlu0 %v4803, 56
    %v4891 = vpop.permute.xlu0 %4890
    %4892 = vrot.lane.b32.xlu0 %v4804, 56
    %v4893 = vpop.permute.xlu0 %4892
    %4894 = vrot.lane.b32.xlu0 %v4805, 56
    %v4895 = vpop.permute.xlu0 %4894
    %4896 = vrot.lane.b32.xlu0 %v4806, 56
    %v4897 = vpop.permute.xlu0 %4896
    %4898 = vrot.lane.b32.xlu0 %v4807, 56
    %v4899 = vpop.permute.xlu0 %4898
    %4900 = vrot.lane.b32.xlu0 %v4808, 56
    %v4901 = vpop.permute.xlu0 %4900
    %4902 = vrot.lane.b32.xlu0 %v4809, 56
    %v4903 = vpop.permute.xlu0 %4902
    %4904 = vrot.lane.b32.xlu0 %v4810, 56
    %v4905 = vpop.permute.xlu0 %4904
    %4906 = vrot.lane.b32.xlu0 %v4811, 56
    %v4907 = vpop.permute.xlu0 %4906
    %vm4940 = vcmask 523712
    %4941 = vst.msk [vmem:[#allocation5] sm:$0xff] %vm4940, %v4845
    %4942 = vst.msk [vmem:[#allocation5 + $0x8] sm:$0xff] %vm4940, %v4847
    %4943 = vst.msk [vmem:[#allocation5 + $0x10] sm:$0xff] %vm4940, %v4849
    %4944 = vst.msk [vmem:[#allocation5 + $0x18] sm:$0xff] %vm4940, %v4851
    %4945 = vst.msk [vmem:[#allocation5 + $0x20] sm:$0xff] %vm4940, %v4853
    %4946 = vst.msk [vmem:[#allocation5 + $0x28] sm:$0xff] %vm4940, %v4855
    %4947 = vst.msk [vmem:[#allocation5 + $0x30] sm:$0xff] %vm4940, %v4857
    %4948 = vst.msk [vmem:[#allocation5 + $0x38] sm:$0xff] %vm4940, %v4859
    %4949 = vst.msk [vmem:[#allocation5 + $0x40] sm:$0xff] %vm4940, %v4861
    %4950 = vst.msk [vmem:[#allocation5 + $0x48] sm:$0xff] %vm4940, %v4863
    %4951 = vst.msk [vmem:[#allocation5 + $0x50] sm:$0xff] %vm4940, %v4865
    %4952 = vst.msk [vmem:[#allocation5 + $0x58] sm:$0xff] %vm4940, %v4867
    %4953 = vst.msk [vmem:[#allocation5 + $0x60] sm:$0xff] %vm4940, %v4869
    %4954 = vst.msk [vmem:[#allocation5 + $0x68] sm:$0xff] %vm4940, %v4871
    %4955 = vst.msk [vmem:[#allocation5 + $0x70] sm:$0xff] %vm4940, %v4873
    %4956 = vst.msk [vmem:[#allocation5 + $0x78] sm:$0xff] %vm4940, %v4875
    %4957 = vst.msk [vmem:[#allocation5 + $0x80] sm:$0xff] %vm4940, %v4877
    %4958 = vst.msk [vmem:[#allocation5 + $0x88] sm:$0xff] %vm4940, %v4879
    %4959 = vst.msk [vmem:[#allocation5 + $0x90] sm:$0xff] %vm4940, %v4881
    %4960 = vst.msk [vmem:[#allocation5 + $0x98] sm:$0xff] %vm4940, %v4883
    %4961 = vst.msk [vmem:[#allocation5 + $0xa0] sm:$0xff] %vm4940, %v4885
    %4962 = vst.msk [vmem:[#allocation5 + $0xa8] sm:$0xff] %vm4940, %v4887
    %4963 = vst.msk [vmem:[#allocation5 + $0xb0] sm:$0xff] %vm4940, %v4889
    %4964 = vst.msk [vmem:[#allocation5 + $0xb8] sm:$0xff] %vm4940, %v4891
    %4965 = vst.msk [vmem:[#allocation5 + $0xc0] sm:$0xff] %vm4940, %v4893
    %4966 = vst.msk [vmem:[#allocation5 + $0xc8] sm:$0xff] %vm4940, %v4895
    %4967 = vst.msk [vmem:[#allocation5 + $0xd0] sm:$0xff] %vm4940, %v4897
    %4968 = vst.msk [vmem:[#allocation5 + $0xd8] sm:$0xff] %vm4940, %v4899
    %4969 = vst.msk [vmem:[#allocation5 + $0xe0] sm:$0xff] %vm4940, %v4901
    %4970 = vst.msk [vmem:[#allocation5 + $0xe8] sm:$0xff] %vm4940, %v4903
    %4971 = vst.msk [vmem:[#allocation5 + $0xf0] sm:$0xff] %vm4940, %v4905
    %4972 = vst.msk [vmem:[#allocation5 + $0xf8] sm:$0xff] %vm4940, %v4907
    %v4973 = vpack.c.bf16 %v3524, %v3522
    %v4974 = vpack.c.bf16 %v3528, %v3526
    %v4975 = vpack.c.bf16 %v3532, %v3530
    %v4976 = vpack.c.bf16 %v3536, %v3534
    %5009 = vrot.lane.b32.xlu0 %v3562, 64
    %v5010 = vpop.permute.xlu0 %5009
    %5011 = vrot.lane.b32.xlu0 %v3563, 64
    %v5012 = vpop.permute.xlu0 %5011
    %5013 = vrot.lane.b32.xlu0 %v3564, 64
    %v5014 = vpop.permute.xlu0 %5013
    %5015 = vrot.lane.b32.xlu0 %v3565, 64
    %v5016 = vpop.permute.xlu0 %5015
    %5017 = vrot.lane.b32.xlu0 %v3566, 64
    %v5018 = vpop.permute.xlu0 %5017
    %5019 = vrot.lane.b32.xlu0 %v3567, 64
    %v5020 = vpop.permute.xlu0 %5019
    %5021 = vrot.lane.b32.xlu0 %v3568, 64
    %v5022 = vpop.permute.xlu0 %5021
    %5023 = vrot.lane.b32.xlu0 %v3569, 64
    %v5024 = vpop.permute.xlu0 %5023
    %5025 = vrot.lane.b32.xlu0 %v3570, 64
    %v5026 = vpop.permute.xlu0 %5025
    %5027 = vrot.lane.b32.xlu0 %v3571, 64
    %v5028 = vpop.permute.xlu0 %5027
    %5029 = vrot.lane.b32.xlu0 %v3572, 64
    %v5030 = vpop.permute.xlu0 %5029
    %5031 = vrot.lane.b32.xlu0 %v3573, 64
    %v5032 = vpop.permute.xlu0 %5031
    %5033 = vrot.lane.b32.xlu0 %v3574, 64
    %v5034 = vpop.permute.xlu0 %5033
    %5035 = vrot.lane.b32.xlu0 %v3575, 64
    %v5036 = vpop.permute.xlu0 %5035
    %5037 = vrot.lane.b32.xlu0 %v3576, 64
    %v5038 = vpop.permute.xlu0 %5037
    %5039 = vrot.lane.b32.xlu0 %v3577, 64
    %v5040 = vpop.permute.xlu0 %5039
    %5041 = vrot.lane.b32.xlu0 %v3578, 64
    %v5042 = vpop.permute.xlu0 %5041
    %5043 = vrot.lane.b32.xlu0 %v3579, 64
    %v5044 = vpop.permute.xlu0 %5043
    %5045 = vrot.lane.b32.xlu0 %v3580, 64
    %v5046 = vpop.permute.xlu0 %5045
    %5047 = vrot.lane.b32.xlu0 %v3581, 64
    %v5048 = vpop.permute.xlu0 %5047
    %5049 = vrot.lane.b32.xlu0 %v3582, 64
    %v5050 = vpop.permute.xlu0 %5049
    %5051 = vrot.lane.b32.xlu0 %v3583, 64
    %v5052 = vpop.permute.xlu0 %5051
    %5053 = vrot.lane.b32.xlu0 %v3584, 64
    %v5054 = vpop.permute.xlu0 %5053
    %5055 = vrot.lane.b32.xlu0 %v3585, 64
    %v5056 = vpop.permute.xlu0 %5055
    %5057 = vrot.lane.b32.xlu0 %v3586, 64
    %v5058 = vpop.permute.xlu0 %5057
    %5059 = vrot.lane.b32.xlu0 %v3587, 64
    %v5060 = vpop.permute.xlu0 %5059
    %5061 = vrot.lane.b32.xlu0 %v3588, 64
    %v5062 = vpop.permute.xlu0 %5061
    %5063 = vrot.lane.b32.xlu0 %v3589, 64
    %v5064 = vpop.permute.xlu0 %5063
    %5065 = vrot.lane.b32.xlu0 %v4973, 64
    %v5066 = vpop.permute.xlu0 %5065
    %5067 = vrot.lane.b32.xlu0 %v4974, 64
    %v5068 = vpop.permute.xlu0 %5067
    %5069 = vrot.lane.b32.xlu0 %v4975, 64
    %v5070 = vpop.permute.xlu0 %5069
    %5071 = vrot.lane.b32.xlu0 %v4976, 64
    %v5072 = vpop.permute.xlu0 %5071
    %vm5105 = vcmask 589312
    %5106 = vst.msk [vmem:[#allocation5] sm:$0xff] %vm5105, %v5010
    %5107 = vst.msk [vmem:[#allocation5 + $0x8] sm:$0xff] %vm5105, %v5012
    %5108 = vst.msk [vmem:[#allocation5 + $0x10] sm:$0xff] %vm5105, %v5014
    %5109 = vst.msk [vmem:[#allocation5 + $0x18] sm:$0xff] %vm5105, %v5016
    %5110 = vst.msk [vmem:[#allocation5 + $0x20] sm:$0xff] %vm5105, %v5018
    %5111 = vst.msk [vmem:[#allocation5 + $0x28] sm:$0xff] %vm5105, %v5020
    %5112 = vst.msk [vmem:[#allocation5 + $0x30] sm:$0xff] %vm5105, %v5022
    %5113 = vst.msk [vmem:[#allocation5 + $0x38] sm:$0xff] %vm5105, %v5024
    %5114 = vst.msk [vmem:[#allocation5 + $0x40] sm:$0xff] %vm5105, %v5026
    %5115 = vst.msk [vmem:[#allocation5 + $0x48] sm:$0xff] %vm5105, %v5028
    %5116 = vst.msk [vmem:[#allocation5 + $0x50] sm:$0xff] %vm5105, %v5030
    %5117 = vst.msk [vmem:[#allocation5 + $0x58] sm:$0xff] %vm5105, %v5032
    %5118 = vst.msk [vmem:[#allocation5 + $0x60] sm:$0xff] %vm5105, %v5034
    %5119 = vst.msk [vmem:[#allocation5 + $0x68] sm:$0xff] %vm5105, %v5036
    %5120 = vst.msk [vmem:[#allocation5 + $0x70] sm:$0xff] %vm5105, %v5038
    %5121 = vst.msk [vmem:[#allocation5 + $0x78] sm:$0xff] %vm5105, %v5040
    %5122 = vst.msk [vmem:[#allocation5 + $0x80] sm:$0xff] %vm5105, %v5042
    %5123 = vst.msk [vmem:[#allocation5 + $0x88] sm:$0xff] %vm5105, %v5044
    %5124 = vst.msk [vmem:[#allocation5 + $0x90] sm:$0xff] %vm5105, %v5046
    %5125 = vst.msk [vmem:[#allocation5 + $0x98] sm:$0xff] %vm5105, %v5048
    %5126 = vst.msk [vmem:[#allocation5 + $0xa0] sm:$0xff] %vm5105, %v5050
    %5127 = vst.msk [vmem:[#allocation5 + $0xa8] sm:$0xff] %vm5105, %v5052
    %5128 = vst.msk [vmem:[#allocation5 + $0xb0] sm:$0xff] %vm5105, %v5054
    %5129 = vst.msk [vmem:[#allocation5 + $0xb8] sm:$0xff] %vm5105, %v5056
    %5130 = vst.msk [vmem:[#allocation5 + $0xc0] sm:$0xff] %vm5105, %v5058
    %5131 = vst.msk [vmem:[#allocation5 + $0xc8] sm:$0xff] %vm5105, %v5060
    %5132 = vst.msk [vmem:[#allocation5 + $0xd0] sm:$0xff] %vm5105, %v5062
    %5133 = vst.msk [vmem:[#allocation5 + $0xd8] sm:$0xff] %vm5105, %v5064
    %5134 = vst.msk [vmem:[#allocation5 + $0xe0] sm:$0xff] %vm5105, %v5066
    %5135 = vst.msk [vmem:[#allocation5 + $0xe8] sm:$0xff] %vm5105, %v5068
    %5136 = vst.msk [vmem:[#allocation5 + $0xf0] sm:$0xff] %vm5105, %v5070
    %5137 = vst.msk [vmem:[#allocation5 + $0xf8] sm:$0xff] %vm5105, %v5072
    %v5138 = vpack.c.bf16 %v3525, %v3523
    %v5139 = vpack.c.bf16 %v3529, %v3527
    %v5140 = vpack.c.bf16 %v3533, %v3531
    %v5141 = vpack.c.bf16 %v3537, %v3535
    %5146 = vrot.lane.b32.xlu0 %v3626, 72
    %v5147 = vpop.permute.xlu0 %5146
    %5148 = vrot.lane.b32.xlu0 %v3627, 72
    %v5149 = vpop.permute.xlu0 %5148
    %5150 = vrot.lane.b32.xlu0 %v3628, 72
    %v5151 = vpop.permute.xlu0 %5150
    %5152 = vrot.lane.b32.xlu0 %v3629, 72
    %v5153 = vpop.permute.xlu0 %5152
    %5154 = vrot.lane.b32.xlu0 %v3630, 72
    %v5155 = vpop.permute.xlu0 %5154
    %5156 = vrot.lane.b32.xlu0 %v3631, 72
    %v5157 = vpop.permute.xlu0 %5156
    %5158 = vrot.lane.b32.xlu0 %v3632, 72
    %v5159 = vpop.permute.xlu0 %5158
    %5160 = vrot.lane.b32.xlu0 %v3633, 72
    %v5161 = vpop.permute.xlu0 %5160
    %5162 = vrot.lane.b32.xlu0 %v3634, 72
    %v5163 = vpop.permute.xlu0 %5162
    %5164 = vrot.lane.b32.xlu0 %v3635, 72
    %v5165 = vpop.permute.xlu0 %5164
    %5166 = vrot.lane.b32.xlu0 %v3636, 72
    %v5167 = vpop.permute.xlu0 %5166
    %5168 = vrot.lane.b32.xlu0 %v3637, 72
    %v5169 = vpop.permute.xlu0 %5168
    %5170 = vrot.lane.b32.xlu0 %v3638, 72
    %v5171 = vpop.permute.xlu0 %5170
    %5172 = vrot.lane.b32.xlu0 %v3639, 72
    %v5173 = vpop.permute.xlu0 %5172
    %5174 = vrot.lane.b32.xlu0 %v3640, 72
    %v5175 = vpop.permute.xlu0 %5174
    %5176 = vrot.lane.b32.xlu0 %v3641, 72
    %v5177 = vpop.permute.xlu0 %5176
    %5178 = vrot.lane.b32.xlu0 %v3642, 72
    %v5179 = vpop.permute.xlu0 %5178
    %5180 = vrot.lane.b32.xlu0 %v3643, 72
    %v5181 = vpop.permute.xlu0 %5180
    %5182 = vrot.lane.b32.xlu0 %v3644, 72
    %v5183 = vpop.permute.xlu0 %5182
    %5184 = vrot.lane.b32.xlu0 %v3645, 72
    %v5185 = vpop.permute.xlu0 %5184
    %5186 = vrot.lane.b32.xlu0 %v3646, 72
    %v5187 = vpop.permute.xlu0 %5186
    %5188 = vrot.lane.b32.xlu0 %v3647, 72
    %v5189 = vpop.permute.xlu0 %5188
    %5190 = vrot.lane.b32.xlu0 %v3648, 72
    %v5191 = vpop.permute.xlu0 %5190
    %5192 = vrot.lane.b32.xlu0 %v3649, 72
    %v5193 = vpop.permute.xlu0 %5192
    %5194 = vrot.lane.b32.xlu0 %v3650, 72
    %v5195 = vpop.permute.xlu0 %5194
    %5196 = vrot.lane.b32.xlu0 %v3651, 72
    %v5197 = vpop.permute.xlu0 %5196
    %5198 = vrot.lane.b32.xlu0 %v3652, 72
    %v5199 = vpop.permute.xlu0 %5198
    %5200 = vrot.lane.b32.xlu0 %v3653, 72
    %v5201 = vpop.permute.xlu0 %5200
    %5202 = vrot.lane.b32.xlu0 %v5138, 72
    %v5203 = vpop.permute.xlu0 %5202
    %5204 = vrot.lane.b32.xlu0 %v5139, 72
    %v5205 = vpop.permute.xlu0 %5204
    %5206 = vrot.lane.b32.xlu0 %v5140, 72
    %v5207 = vpop.permute.xlu0 %5206
    %5208 = vrot.lane.b32.xlu0 %v5141, 72
    %v5209 = vpop.permute.xlu0 %5208
    %vm5242 = vcmask 654912
    %5243 = vst.msk [vmem:[#allocation5] sm:$0xff] %vm5242, %v5147
    %5244 = vst.msk [vmem:[#allocation5 + $0x8] sm:$0xff] %vm5242, %v5149
    %5245 = vst.msk [vmem:[#allocation5 + $0x10] sm:$0xff] %vm5242, %v5151
    %5246 = vst.msk [vmem:[#allocation5 + $0x18] sm:$0xff] %vm5242, %v5153
    %5247 = vst.msk [vmem:[#allocation5 + $0x20] sm:$0xff] %vm5242, %v5155
    %5248 = vst.msk [vmem:[#allocation5 + $0x28] sm:$0xff] %vm5242, %v5157
    %5249 = vst.msk [vmem:[#allocation5 + $0x30] sm:$0xff] %vm5242, %v5159
    %5250 = vst.msk [vmem:[#allocation5 + $0x38] sm:$0xff] %vm5242, %v5161
    %5251 = vst.msk [vmem:[#allocation5 + $0x40] sm:$0xff] %vm5242, %v5163
    %5252 = vst.msk [vmem:[#allocation5 + $0x48] sm:$0xff] %vm5242, %v5165
    %5253 = vst.msk [vmem:[#allocation5 + $0x50] sm:$0xff] %vm5242, %v5167
    %5254 = vst.msk [vmem:[#allocation5 + $0x58] sm:$0xff] %vm5242, %v5169
    %5255 = vst.msk [vmem:[#allocation5 + $0x60] sm:$0xff] %vm5242, %v5171
    %5256 = vst.msk [vmem:[#allocation5 + $0x68] sm:$0xff] %vm5242, %v5173
    %5257 = vst.msk [vmem:[#allocation5 + $0x70] sm:$0xff] %vm5242, %v5175
    %5258 = vst.msk [vmem:[#allocation5 + $0x78] sm:$0xff] %vm5242, %v5177
    %5259 = vst.msk [vmem:[#allocation5 + $0x80] sm:$0xff] %vm5242, %v5179
    %5260 = vst.msk [vmem:[#allocation5 + $0x88] sm:$0xff] %vm5242, %v5181
    %5261 = vst.msk [vmem:[#allocation5 + $0x90] sm:$0xff] %vm5242, %v5183
    %5262 = vst.msk [vmem:[#allocation5 + $0x98] sm:$0xff] %vm5242, %v5185
    %5263 = vst.msk [vmem:[#allocation5 + $0xa0] sm:$0xff] %vm5242, %v5187
    %5264 = vst.msk [vmem:[#allocation5 + $0xa8] sm:$0xff] %vm5242, %v5189
    %5265 = vst.msk [vmem:[#allocation5 + $0xb0] sm:$0xff] %vm5242, %v5191
    %5266 = vst.msk [vmem:[#allocation5 + $0xb8] sm:$0xff] %vm5242, %v5193
    %5267 = vst.msk [vmem:[#allocation5 + $0xc0] sm:$0xff] %vm5242, %v5195
    %5268 = vst.msk [vmem:[#allocation5 + $0xc8] sm:$0xff] %vm5242, %v5197
    %5269 = vst.msk [vmem:[#allocation5 + $0xd0] sm:$0xff] %vm5242, %v5199
    %5270 = vst.msk [vmem:[#allocation5 + $0xd8] sm:$0xff] %vm5242, %v5201
    %5271 = vst.msk [vmem:[#allocation5 + $0xe0] sm:$0xff] %vm5242, %v5203
    %5272 = vst.msk [vmem:[#allocation5 + $0xe8] sm:$0xff] %vm5242, %v5205
    %5273 = vst.msk [vmem:[#allocation5 + $0xf0] sm:$0xff] %vm5242, %v5207
    %5274 = vst.msk [vmem:[#allocation5 + $0xf8] sm:$0xff] %vm5242, %v5209
    %v5275 = vpack.c.bf16 %v3526, %v3524
    %v5276 = vpack.c.bf16 %v3530, %v3528
    %v5277 = vpack.c.bf16 %v3534, %v3532
    %v5278 = vpack.c.bf16 %v3538, %v3536
    %5283 = vrot.lane.b32.xlu0 %v3819, 80
    %v5284 = vpop.permute.xlu0 %5283
    %5285 = vrot.lane.b32.xlu0 %v3820, 80
    %v5286 = vpop.permute.xlu0 %5285
    %5287 = vrot.lane.b32.xlu0 %v3821, 80
    %v5288 = vpop.permute.xlu0 %5287
    %5289 = vrot.lane.b32.xlu0 %v3822, 80
    %v5290 = vpop.permute.xlu0 %5289
    %5291 = vrot.lane.b32.xlu0 %v3823, 80
    %v5292 = vpop.permute.xlu0 %5291
    %5293 = vrot.lane.b32.xlu0 %v3824, 80
    %v5294 = vpop.permute.xlu0 %5293
    %5295 = vrot.lane.b32.xlu0 %v3825, 80
    %v5296 = vpop.permute.xlu0 %5295
    %5297 = vrot.lane.b32.xlu0 %v3826, 80
    %v5298 = vpop.permute.xlu0 %5297
    %5299 = vrot.lane.b32.xlu0 %v3827, 80
    %v5300 = vpop.permute.xlu0 %5299
    %5301 = vrot.lane.b32.xlu0 %v3828, 80
    %v5302 = vpop.permute.xlu0 %5301
    %5303 = vrot.lane.b32.xlu0 %v3829, 80
    %v5304 = vpop.permute.xlu0 %5303
    %5305 = vrot.lane.b32.xlu0 %v3830, 80
    %v5306 = vpop.permute.xlu0 %5305
    %5307 = vrot.lane.b32.xlu0 %v3831, 80
    %v5308 = vpop.permute.xlu0 %5307
    %5309 = vrot.lane.b32.xlu0 %v3832, 80
    %v5310 = vpop.permute.xlu0 %5309
    %5311 = vrot.lane.b32.xlu0 %v3833, 80
    %v5312 = vpop.permute.xlu0 %5311
    %5313 = vrot.lane.b32.xlu0 %v3834, 80
    %v5314 = vpop.permute.xlu0 %5313
    %5315 = vrot.lane.b32.xlu0 %v3835, 80
    %v5316 = vpop.permute.xlu0 %5315
    %5317 = vrot.lane.b32.xlu0 %v3836, 80
    %v5318 = vpop.permute.xlu0 %5317
    %5319 = vrot.lane.b32.xlu0 %v3837, 80
    %v5320 = vpop.permute.xlu0 %5319
    %5321 = vrot.lane.b32.xlu0 %v3838, 80
    %v5322 = vpop.permute.xlu0 %5321
    %5323 = vrot.lane.b32.xlu0 %v3839, 80
    %v5324 = vpop.permute.xlu0 %5323
    %5325 = vrot.lane.b32.xlu0 %v3840, 80
    %v5326 = vpop.permute.xlu0 %5325
    %5327 = vrot.lane.b32.xlu0 %v3841, 80
    %v5328 = vpop.permute.xlu0 %5327
    %5329 = vrot.lane.b32.xlu0 %v3842, 80
    %v5330 = vpop.permute.xlu0 %5329
    %5331 = vrot.lane.b32.xlu0 %v3843, 80
    %v5332 = vpop.permute.xlu0 %5331
    %5333 = vrot.lane.b32.xlu0 %v3844, 80
    %v5334 = vpop.permute.xlu0 %5333
    %5335 = vrot.lane.b32.xlu0 %v3845, 80
    %v5336 = vpop.permute.xlu0 %5335
    %5337 = vrot.lane.b32.xlu0 %v3846, 80
    %v5338 = vpop.permute.xlu0 %5337
    %5339 = vrot.lane.b32.xlu0 %v5275, 80
    %v5340 = vpop.permute.xlu0 %5339
    %5341 = vrot.lane.b32.xlu0 %v5276, 80
    %v5342 = vpop.permute.xlu0 %5341
    %5343 = vrot.lane.b32.xlu0 %v5277, 80
    %v5344 = vpop.permute.xlu0 %5343
    %5345 = vrot.lane.b32.xlu0 %v5278, 80
    %v5346 = vpop.permute.xlu0 %5345
    %vm5379 = vcmask 720512
    %5380 = vst.msk [vmem:[#allocation5] sm:$0xff] %vm5379, %v5284
    %5381 = vst.msk [vmem:[#allocation5 + $0x8] sm:$0xff] %vm5379, %v5286
    %5382 = vst.msk [vmem:[#allocation5 + $0x10] sm:$0xff] %vm5379, %v5288
    %5383 = vst.msk [vmem:[#allocation5 + $0x18] sm:$0xff] %vm5379, %v5290
    %5384 = vst.msk [vmem:[#allocation5 + $0x20] sm:$0xff] %vm5379, %v5292
    %5385 = vst.msk [vmem:[#allocation5 + $0x28] sm:$0xff] %vm5379, %v5294
    %5386 = vst.msk [vmem:[#allocation5 + $0x30] sm:$0xff] %vm5379, %v5296
    %5387 = vst.msk [vmem:[#allocation5 + $0x38] sm:$0xff] %vm5379, %v5298
    %5388 = vst.msk [vmem:[#allocation5 + $0x40] sm:$0xff] %vm5379, %v5300
    %5389 = vst.msk [vmem:[#allocation5 + $0x48] sm:$0xff] %vm5379, %v5302
    %5390 = vst.msk [vmem:[#allocation5 + $0x50] sm:$0xff] %vm5379, %v5304
    %5391 = vst.msk [vmem:[#allocation5 + $0x58] sm:$0xff] %vm5379, %v5306
    %5392 = vst.msk [vmem:[#allocation5 + $0x60] sm:$0xff] %vm5379, %v5308
    %5393 = vst.msk [vmem:[#allocation5 + $0x68] sm:$0xff] %vm5379, %v5310
    %5394 = vst.msk [vmem:[#allocation5 + $0x70] sm:$0xff] %vm5379, %v5312
    %5395 = vst.msk [vmem:[#allocation5 + $0x78] sm:$0xff] %vm5379, %v5314
    %5396 = vst.msk [vmem:[#allocation5 + $0x80] sm:$0xff] %vm5379, %v5316
    %5397 = vst.msk [vmem:[#allocation5 + $0x88] sm:$0xff] %vm5379, %v5318
    %5398 = vst.msk [vmem:[#allocation5 + $0x90] sm:$0xff] %vm5379, %v5320
    %5399 = vst.msk [vmem:[#allocation5 + $0x98] sm:$0xff] %vm5379, %v5322
    %5400 = vst.msk [vmem:[#allocation5 + $0xa0] sm:$0xff] %vm5379, %v5324
    %5401 = vst.msk [vmem:[#allocation5 + $0xa8] sm:$0xff] %vm5379, %v5326
    %5402 = vst.msk [vmem:[#allocation5 + $0xb0] sm:$0xff] %vm5379, %v5328
    %5403 = vst.msk [vmem:[#allocation5 + $0xb8] sm:$0xff] %vm5379, %v5330
    %5404 = vst.msk [vmem:[#allocation5 + $0xc0] sm:$0xff] %vm5379, %v5332
    %5405 = vst.msk [vmem:[#allocation5 + $0xc8] sm:$0xff] %vm5379, %v5334
    %5406 = vst.msk [vmem:[#allocation5 + $0xd0] sm:$0xff] %vm5379, %v5336
    %5407 = vst.msk [vmem:[#allocation5 + $0xd8] sm:$0xff] %vm5379, %v5338
    %5408 = vst.msk [vmem:[#allocation5 + $0xe0] sm:$0xff] %vm5379, %v5340
    %5409 = vst.msk [vmem:[#allocation5 + $0xe8] sm:$0xff] %vm5379, %v5342
    %5410 = vst.msk [vmem:[#allocation5 + $0xf0] sm:$0xff] %vm5379, %v5344
    %5411 = vst.msk [vmem:[#allocation5 + $0xf8] sm:$0xff] %vm5379, %v5346
    %v5412 = vpack.c.bf16 %v3527, %v3525
    %v5413 = vpack.c.bf16 %v3531, %v3529
    %v5414 = vpack.c.bf16 %v3535, %v3533
    %v5415 = vpack.c.bf16 %v3539, %v3537
    %5420 = vrot.lane.b32.xlu0 %v4012, 88
    %v5421 = vpop.permute.xlu0 %5420
    %5422 = vrot.lane.b32.xlu0 %v4013, 88
    %v5423 = vpop.permute.xlu0 %5422
    %5424 = vrot.lane.b32.xlu0 %v4014, 88
    %v5425 = vpop.permute.xlu0 %5424
    %5426 = vrot.lane.b32.xlu0 %v4015, 88
    %v5427 = vpop.permute.xlu0 %5426
    %5428 = vrot.lane.b32.xlu0 %v4016, 88
    %v5429 = vpop.permute.xlu0 %5428
    %5430 = vrot.lane.b32.xlu0 %v4017, 88
    %v5431 = vpop.permute.xlu0 %5430
    %5432 = vrot.lane.b32.xlu0 %v4018, 88
    %v5433 = vpop.permute.xlu0 %5432
    %5434 = vrot.lane.b32.xlu0 %v4019, 88
    %v5435 = vpop.permute.xlu0 %5434
    %5436 = vrot.lane.b32.xlu0 %v4020, 88
    %v5437 = vpop.permute.xlu0 %5436
    %5438 = vrot.lane.b32.xlu0 %v4021, 88
    %v5439 = vpop.permute.xlu0 %5438
    %5440 = vrot.lane.b32.xlu0 %v4022, 88
    %v5441 = vpop.permute.xlu0 %5440
    %5442 = vrot.lane.b32.xlu0 %v4023, 88
    %v5443 = vpop.permute.xlu0 %5442
    %5444 = vrot.lane.b32.xlu0 %v4024, 88
    %v5445 = vpop.permute.xlu0 %5444
    %5446 = vrot.lane.b32.xlu0 %v4025, 88
    %v5447 = vpop.permute.xlu0 %5446
    %5448 = vrot.lane.b32.xlu0 %v4026, 88
    %v5449 = vpop.permute.xlu0 %5448
    %5450 = vrot.lane.b32.xlu0 %v4027, 88
    %v5451 = vpop.permute.xlu0 %5450
    %5452 = vrot.lane.b32.xlu0 %v4028, 88
    %v5453 = vpop.permute.xlu0 %5452
    %5454 = vrot.lane.b32.xlu0 %v4029, 88
    %v5455 = vpop.permute.xlu0 %5454
    %5456 = vrot.lane.b32.xlu0 %v4030, 88
    %v5457 = vpop.permute.xlu0 %5456
    %5458 = vrot.lane.b32.xlu0 %v4031, 88
    %v5459 = vpop.permute.xlu0 %5458
    %5460 = vrot.lane.b32.xlu0 %v4032, 88
    %v5461 = vpop.permute.xlu0 %5460
    %5462 = vrot.lane.b32.xlu0 %v4033, 88
    %v5463 = vpop.permute.xlu0 %5462
    %5464 = vrot.lane.b32.xlu0 %v4034, 88
    %v5465 = vpop.permute.xlu0 %5464
    %5466 = vrot.lane.b32.xlu0 %v4035, 88
    %v5467 = vpop.permute.xlu0 %5466
    %5468 = vrot.lane.b32.xlu0 %v4036, 88
    %v5469 = vpop.permute.xlu0 %5468
    %5470 = vrot.lane.b32.xlu0 %v4037, 88
    %v5471 = vpop.permute.xlu0 %5470
    %5472 = vrot.lane.b32.xlu0 %v4038, 88
    %v5473 = vpop.permute.xlu0 %5472
    %5474 = vrot.lane.b32.xlu0 %v4039, 88
    %v5475 = vpop.permute.xlu0 %5474
    %5476 = vrot.lane.b32.xlu0 %v5412, 88
    %v5477 = vpop.permute.xlu0 %5476
    %5478 = vrot.lane.b32.xlu0 %v5413, 88
    %v5479 = vpop.permute.xlu0 %5478
    %5480 = vrot.lane.b32.xlu0 %v5414, 88
    %v5481 = vpop.permute.xlu0 %5480
    %5482 = vrot.lane.b32.xlu0 %v5415, 88
    %v5483 = vpop.permute.xlu0 %5482
    %vm5516 = vcmask 786112
    %5517 = vst.msk [vmem:[#allocation5] sm:$0xff] %vm5516, %v5421
    %5518 = vst.msk [vmem:[#allocation5 + $0x8] sm:$0xff] %vm5516, %v5423
    %5519 = vst.msk [vmem:[#allocation5 + $0x10] sm:$0xff] %vm5516, %v5425
    %5520 = vst.msk [vmem:[#allocation5 + $0x18] sm:$0xff] %vm5516, %v5427
    %5521 = vst.msk [vmem:[#allocation5 + $0x20] sm:$0xff] %vm5516, %v5429
    %5522 = vst.msk [vmem:[#allocation5 + $0x28] sm:$0xff] %vm5516, %v5431
    %5523 = vst.msk [vmem:[#allocation5 + $0x30] sm:$0xff] %vm5516, %v5433
    %5524 = vst.msk [vmem:[#allocation5 + $0x38] sm:$0xff] %vm5516, %v5435
    %5525 = vst.msk [vmem:[#allocation5 + $0x40] sm:$0xff] %vm5516, %v5437
    %5526 = vst.msk [vmem:[#allocation5 + $0x48] sm:$0xff] %vm5516, %v5439
    %5527 = vst.msk [vmem:[#allocation5 + $0x50] sm:$0xff] %vm5516, %v5441
    %5528 = vst.msk [vmem:[#allocation5 + $0x58] sm:$0xff] %vm5516, %v5443
    %5529 = vst.msk [vmem:[#allocation5 + $0x60] sm:$0xff] %vm5516, %v5445
    %5530 = vst.msk [vmem:[#allocation5 + $0x68] sm:$0xff] %vm5516, %v5447
    %5531 = vst.msk [vmem:[#allocation5 + $0x70] sm:$0xff] %vm5516, %v5449
    %5532 = vst.msk [vmem:[#allocation5 + $0x78] sm:$0xff] %vm5516, %v5451
    %5533 = vst.msk [vmem:[#allocation5 + $0x80] sm:$0xff] %vm5516, %v5453
    %5534 = vst.msk [vmem:[#allocation5 + $0x88] sm:$0xff] %vm5516, %v5455
    %5535 = vst.msk [vmem:[#allocation5 + $0x90] sm:$0xff] %vm5516, %v5457
    %5536 = vst.msk [vmem:[#allocation5 + $0x98] sm:$0xff] %vm5516, %v5459
    %5537 = vst.msk [vmem:[#allocation5 + $0xa0] sm:$0xff] %vm5516, %v5461
    %5538 = vst.msk [vmem:[#allocation5 + $0xa8] sm:$0xff] %vm5516, %v5463
    %5539 = vst.msk [vmem:[#allocation5 + $0xb0] sm:$0xff] %vm5516, %v5465
    %5540 = vst.msk [vmem:[#allocation5 + $0xb8] sm:$0xff] %vm5516, %v5467
    %5541 = vst.msk [vmem:[#allocation5 + $0xc0] sm:$0xff] %vm5516, %v5469
    %5542 = vst.msk [vmem:[#allocation5 + $0xc8] sm:$0xff] %vm5516, %v5471
    %5543 = vst.msk [vmem:[#allocation5 + $0xd0] sm:$0xff] %vm5516, %v5473
    %5544 = vst.msk [vmem:[#allocation5 + $0xd8] sm:$0xff] %vm5516, %v5475
    %5545 = vst.msk [vmem:[#allocation5 + $0xe0] sm:$0xff] %vm5516, %v5477
    %5546 = vst.msk [vmem:[#allocation5 + $0xe8] sm:$0xff] %vm5516, %v5479
    %5547 = vst.msk [vmem:[#allocation5 + $0xf0] sm:$0xff] %vm5516, %v5481
    %5548 = vst.msk [vmem:[#allocation5 + $0xf8] sm:$0xff] %vm5516, %v5483
    %v5549 = vpack.c.bf16 %v3542, %v3540
    %v5550 = vpack.c.bf16 %v3546, %v3544
    %v5551 = vpack.c.bf16 %v3550, %v3548
    %v5552 = vpack.c.bf16 %v3554, %v3552
    %5557 = vrot.lane.b32.xlu0 %v4205, 96
    %v5558 = vpop.permute.xlu0 %5557
    %5559 = vrot.lane.b32.xlu0 %v4206, 96
    %v5560 = vpop.permute.xlu0 %5559
    %5561 = vrot.lane.b32.xlu0 %v4207, 96
    %v5562 = vpop.permute.xlu0 %5561
    %5563 = vrot.lane.b32.xlu0 %v4208, 96
    %v5564 = vpop.permute.xlu0 %5563
    %5565 = vrot.lane.b32.xlu0 %v4209, 96
    %v5566 = vpop.permute.xlu0 %5565
    %5567 = vrot.lane.b32.xlu0 %v4210, 96
    %v5568 = vpop.permute.xlu0 %5567
    %5569 = vrot.lane.b32.xlu0 %v4211, 96
    %v5570 = vpop.permute.xlu0 %5569
    %5571 = vrot.lane.b32.xlu0 %v4212, 96
    %v5572 = vpop.permute.xlu0 %5571
    %5573 = vrot.lane.b32.xlu0 %v4213, 96
    %v5574 = vpop.permute.xlu0 %5573
    %5575 = vrot.lane.b32.xlu0 %v4214, 96
    %v5576 = vpop.permute.xlu0 %5575
    %5577 = vrot.lane.b32.xlu0 %v4215, 96
    %v5578 = vpop.permute.xlu0 %5577
    %5579 = vrot.lane.b32.xlu0 %v4216, 96
    %v5580 = vpop.permute.xlu0 %5579
    %5581 = vrot.lane.b32.xlu0 %v4217, 96
    %v5582 = vpop.permute.xlu0 %5581
    %5583 = vrot.lane.b32.xlu0 %v4218, 96
    %v5584 = vpop.permute.xlu0 %5583
    %5585 = vrot.lane.b32.xlu0 %v4219, 96
    %v5586 = vpop.permute.xlu0 %5585
    %5587 = vrot.lane.b32.xlu0 %v4220, 96
    %v5588 = vpop.permute.xlu0 %5587
    %5589 = vrot.lane.b32.xlu0 %v4221, 96
    %v5590 = vpop.permute.xlu0 %5589
    %5591 = vrot.lane.b32.xlu0 %v4222, 96
    %v5592 = vpop.permute.xlu0 %5591
    %5593 = vrot.lane.b32.xlu0 %v4223, 96
    %v5594 = vpop.permute.xlu0 %5593
    %5595 = vrot.lane.b32.xlu0 %v4224, 96
    %v5596 = vpop.permute.xlu0 %5595
    %5597 = vrot.lane.b32.xlu0 %v4225, 96
    %v5598 = vpop.permute.xlu0 %5597
    %5599 = vrot.lane.b32.xlu0 %v4226, 96
    %v5600 = vpop.permute.xlu0 %5599
    %5601 = vrot.lane.b32.xlu0 %v4227, 96
    %v5602 = vpop.permute.xlu0 %5601
    %5603 = vrot.lane.b32.xlu0 %v4228, 96
    %v5604 = vpop.permute.xlu0 %5603
    %5605 = vrot.lane.b32.xlu0 %v4229, 96
    %v5606 = vpop.permute.xlu0 %5605
    %5607 = vrot.lane.b32.xlu0 %v4230, 96
    %v5608 = vpop.permute.xlu0 %5607
    %5609 = vrot.lane.b32.xlu0 %v4231, 96
    %v5610 = vpop.permute.xlu0 %5609
    %5611 = vrot.lane.b32.xlu0 %v4232, 96
    %v5612 = vpop.permute.xlu0 %5611
    %5613 = vrot.lane.b32.xlu0 %v5549, 96
    %v5614 = vpop.permute.xlu0 %5613
    %5615 = vrot.lane.b32.xlu0 %v5550, 96
    %v5616 = vpop.permute.xlu0 %5615
    %5617 = vrot.lane.b32.xlu0 %v5551, 96
    %v5618 = vpop.permute.xlu0 %5617
    %5619 = vrot.lane.b32.xlu0 %v5552, 96
    %v5620 = vpop.permute.xlu0 %5619
    %vm5653 = vcmask 851712
    %5654 = vst.msk [vmem:[#allocation5] sm:$0xff] %vm5653, %v5558
    %5655 = vst.msk [vmem:[#allocation5 + $0x8] sm:$0xff] %vm5653, %v5560
    %5656 = vst.msk [vmem:[#allocation5 + $0x10] sm:$0xff] %vm5653, %v5562
    %5657 = vst.msk [vmem:[#allocation5 + $0x18] sm:$0xff] %vm5653, %v5564
    %5658 = vst.msk [vmem:[#allocation5 + $0x20] sm:$0xff] %vm5653, %v5566
    %5659 = vst.msk [vmem:[#allocation5 + $0x28] sm:$0xff] %vm5653, %v5568
    %5660 = vst.msk [vmem:[#allocation5 + $0x30] sm:$0xff] %vm5653, %v5570
    %5661 = vst.msk [vmem:[#allocation5 + $0x38] sm:$0xff] %vm5653, %v5572
    %5662 = vst.msk [vmem:[#allocation5 + $0x40] sm:$0xff] %vm5653, %v5574
    %5663 = vst.msk [vmem:[#allocation5 + $0x48] sm:$0xff] %vm5653, %v5576
    %5664 = vst.msk [vmem:[#allocation5 + $0x50] sm:$0xff] %vm5653, %v5578
    %5665 = vst.msk [vmem:[#allocation5 + $0x58] sm:$0xff] %vm5653, %v5580
    %5666 = vst.msk [vmem:[#allocation5 + $0x60] sm:$0xff] %vm5653, %v5582
    %5667 = vst.msk [vmem:[#allocation5 + $0x68] sm:$0xff] %vm5653, %v5584
    %5668 = vst.msk [vmem:[#allocation5 + $0x70] sm:$0xff] %vm5653, %v5586
    %5669 = vst.msk [vmem:[#allocation5 + $0x78] sm:$0xff] %vm5653, %v5588
    %5670 = vst.msk [vmem:[#allocation5 + $0x80] sm:$0xff] %vm5653, %v5590
    %5671 = vst.msk [vmem:[#allocation5 + $0x88] sm:$0xff] %vm5653, %v5592
    %5672 = vst.msk [vmem:[#allocation5 + $0x90] sm:$0xff] %vm5653, %v5594
    %5673 = vst.msk [vmem:[#allocation5 + $0x98] sm:$0xff] %vm5653, %v5596
    %5674 = vst.msk [vmem:[#allocation5 + $0xa0] sm:$0xff] %vm5653, %v5598
    %5675 = vst.msk [vmem:[#allocation5 + $0xa8] sm:$0xff] %vm5653, %v5600
    %5676 = vst.msk [vmem:[#allocation5 + $0xb0] sm:$0xff] %vm5653, %v5602
    %5677 = vst.msk [vmem:[#allocation5 + $0xb8] sm:$0xff] %vm5653, %v5604
    %5678 = vst.msk [vmem:[#allocation5 + $0xc0] sm:$0xff] %vm5653, %v5606
    %5679 = vst.msk [vmem:[#allocation5 + $0xc8] sm:$0xff] %vm5653, %v5608
    %5680 = vst.msk [vmem:[#allocation5 + $0xd0] sm:$0xff] %vm5653, %v5610
    %5681 = vst.msk [vmem:[#allocation5 + $0xd8] sm:$0xff] %vm5653, %v5612
    %5682 = vst.msk [vmem:[#allocation5 + $0xe0] sm:$0xff] %vm5653, %v5614
    %5683 = vst.msk [vmem:[#allocation5 + $0xe8] sm:$0xff] %vm5653, %v5616
    %5684 = vst.msk [vmem:[#allocation5 + $0xf0] sm:$0xff] %vm5653, %v5618
    %5685 = vst.msk [vmem:[#allocation5 + $0xf8] sm:$0xff] %vm5653, %v5620
    %v5686 = vpack.c.bf16 %v3543, %v3541
    %v5687 = vpack.c.bf16 %v3547, %v3545
    %v5688 = vpack.c.bf16 %v3551, %v3549
    %v5689 = vpack.c.bf16 %v3555, %v3553
    %5694 = vrot.lane.b32.xlu0 %v4398, 104
    %v5695 = vpop.permute.xlu0 %5694
    %5696 = vrot.lane.b32.xlu0 %v4399, 104
    %v5697 = vpop.permute.xlu0 %5696
    %5698 = vrot.lane.b32.xlu0 %v4400, 104
    %v5699 = vpop.permute.xlu0 %5698
    %5700 = vrot.lane.b32.xlu0 %v4401, 104
    %v5701 = vpop.permute.xlu0 %5700
    %5702 = vrot.lane.b32.xlu0 %v4402, 104
    %v5703 = vpop.permute.xlu0 %5702
    %5704 = vrot.lane.b32.xlu0 %v4403, 104
    %v5705 = vpop.permute.xlu0 %5704
    %5706 = vrot.lane.b32.xlu0 %v4404, 104
    %v5707 = vpop.permute.xlu0 %5706
    %5708 = vrot.lane.b32.xlu0 %v4405, 104
    %v5709 = vpop.permute.xlu0 %5708
    %5710 = vrot.lane.b32.xlu0 %v4406, 104
    %v5711 = vpop.permute.xlu0 %5710
    %5712 = vrot.lane.b32.xlu0 %v4407, 104
    %v5713 = vpop.permute.xlu0 %5712
    %5714 = vrot.lane.b32.xlu0 %v4408, 104
    %v5715 = vpop.permute.xlu0 %5714
    %5716 = vrot.lane.b32.xlu0 %v4409, 104
    %v5717 = vpop.permute.xlu0 %5716
    %5718 = vrot.lane.b32.xlu0 %v4410, 104
    %v5719 = vpop.permute.xlu0 %5718
    %5720 = vrot.lane.b32.xlu0 %v4411, 104
    %v5721 = vpop.permute.xlu0 %5720
    %5722 = vrot.lane.b32.xlu0 %v4412, 104
    %v5723 = vpop.permute.xlu0 %5722
    %5724 = vrot.lane.b32.xlu0 %v4413, 104
    %v5725 = vpop.permute.xlu0 %5724
    %5726 = vrot.lane.b32.xlu0 %v4414, 104
    %v5727 = vpop.permute.xlu0 %5726
    %5728 = vrot.lane.b32.xlu0 %v4415, 104
    %v5729 = vpop.permute.xlu0 %5728
    %5730 = vrot.lane.b32.xlu0 %v4416, 104
    %v5731 = vpop.permute.xlu0 %5730
    %5732 = vrot.lane.b32.xlu0 %v4417, 104
    %v5733 = vpop.permute.xlu0 %5732
    %5734 = vrot.lane.b32.xlu0 %v4418, 104
    %v5735 = vpop.permute.xlu0 %5734
    %5736 = vrot.lane.b32.xlu0 %v4419, 104
    %v5737 = vpop.permute.xlu0 %5736
    %5738 = vrot.lane.b32.xlu0 %v4420, 104
    %v5739 = vpop.permute.xlu0 %5738
    %5740 = vrot.lane.b32.xlu0 %v4421, 104
    %v5741 = vpop.permute.xlu0 %5740
    %5742 = vrot.lane.b32.xlu0 %v4422, 104
    %v5743 = vpop.permute.xlu0 %5742
    %5744 = vrot.lane.b32.xlu0 %v4423, 104
    %v5745 = vpop.permute.xlu0 %5744
    %5746 = vrot.lane.b32.xlu0 %v4424, 104
    %v5747 = vpop.permute.xlu0 %5746
    %5748 = vrot.lane.b32.xlu0 %v4425, 104
    %v5749 = vpop.permute.xlu0 %5748
    %5750 = vrot.lane.b32.xlu0 %v5686, 104
    %v5751 = vpop.permute.xlu0 %5750
    %5752 = vrot.lane.b32.xlu0 %v5687, 104
    %v5753 = vpop.permute.xlu0 %5752
    %5754 = vrot.lane.b32.xlu0 %v5688, 104
    %v5755 = vpop.permute.xlu0 %5754
    %5756 = vrot.lane.b32.xlu0 %v5689, 104
    %v5757 = vpop.permute.xlu0 %5756
    %vm5790 = vcmask 917312
    %5791 = vst.msk [vmem:[#allocation5] sm:$0xff] %vm5790, %v5695
    %5792 = vst.msk [vmem:[#allocation5 + $0x8] sm:$0xff] %vm5790, %v5697
    %5793 = vst.msk [vmem:[#allocation5 + $0x10] sm:$0xff] %vm5790, %v5699
    %5794 = vst.msk [vmem:[#allocation5 + $0x18] sm:$0xff] %vm5790, %v5701
    %5795 = vst.msk [vmem:[#allocation5 + $0x20] sm:$0xff] %vm5790, %v5703
    %5796 = vst.msk [vmem:[#allocation5 + $0x28] sm:$0xff] %vm5790, %v5705
    %5797 = vst.msk [vmem:[#allocation5 + $0x30] sm:$0xff] %vm5790, %v5707
    %5798 = vst.msk [vmem:[#allocation5 + $0x38] sm:$0xff] %vm5790, %v5709
    %5799 = vst.msk [vmem:[#allocation5 + $0x40] sm:$0xff] %vm5790, %v5711
    %5800 = vst.msk [vmem:[#allocation5 + $0x48] sm:$0xff] %vm5790, %v5713
    %5801 = vst.msk [vmem:[#allocation5 + $0x50] sm:$0xff] %vm5790, %v5715
    %5802 = vst.msk [vmem:[#allocation5 + $0x58] sm:$0xff] %vm5790, %v5717
    %5803 = vst.msk [vmem:[#allocation5 + $0x60] sm:$0xff] %vm5790, %v5719
    %5804 = vst.msk [vmem:[#allocation5 + $0x68] sm:$0xff] %vm5790, %v5721
    %5805 = vst.msk [vmem:[#allocation5 + $0x70] sm:$0xff] %vm5790, %v5723
    %5806 = vst.msk [vmem:[#allocation5 + $0x78] sm:$0xff] %vm5790, %v5725
    %5807 = vst.msk [vmem:[#allocation5 + $0x80] sm:$0xff] %vm5790, %v5727
    %5808 = vst.msk [vmem:[#allocation5 + $0x88] sm:$0xff] %vm5790, %v5729
    %5809 = vst.msk [vmem:[#allocation5 + $0x90] sm:$0xff] %vm5790, %v5731
    %5810 = vst.msk [vmem:[#allocation5 + $0x98] sm:$0xff] %vm5790, %v5733
    %5811 = vst.msk [vmem:[#allocation5 + $0xa0] sm:$0xff] %vm5790, %v5735
    %5812 = vst.msk [vmem:[#allocation5 + $0xa8] sm:$0xff] %vm5790, %v5737
    %5813 = vst.msk [vmem:[#allocation5 + $0xb0] sm:$0xff] %vm5790, %v5739
    %5814 = vst.msk [vmem:[#allocation5 + $0xb8] sm:$0xff] %vm5790, %v5741
    %5815 = vst.msk [vmem:[#allocation5 + $0xc0] sm:$0xff] %vm5790, %v5743
    %5816 = vst.msk [vmem:[#allocation5 + $0xc8] sm:$0xff] %vm5790, %v5745
    %5817 = vst.msk [vmem:[#allocation5 + $0xd0] sm:$0xff] %vm5790, %v5747
    %5818 = vst.msk [vmem:[#allocation5 + $0xd8] sm:$0xff] %vm5790, %v5749
    %5819 = vst.msk [vmem:[#allocation5 + $0xe0] sm:$0xff] %vm5790, %v5751
    %5820 = vst.msk [vmem:[#allocation5 + $0xe8] sm:$0xff] %vm5790, %v5753
    %5821 = vst.msk [vmem:[#allocation5 + $0xf0] sm:$0xff] %vm5790, %v5755
    %5822 = vst.msk [vmem:[#allocation5 + $0xf8] sm:$0xff] %vm5790, %v5757
    %v5823 = vpack.c.bf16 %v3544, %v3542
    %v5824 = vpack.c.bf16 %v3548, %v3546
    %v5825 = vpack.c.bf16 %v3552, %v3550
    %v5826 = vpack.c.bf16 %v3556, %v3554
    %5831 = vrot.lane.b32.xlu0 %v4591, 112
    %v5832 = vpop.permute.xlu0 %5831
    %5833 = vrot.lane.b32.xlu0 %v4592, 112
    %v5834 = vpop.permute.xlu0 %5833
    %5835 = vrot.lane.b32.xlu0 %v4593, 112
    %v5836 = vpop.permute.xlu0 %5835
    %5837 = vrot.lane.b32.xlu0 %v4594, 112
    %v5838 = vpop.permute.xlu0 %5837
    %5839 = vrot.lane.b32.xlu0 %v4595, 112
    %v5840 = vpop.permute.xlu0 %5839
    %5841 = vrot.lane.b32.xlu0 %v4596, 112
    %v5842 = vpop.permute.xlu0 %5841
    %5843 = vrot.lane.b32.xlu0 %v4597, 112
    %v5844 = vpop.permute.xlu0 %5843
    %5845 = vrot.lane.b32.xlu0 %v4598, 112
    %v5846 = vpop.permute.xlu0 %5845
    %5847 = vrot.lane.b32.xlu0 %v4599, 112
    %v5848 = vpop.permute.xlu0 %5847
    %5849 = vrot.lane.b32.xlu0 %v4600, 112
    %v5850 = vpop.permute.xlu0 %5849
    %5851 = vrot.lane.b32.xlu0 %v4601, 112
    %v5852 = vpop.permute.xlu0 %5851
    %5853 = vrot.lane.b32.xlu0 %v4602, 112
    %v5854 = vpop.permute.xlu0 %5853
    %5855 = vrot.lane.b32.xlu0 %v4603, 112
    %v5856 = vpop.permute.xlu0 %5855
    %5857 = vrot.lane.b32.xlu0 %v4604, 112
    %v5858 = vpop.permute.xlu0 %5857
    %5859 = vrot.lane.b32.xlu0 %v4605, 112
    %v5860 = vpop.permute.xlu0 %5859
    %5861 = vrot.lane.b32.xlu0 %v4606, 112
    %v5862 = vpop.permute.xlu0 %5861
    %5863 = vrot.lane.b32.xlu0 %v4607, 112
    %v5864 = vpop.permute.xlu0 %5863
    %5865 = vrot.lane.b32.xlu0 %v4608, 112
    %v5866 = vpop.permute.xlu0 %5865
    %5867 = vrot.lane.b32.xlu0 %v4609, 112
    %v5868 = vpop.permute.xlu0 %5867
    %5869 = vrot.lane.b32.xlu0 %v4610, 112
    %v5870 = vpop.permute.xlu0 %5869
    %5871 = vrot.lane.b32.xlu0 %v4611, 112
    %v5872 = vpop.permute.xlu0 %5871
    %5873 = vrot.lane.b32.xlu0 %v4612, 112
    %v5874 = vpop.permute.xlu0 %5873
    %5875 = vrot.lane.b32.xlu0 %v4613, 112
    %v5876 = vpop.permute.xlu0 %5875
    %5877 = vrot.lane.b32.xlu0 %v4614, 112
    %v5878 = vpop.permute.xlu0 %5877
    %5879 = vrot.lane.b32.xlu0 %v4615, 112
    %v5880 = vpop.permute.xlu0 %5879
    %5881 = vrot.lane.b32.xlu0 %v4616, 112
    %v5882 = vpop.permute.xlu0 %5881
    %5883 = vrot.lane.b32.xlu0 %v4617, 112
    %v5884 = vpop.permute.xlu0 %5883
    %5885 = vrot.lane.b32.xlu0 %v4618, 112
    %v5886 = vpop.permute.xlu0 %5885
    %5887 = vrot.lane.b32.xlu0 %v5823, 112
    %v5888 = vpop.permute.xlu0 %5887
    %5889 = vrot.lane.b32.xlu0 %v5824, 112
    %v5890 = vpop.permute.xlu0 %5889
    %5891 = vrot.lane.b32.xlu0 %v5825, 112
    %v5892 = vpop.permute.xlu0 %5891
    %5893 = vrot.lane.b32.xlu0 %v5826, 112
    %v5894 = vpop.permute.xlu0 %5893
    %vm5927 = vcmask 982912
    %5928 = vst.msk [vmem:[#allocation5] sm:$0xff] %vm5927, %v5832
    %5929 = vst.msk [vmem:[#allocation5 + $0x8] sm:$0xff] %vm5927, %v5834
    %5930 = vst.msk [vmem:[#allocation5 + $0x10] sm:$0xff] %vm5927, %v5836
    %5931 = vst.msk [vmem:[#allocation5 + $0x18] sm:$0xff] %vm5927, %v5838
    %5932 = vst.msk [vmem:[#allocation5 + $0x20] sm:$0xff] %vm5927, %v5840
    %5933 = vst.msk [vmem:[#allocation5 + $0x28] sm:$0xff] %vm5927, %v5842
    %5934 = vst.msk [vmem:[#allocation5 + $0x30] sm:$0xff] %vm5927, %v5844
    %5935 = vst.msk [vmem:[#allocation5 + $0x38] sm:$0xff] %vm5927, %v5846
    %5936 = vst.msk [vmem:[#allocation5 + $0x40] sm:$0xff] %vm5927, %v5848
    %5937 = vst.msk [vmem:[#allocation5 + $0x48] sm:$0xff] %vm5927, %v5850
    %5938 = vst.msk [vmem:[#allocation5 + $0x50] sm:$0xff] %vm5927, %v5852
    %5939 = vst.msk [vmem:[#allocation5 + $0x58] sm:$0xff] %vm5927, %v5854
    %5940 = vst.msk [vmem:[#allocation5 + $0x60] sm:$0xff] %vm5927, %v5856
    %5941 = vst.msk [vmem:[#allocation5 + $0x68] sm:$0xff] %vm5927, %v5858
    %5942 = vst.msk [vmem:[#allocation5 + $0x70] sm:$0xff] %vm5927, %v5860
    %5943 = vst.msk [vmem:[#allocation5 + $0x78] sm:$0xff] %vm5927, %v5862
    %5944 = vst.msk [vmem:[#allocation5 + $0x80] sm:$0xff] %vm5927, %v5864
    %5945 = vst.msk [vmem:[#allocation5 + $0x88] sm:$0xff] %vm5927, %v5866
    %5946 = vst.msk [vmem:[#allocation5 + $0x90] sm:$0xff] %vm5927, %v5868
    %5947 = vst.msk [vmem:[#allocation5 + $0x98] sm:$0xff] %vm5927, %v5870
    %5948 = vst.msk [vmem:[#allocation5 + $0xa0] sm:$0xff] %vm5927, %v5872
    %5949 = vst.msk [vmem:[#allocation5 + $0xa8] sm:$0xff] %vm5927, %v5874
    %5950 = vst.msk [vmem:[#allocation5 + $0xb0] sm:$0xff] %vm5927, %v5876
    %5951 = vst.msk [vmem:[#allocation5 + $0xb8] sm:$0xff] %vm5927, %v5878
    %5952 = vst.msk [vmem:[#allocation5 + $0xc0] sm:$0xff] %vm5927, %v5880
    %5953 = vst.msk [vmem:[#allocation5 + $0xc8] sm:$0xff] %vm5927, %v5882
    %5954 = vst.msk [vmem:[#allocation5 + $0xd0] sm:$0xff] %vm5927, %v5884
    %5955 = vst.msk [vmem:[#allocation5 + $0xd8] sm:$0xff] %vm5927, %v5886
    %5956 = vst.msk [vmem:[#allocation5 + $0xe0] sm:$0xff] %vm5927, %v5888
    %5957 = vst.msk [vmem:[#allocation5 + $0xe8] sm:$0xff] %vm5927, %v5890
    %5958 = vst.msk [vmem:[#allocation5 + $0xf0] sm:$0xff] %vm5927, %v5892
    %5959 = vst.msk [vmem:[#allocation5 + $0xf8] sm:$0xff] %vm5927, %v5894
    %v5960 = vpack.c.bf16 %v3545, %v3543
    %v5961 = vpack.c.bf16 %v3549, %v3547
    %v5962 = vpack.c.bf16 %v3553, %v3551
    %v5963 = vpack.c.bf16 %v3557, %v3555
    %5968 = vrot.lane.b32.xlu0 %v4784, 120
    %v5969 = vpop.permute.xlu0 %5968
    %5970 = vrot.lane.b32.xlu0 %v4785, 120
    %v5971 = vpop.permute.xlu0 %5970
    %5972 = vrot.lane.b32.xlu0 %v4786, 120
    %v5973 = vpop.permute.xlu0 %5972
    %5974 = vrot.lane.b32.xlu0 %v4787, 120
    %v5975 = vpop.permute.xlu0 %5974
    %5976 = vrot.lane.b32.xlu0 %v4788, 120
    %v5977 = vpop.permute.xlu0 %5976
    %5978 = vrot.lane.b32.xlu0 %v4789, 120
    %v5979 = vpop.permute.xlu0 %5978
    %5980 = vrot.lane.b32.xlu0 %v4790, 120
    %v5981 = vpop.permute.xlu0 %5980
    %5982 = vrot.lane.b32.xlu0 %v4791, 120
    %v5983 = vpop.permute.xlu0 %5982
    %5984 = vrot.lane.b32.xlu0 %v4792, 120
    %v5985 = vpop.permute.xlu0 %5984
    %5986 = vrot.lane.b32.xlu0 %v4793, 120
    %v5987 = vpop.permute.xlu0 %5986
    %5988 = vrot.lane.b32.xlu0 %v4794, 120
    %v5989 = vpop.permute.xlu0 %5988
    %5990 = vrot.lane.b32.xlu0 %v4795, 120
    %v5991 = vpop.permute.xlu0 %5990
    %5992 = vrot.lane.b32.xlu0 %v4796, 120
    %v5993 = vpop.permute.xlu0 %5992
    %5994 = vrot.lane.b32.xlu0 %v4797, 120
    %v5995 = vpop.permute.xlu0 %5994
    %5996 = vrot.lane.b32.xlu0 %v4798, 120
    %v5997 = vpop.permute.xlu0 %5996
    %5998 = vrot.lane.b32.xlu0 %v4799, 120
    %v5999 = vpop.permute.xlu0 %5998
    %6000 = vrot.lane.b32.xlu0 %v4800, 120
    %v6001 = vpop.permute.xlu0 %6000
    %6002 = vrot.lane.b32.xlu0 %v4801, 120
    %v6003 = vpop.permute.xlu0 %6002
    %6004 = vrot.lane.b32.xlu0 %v4802, 120
    %v6005 = vpop.permute.xlu0 %6004
    %6006 = vrot.lane.b32.xlu0 %v4803, 120
    %v6007 = vpop.permute.xlu0 %6006
    %6008 = vrot.lane.b32.xlu0 %v4804, 120
    %v6009 = vpop.permute.xlu0 %6008
    %6010 = vrot.lane.b32.xlu0 %v4805, 120
    %v6011 = vpop.permute.xlu0 %6010
    %6012 = vrot.lane.b32.xlu0 %v4806, 120
    %v6013 = vpop.permute.xlu0 %6012
    %6014 = vrot.lane.b32.xlu0 %v4807, 120
    %v6015 = vpop.permute.xlu0 %6014
    %6016 = vrot.lane.b32.xlu0 %v4808, 120
    %v6017 = vpop.permute.xlu0 %6016
    %6018 = vrot.lane.b32.xlu0 %v4809, 120
    %v6019 = vpop.permute.xlu0 %6018
    %6020 = vrot.lane.b32.xlu0 %v4810, 120
    %v6021 = vpop.permute.xlu0 %6020
    %6022 = vrot.lane.b32.xlu0 %v4811, 120
    %v6023 = vpop.permute.xlu0 %6022
    %6024 = vrot.lane.b32.xlu0 %v5960, 120
    %v6025 = vpop.permute.xlu0 %6024
    %6026 = vrot.lane.b32.xlu0 %v5961, 120
    %v6027 = vpop.permute.xlu0 %6026
    %6028 = vrot.lane.b32.xlu0 %v5962, 120
    %v6029 = vpop.permute.xlu0 %6028
    %6030 = vrot.lane.b32.xlu0 %v5963, 120
    %v6031 = vpop.permute.xlu0 %6030
    %vm6064 = vcmask 1048512
    %6065 = vst.msk [vmem:[#allocation5] sm:$0xff] %vm6064, %v5969
    %6066 = vst.msk [vmem:[#allocation5 + $0x8] sm:$0xff] %vm6064, %v5971
    %6067 = vst.msk [vmem:[#allocation5 + $0x10] sm:$0xff] %vm6064, %v5973
    %6068 = vst.msk [vmem:[#allocation5 + $0x18] sm:$0xff] %vm6064, %v5975
    %6069 = vst.msk [vmem:[#allocation5 + $0x20] sm:$0xff] %vm6064, %v5977
    %6070 = vst.msk [vmem:[#allocation5 + $0x28] sm:$0xff] %vm6064, %v5979
    %6071 = vst.msk [vmem:[#allocation5 + $0x30] sm:$0xff] %vm6064, %v5981
    %6072 = vst.msk [vmem:[#allocation5 + $0x38] sm:$0xff] %vm6064, %v5983
    %6073 = vst.msk [vmem:[#allocation5 + $0x40] sm:$0xff] %vm6064, %v5985
    %6074 = vst.msk [vmem:[#allocation5 + $0x48] sm:$0xff] %vm6064, %v5987
    %6075 = vst.msk [vmem:[#allocation5 + $0x50] sm:$0xff] %vm6064, %v5989
    %6076 = vst.msk [vmem:[#allocation5 + $0x58] sm:$0xff] %vm6064, %v5991
    %6077 = vst.msk [vmem:[#allocation5 + $0x60] sm:$0xff] %vm6064, %v5993
    %6078 = vst.msk [vmem:[#allocation5 + $0x68] sm:$0xff] %vm6064, %v5995
    %6079 = vst.msk [vmem:[#allocation5 + $0x70] sm:$0xff] %vm6064, %v5997
    %6080 = vst.msk [vmem:[#allocation5 + $0x78] sm:$0xff] %vm6064, %v5999
    %6081 = vst.msk [vmem:[#allocation5 + $0x80] sm:$0xff] %vm6064, %v6001
    %6082 = vst.msk [vmem:[#allocation5 + $0x88] sm:$0xff] %vm6064, %v6003
    %6083 = vst.msk [vmem:[#allocation5 + $0x90] sm:$0xff] %vm6064, %v6005
    %6084 = vst.msk [vmem:[#allocation5 + $0x98] sm:$0xff] %vm6064, %v6007
    %6085 = vst.msk [vmem:[#allocation5 + $0xa0] sm:$0xff] %vm6064, %v6009
    %6086 = vst.msk [vmem:[#allocation5 + $0xa8] sm:$0xff] %vm6064, %v6011
    %6087 = vst.msk [vmem:[#allocation5 + $0xb0] sm:$0xff] %vm6064, %v6013
    %6088 = vst.msk [vmem:[#allocation5 + $0xb8] sm:$0xff] %vm6064, %v6015
    %6089 = vst.msk [vmem:[#allocation5 + $0xc0] sm:$0xff] %vm6064, %v6017
    %6090 = vst.msk [vmem:[#allocation5 + $0xc8] sm:$0xff] %vm6064, %v6019
    %6091 = vst.msk [vmem:[#allocation5 + $0xd0] sm:$0xff] %vm6064, %v6021
    %6092 = vst.msk [vmem:[#allocation5 + $0xd8] sm:$0xff] %vm6064, %v6023
    %6093 = vst.msk [vmem:[#allocation5 + $0xe0] sm:$0xff] %vm6064, %v6025
    %6094 = vst.msk [vmem:[#allocation5 + $0xe8] sm:$0xff] %vm6064, %v6027
    %6095 = vst.msk [vmem:[#allocation5 + $0xf0] sm:$0xff] %vm6064, %v6029
    %6096 = vst.msk [vmem:[#allocation5 + $0xf8] sm:$0xff] %vm6064, %v6031
    %v6097 = vld [vmem:[#allocation5] sm:$0xff]
    %v6098 = vld [vmem:[#allocation5 + $0x8] sm:$0xff]
    %v6099 = vld [vmem:[#allocation5 + $0x10] sm:$0xff]
    %v6100 = vld [vmem:[#allocation5 + $0x18] sm:$0xff]
    %v6101 = vld [vmem:[#allocation5 + $0x20] sm:$0xff]
    %v6102 = vld [vmem:[#allocation5 + $0x28] sm:$0xff]
    %v6103 = vld [vmem:[#allocation5 + $0x30] sm:$0xff]
    %v6104 = vld [vmem:[#allocation5 + $0x38] sm:$0xff]
    %v6105 = vld [vmem:[#allocation5 + $0x40] sm:$0xff]
    %v6106 = vld [vmem:[#allocation5 + $0x48] sm:$0xff]
    %v6107 = vld [vmem:[#allocation5 + $0x50] sm:$0xff]
    %v6108 = vld [vmem:[#allocation5 + $0x58] sm:$0xff]
    %v6109 = vld [vmem:[#allocation5 + $0x60] sm:$0xff]
    %v6110 = vld [vmem:[#allocation5 + $0x68] sm:$0xff]
    %v6111 = vld [vmem:[#allocation5 + $0x70] sm:$0xff]
    %v6112 = vld [vmem:[#allocation5 + $0x78] sm:$0xff]
    %v6113 = vld [vmem:[#allocation5 + $0x80] sm:$0xff]
    %v6114 = vld [vmem:[#allocation5 + $0x88] sm:$0xff]
    %v6115 = vld [vmem:[#allocation5 + $0x90] sm:$0xff]
    %v6116 = vld [vmem:[#allocation5 + $0x98] sm:$0xff]
    %v6117 = vld [vmem:[#allocation5 + $0xa0] sm:$0xff]
    %v6118 = vld [vmem:[#allocation5 + $0xa8] sm:$0xff]
    %v6119 = vld [vmem:[#allocation5 + $0xb0] sm:$0xff]
    %v6120 = vld [vmem:[#allocation5 + $0xb8] sm:$0xff]
    %v6121 = vld [vmem:[#allocation5 + $0xc0] sm:$0xff]
    %v6122 = vld [vmem:[#allocation5 + $0xc8] sm:$0xff]
    %v6123 = vld [vmem:[#allocation5 + $0xd0] sm:$0xff]
    %v6124 = vld [vmem:[#allocation5 + $0xd8] sm:$0xff]
    %v6125 = vld [vmem:[#allocation5 + $0xe0] sm:$0xff]
    %v6126 = vld [vmem:[#allocation5 + $0xe8] sm:$0xff]
    %v6127 = vld [vmem:[#allocation5 + $0xf0] sm:$0xff]
    %v6128 = vld [vmem:[#allocation5 + $0xf8] sm:$0xff]
    %v6129 = vld [vmem:[%s2] sm:$0xf]
    %v6130 = vld [vmem:[%s2 + $0x4] sm:$0xf]
    %v6131 = vld [vmem:[%s2 + $0x8] sm:$0xf]
    %v6132 = vld [vmem:[%s2 + $0xc] sm:$0xf]
    %v6133 = vld [vmem:[%s2 + $0x10] sm:$0xf]
    %v6134 = vld [vmem:[%s2 + $0x14] sm:$0xf]
    %v6135 = vld [vmem:[%s2 + $0x18] sm:$0xf]
    %v6136 = vld [vmem:[%s2 + $0x1c] sm:$0xf]
    %v6137 = vld [vmem:[%s2 + $0x20] sm:$0xf]
    %v6138 = vld [vmem:[%s2 + $0x24] sm:$0xf]
    %v6139 = vld [vmem:[%s2 + $0x28] sm:$0xf]
    %v6140 = vld [vmem:[%s2 + $0x2c] sm:$0xf]
    %v6141 = vld [vmem:[%s2 + $0x30] sm:$0xf]
    %v6142 = vld [vmem:[%s2 + $0x34] sm:$0xf]
    %v6143 = vld [vmem:[%s2 + $0x38] sm:$0xf]
    %v6144 = vld [vmem:[%s2 + $0x3c] sm:$0xf]
    %v6161 = vunpack.c.l.b16 %v6129
    %v6162 = vunpack.c.l.b16 %v6130
    %v6163 = vunpack.c.l.b16 %v6131
    %v6164 = vunpack.c.l.b16 %v6132
    %v6165 = vunpack.c.l.b16 %v6133
    %v6166 = vunpack.c.l.b16 %v6134
    %v6167 = vunpack.c.l.b16 %v6135
    %v6168 = vunpack.c.l.b16 %v6136
    %v6169 = vunpack.c.l.b16 %v6137
    %v6170 = vunpack.c.l.b16 %v6138
    %v6171 = vunpack.c.l.b16 %v6139
    %v6172 = vunpack.c.l.b16 %v6140
    %v6173 = vunpack.c.l.b16 %v6141
    %v6174 = vunpack.c.l.b16 %v6142
    %v6175 = vunpack.c.l.b16 %v6143
    %v6176 = vunpack.c.l.b16 %v6144
    %v6177 = vpack.c.b16 %v6162, %v6161
    %v6178 = vpack.c.b16 %v6164, %v6163
    %v6179 = vpack.c.b16 %v6166, %v6165
    %v6180 = vpack.c.b16 %v6168, %v6167
    %v6181 = vpack.c.b16 %v6170, %v6169
    %v6182 = vpack.c.b16 %v6172, %v6171
    %v6183 = vpack.c.b16 %v6174, %v6173
    %v6184 = vpack.c.b16 %v6176, %v6175
    %6193 = vmatprep.subr.bf16.mxu0 0
    %6194 = vmatpush1.bf16.msra.mxu0 %v6177
    %6195 = vmatprep.subr.bf16.mxu0 0
    %6196 = vmatpush1.bf16.msra.mxu0 %v6178
    %6197 = vmatprep.subr.bf16.mxu0 0
    %6198 = vmatpush1.bf16.msra.mxu0 %v6179
    %6199 = vmatprep.subr.bf16.mxu0 0
    %6200 = vmatpush1.bf16.msra.mxu0 %v6180
    %6201 = vmatprep.subr.bf16.mxu0 0
    %6202 = vmatpush1.bf16.msra.mxu0 %v6181
    %6203 = vmatprep.subr.bf16.mxu0 0
    %6204 = vmatpush1.bf16.msra.mxu0 %v6182
    %6205 = vmatprep.subr.bf16.mxu0 0
    %6206 = vmatpush1.bf16.msra.mxu0 %v6183
    %6207 = vmatprep.subr.bf16.mxu0 0
    %6208 = vmatpush1.bf16.msra.mxu0 %v6184
    %6209 = vmatprep.subr.bf16.mxu0 0
    %6210 = vmatpush1.bf16.msra.mxu0 0
    %6211 = vmatprep.subr.bf16.mxu0 0
    %6212 = vmatpush1.bf16.msra.mxu0 0
    %6213 = vmatprep.subr.bf16.mxu0 0
    %6214 = vmatpush1.bf16.msra.mxu0 0
    %6215 = vmatprep.subr.bf16.mxu0 0
    %6216 = vmatpush1.bf16.msra.mxu0 0
    %6217 = vmatprep.subr.bf16.mxu0 0
    %6218 = vmatpush1.bf16.msra.mxu0 0
    %6219 = vmatprep.subr.bf16.mxu0 0
    %6220 = vmatpush1.bf16.msra.mxu0 0
    %6221 = vmatprep.subr.bf16.mxu0 0
    %6222 = vmatpush1.bf16.msra.mxu0 0
    %6223 = vmatprep.subr.bf16.mxu0 0
    %6224 = vmatpush1.bf16.msra.mxu0 0
    %6225 = vmatprep.mubr.bf16.mxu0 0
    %6226 = vmatmul.mubr.bf16.gmra.mrb[0].mxu0 %v6097
    %v6227 = vpop.f32.mrb[0].mxu0
    %v6228 = vadd.f32 0.0, %v6227
    %v6229 = vpop.f32.mrb[0].mxu0
    %v6230 = vpop.f32.mrb[0].mxu0
    %v6231 = vadd.f32 0.0, %v6230
    %v6232 = vpop.f32.mrb[0].mxu0
    %6233 = vmatprep.mubr.bf16.mxu0 0
    %6234 = vmatmul.mubr.bf16.gmra.mrb[0].mxu0 %v6098
    %v6235 = vpop.f32.mrb[0].mxu0
    %v6236 = vadd.f32 0.0, %v6235
    %v6237 = vpop.f32.mrb[0].mxu0
    %v6238 = vpop.f32.mrb[0].mxu0
    %v6239 = vadd.f32 0.0, %v6238
    %v6240 = vpop.f32.mrb[0].mxu0
    %6241 = vmatprep.mubr.bf16.mxu0 0
    %6242 = vmatmul.mubr.bf16.gmra.mrb[0].mxu0 %v6099
    %v6243 = vpop.f32.mrb[0].mxu0
    %v6244 = vadd.f32 0.0, %v6243
    %v6245 = vpop.f32.mrb[0].mxu0
    %v6246 = vpop.f32.mrb[0].mxu0
    %v6247 = vadd.f32 0.0, %v6246
    %v6248 = vpop.f32.mrb[0].mxu0
    %6249 = vmatprep.mubr.bf16.mxu0 0
    %6250 = vmatmul.mubr.bf16.gmra.mrb[0].mxu0 %v6100
    %v6251 = vpop.f32.mrb[0].mxu0
    %v6252 = vadd.f32 0.0, %v6251
    %v6253 = vpop.f32.mrb[0].mxu0
    %v6254 = vpop.f32.mrb[0].mxu0
    %v6255 = vadd.f32 0.0, %v6254
    %v6256 = vpop.f32.mrb[0].mxu0
    %6257 = vmatprep.mubr.bf16.mxu0 0
    %6258 = vmatmul.mubr.bf16.gmra.mrb[0].mxu0 %v6101
    %v6259 = vpop.f32.mrb[0].mxu0
    %v6260 = vadd.f32 0.0, %v6259
    %v6261 = vpop.f32.mrb[0].mxu0
    %v6262 = vpop.f32.mrb[0].mxu0
    %v6263 = vadd.f32 0.0, %v6262
    %v6264 = vpop.f32.mrb[0].mxu0
    %6265 = vmatprep.mubr.bf16.mxu0 0
    %6266 = vmatmul.mubr.bf16.gmra.mrb[0].mxu0 %v6102
    %v6267 = vpop.f32.mrb[0].mxu0
    %v6268 = vadd.f32 0.0, %v6267
    %v6269 = vpop.f32.mrb[0].mxu0
    %v6270 = vpop.f32.mrb[0].mxu0
    %v6271 = vadd.f32 0.0, %v6270
    %v6272 = vpop.f32.mrb[0].mxu0
    %6273 = vmatprep.mubr.bf16.mxu0 0
    %6274 = vmatmul.mubr.bf16.gmra.mrb[0].mxu0 %v6103
    %v6275 = vpop.f32.mrb[0].mxu0
    %v6276 = vadd.f32 0.0, %v6275
    %v6277 = vpop.f32.mrb[0].mxu0
    %v6278 = vpop.f32.mrb[0].mxu0
    %v6279 = vadd.f32 0.0, %v6278
    %v6280 = vpop.f32.mrb[0].mxu0
    %6281 = vmatprep.mubr.bf16.mxu0 0
    %6282 = vmatmul.mubr.bf16.gmra.mrb[0].mxu0 %v6104
    %v6283 = vpop.f32.mrb[0].mxu0
    %v6284 = vadd.f32 0.0, %v6283
    %v6285 = vpop.f32.mrb[0].mxu0
    %v6286 = vpop.f32.mrb[0].mxu0
    %v6287 = vadd.f32 0.0, %v6286
    %v6288 = vpop.f32.mrb[0].mxu0
    %6289 = vmatprep.mubr.bf16.mxu0 0
    %6290 = vmatmul.mubr.bf16.gmra.mrb[0].mxu0 %v6105
    %v6291 = vpop.f32.mrb[0].mxu0
    %v6292 = vadd.f32 0.0, %v6291
    %v6293 = vpop.f32.mrb[0].mxu0
    %v6294 = vpop.f32.mrb[0].mxu0
    %v6295 = vadd.f32 0.0, %v6294
    %v6296 = vpop.f32.mrb[0].mxu0
    %6297 = vmatprep.mubr.bf16.mxu0 0
    %6298 = vmatmul.mubr.bf16.gmra.mrb[0].mxu0 %v6106
    %v6299 = vpop.f32.mrb[0].mxu0
    %v6300 = vadd.f32 0.0, %v6299
    %v6301 = vpop.f32.mrb[0].mxu0
    %v6302 = vpop.f32.mrb[0].mxu0
    %v6303 = vadd.f32 0.0, %v6302
    %v6304 = vpop.f32.mrb[0].mxu0
    %6305 = vmatprep.mubr.bf16.mxu0 0
    %6306 = vmatmul.mubr.bf16.gmra.mrb[0].mxu0 %v6107
    %v6307 = vpop.f32.mrb[0].mxu0
    %v6308 = vadd.f32 0.0, %v6307
    %v6309 = vpop.f32.mrb[0].mxu0
    %v6310 = vpop.f32.mrb[0].mxu0
    %v6311 = vadd.f32 0.0, %v6310
    %v6312 = vpop.f32.mrb[0].mxu0
    %6313 = vmatprep.mubr.bf16.mxu0 0
    %6314 = vmatmul.mubr.bf16.gmra.mrb[0].mxu0 %v6108
    %v6315 = vpop.f32.mrb[0].mxu0
    %v6316 = vadd.f32 0.0, %v6315
    %v6317 = vpop.f32.mrb[0].mxu0
    %v6318 = vpop.f32.mrb[0].mxu0
    %v6319 = vadd.f32 0.0, %v6318
    %v6320 = vpop.f32.mrb[0].mxu0
    %6321 = vmatprep.mubr.bf16.mxu0 0
    %6322 = vmatmul.mubr.bf16.gmra.mrb[0].mxu0 %v6109
    %v6323 = vpop.f32.mrb[0].mxu0
    %v6324 = vadd.f32 0.0, %v6323
    %v6325 = vpop.f32.mrb[0].mxu0
    %v6326 = vpop.f32.mrb[0].mxu0
    %v6327 = vadd.f32 0.0, %v6326
    %v6328 = vpop.f32.mrb[0].mxu0
    %6329 = vmatprep.mubr.bf16.mxu0 0
    %6330 = vmatmul.mubr.bf16.gmra.mrb[0].mxu0 %v6110
    %v6331 = vpop.f32.mrb[0].mxu0
    %v6332 = vadd.f32 0.0, %v6331
    %v6333 = vpop.f32.mrb[0].mxu0
    %v6334 = vpop.f32.mrb[0].mxu0
    %v6335 = vadd.f32 0.0, %v6334
    %v6336 = vpop.f32.mrb[0].mxu0
    %6337 = vmatprep.mubr.bf16.mxu0 0
    %6338 = vmatmul.mubr.bf16.gmra.mrb[0].mxu0 %v6111
    %v6339 = vpop.f32.mrb[0].mxu0
    %v6340 = vadd.f32 0.0, %v6339
    %v6341 = vpop.f32.mrb[0].mxu0
    %v6342 = vpop.f32.mrb[0].mxu0
    %v6343 = vadd.f32 0.0, %v6342
    %v6344 = vpop.f32.mrb[0].mxu0
    %6345 = vmatprep.mubr.bf16.mxu0 0
    %6346 = vmatmul.mubr.bf16.gmra.mrb[0].mxu0 %v6112
    %v6347 = vpop.f32.mrb[0].mxu0
    %v6348 = vadd.f32 0.0, %v6347
    %v6349 = vpop.f32.mrb[0].mxu0
    %v6350 = vpop.f32.mrb[0].mxu0
    %v6351 = vadd.f32 0.0, %v6350
    %v6352 = vpop.f32.mrb[0].mxu0
    %6353 = vmatprep.mubr.bf16.mxu0 0
    %6354 = vmatmul.mubr.bf16.gmra.mrb[0].mxu0 %v6113
    %v6355 = vpop.f32.mrb[0].mxu0
    %v6356 = vadd.f32 0.0, %v6355
    %v6357 = vpop.f32.mrb[0].mxu0
    %v6358 = vpop.f32.mrb[0].mxu0
    %v6359 = vadd.f32 0.0, %v6358
    %v6360 = vpop.f32.mrb[0].mxu0
    %6361 = vmatprep.mubr.bf16.mxu0 0
    %6362 = vmatmul.mubr.bf16.gmra.mrb[0].mxu0 %v6114
    %v6363 = vpop.f32.mrb[0].mxu0
    %v6364 = vadd.f32 0.0, %v6363
    %v6365 = vpop.f32.mrb[0].mxu0
    %v6366 = vpop.f32.mrb[0].mxu0
    %v6367 = vadd.f32 0.0, %v6366
    %v6368 = vpop.f32.mrb[0].mxu0
    %6369 = vmatprep.mubr.bf16.mxu0 0
    %6370 = vmatmul.mubr.bf16.gmra.mrb[0].mxu0 %v6115
    %v6371 = vpop.f32.mrb[0].mxu0
    %v6372 = vadd.f32 0.0, %v6371
    %v6373 = vpop.f32.mrb[0].mxu0
    %v6374 = vpop.f32.mrb[0].mxu0
    %v6375 = vadd.f32 0.0, %v6374
    %v6376 = vpop.f32.mrb[0].mxu0
    %6377 = vmatprep.mubr.bf16.mxu0 0
    %6378 = vmatmul.mubr.bf16.gmra.mrb[0].mxu0 %v6116
    %v6379 = vpop.f32.mrb[0].mxu0
    %v6380 = vadd.f32 0.0, %v6379
    %v6381 = vpop.f32.mrb[0].mxu0
    %v6382 = vpop.f32.mrb[0].mxu0
    %v6383 = vadd.f32 0.0, %v6382
    %v6384 = vpop.f32.mrb[0].mxu0
    %6385 = vmatprep.mubr.bf16.mxu0 0
    %6386 = vmatmul.mubr.bf16.gmra.mrb[0].mxu0 %v6117
    %v6387 = vpop.f32.mrb[0].mxu0
    %v6388 = vadd.f32 0.0, %v6387
    %v6389 = vpop.f32.mrb[0].mxu0
    %v6390 = vpop.f32.mrb[0].mxu0
    %v6391 = vadd.f32 0.0, %v6390
    %v6392 = vpop.f32.mrb[0].mxu0
    %6393 = vmatprep.mubr.bf16.mxu0 0
    %6394 = vmatmul.mubr.bf16.gmra.mrb[0].mxu0 %v6118
    %v6395 = vpop.f32.mrb[0].mxu0
    %v6396 = vadd.f32 0.0, %v6395
    %v6397 = vpop.f32.mrb[0].mxu0
    %v6398 = vpop.f32.mrb[0].mxu0
    %v6399 = vadd.f32 0.0, %v6398
    %v6400 = vpop.f32.mrb[0].mxu0
    %6401 = vmatprep.mubr.bf16.mxu0 0
    %6402 = vmatmul.mubr.bf16.gmra.mrb[0].mxu0 %v6119
    %v6403 = vpop.f32.mrb[0].mxu0
    %v6404 = vadd.f32 0.0, %v6403
    %v6405 = vpop.f32.mrb[0].mxu0
    %v6406 = vpop.f32.mrb[0].mxu0
    %v6407 = vadd.f32 0.0, %v6406
    %v6408 = vpop.f32.mrb[0].mxu0
    %6409 = vmatprep.mubr.bf16.mxu0 0
    %6410 = vmatmul.mubr.bf16.gmra.mrb[0].mxu0 %v6120
    %v6411 = vpop.f32.mrb[0].mxu0
    %v6412 = vadd.f32 0.0, %v6411
    %v6413 = vpop.f32.mrb[0].mxu0
    %v6414 = vpop.f32.mrb[0].mxu0
    %v6415 = vadd.f32 0.0, %v6414
    %v6416 = vpop.f32.mrb[0].mxu0
    %6417 = vmatprep.mubr.bf16.mxu0 0
    %6418 = vmatmul.mubr.bf16.gmra.mrb[0].mxu0 %v6121
    %v6419 = vpop.f32.mrb[0].mxu0
    %v6420 = vadd.f32 0.0, %v6419
    %v6421 = vpop.f32.mrb[0].mxu0
    %v6422 = vpop.f32.mrb[0].mxu0
    %v6423 = vadd.f32 0.0, %v6422
    %v6424 = vpop.f32.mrb[0].mxu0
    %6425 = vmatprep.mubr.bf16.mxu0 0
    %6426 = vmatmul.mubr.bf16.gmra.mrb[0].mxu0 %v6122
    %v6427 = vpop.f32.mrb[0].mxu0
    %v6428 = vadd.f32 0.0, %v6427
    %v6429 = vpop.f32.mrb[0].mxu0
    %v6430 = vpop.f32.mrb[0].mxu0
    %v6431 = vadd.f32 0.0, %v6430
    %v6432 = vpop.f32.mrb[0].mxu0
    %6433 = vmatprep.mubr.bf16.mxu0 0
    %6434 = vmatmul.mubr.bf16.gmra.mrb[0].mxu0 %v6123
    %v6435 = vpop.f32.mrb[0].mxu0
    %v6436 = vadd.f32 0.0, %v6435
    %v6437 = vpop.f32.mrb[0].mxu0
    %v6438 = vpop.f32.mrb[0].mxu0
    %v6439 = vadd.f32 0.0, %v6438
    %v6440 = vpop.f32.mrb[0].mxu0
    %6441 = vmatprep.mubr.bf16.mxu0 0
    %6442 = vmatmul.mubr.bf16.gmra.mrb[0].mxu0 %v6124
    %v6443 = vpop.f32.mrb[0].mxu0
    %v6444 = vadd.f32 0.0, %v6443
    %v6445 = vpop.f32.mrb[0].mxu0
    %v6446 = vpop.f32.mrb[0].mxu0
    %v6447 = vadd.f32 0.0, %v6446
    %v6448 = vpop.f32.mrb[0].mxu0
    %6449 = vmatprep.mubr.bf16.mxu0 0
    %6450 = vmatmul.mubr.bf16.gmra.mrb[0].mxu0 %v6125
    %v6451 = vpop.f32.mrb[0].mxu0
    %v6452 = vadd.f32 0.0, %v6451
    %v6453 = vpop.f32.mrb[0].mxu0
    %v6454 = vpop.f32.mrb[0].mxu0
    %v6455 = vadd.f32 0.0, %v6454
    %v6456 = vpop.f32.mrb[0].mxu0
    %6457 = vmatprep.mubr.bf16.mxu0 0
    %6458 = vmatmul.mubr.bf16.gmra.mrb[0].mxu0 %v6126
    %v6459 = vpop.f32.mrb[0].mxu0
    %v6460 = vadd.f32 0.0, %v6459
    %v6461 = vpop.f32.mrb[0].mxu0
    %v6462 = vpop.f32.mrb[0].mxu0
    %v6463 = vadd.f32 0.0, %v6462
    %v6464 = vpop.f32.mrb[0].mxu0
    %6465 = vmatprep.mubr.bf16.mxu0 0
    %6466 = vmatmul.mubr.bf16.gmra.mrb[0].mxu0 %v6127
    %v6467 = vpop.f32.mrb[0].mxu0
    %v6468 = vadd.f32 0.0, %v6467
    %v6469 = vpop.f32.mrb[0].mxu0
    %v6470 = vpop.f32.mrb[0].mxu0
    %v6471 = vadd.f32 0.0, %v6470
    %v6472 = vpop.f32.mrb[0].mxu0
    %6473 = vmatprep.mubr.bf16.mxu0 0
    %6474 = vmatmul.mubr.bf16.gmra.mrb[0].mxu0 %v6128
    %v6475 = vpop.f32.mrb[0].mxu0
    %v6476 = vadd.f32 0.0, %v6475
    %v6477 = vpop.f32.mrb[0].mxu0
    %v6478 = vpop.f32.mrb[0].mxu0
    %v6479 = vadd.f32 0.0, %v6478
    %v6480 = vpop.f32.mrb[0].mxu0
    %6481 = vdwg.mxu0
    %vm6482 = vcmask 130048
    %v6483 = vsel %vm6482, %v6228, 0.0
    %v6484 = vsel %vm6482, %v6231, 0.0
    %v6485 = vadd.f32 %v6483, %v6484
    %v6486 = vsel %vm6482, %v6236, 0.0
    %v6487 = vadd.f32 %v6485, %v6486
    %v6488 = vsel %vm6482, %v6239, 0.0
    %v6489 = vadd.f32 %v6487, %v6488
    %v6490 = vsel %vm6482, %v6244, 0.0
    %v6491 = vadd.f32 %v6489, %v6490
    %v6492 = vsel %vm6482, %v6247, 0.0
    %v6493 = vadd.f32 %v6491, %v6492
    %v6494 = vsel %vm6482, %v6252, 0.0
    %v6495 = vadd.f32 %v6493, %v6494
    %v6496 = vsel %vm6482, %v6255, 0.0
    %v6497 = vadd.f32 %v6495, %v6496
    %v6498 = vsel %vm6482, %v6260, 0.0
    %v6499 = vadd.f32 %v6497, %v6498
    %v6500 = vsel %vm6482, %v6263, 0.0
    %v6501 = vadd.f32 %v6499, %v6500
    %v6502 = vsel %vm6482, %v6268, 0.0
    %v6503 = vadd.f32 %v6501, %v6502
    %v6504 = vsel %vm6482, %v6271, 0.0
    %v6505 = vadd.f32 %v6503, %v6504
    %v6506 = vsel %vm6482, %v6276, 0.0
    %v6507 = vadd.f32 %v6505, %v6506
    %v6508 = vsel %vm6482, %v6279, 0.0
    %v6509 = vadd.f32 %v6507, %v6508
    %v6510 = vsel %vm6482, %v6284, 0.0
    %v6511 = vadd.f32 %v6509, %v6510
    %v6512 = vsel %vm6482, %v6287, 0.0
    %v6513 = vadd.f32 %v6511, %v6512
    %v6514 = vsel %vm6482, %v6292, 0.0
    %v6515 = vadd.f32 %v6513, %v6514
    %v6516 = vsel %vm6482, %v6295, 0.0
    %v6517 = vadd.f32 %v6515, %v6516
    %v6518 = vsel %vm6482, %v6300, 0.0
    %v6519 = vadd.f32 %v6517, %v6518
    %v6520 = vsel %vm6482, %v6303, 0.0
    %v6521 = vadd.f32 %v6519, %v6520
    %v6522 = vsel %vm6482, %v6308, 0.0
    %v6523 = vadd.f32 %v6521, %v6522
    %v6524 = vsel %vm6482, %v6311, 0.0
    %v6525 = vadd.f32 %v6523, %v6524
    %v6526 = vsel %vm6482, %v6316, 0.0
    %v6527 = vadd.f32 %v6525, %v6526
    %v6528 = vsel %vm6482, %v6319, 0.0
    %v6529 = vadd.f32 %v6527, %v6528
    %v6530 = vsel %vm6482, %v6324, 0.0
    %v6531 = vadd.f32 %v6529, %v6530
    %v6532 = vsel %vm6482, %v6327, 0.0
    %v6533 = vadd.f32 %v6531, %v6532
    %v6534 = vsel %vm6482, %v6332, 0.0
    %v6535 = vadd.f32 %v6533, %v6534
    %v6536 = vsel %vm6482, %v6335, 0.0
    %v6537 = vadd.f32 %v6535, %v6536
    %v6538 = vsel %vm6482, %v6340, 0.0
    %v6539 = vadd.f32 %v6537, %v6538
    %v6540 = vsel %vm6482, %v6343, 0.0
    %v6541 = vadd.f32 %v6539, %v6540
    %v6542 = vsel %vm6482, %v6348, 0.0
    %v6543 = vadd.f32 %v6541, %v6542
    %v6544 = vsel %vm6482, %v6351, 0.0
    %v6545 = vadd.f32 %v6543, %v6544
    %v6546 = vsel %vm6482, %v6356, 0.0
    %v6547 = vadd.f32 %v6545, %v6546
    %v6548 = vsel %vm6482, %v6359, 0.0
    %v6549 = vadd.f32 %v6547, %v6548
    %v6550 = vsel %vm6482, %v6364, 0.0
    %v6551 = vadd.f32 %v6549, %v6550
    %v6552 = vsel %vm6482, %v6367, 0.0
    %v6553 = vadd.f32 %v6551, %v6552
    %v6554 = vsel %vm6482, %v6372, 0.0
    %v6555 = vadd.f32 %v6553, %v6554
    %v6556 = vsel %vm6482, %v6375, 0.0
    %v6557 = vadd.f32 %v6555, %v6556
    %v6558 = vsel %vm6482, %v6380, 0.0
    %v6559 = vadd.f32 %v6557, %v6558
    %v6560 = vsel %vm6482, %v6383, 0.0
    %v6561 = vadd.f32 %v6559, %v6560
    %v6562 = vsel %vm6482, %v6388, 0.0
    %v6563 = vadd.f32 %v6561, %v6562
    %v6564 = vsel %vm6482, %v6391, 0.0
    %v6565 = vadd.f32 %v6563, %v6564
    %v6566 = vsel %vm6482, %v6396, 0.0
    %v6567 = vadd.f32 %v6565, %v6566
    %v6568 = vsel %vm6482, %v6399, 0.0
    %v6569 = vadd.f32 %v6567, %v6568
    %v6570 = vsel %vm6482, %v6404, 0.0
    %v6571 = vadd.f32 %v6569, %v6570
    %v6572 = vsel %vm6482, %v6407, 0.0
    %v6573 = vadd.f32 %v6571, %v6572
    %v6574 = vsel %vm6482, %v6412, 0.0
    %v6575 = vadd.f32 %v6573, %v6574
    %v6576 = vsel %vm6482, %v6415, 0.0
    %v6577 = vadd.f32 %v6575, %v6576
    %v6578 = vsel %vm6482, %v6420, 0.0
    %v6579 = vadd.f32 %v6577, %v6578
    %v6580 = vsel %vm6482, %v6423, 0.0
    %v6581 = vadd.f32 %v6579, %v6580
    %v6582 = vsel %vm6482, %v6428, 0.0
    %v6583 = vadd.f32 %v6581, %v6582
    %v6584 = vsel %vm6482, %v6431, 0.0
    %v6585 = vadd.f32 %v6583, %v6584
    %v6586 = vsel %vm6482, %v6436, 0.0
    %v6587 = vadd.f32 %v6585, %v6586
    %v6588 = vsel %vm6482, %v6439, 0.0
    %v6589 = vadd.f32 %v6587, %v6588
    %v6590 = vsel %vm6482, %v6444, 0.0
    %v6591 = vadd.f32 %v6589, %v6590
    %v6592 = vsel %vm6482, %v6447, 0.0
    %v6593 = vadd.f32 %v6591, %v6592
    %v6594 = vsel %vm6482, %v6452, 0.0
    %v6595 = vadd.f32 %v6593, %v6594
    %v6596 = vsel %vm6482, %v6455, 0.0
    %v6597 = vadd.f32 %v6595, %v6596
    %v6598 = vsel %vm6482, %v6460, 0.0
    %v6599 = vadd.f32 %v6597, %v6598
    %v6600 = vsel %vm6482, %v6463, 0.0
    %v6601 = vadd.f32 %v6599, %v6600
    %v6602 = vsel %vm6482, %v6468, 0.0
    %v6603 = vadd.f32 %v6601, %v6602
    %v6604 = vsel %vm6482, %v6471, 0.0
    %v6605 = vadd.f32 %v6603, %v6604
    %v6606 = vsel %vm6482, %v6476, 0.0
    %v6607 = vadd.f32 %v6605, %v6606
    %v6608 = vsel %vm6482, %v6479, 0.0
    %v6609 = vadd.f32 %v6607, %v6608
    %v6610 = vrot.slane %v6609, 4
    %v6611 = vadd.f32 %v6609, %v6610
    %v6612 = vrot.slane %v6611, 2
    %v6613 = vadd.f32 %v6611, %v6612
    %v6614 = vrot.slane %v6613, 1
    %v6615 = vadd.f32 %v6613, %v6614
    %v6616 = vmul.f32 %v6228, %v6228
    %v6617 = vmul.f32 %v6231, %v6231
    %v6618 = vmul.f32 %v6236, %v6236
    %v6619 = vmul.f32 %v6239, %v6239
    %v6620 = vmul.f32 %v6244, %v6244
    %v6621 = vmul.f32 %v6247, %v6247
    %v6622 = vmul.f32 %v6252, %v6252
    %v6623 = vmul.f32 %v6255, %v6255
    %v6624 = vmul.f32 %v6260, %v6260
    %v6625 = vmul.f32 %v6263, %v6263
    %v6626 = vmul.f32 %v6268, %v6268
    %v6627 = vmul.f32 %v6271, %v6271
    %v6628 = vmul.f32 %v6276, %v6276
    %v6629 = vmul.f32 %v6279, %v6279
    %v6630 = vmul.f32 %v6284, %v6284
    %v6631 = vmul.f32 %v6287, %v6287
    %v6632 = vmul.f32 %v6292, %v6292
    %v6633 = vmul.f32 %v6295, %v6295
    %v6634 = vmul.f32 %v6300, %v6300
    %v6635 = vmul.f32 %v6303, %v6303
    %v6636 = vmul.f32 %v6308, %v6308
    %v6637 = vmul.f32 %v6311, %v6311
    %v6638 = vmul.f32 %v6316, %v6316
    %v6639 = vmul.f32 %v6319, %v6319
    %v6640 = vmul.f32 %v6324, %v6324
    %v6641 = vmul.f32 %v6327, %v6327
    %v6642 = vmul.f32 %v6332, %v6332
    %v6643 = vmul.f32 %v6335, %v6335
    %v6644 = vmul.f32 %v6340, %v6340
    %v6645 = vmul.f32 %v6343, %v6343
    %v6646 = vmul.f32 %v6348, %v6348
    %v6647 = vmul.f32 %v6351, %v6351
    %v6648 = vmul.f32 %v6356, %v6356
    %v6649 = vmul.f32 %v6359, %v6359
    %v6650 = vmul.f32 %v6364, %v6364
    %v6651 = vmul.f32 %v6367, %v6367
    %v6652 = vmul.f32 %v6372, %v6372
    %v6653 = vmul.f32 %v6375, %v6375
    %v6654 = vmul.f32 %v6380, %v6380
    %v6655 = vmul.f32 %v6383, %v6383
    %v6656 = vmul.f32 %v6388, %v6388
    %v6657 = vmul.f32 %v6391, %v6391
    %v6658 = vmul.f32 %v6396, %v6396
    %v6659 = vmul.f32 %v6399, %v6399
    %v6660 = vmul.f32 %v6404, %v6404
    %v6661 = vmul.f32 %v6407, %v6407
    %v6662 = vmul.f32 %v6412, %v6412
    %v6663 = vmul.f32 %v6415, %v6415
    %v6664 = vmul.f32 %v6420, %v6420
    %v6665 = vmul.f32 %v6423, %v6423
    %v6666 = vmul.f32 %v6428, %v6428
    %v6667 = vmul.f32 %v6431, %v6431
    %v6668 = vmul.f32 %v6436, %v6436
    %v6669 = vmul.f32 %v6439, %v6439
    %v6670 = vmul.f32 %v6444, %v6444
    %v6671 = vmul.f32 %v6447, %v6447
    %v6672 = vmul.f32 %v6452, %v6452
    %v6673 = vmul.f32 %v6455, %v6455
    %v6674 = vmul.f32 %v6460, %v6460
    %v6675 = vmul.f32 %v6463, %v6463
    %v6676 = vmul.f32 %v6468, %v6468
    %v6677 = vmul.f32 %v6471, %v6471
    %v6678 = vmul.f32 %v6476, %v6476
    %v6679 = vmul.f32 %v6479, %v6479
    %v6680 = vsel %vm6482, %v6616, 0.0
    %v6681 = vsel %vm6482, %v6617, 0.0
    %v6682 = vadd.f32 %v6680, %v6681
    %v6683 = vsel %vm6482, %v6618, 0.0
    %v6684 = vadd.f32 %v6682, %v6683
    %v6685 = vsel %vm6482, %v6619, 0.0
    %v6686 = vadd.f32 %v6684, %v6685
    %v6687 = vsel %vm6482, %v6620, 0.0
    %v6688 = vadd.f32 %v6686, %v6687
    %v6689 = vsel %vm6482, %v6621, 0.0
    %v6690 = vadd.f32 %v6688, %v6689
    %v6691 = vsel %vm6482, %v6622, 0.0
    %v6692 = vadd.f32 %v6690, %v6691
    %v6693 = vsel %vm6482, %v6623, 0.0
    %v6694 = vadd.f32 %v6692, %v6693
    %v6695 = vsel %vm6482, %v6624, 0.0
    %v6696 = vadd.f32 %v6694, %v6695
    %v6697 = vsel %vm6482, %v6625, 0.0
    %v6698 = vadd.f32 %v6696, %v6697
    %v6699 = vsel %vm6482, %v6626, 0.0
    %v6700 = vadd.f32 %v6698, %v6699
    %v6701 = vsel %vm6482, %v6627, 0.0
    %v6702 = vadd.f32 %v6700, %v6701
    %v6703 = vsel %vm6482, %v6628, 0.0
    %v6704 = vadd.f32 %v6702, %v6703
    %v6705 = vsel %vm6482, %v6629, 0.0
    %v6706 = vadd.f32 %v6704, %v6705
    %v6707 = vsel %vm6482, %v6630, 0.0
    %v6708 = vadd.f32 %v6706, %v6707
    %v6709 = vsel %vm6482, %v6631, 0.0
    %v6710 = vadd.f32 %v6708, %v6709
    %v6711 = vsel %vm6482, %v6632, 0.0
    %v6712 = vadd.f32 %v6710, %v6711
    %v6713 = vsel %vm6482, %v6633, 0.0
    %v6714 = vadd.f32 %v6712, %v6713
    %v6715 = vsel %vm6482, %v6634, 0.0
    %v6716 = vadd.f32 %v6714, %v6715
    %v6717 = vsel %vm6482, %v6635, 0.0
    %v6718 = vadd.f32 %v6716, %v6717
    %v6719 = vsel %vm6482, %v6636, 0.0
    %v6720 = vadd.f32 %v6718, %v6719
    %v6721 = vsel %vm6482, %v6637, 0.0
    %v6722 = vadd.f32 %v6720, %v6721
    %v6723 = vsel %vm6482, %v6638, 0.0
    %v6724 = vadd.f32 %v6722, %v6723
    %v6725 = vsel %vm6482, %v6639, 0.0
    %v6726 = vadd.f32 %v6724, %v6725
    %v6727 = vsel %vm6482, %v6640, 0.0
    %v6728 = vadd.f32 %v6726, %v6727
    %v6729 = vsel %vm6482, %v6641, 0.0
    %v6730 = vadd.f32 %v6728, %v6729
    %v6731 = vsel %vm6482, %v6642, 0.0
    %v6732 = vadd.f32 %v6730, %v6731
    %v6733 = vsel %vm6482, %v6643, 0.0
    %v6734 = vadd.f32 %v6732, %v6733
    %v6735 = vsel %vm6482, %v6644, 0.0
    %v6736 = vadd.f32 %v6734, %v6735
    %v6737 = vsel %vm6482, %v6645, 0.0
    %v6738 = vadd.f32 %v6736, %v6737
    %v6739 = vsel %vm6482, %v6646, 0.0
    %v6740 = vadd.f32 %v6738, %v6739
    %v6741 = vsel %vm6482, %v6647, 0.0
    %v6742 = vadd.f32 %v6740, %v6741
    %v6743 = vsel %vm6482, %v6648, 0.0
    %v6744 = vadd.f32 %v6742, %v6743
    %v6745 = vsel %vm6482, %v6649, 0.0
    %v6746 = vadd.f32 %v6744, %v6745
    %v6747 = vsel %vm6482, %v6650, 0.0
    %v6748 = vadd.f32 %v6746, %v6747
    %v6749 = vsel %vm6482, %v6651, 0.0
    %v6750 = vadd.f32 %v6748, %v6749
    %v6751 = vsel %vm6482, %v6652, 0.0
    %v6752 = vadd.f32 %v6750, %v6751
    %v6753 = vsel %vm6482, %v6653, 0.0
    %v6754 = vadd.f32 %v6752, %v6753
    %v6755 = vsel %vm6482, %v6654, 0.0
    %v6756 = vadd.f32 %v6754, %v6755
    %v6757 = vsel %vm6482, %v6655, 0.0
    %v6758 = vadd.f32 %v6756, %v6757
    %v6759 = vsel %vm6482, %v6656, 0.0
    %v6760 = vadd.f32 %v6758, %v6759
    %v6761 = vsel %vm6482, %v6657, 0.0
    %v6762 = vadd.f32 %v6760, %v6761
    %v6763 = vsel %vm6482, %v6658, 0.0
    %v6764 = vadd.f32 %v6762, %v6763
    %v6765 = vsel %vm6482, %v6659, 0.0
    %v6766 = vadd.f32 %v6764, %v6765
    %v6767 = vsel %vm6482, %v6660, 0.0
    %v6768 = vadd.f32 %v6766, %v6767
    %v6769 = vsel %vm6482, %v6661, 0.0
    %v6770 = vadd.f32 %v6768, %v6769
    %v6771 = vsel %vm6482, %v6662, 0.0
    %v6772 = vadd.f32 %v6770, %v6771
    %v6773 = vsel %vm6482, %v6663, 0.0
    %v6774 = vadd.f32 %v6772, %v6773
    %v6775 = vsel %vm6482, %v6664, 0.0
    %v6776 = vadd.f32 %v6774, %v6775
    %v6777 = vsel %vm6482, %v6665, 0.0
    %v6778 = vadd.f32 %v6776, %v6777
    %v6779 = vsel %vm6482, %v6666, 0.0
    %v6780 = vadd.f32 %v6778, %v6779
    %v6781 = vsel %vm6482, %v6667, 0.0
    %v6782 = vadd.f32 %v6780, %v6781
    %v6783 = vsel %vm6482, %v6668, 0.0
    %v6784 = vadd.f32 %v6782, %v6783
    %v6785 = vsel %vm6482, %v6669, 0.0
    %v6786 = vadd.f32 %v6784, %v6785
    %v6787 = vsel %vm6482, %v6670, 0.0
    %v6788 = vadd.f32 %v6786, %v6787
    %v6789 = vsel %vm6482, %v6671, 0.0
    %v6790 = vadd.f32 %v6788, %v6789
    %v6791 = vsel %vm6482, %v6672, 0.0
    %v6792 = vadd.f32 %v6790, %v6791
    %v6793 = vsel %vm6482, %v6673, 0.0
    %v6794 = vadd.f32 %v6792, %v6793
    %v6795 = vsel %vm6482, %v6674, 0.0
    %v6796 = vadd.f32 %v6794, %v6795
    %v6797 = vsel %vm6482, %v6675, 0.0
    %v6798 = vadd.f32 %v6796, %v6797
    %v6799 = vsel %vm6482, %v6676, 0.0
    %v6800 = vadd.f32 %v6798, %v6799
    %v6801 = vsel %vm6482, %v6677, 0.0
    %v6802 = vadd.f32 %v6800, %v6801
    %v6803 = vsel %vm6482, %v6678, 0.0
    %v6804 = vadd.f32 %v6802, %v6803
    %v6805 = vsel %vm6482, %v6679, 0.0
    %v6806 = vadd.f32 %v6804, %v6805
    %v6807 = vrot.slane %v6806, 4
    %v6808 = vadd.f32 %v6806, %v6807
    %v6809 = vrot.slane %v6808, 2
    %v6810 = vadd.f32 %v6808, %v6809
    %v6811 = vrot.slane %v6810, 1
    %v6812 = vadd.f32 %v6810, %v6811
    %v6813 = vmul.f32 %v6615, 0.001953125
    %v6814 = vmul.f32 %v6812, 0.001953125
    %v6815 = vmul.f32 %v6813, %v6813
    %v6816 = vsub.f32 %v6814, %v6815
    %v6817 = vmax.f32 %v6816, 0.0
    %v6818 = vld [vmem:[%s5] sm:$0x3]
    %v6819 = vadd.f32 %v6817, 1e-05
    %v6820 = vrsqrt.pop %v6819
    %v6821 = vmul.f32 %v6818, %v6820
    %v6822 = vmul.f32 %v6813, %v6821
    %v6824 = vrot.slane %v6822, 7
    %v6826 = vsub.f32 %v6818, %v6824
    %v6827 = vlaneseq
    %v6828 = vshrl.u32 %v6827, 7
    %v6829 = vsub.s32 0, %v6828
    %v6830 = vrot.slane %v6821, %v6829
    %v6831 = vmul.f32 %v6228, %v6830
    %v6832 = vmul.f32 %v6231, %v6830
    %v6833 = vmul.f32 %v6236, %v6830
    %v6834 = vmul.f32 %v6239, %v6830
    %v6835 = vmul.f32 %v6244, %v6830
    %v6836 = vmul.f32 %v6247, %v6830
    %v6837 = vmul.f32 %v6252, %v6830
    %v6838 = vmul.f32 %v6255, %v6830
    %v6839 = vmul.f32 %v6260, %v6830
    %v6840 = vmul.f32 %v6263, %v6830
    %v6841 = vmul.f32 %v6268, %v6830
    %v6842 = vmul.f32 %v6271, %v6830
    %v6843 = vmul.f32 %v6276, %v6830
    %v6844 = vmul.f32 %v6279, %v6830
    %v6845 = vmul.f32 %v6284, %v6830
    %v6846 = vmul.f32 %v6287, %v6830
    %v6847 = vmul.f32 %v6292, %v6830
    %v6848 = vmul.f32 %v6295, %v6830
    %v6849 = vmul.f32 %v6300, %v6830
    %v6850 = vmul.f32 %v6303, %v6830
    %v6851 = vmul.f32 %v6308, %v6830
    %v6852 = vmul.f32 %v6311, %v6830
    %v6853 = vmul.f32 %v6316, %v6830
    %v6854 = vmul.f32 %v6319, %v6830
    %v6855 = vmul.f32 %v6324, %v6830
    %v6856 = vmul.f32 %v6327, %v6830
    %v6857 = vmul.f32 %v6332, %v6830
    %v6858 = vmul.f32 %v6335, %v6830
    %v6859 = vmul.f32 %v6340, %v6830
    %v6860 = vmul.f32 %v6343, %v6830
    %v6861 = vmul.f32 %v6348, %v6830
    %v6862 = vmul.f32 %v6351, %v6830
    %v6863 = vmul.f32 %v6356, %v6830
    %v6864 = vmul.f32 %v6359, %v6830
    %v6865 = vmul.f32 %v6364, %v6830
    %v6866 = vmul.f32 %v6367, %v6830
    %v6867 = vmul.f32 %v6372, %v6830
    %v6868 = vmul.f32 %v6375, %v6830
    %v6869 = vmul.f32 %v6380, %v6830
    %v6870 = vmul.f32 %v6383, %v6830
    %v6871 = vmul.f32 %v6388, %v6830
    %v6872 = vmul.f32 %v6391, %v6830
    %v6873 = vmul.f32 %v6396, %v6830
    %v6874 = vmul.f32 %v6399, %v6830
    %v6875 = vmul.f32 %v6404, %v6830
    %v6876 = vmul.f32 %v6407, %v6830
    %v6877 = vmul.f32 %v6412, %v6830
    %v6878 = vmul.f32 %v6415, %v6830
    %v6879 = vmul.f32 %v6420, %v6830
    %v6880 = vmul.f32 %v6423, %v6830
    %v6881 = vmul.f32 %v6428, %v6830
    %v6882 = vmul.f32 %v6431, %v6830
    %v6883 = vmul.f32 %v6436, %v6830
    %v6884 = vmul.f32 %v6439, %v6830
    %v6885 = vmul.f32 %v6444, %v6830
    %v6886 = vmul.f32 %v6447, %v6830
    %v6887 = vmul.f32 %v6452, %v6830
    %v6888 = vmul.f32 %v6455, %v6830
    %v6889 = vmul.f32 %v6460, %v6830
    %v6890 = vmul.f32 %v6463, %v6830
    %v6891 = vmul.f32 %v6468, %v6830
    %v6892 = vmul.f32 %v6471, %v6830
    %v6893 = vmul.f32 %v6476, %v6830
    %v6894 = vmul.f32 %v6479, %v6830
    %v6895 = vlaneseq
    %v6896 = vshrl.u32 %v6895, 7
    %v6897 = vsub.s32 1, %v6896
    %v6898 = vrot.slane %v6826, %v6897
    %v6899 = vadd.f32 %v6831, %v6898
    %v6900 = vadd.f32 %v6832, %v6898
    %v6901 = vadd.f32 %v6833, %v6898
    %v6902 = vadd.f32 %v6834, %v6898
    %v6903 = vadd.f32 %v6835, %v6898
    %v6904 = vadd.f32 %v6836, %v6898
    %v6905 = vadd.f32 %v6837, %v6898
    %v6906 = vadd.f32 %v6838, %v6898
    %v6907 = vadd.f32 %v6839, %v6898
    %v6908 = vadd.f32 %v6840, %v6898
    %v6909 = vadd.f32 %v6841, %v6898
    %v6910 = vadd.f32 %v6842, %v6898
    %v6911 = vadd.f32 %v6843, %v6898
    %v6912 = vadd.f32 %v6844, %v6898
    %v6913 = vadd.f32 %v6845, %v6898
    %v6914 = vadd.f32 %v6846, %v6898
    %v6915 = vadd.f32 %v6847, %v6898
    %v6916 = vadd.f32 %v6848, %v6898
    %v6917 = vadd.f32 %v6849, %v6898
    %v6918 = vadd.f32 %v6850, %v6898
    %v6919 = vadd.f32 %v6851, %v6898
    %v6920 = vadd.f32 %v6852, %v6898
    %v6921 = vadd.f32 %v6853, %v6898
    %v6922 = vadd.f32 %v6854, %v6898
    %v6923 = vadd.f32 %v6855, %v6898
    %v6924 = vadd.f32 %v6856, %v6898
    %v6925 = vadd.f32 %v6857, %v6898
    %v6926 = vadd.f32 %v6858, %v6898
    %v6927 = vadd.f32 %v6859, %v6898
    %v6928 = vadd.f32 %v6860, %v6898
    %v6929 = vadd.f32 %v6861, %v6898
    %v6930 = vadd.f32 %v6862, %v6898
    %v6931 = vadd.f32 %v6863, %v6898
    %v6932 = vadd.f32 %v6864, %v6898
    %v6933 = vadd.f32 %v6865, %v6898
    %v6934 = vadd.f32 %v6866, %v6898
    %v6935 = vadd.f32 %v6867, %v6898
    %v6936 = vadd.f32 %v6868, %v6898
    %v6937 = vadd.f32 %v6869, %v6898
    %v6938 = vadd.f32 %v6870, %v6898
    %v6939 = vadd.f32 %v6871, %v6898
    %v6940 = vadd.f32 %v6872, %v6898
    %v6941 = vadd.f32 %v6873, %v6898
    %v6942 = vadd.f32 %v6874, %v6898
    %v6943 = vadd.f32 %v6875, %v6898
    %v6944 = vadd.f32 %v6876, %v6898
    %v6945 = vadd.f32 %v6877, %v6898
    %v6946 = vadd.f32 %v6878, %v6898
    %v6947 = vadd.f32 %v6879, %v6898
    %v6948 = vadd.f32 %v6880, %v6898
    %v6949 = vadd.f32 %v6881, %v6898
    %v6950 = vadd.f32 %v6882, %v6898
    %v6951 = vadd.f32 %v6883, %v6898
    %v6952 = vadd.f32 %v6884, %v6898
    %v6953 = vadd.f32 %v6885, %v6898
    %v6954 = vadd.f32 %v6886, %v6898
    %v6955 = vadd.f32 %v6887, %v6898
    %v6956 = vadd.f32 %v6888, %v6898
    %v6957 = vadd.f32 %v6889, %v6898
    %v6958 = vadd.f32 %v6890, %v6898
    %v6959 = vadd.f32 %v6891, %v6898
    %v6960 = vadd.f32 %v6892, %v6898
    %v6961 = vadd.f32 %v6893, %v6898
    %v6962 = vadd.f32 %v6894, %v6898
    %v6963 = vmul.f32 %v6899, 0.2
    %v6964 = vmul.f32 %v6900, 0.2
    %v6965 = vmul.f32 %v6901, 0.2
    %v6966 = vmul.f32 %v6902, 0.2
    %v6967 = vmul.f32 %v6903, 0.2
    %v6968 = vmul.f32 %v6904, 0.2
    %v6969 = vmul.f32 %v6905, 0.2
    %v6970 = vmul.f32 %v6906, 0.2
    %v6971 = vmul.f32 %v6907, 0.2
    %v6972 = vmul.f32 %v6908, 0.2
    %v6973 = vmul.f32 %v6909, 0.2
    %v6974 = vmul.f32 %v6910, 0.2
    %v6975 = vmul.f32 %v6911, 0.2
    %v6976 = vmul.f32 %v6912, 0.2
    %v6977 = vmul.f32 %v6913, 0.2
    %v6978 = vmul.f32 %v6914, 0.2
    %v6979 = vmul.f32 %v6915, 0.2
    %v6980 = vmul.f32 %v6916, 0.2
    %v6981 = vmul.f32 %v6917, 0.2
    %v6982 = vmul.f32 %v6918, 0.2
    %v6983 = vmul.f32 %v6919, 0.2
    %v6984 = vmul.f32 %v6920, 0.2
    %v6985 = vmul.f32 %v6921, 0.2
    %v6986 = vmul.f32 %v6922, 0.2
    %v6987 = vmul.f32 %v6923, 0.2
    %v6988 = vmul.f32 %v6924, 0.2
    %v6989 = vmul.f32 %v6925, 0.2
    %v6990 = vmul.f32 %v6926, 0.2
    %v6991 = vmul.f32 %v6927, 0.2
    %v6992 = vmul.f32 %v6928, 0.2
    %v6993 = vmul.f32 %v6929, 0.2
    %v6994 = vmul.f32 %v6930, 0.2
    %v6995 = vmul.f32 %v6931, 0.2
    %v6996 = vmul.f32 %v6932, 0.2
    %v6997 = vmul.f32 %v6933, 0.2
    %v6998 = vmul.f32 %v6934, 0.2
    %v6999 = vmul.f32 %v6935, 0.2
    %v7000 = vmul.f32 %v6936, 0.2
    %v7001 = vmul.f32 %v6937, 0.2
    %v7002 = vmul.f32 %v6938, 0.2
    %v7003 = vmul.f32 %v6939, 0.2
    %v7004 = vmul.f32 %v6940, 0.2
    %v7005 = vmul.f32 %v6941, 0.2
    %v7006 = vmul.f32 %v6942, 0.2
    %v7007 = vmul.f32 %v6943, 0.2
    %v7008 = vmul.f32 %v6944, 0.2
    %v7009 = vmul.f32 %v6945, 0.2
    %v7010 = vmul.f32 %v6946, 0.2
    %v7011 = vmul.f32 %v6947, 0.2
    %v7012 = vmul.f32 %v6948, 0.2
    %v7013 = vmul.f32 %v6949, 0.2
    %v7014 = vmul.f32 %v6950, 0.2
    %v7015 = vmul.f32 %v6951, 0.2
    %v7016 = vmul.f32 %v6952, 0.2
    %v7017 = vmul.f32 %v6953, 0.2
    %v7018 = vmul.f32 %v6954, 0.2
    %v7019 = vmul.f32 %v6955, 0.2
    %v7020 = vmul.f32 %v6956, 0.2
    %v7021 = vmul.f32 %v6957, 0.2
    %v7022 = vmul.f32 %v6958, 0.2
    %v7023 = vmul.f32 %v6959, 0.2
    %v7024 = vmul.f32 %v6960, 0.2
    %v7025 = vmul.f32 %v6961, 0.2
    %v7026 = vmul.f32 %v6962, 0.2
    %v7027 = vmax.f32 %v6899, %v6963
    %v7028 = vmax.f32 %v6900, %v6964
    %v7029 = vmax.f32 %v6901, %v6965
    %v7030 = vmax.f32 %v6902, %v6966
    %v7031 = vmax.f32 %v6903, %v6967
    %v7032 = vmax.f32 %v6904, %v6968
    %v7033 = vmax.f32 %v6905, %v6969
    %v7034 = vmax.f32 %v6906, %v6970
    %v7035 = vmax.f32 %v6907, %v6971
    %v7036 = vmax.f32 %v6908, %v6972
    %v7037 = vmax.f32 %v6909, %v6973
    %v7038 = vmax.f32 %v6910, %v6974
    %v7039 = vmax.f32 %v6911, %v6975
    %v7040 = vmax.f32 %v6912, %v6976
    %v7041 = vmax.f32 %v6913, %v6977
    %v7042 = vmax.f32 %v6914, %v6978
    %v7043 = vmax.f32 %v6915, %v6979
    %v7044 = vmax.f32 %v6916, %v6980
    %v7045 = vmax.f32 %v6917, %v6981
    %v7046 = vmax.f32 %v6918, %v6982
    %v7047 = vmax.f32 %v6919, %v6983
    %v7048 = vmax.f32 %v6920, %v6984
    %v7049 = vmax.f32 %v6921, %v6985
    %v7050 = vmax.f32 %v6922, %v6986
    %v7051 = vmax.f32 %v6923, %v6987
    %v7052 = vmax.f32 %v6924, %v6988
    %v7053 = vmax.f32 %v6925, %v6989
    %v7054 = vmax.f32 %v6926, %v6990
    %v7055 = vmax.f32 %v6927, %v6991
    %v7056 = vmax.f32 %v6928, %v6992
    %v7057 = vmax.f32 %v6929, %v6993
    %v7058 = vmax.f32 %v6930, %v6994
    %v7059 = vmax.f32 %v6931, %v6995
    %v7060 = vmax.f32 %v6932, %v6996
    %v7061 = vmax.f32 %v6933, %v6997
    %v7062 = vmax.f32 %v6934, %v6998
    %v7063 = vmax.f32 %v6935, %v6999
    %v7064 = vmax.f32 %v6936, %v7000
    %v7065 = vmax.f32 %v6937, %v7001
    %v7066 = vmax.f32 %v6938, %v7002
    %v7067 = vmax.f32 %v6939, %v7003
    %v7068 = vmax.f32 %v6940, %v7004
    %v7069 = vmax.f32 %v6941, %v7005
    %v7070 = vmax.f32 %v6942, %v7006
    %v7071 = vmax.f32 %v6943, %v7007
    %v7072 = vmax.f32 %v6944, %v7008
    %v7073 = vmax.f32 %v6945, %v7009
    %v7074 = vmax.f32 %v6946, %v7010
    %v7075 = vmax.f32 %v6947, %v7011
    %v7076 = vmax.f32 %v6948, %v7012
    %v7077 = vmax.f32 %v6949, %v7013
    %v7078 = vmax.f32 %v6950, %v7014
    %v7079 = vmax.f32 %v6951, %v7015
    %v7080 = vmax.f32 %v6952, %v7016
    %v7081 = vmax.f32 %v6953, %v7017
    %v7082 = vmax.f32 %v6954, %v7018
    %v7083 = vmax.f32 %v6955, %v7019
    %v7084 = vmax.f32 %v6956, %v7020
    %v7085 = vmax.f32 %v6957, %v7021
    %v7086 = vmax.f32 %v6958, %v7022
    %v7087 = vmax.f32 %v6959, %v7023
    %v7088 = vmax.f32 %v6960, %v7024
    %v7089 = vmax.f32 %v6961, %v7025
    %v7090 = vmax.f32 %v6962, %v7026
    %7091 = vst.msk [vmem:[#allocation3] sm:$0xff] %vm6482, 0.0
    %7092 = vst.msk [vmem:[#allocation3 + $0x8] sm:$0xff] %vm6482, 0.0
    %7093 = vst.msk [vmem:[#allocation3 + $0x10] sm:$0xff] %vm6482, 0.0
    %7094 = vst.msk [vmem:[#allocation3 + $0x18] sm:$0xff] %vm6482, 0.0
    %7095 = vst.msk [vmem:[#allocation3 + $0x20] sm:$0xff] %vm6482, 0.0
    %7096 = vst.msk [vmem:[#allocation3 + $0x28] sm:$0xff] %vm6482, 0.0
    %7097 = vst.msk [vmem:[#allocation3 + $0x30] sm:$0xff] %vm6482, 0.0
    %7098 = vst.msk [vmem:[#allocation3 + $0x38] sm:$0xff] %vm6482, 0.0
    %7099 = vst.msk [vmem:[#allocation3 + $0x40] sm:$0xff] %vm6482, 0.0
    %7100 = vst.msk [vmem:[#allocation3 + $0x48] sm:$0xff] %vm6482, 0.0
    %s7101 = scalar_lea.vmem [#allocation3], 720
    %7102 = vst.msk [vmem:[%s7101] sm:$0xff] %vm6482, 0.0
    %7103 = vst.msk [vmem:[%s7101 + $0x8] sm:$0xff] %vm6482, 0.0
    %7104 = vst.msk [vmem:[%s7101 + $0x10] sm:$0xff] %vm6482, 0.0
    %7105 = vst.msk [vmem:[%s7101 + $0x18] sm:$0xff] %vm6482, 0.0
    %7106 = vst.msk [vmem:[%s7101 + $0x20] sm:$0xff] %vm6482, 0.0
    %7107 = vst.msk [vmem:[%s7101 + $0x28] sm:$0xff] %vm6482, 0.0
    %7108 = vst.msk [vmem:[%s7101 + $0x30] sm:$0xff] %vm6482, 0.0
    %7109 = vst.msk [vmem:[%s7101 + $0x38] sm:$0xff] %vm6482, 0.0
    %7110 = vst.msk [vmem:[%s7101 + $0x40] sm:$0xff] %vm6482, 0.0
    %7111 = vst.msk [vmem:[%s7101 + $0x48] sm:$0xff] %vm6482, 0.0
    %s7112 = scalar_lea.vmem [#allocation3], 80
    %7113 = vst.msk [vmem:[%s7112] sm:$0xff] %vm6482, 0.0
    %7114 = vst.msk [vmem:[%s7112 + $0x50] sm:$0xff] %vm6482, 0.0
    %7115 = vst.msk [vmem:[%s7112 + $0xa0] sm:$0xff] %vm6482, 0.0
    %7116 = vst.msk [vmem:[%s7112 + $0xf0] sm:$0xff] %vm6482, 0.0
    %7117 = vst.msk [vmem:[%s7112 + $0x140] sm:$0xff] %vm6482, 0.0
    %7118 = vst.msk [vmem:[%s7112 + $0x190] sm:$0xff] %vm6482, 0.0
    %7119 = vst.msk [vmem:[%s7112 + $0x1e0] sm:$0xff] %vm6482, 0.0
    %7120 = vst.msk [vmem:[%s7112 + $0x230] sm:$0xff] %vm6482, 0.0
    %s7121 = scalar_lea.vmem [#allocation3], 152
    %7122 = vst.msk [vmem:[%s7121] sm:$0xff] %vm6482, 0.0
    %7123 = vst.msk [vmem:[%s7121 + $0x50] sm:$0xff] %vm6482, 0.0
    %7124 = vst.msk [vmem:[%s7121 + $0xa0] sm:$0xff] %vm6482, 0.0
    %7125 = vst.msk [vmem:[%s7121 + $0xf0] sm:$0xff] %vm6482, 0.0
    %7126 = vst.msk [vmem:[%s7121 + $0x140] sm:$0xff] %vm6482, 0.0
    %7127 = vst.msk [vmem:[%s7121 + $0x190] sm:$0xff] %vm6482, 0.0
    %7128 = vst.msk [vmem:[%s7121 + $0x1e0] sm:$0xff] %vm6482, 0.0
    %7129 = vst.msk [vmem:[%s7121 + $0x230] sm:$0xff] %vm6482, 0.0
    %s7130 = scalar_lea.vmem [#allocation3], 88
    %7131 = vst.msk [vmem:[%s7130] sm:$0xff] %vm6482, %v7027
    %7132 = vst.msk [vmem:[%s7130 + $0x8] sm:$0xff] %vm6482, %v7028
    %7133 = vst.msk [vmem:[%s7130 + $0x10] sm:$0xff] %vm6482, %v7029
    %7134 = vst.msk [vmem:[%s7130 + $0x18] sm:$0xff] %vm6482, %v7030
    %7135 = vst.msk [vmem:[%s7130 + $0x20] sm:$0xff] %vm6482, %v7031
    %7136 = vst.msk [vmem:[%s7130 + $0x28] sm:$0xff] %vm6482, %v7032
    %7137 = vst.msk [vmem:[%s7130 + $0x30] sm:$0xff] %vm6482, %v7033
    %7138 = vst.msk [vmem:[%s7130 + $0x38] sm:$0xff] %vm6482, %v7034
    %7139 = vst.msk [vmem:[%s7130 + $0x50] sm:$0xff] %vm6482, %v7035
    %7140 = vst.msk [vmem:[%s7130 + $0x58] sm:$0xff] %vm6482, %v7036
    %7141 = vst.msk [vmem:[%s7130 + $0x60] sm:$0xff] %vm6482, %v7037
    %7142 = vst.msk [vmem:[%s7130 + $0x68] sm:$0xff] %vm6482, %v7038
    %7143 = vst.msk [vmem:[%s7130 + $0x70] sm:$0xff] %vm6482, %v7039
    %7144 = vst.msk [vmem:[%s7130 + $0x78] sm:$0xff] %vm6482, %v7040
    %7145 = vst.msk [vmem:[%s7130 + $0x80] sm:$0xff] %vm6482, %v7041
    %7146 = vst.msk [vmem:[%s7130 + $0x88] sm:$0xff] %vm6482, %v7042
    %7147 = vst.msk [vmem:[%s7130 + $0xa0] sm:$0xff] %vm6482, %v7043
    %7148 = vst.msk [vmem:[%s7130 + $0xa8] sm:$0xff] %vm6482, %v7044
    %7149 = vst.msk [vmem:[%s7130 + $0xb0] sm:$0xff] %vm6482, %v7045
    %7150 = vst.msk [vmem:[%s7130 + $0xb8] sm:$0xff] %vm6482, %v7046
    %7151 = vst.msk [vmem:[%s7130 + $0xc0] sm:$0xff] %vm6482, %v7047
    %7152 = vst.msk [vmem:[%s7130 + $0xc8] sm:$0xff] %vm6482, %v7048
    %7153 = vst.msk [vmem:[%s7130 + $0xd0] sm:$0xff] %vm6482, %v7049
    %7154 = vst.msk [vmem:[%s7130 + $0xd8] sm:$0xff] %vm6482, %v7050
    %7155 = vst.msk [vmem:[%s7130 + $0xf0] sm:$0xff] %vm6482, %v7051
    %7156 = vst.msk [vmem:[%s7130 + $0xf8] sm:$0xff] %vm6482, %v7052
    %7157 = vst.msk [vmem:[%s7130 + $0x100] sm:$0xff] %vm6482, %v7053
    %7158 = vst.msk [vmem:[%s7130 + $0x108] sm:$0xff] %vm6482, %v7054
    %7159 = vst.msk [vmem:[%s7130 + $0x110] sm:$0xff] %vm6482, %v7055
    %7160 = vst.msk [vmem:[%s7130 + $0x118] sm:$0xff] %vm6482, %v7056
    %7161 = vst.msk [vmem:[%s7130 + $0x120] sm:$0xff] %vm6482, %v7057
    %7162 = vst.msk [vmem:[%s7130 + $0x128] sm:$0xff] %vm6482, %v7058
    %7163 = vst.msk [vmem:[%s7130 + $0x140] sm:$0xff] %vm6482, %v7059
    %7164 = vst.msk [vmem:[%s7130 + $0x148] sm:$0xff] %vm6482, %v7060
    %7165 = vst.msk [vmem:[%s7130 + $0x150] sm:$0xff] %vm6482, %v7061
    %7166 = vst.msk [vmem:[%s7130 + $0x158] sm:$0xff] %vm6482, %v7062
    %7167 = vst.msk [vmem:[%s7130 + $0x160] sm:$0xff] %vm6482, %v7063
    %7168 = vst.msk [vmem:[%s7130 + $0x168] sm:$0xff] %vm6482, %v7064
    %7169 = vst.msk [vmem:[%s7130 + $0x170] sm:$0xff] %vm6482, %v7065
    %7170 = vst.msk [vmem:[%s7130 + $0x178] sm:$0xff] %vm6482, %v7066
    %7171 = vst.msk [vmem:[%s7130 + $0x190] sm:$0xff] %vm6482, %v7067
    %7172 = vst.msk [vmem:[%s7130 + $0x198] sm:$0xff] %vm6482, %v7068
    %7173 = vst.msk [vmem:[%s7130 + $0x1a0] sm:$0xff] %vm6482, %v7069
    %7174 = vst.msk [vmem:[%s7130 + $0x1a8] sm:$0xff] %vm6482, %v7070
    %7175 = vst.msk [vmem:[%s7130 + $0x1b0] sm:$0xff] %vm6482, %v7071
    %7176 = vst.msk [vmem:[%s7130 + $0x1b8] sm:$0xff] %vm6482, %v7072
    %7177 = vst.msk [vmem:[%s7130 + $0x1c0] sm:$0xff] %vm6482, %v7073
    %7178 = vst.msk [vmem:[%s7130 + $0x1c8] sm:$0xff] %vm6482, %v7074
    %7179 = vst.msk [vmem:[%s7130 + $0x1e0] sm:$0xff] %vm6482, %v7075
    %7180 = vst.msk [vmem:[%s7130 + $0x1e8] sm:$0xff] %vm6482, %v7076
    %7181 = vst.msk [vmem:[%s7130 + $0x1f0] sm:$0xff] %vm6482, %v7077
    %7182 = vst.msk [vmem:[%s7130 + $0x1f8] sm:$0xff] %vm6482, %v7078
    %7183 = vst.msk [vmem:[%s7130 + $0x200] sm:$0xff] %vm6482, %v7079
    %7184 = vst.msk [vmem:[%s7130 + $0x208] sm:$0xff] %vm6482, %v7080
    %7185 = vst.msk [vmem:[%s7130 + $0x210] sm:$0xff] %vm6482, %v7081
    %7186 = vst.msk [vmem:[%s7130 + $0x218] sm:$0xff] %vm6482, %v7082
    %7187 = vst.msk [vmem:[%s7130 + $0x230] sm:$0xff] %vm6482, %v7083
    %7188 = vst.msk [vmem:[%s7130 + $0x238] sm:$0xff] %vm6482, %v7084
    %7189 = vst.msk [vmem:[%s7130 + $0x240] sm:$0xff] %vm6482, %v7085
    %7190 = vst.msk [vmem:[%s7130 + $0x248] sm:$0xff] %vm6482, %v7086
    %7191 = vst.msk [vmem:[%s7130 + $0x250] sm:$0xff] %vm6482, %v7087
    %7192 = vst.msk [vmem:[%s7130 + $0x258] sm:$0xff] %vm6482, %v7088
    %7193 = vst.msk [vmem:[%s7130 + $0x260] sm:$0xff] %vm6482, %v7089
    %7194 = vst.msk [vmem:[%s7130 + $0x268] sm:$0xff] %vm6482, %v7090
    %v7195 = vld [vmem:[#allocation3] sm:$0xff]
    %v7196 = vld [vmem:[#allocation3 + $0x8] sm:$0xff]
    %v7197 = vld [vmem:[#allocation3 + $0x10] sm:$0xff]
    %v7198 = vld [vmem:[#allocation3 + $0x18] sm:$0xff]
    %v7199 = vld [vmem:[#allocation3 + $0x20] sm:$0xff]
    %v7200 = vld [vmem:[#allocation3 + $0x28] sm:$0xff]
    %v7201 = vld [vmem:[#allocation3 + $0x30] sm:$0xff]
    %v7202 = vld [vmem:[#allocation3 + $0x38] sm:$0xff]
    %v7203 = vld [vmem:[#allocation3 + $0x40] sm:$0xff]
    %v7204 = vld [vmem:[#allocation3 + $0x48] sm:$0xff]
    %v7205 = vld [vmem:[#allocation3 + $0x50] sm:$0xff]
    %v7206 = vld [vmem:[#allocation3 + $0x58] sm:$0xff]
    %v7207 = vld [vmem:[#allocation3 + $0x60] sm:$0xff]
    %v7208 = vld [vmem:[#allocation3 + $0x68] sm:$0xff]
    %v7209 = vld [vmem:[#allocation3 + $0x70] sm:$0xff]
    %v7210 = vld [vmem:[#allocation3 + $0x78] sm:$0xff]
    %v7211 = vld [vmem:[#allocation3 + $0x80] sm:$0xff]
    %v7212 = vld [vmem:[#allocation3 + $0x88] sm:$0xff]
    %v7213 = vld [vmem:[#allocation3 + $0x90] sm:$0xff]
    %v7214 = vld [vmem:[#allocation3 + $0x98] sm:$0xff]
    %v7215 = vld [vmem:[#allocation3 + $0xa0] sm:$0xff]
    %v7216 = vld [vmem:[#allocation3 + $0xa8] sm:$0xff]
    %v7217 = vld [vmem:[#allocation3 + $0xb0] sm:$0xff]
    %v7218 = vld [vmem:[#allocation3 + $0xb8] sm:$0xff]
    %v7219 = vld [vmem:[#allocation3 + $0xc0] sm:$0xff]
    %v7220 = vld [vmem:[#allocation3 + $0xc8] sm:$0xff]
    %v7221 = vld [vmem:[#allocation3 + $0xd0] sm:$0xff]
    %v7222 = vld [vmem:[#allocation3 + $0xd8] sm:$0xff]
    %v7223 = vld [vmem:[#allocation3 + $0xe0] sm:$0xff]
    %v7224 = vld [vmem:[#allocation3 + $0xe8] sm:$0xff]
    %v7225 = vld [vmem:[#allocation3 + $0xf0] sm:$0xff]
    %v7226 = vld [vmem:[#allocation3 + $0xf8] sm:$0xff]
    %v7227 = vld [vmem:[#allocation3 + $0x100] sm:$0xff]
    %v7228 = vld [vmem:[#allocation3 + $0x108] sm:$0xff]
    %v7229 = vld [vmem:[#allocation3 + $0x110] sm:$0xff]
    %v7230 = vld [vmem:[#allocation3 + $0x118] sm:$0xff]
    %v7231 = vld [vmem:[#allocation3 + $0x120] sm:$0xff]
    %v7232 = vld [vmem:[#allocation3 + $0x128] sm:$0xff]
    %v7233 = vld [vmem:[#allocation3 + $0x130] sm:$0xff]
    %v7234 = vld [vmem:[#allocation3 + $0x138] sm:$0xff]
    %v7235 = vld [vmem:[#allocation3 + $0x140] sm:$0xff]
    %v7236 = vld [vmem:[#allocation3 + $0x148] sm:$0xff]
    %v7237 = vld [vmem:[#allocation3 + $0x150] sm:$0xff]
    %v7238 = vld [vmem:[#allocation3 + $0x158] sm:$0xff]
    %v7239 = vld [vmem:[#allocation3 + $0x160] sm:$0xff]
    %v7240 = vld [vmem:[#allocation3 + $0x168] sm:$0xff]
    %v7241 = vld [vmem:[#allocation3 + $0x170] sm:$0xff]
    %v7242 = vld [vmem:[#allocation3 + $0x178] sm:$0xff]
    %v7243 = vld [vmem:[#allocation3 + $0x180] sm:$0xff]
    %v7244 = vld [vmem:[#allocation3 + $0x188] sm:$0xff]
    %v7245 = vld [vmem:[#allocation3 + $0x190] sm:$0xff]
    %v7246 = vld [vmem:[#allocation3 + $0x198] sm:$0xff]
    %v7247 = vld [vmem:[#allocation3 + $0x1a0] sm:$0xff]
    %v7248 = vld [vmem:[#allocation3 + $0x1a8] sm:$0xff]
    %v7249 = vld [vmem:[#allocation3 + $0x1b0] sm:$0xff]
    %v7250 = vld [vmem:[#allocation3 + $0x1b8] sm:$0xff]
    %v7251 = vld [vmem:[#allocation3 + $0x1c0] sm:$0xff]
    %v7252 = vld [vmem:[#allocation3 + $0x1c8] sm:$0xff]
    %v7253 = vld [vmem:[#allocation3 + $0x1d0] sm:$0xff]
    %v7254 = vld [vmem:[#allocation3 + $0x1d8] sm:$0xff]
    %v7255 = vld [vmem:[#allocation3 + $0x1e0] sm:$0xff]
    %v7256 = vld [vmem:[#allocation3 + $0x1e8] sm:$0xff]
    %v7257 = vld [vmem:[#allocation3 + $0x1f0] sm:$0xff]
    %v7258 = vld [vmem:[#allocation3 + $0x1f8] sm:$0xff]
    %v7259 = vld [vmem:[#allocation3 + $0x200] sm:$0xff]
    %v7260 = vld [vmem:[#allocation3 + $0x208] sm:$0xff]
    %v7261 = vld [vmem:[#allocation3 + $0x210] sm:$0xff]
    %v7262 = vld [vmem:[#allocation3 + $0x218] sm:$0xff]
    %v7263 = vld [vmem:[#allocation3 + $0x220] sm:$0xff]
    %v7264 = vld [vmem:[#allocation3 + $0x228] sm:$0xff]
    %v7265 = vld [vmem:[#allocation3 + $0x230] sm:$0xff]
    %v7266 = vld [vmem:[#allocation3 + $0x238] sm:$0xff]
    %v7267 = vld [vmem:[#allocation3 + $0x240] sm:$0xff]
    %v7268 = vld [vmem:[#allocation3 + $0x248] sm:$0xff]
    %v7269 = vld [vmem:[#allocation3 + $0x250] sm:$0xff]
    %v7270 = vld [vmem:[#allocation3 + $0x258] sm:$0xff]
    %v7271 = vld [vmem:[#allocation3 + $0x260] sm:$0xff]
    %v7272 = vld [vmem:[#allocation3 + $0x268] sm:$0xff]
    %v7273 = vld [vmem:[#allocation3 + $0x270] sm:$0xff]
    %v7274 = vld [vmem:[#allocation3 + $0x278] sm:$0xff]
    %v7275 = vld [vmem:[#allocation3 + $0x280] sm:$0xff]
    %v7276 = vld [vmem:[#allocation3 + $0x288] sm:$0xff]
    %v7277 = vld [vmem:[#allocation3 + $0x290] sm:$0xff]
    %v7278 = vld [vmem:[#allocation3 + $0x298] sm:$0xff]
    %v7279 = vld [vmem:[#allocation3 + $0x2a0] sm:$0xff]
    %v7280 = vld [vmem:[#allocation3 + $0x2a8] sm:$0xff]
    %v7281 = vld [vmem:[#allocation3 + $0x2b0] sm:$0xff]
    %v7282 = vld [vmem:[#allocation3 + $0x2b8] sm:$0xff]
    %v7283 = vld [vmem:[#allocation3 + $0x2c0] sm:$0xff]
    %v7284 = vld [vmem:[#allocation3 + $0x2c8] sm:$0xff]
    %v7285 = vld [vmem:[#allocation3 + $0x2d0] sm:$0xff]
    %v7286 = vld [vmem:[#allocation3 + $0x2d8] sm:$0xff]
    %v7287 = vld [vmem:[#allocation3 + $0x2e0] sm:$0xff]
    %v7288 = vld [vmem:[#allocation3 + $0x2e8] sm:$0xff]
    %v7289 = vld [vmem:[#allocation3 + $0x2f0] sm:$0xff]
    %v7290 = vld [vmem:[#allocation3 + $0x2f8] sm:$0xff]
    %v7291 = vld [vmem:[#allocation3 + $0x300] sm:$0xff]
    %v7292 = vld [vmem:[#allocation3 + $0x308] sm:$0xff]
    %v7293 = vld [vmem:[#allocation3 + $0x310] sm:$0xff]
    %v7294 = vld [vmem:[#allocation3 + $0x318] sm:$0xff]
    %v7295 = vpack.c.bf16 %v7197, %v7195
    %v7296 = vpack.c.bf16 %v7201, %v7199
    %v7297 = vpack.c.bf16 %v7217, %v7215
    %v7298 = vpack.c.bf16 %v7221, %v7219
    %v7299 = vpack.c.bf16 %v7237, %v7235
    %v7300 = vpack.c.bf16 %v7241, %v7239
    %v7301 = vpack.c.bf16 %v7257, %v7255
    %v7302 = vpack.c.bf16 %v7261, %v7259
    %7303 = vst.msk [vmem:[#allocation6] sm:$0xff] %vm6482, %v7295
    %7304 = vst.msk [vmem:[#allocation6 + $0x10] sm:$0xff] %vm6482, %v7296
    %7305 = vst.msk [vmem:[#allocation6 + $0x20] sm:$0xff] %vm6482, %v7297
    %7306 = vst.msk [vmem:[#allocation6 + $0x30] sm:$0xff] %vm6482, %v7298
    %7307 = vst.msk [vmem:[#allocation6 + $0x40] sm:$0xff] %vm6482, %v7299
    %7308 = vst.msk [vmem:[#allocation6 + $0x50] sm:$0xff] %vm6482, %v7300
    %7309 = vst.msk [vmem:[#allocation6 + $0x60] sm:$0xff] %vm6482, %v7301
    %7310 = vst.msk [vmem:[#allocation6 + $0x70] sm:$0xff] %vm6482, %v7302
    %v7311 = vpack.c.bf16 %v7198, %v7196
    %v7312 = vpack.c.bf16 %v7202, %v7200
    %v7313 = vpack.c.bf16 %v7218, %v7216
    %v7314 = vpack.c.bf16 %v7222, %v7220
    %v7315 = vpack.c.bf16 %v7238, %v7236
    %v7316 = vpack.c.bf16 %v7242, %v7240
    %v7317 = vpack.c.bf16 %v7258, %v7256
    %v7318 = vpack.c.bf16 %v7262, %v7260
    %7327 = vrot.lane.b32.xlu0 %v7311, 16
    %v7328 = vpop.permute.xlu0 %7327
    %7329 = vrot.lane.b32.xlu0 %v7312, 16
    %v7330 = vpop.permute.xlu0 %7329
    %7331 = vrot.lane.b32.xlu0 %v7313, 16
    %v7332 = vpop.permute.xlu0 %7331
    %7333 = vrot.lane.b32.xlu0 %v7314, 16
    %v7334 = vpop.permute.xlu0 %7333
    %7335 = vrot.lane.b32.xlu0 %v7315, 16
    %v7336 = vpop.permute.xlu0 %7335
    %7337 = vrot.lane.b32.xlu0 %v7316, 16
    %v7338 = vpop.permute.xlu0 %7337
    %7339 = vrot.lane.b32.xlu0 %v7317, 16
    %v7340 = vpop.permute.xlu0 %7339
    %7341 = vrot.lane.b32.xlu0 %v7318, 16
    %v7342 = vpop.permute.xlu0 %7341
    %vm7351 = vcmask 261248
    %7352 = vst.msk [vmem:[#allocation6] sm:$0xff] %vm7351, %v7328
    %7353 = vst.msk [vmem:[#allocation6 + $0x10] sm:$0xff] %vm7351, %v7330
    %7354 = vst.msk [vmem:[#allocation6 + $0x20] sm:$0xff] %vm7351, %v7332
    %7355 = vst.msk [vmem:[#allocation6 + $0x30] sm:$0xff] %vm7351, %v7334
    %7356 = vst.msk [vmem:[#allocation6 + $0x40] sm:$0xff] %vm7351, %v7336
    %7357 = vst.msk [vmem:[#allocation6 + $0x50] sm:$0xff] %vm7351, %v7338
    %7358 = vst.msk [vmem:[#allocation6 + $0x60] sm:$0xff] %vm7351, %v7340
    %7359 = vst.msk [vmem:[#allocation6 + $0x70] sm:$0xff] %vm7351, %v7342
    %v7360 = vpack.c.bf16 %v7199, %v7197
    %v7361 = vpack.c.bf16 %v7203, %v7201
    %v7362 = vpack.c.bf16 %v7219, %v7217
    %v7363 = vpack.c.bf16 %v7223, %v7221
    %v7364 = vpack.c.bf16 %v7239, %v7237
    %v7365 = vpack.c.bf16 %v7243, %v7241
    %v7366 = vpack.c.bf16 %v7259, %v7257
    %v7367 = vpack.c.bf16 %v7263, %v7261
    %7376 = vrot.lane.b32.xlu0 %v7360, 32
    %v7377 = vpop.permute.xlu0 %7376
    %7378 = vrot.lane.b32.xlu0 %v7361, 32
    %v7379 = vpop.permute.xlu0 %7378
    %7380 = vrot.lane.b32.xlu0 %v7362, 32
    %v7381 = vpop.permute.xlu0 %7380
    %7382 = vrot.lane.b32.xlu0 %v7363, 32
    %v7383 = vpop.permute.xlu0 %7382
    %7384 = vrot.lane.b32.xlu0 %v7364, 32
    %v7385 = vpop.permute.xlu0 %7384
    %7386 = vrot.lane.b32.xlu0 %v7365, 32
    %v7387 = vpop.permute.xlu0 %7386
    %7388 = vrot.lane.b32.xlu0 %v7366, 32
    %v7389 = vpop.permute.xlu0 %7388
    %7390 = vrot.lane.b32.xlu0 %v7367, 32
    %v7391 = vpop.permute.xlu0 %7390
    %vm7400 = vcmask 392448
    %7401 = vst.msk [vmem:[#allocation6] sm:$0xff] %vm7400, %v7377
    %7402 = vst.msk [vmem:[#allocation6 + $0x10] sm:$0xff] %vm7400, %v7379
    %7403 = vst.msk [vmem:[#allocation6 + $0x20] sm:$0xff] %vm7400, %v7381
    %7404 = vst.msk [vmem:[#allocation6 + $0x30] sm:$0xff] %vm7400, %v7383
    %7405 = vst.msk [vmem:[#allocation6 + $0x40] sm:$0xff] %vm7400, %v7385
    %7406 = vst.msk [vmem:[#allocation6 + $0x50] sm:$0xff] %vm7400, %v7387
    %7407 = vst.msk [vmem:[#allocation6 + $0x60] sm:$0xff] %vm7400, %v7389
    %7408 = vst.msk [vmem:[#allocation6 + $0x70] sm:$0xff] %vm7400, %v7391
    %v7409 = vpack.c.bf16 %v7200, %v7198
    %v7410 = vpack.c.bf16 %v7204, %v7202
    %v7411 = vpack.c.bf16 %v7220, %v7218
    %v7412 = vpack.c.bf16 %v7224, %v7222
    %v7413 = vpack.c.bf16 %v7240, %v7238
    %v7414 = vpack.c.bf16 %v7244, %v7242
    %v7415 = vpack.c.bf16 %v7260, %v7258
    %v7416 = vpack.c.bf16 %v7264, %v7262
    %7425 = vrot.lane.b32.xlu0 %v7409, 48
    %v7426 = vpop.permute.xlu0 %7425
    %7427 = vrot.lane.b32.xlu0 %v7410, 48
    %v7428 = vpop.permute.xlu0 %7427
    %7429 = vrot.lane.b32.xlu0 %v7411, 48
    %v7430 = vpop.permute.xlu0 %7429
    %7431 = vrot.lane.b32.xlu0 %v7412, 48
    %v7432 = vpop.permute.xlu0 %7431
    %7433 = vrot.lane.b32.xlu0 %v7413, 48
    %v7434 = vpop.permute.xlu0 %7433
    %7435 = vrot.lane.b32.xlu0 %v7414, 48
    %v7436 = vpop.permute.xlu0 %7435
    %7437 = vrot.lane.b32.xlu0 %v7415, 48
    %v7438 = vpop.permute.xlu0 %7437
    %7439 = vrot.lane.b32.xlu0 %v7416, 48
    %v7440 = vpop.permute.xlu0 %7439
    %vm7449 = vcmask 523648
    %7450 = vst.msk [vmem:[#allocation6] sm:$0xff] %vm7449, %v7426
    %7451 = vst.msk [vmem:[#allocation6 + $0x10] sm:$0xff] %vm7449, %v7428
    %7452 = vst.msk [vmem:[#allocation6 + $0x20] sm:$0xff] %vm7449, %v7430
    %7453 = vst.msk [vmem:[#allocation6 + $0x30] sm:$0xff] %vm7449, %v7432
    %7454 = vst.msk [vmem:[#allocation6 + $0x40] sm:$0xff] %vm7449, %v7434
    %7455 = vst.msk [vmem:[#allocation6 + $0x50] sm:$0xff] %vm7449, %v7436
    %7456 = vst.msk [vmem:[#allocation6 + $0x60] sm:$0xff] %vm7449, %v7438
    %7457 = vst.msk [vmem:[#allocation6 + $0x70] sm:$0xff] %vm7449, %v7440
    %v7458 = vpack.c.bf16 %v7207, %v7205
    %v7459 = vpack.c.bf16 %v7211, %v7209
    %v7460 = vpack.c.bf16 %v7227, %v7225
    %v7461 = vpack.c.bf16 %v7231, %v7229
    %v7462 = vpack.c.bf16 %v7247, %v7245
    %v7463 = vpack.c.bf16 %v7251, %v7249
    %v7464 = vpack.c.bf16 %v7267, %v7265
    %v7465 = vpack.c.bf16 %v7271, %v7269
    %7474 = vrot.lane.b32.xlu0 %v7458, 64
    %v7475 = vpop.permute.xlu0 %7474
    %7476 = vrot.lane.b32.xlu0 %v7459, 64
    %v7477 = vpop.permute.xlu0 %7476
    %7478 = vrot.lane.b32.xlu0 %v7460, 64
    %v7479 = vpop.permute.xlu0 %7478
    %7480 = vrot.lane.b32.xlu0 %v7461, 64
    %v7481 = vpop.permute.xlu0 %7480
    %7482 = vrot.lane.b32.xlu0 %v7462, 64
    %v7483 = vpop.permute.xlu0 %7482
    %7484 = vrot.lane.b32.xlu0 %v7463, 64
    %v7485 = vpop.permute.xlu0 %7484
    %7486 = vrot.lane.b32.xlu0 %v7464, 64
    %v7487 = vpop.permute.xlu0 %7486
    %7488 = vrot.lane.b32.xlu0 %v7465, 64
    %v7489 = vpop.permute.xlu0 %7488
    %vm7498 = vcmask 654848
    %7499 = vst.msk [vmem:[#allocation6] sm:$0xff] %vm7498, %v7475
    %7500 = vst.msk [vmem:[#allocation6 + $0x10] sm:$0xff] %vm7498, %v7477
    %7501 = vst.msk [vmem:[#allocation6 + $0x20] sm:$0xff] %vm7498, %v7479
    %7502 = vst.msk [vmem:[#allocation6 + $0x30] sm:$0xff] %vm7498, %v7481
    %7503 = vst.msk [vmem:[#allocation6 + $0x40] sm:$0xff] %vm7498, %v7483
    %7504 = vst.msk [vmem:[#allocation6 + $0x50] sm:$0xff] %vm7498, %v7485
    %7505 = vst.msk [vmem:[#allocation6 + $0x60] sm:$0xff] %vm7498, %v7487
    %7506 = vst.msk [vmem:[#allocation6 + $0x70] sm:$0xff] %vm7498, %v7489
    %v7507 = vpack.c.bf16 %v7208, %v7206
    %v7508 = vpack.c.bf16 %v7212, %v7210
    %v7509 = vpack.c.bf16 %v7228, %v7226
    %v7510 = vpack.c.bf16 %v7232, %v7230
    %v7511 = vpack.c.bf16 %v7248, %v7246
    %v7512 = vpack.c.bf16 %v7252, %v7250
    %v7513 = vpack.c.bf16 %v7268, %v7266
    %v7514 = vpack.c.bf16 %v7272, %v7270
    %7523 = vrot.lane.b32.xlu0 %v7507, 80
    %v7524 = vpop.permute.xlu0 %7523
    %7525 = vrot.lane.b32.xlu0 %v7508, 80
    %v7526 = vpop.permute.xlu0 %7525
    %7527 = vrot.lane.b32.xlu0 %v7509, 80
    %v7528 = vpop.permute.xlu0 %7527
    %7529 = vrot.lane.b32.xlu0 %v7510, 80
    %v7530 = vpop.permute.xlu0 %7529
    %7531 = vrot.lane.b32.xlu0 %v7511, 80
    %v7532 = vpop.permute.xlu0 %7531
    %7533 = vrot.lane.b32.xlu0 %v7512, 80
    %v7534 = vpop.permute.xlu0 %7533
    %7535 = vrot.lane.b32.xlu0 %v7513, 80
    %v7536 = vpop.permute.xlu0 %7535
    %7537 = vrot.lane.b32.xlu0 %v7514, 80
    %v7538 = vpop.permute.xlu0 %7537
    %vm7547 = vcmask 786048
    %7548 = vst.msk [vmem:[#allocation6] sm:$0xff] %vm7547, %v7524
    %7549 = vst.msk [vmem:[#allocation6 + $0x10] sm:$0xff] %vm7547, %v7526
    %7550 = vst.msk [vmem:[#allocation6 + $0x20] sm:$0xff] %vm7547, %v7528
    %7551 = vst.msk [vmem:[#allocation6 + $0x30] sm:$0xff] %vm7547, %v7530
    %7552 = vst.msk [vmem:[#allocation6 + $0x40] sm:$0xff] %vm7547, %v7532
    %7553 = vst.msk [vmem:[#allocation6 + $0x50] sm:$0xff] %vm7547, %v7534
    %7554 = vst.msk [vmem:[#allocation6 + $0x60] sm:$0xff] %vm7547, %v7536
    %7555 = vst.msk [vmem:[#allocation6 + $0x70] sm:$0xff] %vm7547, %v7538
    %v7556 = vpack.c.bf16 %v7209, %v7207
    %v7557 = vpack.c.bf16 %v7213, %v7211
    %v7558 = vpack.c.bf16 %v7229, %v7227
    %v7559 = vpack.c.bf16 %v7233, %v7231
    %v7560 = vpack.c.bf16 %v7249, %v7247
    %v7561 = vpack.c.bf16 %v7253, %v7251
    %v7562 = vpack.c.bf16 %v7269, %v7267
    %v7563 = vpack.c.bf16 %v7273, %v7271
    %7572 = vrot.lane.b32.xlu0 %v7556, 96
    %v7573 = vpop.permute.xlu0 %7572
    %7574 = vrot.lane.b32.xlu0 %v7557, 96
    %v7575 = vpop.permute.xlu0 %7574
    %7576 = vrot.lane.b32.xlu0 %v7558, 96
    %v7577 = vpop.permute.xlu0 %7576
    %7578 = vrot.lane.b32.xlu0 %v7559, 96
    %v7579 = vpop.permute.xlu0 %7578
    %7580 = vrot.lane.b32.xlu0 %v7560, 96
    %v7581 = vpop.permute.xlu0 %7580
    %7582 = vrot.lane.b32.xlu0 %v7561, 96
    %v7583 = vpop.permute.xlu0 %7582
    %7584 = vrot.lane.b32.xlu0 %v7562, 96
    %v7585 = vpop.permute.xlu0 %7584
    %7586 = vrot.lane.b32.xlu0 %v7563, 96
    %v7587 = vpop.permute.xlu0 %7586
    %vm7596 = vcmask 917248
    %7597 = vst.msk [vmem:[#allocation6] sm:$0xff] %vm7596, %v7573
    %7598 = vst.msk [vmem:[#allocation6 + $0x10] sm:$0xff] %vm7596, %v7575
    %7599 = vst.msk [vmem:[#allocation6 + $0x20] sm:$0xff] %vm7596, %v7577
    %7600 = vst.msk [vmem:[#allocation6 + $0x30] sm:$0xff] %vm7596, %v7579
    %7601 = vst.msk [vmem:[#allocation6 + $0x40] sm:$0xff] %vm7596, %v7581
    %7602 = vst.msk [vmem:[#allocation6 + $0x50] sm:$0xff] %vm7596, %v7583
    %7603 = vst.msk [vmem:[#allocation6 + $0x60] sm:$0xff] %vm7596, %v7585
    %7604 = vst.msk [vmem:[#allocation6 + $0x70] sm:$0xff] %vm7596, %v7587
    %v7605 = vpack.c.bf16 %v7210, %v7208
    %v7606 = vpack.c.bf16 %v7214, %v7212
    %v7607 = vpack.c.bf16 %v7230, %v7228
    %v7608 = vpack.c.bf16 %v7234, %v7232
    %v7609 = vpack.c.bf16 %v7250, %v7248
    %v7610 = vpack.c.bf16 %v7254, %v7252
    %v7611 = vpack.c.bf16 %v7270, %v7268
    %v7612 = vpack.c.bf16 %v7274, %v7272
    %7621 = vrot.lane.b32.xlu0 %v7605, 112
    %v7622 = vpop.permute.xlu0 %7621
    %7623 = vrot.lane.b32.xlu0 %v7606, 112
    %v7624 = vpop.permute.xlu0 %7623
    %7625 = vrot.lane.b32.xlu0 %v7607, 112
    %v7626 = vpop.permute.xlu0 %7625
    %7627 = vrot.lane.b32.xlu0 %v7608, 112
    %v7628 = vpop.permute.xlu0 %7627
    %7629 = vrot.lane.b32.xlu0 %v7609, 112
    %v7630 = vpop.permute.xlu0 %7629
    %7631 = vrot.lane.b32.xlu0 %v7610, 112
    %v7632 = vpop.permute.xlu0 %7631
    %7633 = vrot.lane.b32.xlu0 %v7611, 112
    %v7634 = vpop.permute.xlu0 %7633
    %7635 = vrot.lane.b32.xlu0 %v7612, 112
    %v7636 = vpop.permute.xlu0 %7635
    %vm7645 = vcmask 1048448
    %7646 = vst.msk [vmem:[#allocation6] sm:$0xff] %vm7645, %v7622
    %7647 = vst.msk [vmem:[#allocation6 + $0x10] sm:$0xff] %vm7645, %v7624
    %7648 = vst.msk [vmem:[#allocation6 + $0x20] sm:$0xff] %vm7645, %v7626
    %7649 = vst.msk [vmem:[#allocation6 + $0x30] sm:$0xff] %vm7645, %v7628
    %7650 = vst.msk [vmem:[#allocation6 + $0x40] sm:$0xff] %vm7645, %v7630
    %7651 = vst.msk [vmem:[#allocation6 + $0x50] sm:$0xff] %vm7645, %v7632
    %7652 = vst.msk [vmem:[#allocation6 + $0x60] sm:$0xff] %vm7645, %v7634
    %7653 = vst.msk [vmem:[#allocation6 + $0x70] sm:$0xff] %vm7645, %v7636
    %v7654 = vpack.c.bf16 %v7277, %v7275
    %v7655 = vpack.c.bf16 %v7281, %v7279
    %7656 = vst.msk [vmem:[#allocation6 + $0x8] sm:$0xff] %vm6482, %v7297
    %7657 = vst.msk [vmem:[#allocation6 + $0x18] sm:$0xff] %vm6482, %v7298
    %7658 = vst.msk [vmem:[#allocation6 + $0x28] sm:$0xff] %vm6482, %v7299
    %7659 = vst.msk [vmem:[#allocation6 + $0x38] sm:$0xff] %vm6482, %v7300
    %7660 = vst.msk [vmem:[#allocation6 + $0x48] sm:$0xff] %vm6482, %v7301
    %7661 = vst.msk [vmem:[#allocation6 + $0x58] sm:$0xff] %vm6482, %v7302
    %7662 = vst.msk [vmem:[#allocation6 + $0x68] sm:$0xff] %vm6482, %v7654
    %7663 = vst.msk [vmem:[#allocation6 + $0x78] sm:$0xff] %vm6482, %v7655
    %v7664 = vpack.c.bf16 %v7278, %v7276
    %v7665 = vpack.c.bf16 %v7282, %v7280
    %7668 = vrot.lane.b32.xlu0 %v7664, 16
    %v7669 = vpop.permute.xlu0 %7668
    %7670 = vrot.lane.b32.xlu0 %v7665, 16
    %v7671 = vpop.permute.xlu0 %7670
    %7674 = vst.msk [vmem:[#allocation6 + $0x8] sm:$0xff] %vm7351, %v7332
    %7675 = vst.msk [vmem:[#allocation6 + $0x18] sm:$0xff] %vm7351, %v7334
    %7676 = vst.msk [vmem:[#allocation6 + $0x28] sm:$0xff] %vm7351, %v7336
    %7677 = vst.msk [vmem:[#allocation6 + $0x38] sm:$0xff] %vm7351, %v7338
    %7678 = vst.msk [vmem:[#allocation6 + $0x48] sm:$0xff] %vm7351, %v7340
    %7679 = vst.msk [vmem:[#allocation6 + $0x58] sm:$0xff] %vm7351, %v7342
    %7680 = vst.msk [vmem:[#allocation6 + $0x68] sm:$0xff] %vm7351, %v7669
    %7681 = vst.msk [vmem:[#allocation6 + $0x78] sm:$0xff] %vm7351, %v7671
    %v7682 = vpack.c.bf16 %v7279, %v7277
    %v7683 = vpack.c.bf16 %v7283, %v7281
    %7686 = vrot.lane.b32.xlu0 %v7682, 32
    %v7687 = vpop.permute.xlu0 %7686
    %7688 = vrot.lane.b32.xlu0 %v7683, 32
    %v7689 = vpop.permute.xlu0 %7688
    %7692 = vst.msk [vmem:[#allocation6 + $0x8] sm:$0xff] %vm7400, %v7381
    %7693 = vst.msk [vmem:[#allocation6 + $0x18] sm:$0xff] %vm7400, %v7383
    %7694 = vst.msk [vmem:[#allocation6 + $0x28] sm:$0xff] %vm7400, %v7385
    %7695 = vst.msk [vmem:[#allocation6 + $0x38] sm:$0xff] %vm7400, %v7387
    %7696 = vst.msk [vmem:[#allocation6 + $0x48] sm:$0xff] %vm7400, %v7389
    %7697 = vst.msk [vmem:[#allocation6 + $0x58] sm:$0xff] %vm7400, %v7391
    %7698 = vst.msk [vmem:[#allocation6 + $0x68] sm:$0xff] %vm7400, %v7687
    %7699 = vst.msk [vmem:[#allocation6 + $0x78] sm:$0xff] %vm7400, %v7689
    %v7700 = vpack.c.bf16 %v7280, %v7278
    %v7701 = vpack.c.bf16 %v7284, %v7282
    %7704 = vrot.lane.b32.xlu0 %v7700, 48
    %v7705 = vpop.permute.xlu0 %7704
    %7706 = vrot.lane.b32.xlu0 %v7701, 48
    %v7707 = vpop.permute.xlu0 %7706
    %7710 = vst.msk [vmem:[#allocation6 + $0x8] sm:$0xff] %vm7449, %v7430
    %7711 = vst.msk [vmem:[#allocation6 + $0x18] sm:$0xff] %vm7449, %v7432
    %7712 = vst.msk [vmem:[#allocation6 + $0x28] sm:$0xff] %vm7449, %v7434
    %7713 = vst.msk [vmem:[#allocation6 + $0x38] sm:$0xff] %vm7449, %v7436
    %7714 = vst.msk [vmem:[#allocation6 + $0x48] sm:$0xff] %vm7449, %v7438
    %7715 = vst.msk [vmem:[#allocation6 + $0x58] sm:$0xff] %vm7449, %v7440
    %7716 = vst.msk [vmem:[#allocation6 + $0x68] sm:$0xff] %vm7449, %v7705
    %7717 = vst.msk [vmem:[#allocation6 + $0x78] sm:$0xff] %vm7449, %v7707
    %v7718 = vpack.c.bf16 %v7287, %v7285
    %v7719 = vpack.c.bf16 %v7291, %v7289
    %7722 = vrot.lane.b32.xlu0 %v7718, 64
    %v7723 = vpop.permute.xlu0 %7722
    %7724 = vrot.lane.b32.xlu0 %v7719, 64
    %v7725 = vpop.permute.xlu0 %7724
    %7728 = vst.msk [vmem:[#allocation6 + $0x8] sm:$0xff] %vm7498, %v7479
    %7729 = vst.msk [vmem:[#allocation6 + $0x18] sm:$0xff] %vm7498, %v7481
    %7730 = vst.msk [vmem:[#allocation6 + $0x28] sm:$0xff] %vm7498, %v7483
    %7731 = vst.msk [vmem:[#allocation6 + $0x38] sm:$0xff] %vm7498, %v7485
    %7732 = vst.msk [vmem:[#allocation6 + $0x48] sm:$0xff] %vm7498, %v7487
    %7733 = vst.msk [vmem:[#allocation6 + $0x58] sm:$0xff] %vm7498, %v7489
    %7734 = vst.msk [vmem:[#allocation6 + $0x68] sm:$0xff] %vm7498, %v7723
    %7735 = vst.msk [vmem:[#allocation6 + $0x78] sm:$0xff] %vm7498, %v7725
    %v7736 = vpack.c.bf16 %v7288, %v7286
    %v7737 = vpack.c.bf16 %v7292, %v7290
    %7740 = vrot.lane.b32.xlu0 %v7736, 80
    %v7741 = vpop.permute.xlu0 %7740
    %7742 = vrot.lane.b32.xlu0 %v7737, 80
    %v7743 = vpop.permute.xlu0 %7742
    %7746 = vst.msk [vmem:[#allocation6 + $0x8] sm:$0xff] %vm7547, %v7528
    %7747 = vst.msk [vmem:[#allocation6 + $0x18] sm:$0xff] %vm7547, %v7530
    %7748 = vst.msk [vmem:[#allocation6 + $0x28] sm:$0xff] %vm7547, %v7532
    %7749 = vst.msk [vmem:[#allocation6 + $0x38] sm:$0xff] %vm7547, %v7534
    %7750 = vst.msk [vmem:[#allocation6 + $0x48] sm:$0xff] %vm7547, %v7536
    %7751 = vst.msk [vmem:[#allocation6 + $0x58] sm:$0xff] %vm7547, %v7538
    %7752 = vst.msk [vmem:[#allocation6 + $0x68] sm:$0xff] %vm7547, %v7741
    %7753 = vst.msk [vmem:[#allocation6 + $0x78] sm:$0xff] %vm7547, %v7743
    %v7754 = vpack.c.bf16 %v7289, %v7287
    %v7755 = vpack.c.bf16 %v7293, %v7291
    %7758 = vrot.lane.b32.xlu0 %v7754, 96
    %v7759 = vpop.permute.xlu0 %7758
    %7760 = vrot.lane.b32.xlu0 %v7755, 96
    %v7761 = vpop.permute.xlu0 %7760
    %7764 = vst.msk [vmem:[#allocation6 + $0x8] sm:$0xff] %vm7596, %v7577
    %7765 = vst.msk [vmem:[#allocation6 + $0x18] sm:$0xff] %vm7596, %v7579
    %7766 = vst.msk [vmem:[#allocation6 + $0x28] sm:$0xff] %vm7596, %v7581
    %7767 = vst.msk [vmem:[#allocation6 + $0x38] sm:$0xff] %vm7596, %v7583
    %7768 = vst.msk [vmem:[#allocation6 + $0x48] sm:$0xff] %vm7596, %v7585
    %7769 = vst.msk [vmem:[#allocation6 + $0x58] sm:$0xff] %vm7596, %v7587
    %7770 = vst.msk [vmem:[#allocation6 + $0x68] sm:$0xff] %vm7596, %v7759
    %7771 = vst.msk [vmem:[#allocation6 + $0x78] sm:$0xff] %vm7596, %v7761
    %v7772 = vpack.c.bf16 %v7290, %v7288
    %v7773 = vpack.c.bf16 %v7294, %v7292
    %7776 = vrot.lane.b32.xlu0 %v7772, 112
    %v7777 = vpop.permute.xlu0 %7776
    %7778 = vrot.lane.b32.xlu0 %v7773, 112
    %v7779 = vpop.permute.xlu0 %7778
    %7782 = vst.msk [vmem:[#allocation6 + $0x8] sm:$0xff] %vm7645, %v7626
    %7783 = vst.msk [vmem:[#allocation6 + $0x18] sm:$0xff] %vm7645, %v7628
    %7784 = vst.msk [vmem:[#allocation6 + $0x28] sm:$0xff] %vm7645, %v7630
    %7785 = vst.msk [vmem:[#allocation6 + $0x38] sm:$0xff] %vm7645, %v7632
    %7786 = vst.msk [vmem:[#allocation6 + $0x48] sm:$0xff] %vm7645, %v7634
    %7787 = vst.msk [vmem:[#allocation6 + $0x58] sm:$0xff] %vm7645, %v7636
    %7788 = vst.msk [vmem:[#allocation6 + $0x68] sm:$0xff] %vm7645, %v7777
    %7789 = vst.msk [vmem:[#allocation6 + $0x78] sm:$0xff] %vm7645, %v7779
    %v7790 = vld [vmem:[#allocation6] sm:$0xff]
    %v7791 = vld [vmem:[#allocation6 + $0x8] sm:$0xff]
    %v7792 = vld [vmem:[#allocation6 + $0x10] sm:$0xff]
    %v7793 = vld [vmem:[#allocation6 + $0x18] sm:$0xff]
    %v7794 = vld [vmem:[#allocation6 + $0x20] sm:$0xff]
    %v7795 = vld [vmem:[#allocation6 + $0x28] sm:$0xff]
    %v7796 = vld [vmem:[#allocation6 + $0x30] sm:$0xff]
    %v7797 = vld [vmem:[#allocation6 + $0x38] sm:$0xff]
    %v7798 = vld [vmem:[#allocation6 + $0x40] sm:$0xff]
    %v7799 = vld [vmem:[#allocation6 + $0x48] sm:$0xff]
    %v7800 = vld [vmem:[#allocation6 + $0x50] sm:$0xff]
    %v7801 = vld [vmem:[#allocation6 + $0x58] sm:$0xff]
    %v7802 = vld [vmem:[#allocation6 + $0x60] sm:$0xff]
    %v7803 = vld [vmem:[#allocation6 + $0x68] sm:$0xff]
    %v7804 = vld [vmem:[#allocation6 + $0x70] sm:$0xff]
    %v7805 = vld [vmem:[#allocation6 + $0x78] sm:$0xff]
    %v7806 = vld [vmem:[%s3] sm:$0xf]
    %v7807 = vld [vmem:[%s3 + $0x4] sm:$0xf]
    %v7808 = vld [vmem:[%s3 + $0x8] sm:$0xf]
    %v7809 = vld [vmem:[%s3 + $0xc] sm:$0xf]
    %v7810 = vld [vmem:[%s3 + $0x10] sm:$0xf]
    %v7811 = vld [vmem:[%s3 + $0x14] sm:$0xf]
    %v7812 = vld [vmem:[%s3 + $0x18] sm:$0xf]
    %v7813 = vld [vmem:[%s3 + $0x1c] sm:$0xf]
    %v7814 = vld [vmem:[%s3 + $0x20] sm:$0xf]
    %v7815 = vld [vmem:[%s3 + $0x24] sm:$0xf]
    %v7816 = vld [vmem:[%s3 + $0x28] sm:$0xf]
    %v7817 = vld [vmem:[%s3 + $0x2c] sm:$0xf]
    %v7818 = vld [vmem:[%s3 + $0x30] sm:$0xf]
    %v7819 = vld [vmem:[%s3 + $0x34] sm:$0xf]
    %v7820 = vld [vmem:[%s3 + $0x38] sm:$0xf]
    %v7821 = vld [vmem:[%s3 + $0x3c] sm:$0xf]
    %v7822 = vld [vmem:[%s3 + $0x40] sm:$0xf]
    %v7823 = vld [vmem:[%s3 + $0x44] sm:$0xf]
    %v7824 = vld [vmem:[%s3 + $0x48] sm:$0xf]
    %v7825 = vld [vmem:[%s3 + $0x4c] sm:$0xf]
    %v7826 = vld [vmem:[%s3 + $0x50] sm:$0xf]
    %v7827 = vld [vmem:[%s3 + $0x54] sm:$0xf]
    %v7828 = vld [vmem:[%s3 + $0x58] sm:$0xf]
    %v7829 = vld [vmem:[%s3 + $0x5c] sm:$0xf]
    %v7830 = vld [vmem:[%s3 + $0x60] sm:$0xf]
    %v7831 = vld [vmem:[%s3 + $0x64] sm:$0xf]
    %v7832 = vld [vmem:[%s3 + $0x68] sm:$0xf]
    %v7833 = vld [vmem:[%s3 + $0x6c] sm:$0xf]
    %v7834 = vld [vmem:[%s3 + $0x70] sm:$0xf]
    %v7835 = vld [vmem:[%s3 + $0x74] sm:$0xf]
    %v7836 = vld [vmem:[%s3 + $0x78] sm:$0xf]
    %v7837 = vld [vmem:[%s3 + $0x7c] sm:$0xf]
    %v7870 = vunpack.c.l.b16 %v7806
    %v7871 = vunpack.c.l.b16 %v7807
    %v7872 = vunpack.c.l.b16 %v7808
    %v7873 = vunpack.c.l.b16 %v7809
    %v7874 = vunpack.c.l.b16 %v7810
    %v7875 = vunpack.c.l.b16 %v7811
    %v7876 = vunpack.c.l.b16 %v7812
    %v7877 = vunpack.c.l.b16 %v7813
    %v7878 = vunpack.c.l.b16 %v7814
    %v7879 = vunpack.c.l.b16 %v7815
    %v7880 = vunpack.c.l.b16 %v7816
    %v7881 = vunpack.c.l.b16 %v7817
    %v7882 = vunpack.c.l.b16 %v7818
    %v7883 = vunpack.c.l.b16 %v7819
    %v7884 = vunpack.c.l.b16 %v7820
    %v7885 = vunpack.c.l.b16 %v7821
    %v7886 = vunpack.c.l.b16 %v7822
    %v7887 = vunpack.c.l.b16 %v7823
    %v7888 = vunpack.c.l.b16 %v7824
    %v7889 = vunpack.c.l.b16 %v7825
    %v7890 = vunpack.c.l.b16 %v7826
    %v7891 = vunpack.c.l.b16 %v7827
    %v7892 = vunpack.c.l.b16 %v7828
    %v7893 = vunpack.c.l.b16 %v7829
    %v7894 = vunpack.c.l.b16 %v7830
    %v7895 = vunpack.c.l.b16 %v7831
    %v7896 = vunpack.c.l.b16 %v7832
    %v7897 = vunpack.c.l.b16 %v7833
    %v7898 = vunpack.c.l.b16 %v7834
    %v7899 = vunpack.c.l.b16 %v7835
    %v7900 = vunpack.c.l.b16 %v7836
    %v7901 = vunpack.c.l.b16 %v7837
    %v7902 = vpack.c.b16 %v7871, %v7870
    %v7903 = vpack.c.b16 %v7873, %v7872
    %v7904 = vpack.c.b16 %v7875, %v7874
    %v7905 = vpack.c.b16 %v7877, %v7876
    %v7906 = vpack.c.b16 %v7879, %v7878
    %v7907 = vpack.c.b16 %v7881, %v7880
    %v7908 = vpack.c.b16 %v7883, %v7882
    %v7909 = vpack.c.b16 %v7885, %v7884
    %v7910 = vpack.c.b16 %v7887, %v7886
    %v7911 = vpack.c.b16 %v7889, %v7888
    %v7912 = vpack.c.b16 %v7891, %v7890
    %v7913 = vpack.c.b16 %v7893, %v7892
    %v7914 = vpack.c.b16 %v7895, %v7894
    %v7915 = vpack.c.b16 %v7897, %v7896
    %v7916 = vpack.c.b16 %v7899, %v7898
    %v7917 = vpack.c.b16 %v7901, %v7900
    %7934 = vmatprep.subr.bf16.mxu0 0
    %7935 = vmatpush1.bf16.msra.mxu0 %v7902
    %7936 = vmatprep.subr.bf16.mxu0 0
    %7937 = vmatpush1.bf16.msra.mxu0 %v7903
    %7938 = vmatprep.subr.bf16.mxu0 0
    %7939 = vmatpush1.bf16.msra.mxu0 %v7904
    %7940 = vmatprep.subr.bf16.mxu0 0
    %7941 = vmatpush1.bf16.msra.mxu0 %v7905
    %7942 = vmatprep.subr.bf16.mxu0 0
    %7943 = vmatpush1.bf16.msra.mxu0 %v7906
    %7944 = vmatprep.subr.bf16.mxu0 0
    %7945 = vmatpush1.bf16.msra.mxu0 %v7907
    %7946 = vmatprep.subr.bf16.mxu0 0
    %7947 = vmatpush1.bf16.msra.mxu0 %v7908
    %7948 = vmatprep.subr.bf16.mxu0 0
    %7949 = vmatpush1.bf16.msra.mxu0 %v7909
    %7950 = vmatprep.subr.bf16.mxu0 0
    %7951 = vmatpush1.bf16.msra.mxu0 %v7910
    %7952 = vmatprep.subr.bf16.mxu0 0
    %7953 = vmatpush1.bf16.msra.mxu0 %v7911
    %7954 = vmatprep.subr.bf16.mxu0 0
    %7955 = vmatpush1.bf16.msra.mxu0 %v7912
    %7956 = vmatprep.subr.bf16.mxu0 0
    %7957 = vmatpush1.bf16.msra.mxu0 %v7913
    %7958 = vmatprep.subr.bf16.mxu0 0
    %7959 = vmatpush1.bf16.msra.mxu0 %v7914
    %7960 = vmatprep.subr.bf16.mxu0 0
    %7961 = vmatpush1.bf16.msra.mxu0 %v7915
    %7962 = vmatprep.subr.bf16.mxu0 0
    %7963 = vmatpush1.bf16.msra.mxu0 %v7916
    %7964 = vmatprep.subr.bf16.mxu0 0
    %7965 = vmatpush1.bf16.msra.mxu0 %v7917
    %7966 = vmatprep.mubr.bf16.mxu0 %v7791
    %7967 = vmatmul.mubr.bf16.gmra.mrb[0].mxu0 %v7790
    %v7968 = vpop.f32.mrb[0].mxu0
    %v7969 = vadd.f32 0.0, %v7968
    %v7970 = vpop.f32.mrb[0].mxu0
    %v7971 = vpop.f32.mrb[0].mxu0
    %v7972 = vadd.f32 0.0, %v7971
    %v7973 = vpop.f32.mrb[0].mxu0
    %7974 = vmatprep.mubr.bf16.mxu0 %v7793
    %7975 = vmatmul.mubr.bf16.gmra.mrb[0].mxu0 %v7792
    %v7976 = vpop.f32.mrb[0].mxu0
    %v7977 = vadd.f32 0.0, %v7976
    %v7978 = vpop.f32.mrb[0].mxu0
    %v7979 = vpop.f32.mrb[0].mxu0
    %v7980 = vadd.f32 0.0, %v7979
    %v7981 = vpop.f32.mrb[0].mxu0
    %7982 = vmatprep.mubr.bf16.mxu0 %v7795
    %7983 = vmatmul.mubr.bf16.gmra.mrb[0].mxu0 %v7794
    %v7984 = vpop.f32.mrb[0].mxu0
    %v7985 = vadd.f32 0.0, %v7984
    %v7986 = vpop.f32.mrb[0].mxu0
    %v7987 = vpop.f32.mrb[0].mxu0
    %v7988 = vadd.f32 0.0, %v7987
    %v7989 = vpop.f32.mrb[0].mxu0
    %7990 = vmatprep.mubr.bf16.mxu0 %v7797
    %7991 = vmatmul.mubr.bf16.gmra.mrb[0].mxu0 %v7796
    %v7992 = vpop.f32.mrb[0].mxu0
    %v7993 = vadd.f32 0.0, %v7992
    %v7994 = vpop.f32.mrb[0].mxu0
    %v7995 = vpop.f32.mrb[0].mxu0
    %v7996 = vadd.f32 0.0, %v7995
    %v7997 = vpop.f32.mrb[0].mxu0
    %7998 = vmatprep.mubr.bf16.mxu0 %v7799
    %7999 = vmatmul.mubr.bf16.gmra.mrb[0].mxu0 %v7798
    %v8000 = vpop.f32.mrb[0].mxu0
    %v8001 = vadd.f32 0.0, %v8000
    %v8002 = vpop.f32.mrb[0].mxu0
    %v8003 = vpop.f32.mrb[0].mxu0
    %v8004 = vadd.f32 0.0, %v8003
    %v8005 = vpop.f32.mrb[0].mxu0
    %8006 = vmatprep.mubr.bf16.mxu0 %v7801
    %8007 = vmatmul.mubr.bf16.gmra.mrb[0].mxu0 %v7800
    %v8008 = vpop.f32.mrb[0].mxu0
    %v8009 = vadd.f32 0.0, %v8008
    %v8010 = vpop.f32.mrb[0].mxu0
    %v8011 = vpop.f32.mrb[0].mxu0
    %v8012 = vadd.f32 0.0, %v8011
    %v8013 = vpop.f32.mrb[0].mxu0
    %8014 = vmatprep.mubr.bf16.mxu0 %v7803
    %8015 = vmatmul.mubr.bf16.gmra.mrb[0].mxu0 %v7802
    %v8016 = vpop.f32.mrb[0].mxu0
    %v8017 = vadd.f32 0.0, %v8016
    %v8018 = vpop.f32.mrb[0].mxu0
    %v8019 = vpop.f32.mrb[0].mxu0
    %v8020 = vadd.f32 0.0, %v8019
    %v8021 = vpop.f32.mrb[0].mxu0
    %8022 = vmatprep.mubr.bf16.mxu0 %v7805
    %8023 = vmatmul.mubr.bf16.gmra.mrb[0].mxu0 %v7804
    %v8024 = vpop.f32.mrb[0].mxu0
    %v8025 = vadd.f32 0.0, %v8024
    %v8026 = vpop.f32.mrb[0].mxu0
    %v8027 = vpop.f32.mrb[0].mxu0
    %v8028 = vadd.f32 0.0, %v8027
    %v8029 = vpop.f32.mrb[0].mxu0
    %8030 = vdwg.mxu0
    %vm8031 = vcmask 261120
    %v8032 = vsel %vm8031, %v7969, 0.0
    %v8033 = vsel %vm8031, %v7972, 0.0
    %v8034 = vadd.f32 %v8032, %v8033
    %v8035 = vsel %vm8031, %v7977, 0.0
    %v8036 = vadd.f32 %v8034, %v8035
    %v8037 = vsel %vm8031, %v7980, 0.0
    %v8038 = vadd.f32 %v8036, %v8037
    %v8039 = vsel %vm8031, %v7985, 0.0
    %v8040 = vadd.f32 %v8038, %v8039
    %v8041 = vsel %vm8031, %v7988, 0.0
    %v8042 = vadd.f32 %v8040, %v8041
    %v8043 = vsel %vm8031, %v7993, 0.0
    %v8044 = vadd.f32 %v8042, %v8043
    %v8045 = vsel %vm8031, %v7996, 0.0
    %v8046 = vadd.f32 %v8044, %v8045
    %v8047 = vsel %vm8031, %v8001, 0.0
    %v8048 = vadd.f32 %v8046, %v8047
    %v8049 = vsel %vm8031, %v8004, 0.0
    %v8050 = vadd.f32 %v8048, %v8049
    %v8051 = vsel %vm8031, %v8009, 0.0
    %v8052 = vadd.f32 %v8050, %v8051
    %v8053 = vsel %vm8031, %v8012, 0.0
    %v8054 = vadd.f32 %v8052, %v8053
    %v8055 = vsel %vm8031, %v8017, 0.0
    %v8056 = vadd.f32 %v8054, %v8055
    %v8057 = vsel %vm8031, %v8020, 0.0
    %v8058 = vadd.f32 %v8056, %v8057
    %v8059 = vsel %vm8031, %v8025, 0.0
    %v8060 = vadd.f32 %v8058, %v8059
    %v8061 = vsel %vm8031, %v8028, 0.0
    %v8062 = vadd.f32 %v8060, %v8061
    %v8063 = vrot.slane %v8062, 4
    %v8064 = vadd.f32 %v8062, %v8063
    %v8065 = vrot.slane %v8064, 2
    %v8066 = vadd.f32 %v8064, %v8065
    %v8067 = vrot.slane %v8066, 1
    %v8068 = vadd.f32 %v8066, %v8067
    %v8069 = vmul.f32 %v7969, %v7969
    %v8070 = vmul.f32 %v7972, %v7972
    %v8071 = vmul.f32 %v7977, %v7977
    %v8072 = vmul.f32 %v7980, %v7980
    %v8073 = vmul.f32 %v7985, %v7985
    %v8074 = vmul.f32 %v7988, %v7988
    %v8075 = vmul.f32 %v7993, %v7993
    %v8076 = vmul.f32 %v7996, %v7996
    %v8077 = vmul.f32 %v8001, %v8001
    %v8078 = vmul.f32 %v8004, %v8004
    %v8079 = vmul.f32 %v8009, %v8009
    %v8080 = vmul.f32 %v8012, %v8012
    %v8081 = vmul.f32 %v8017, %v8017
    %v8082 = vmul.f32 %v8020, %v8020
    %v8083 = vmul.f32 %v8025, %v8025
    %v8084 = vmul.f32 %v8028, %v8028
    %v8085 = vsel %vm8031, %v8069, 0.0
    %v8086 = vsel %vm8031, %v8070, 0.0
    %v8087 = vadd.f32 %v8085, %v8086
    %v8088 = vsel %vm8031, %v8071, 0.0
    %v8089 = vadd.f32 %v8087, %v8088
    %v8090 = vsel %vm8031, %v8072, 0.0
    %v8091 = vadd.f32 %v8089, %v8090
    %v8092 = vsel %vm8031, %v8073, 0.0
    %v8093 = vadd.f32 %v8091, %v8092
    %v8094 = vsel %vm8031, %v8074, 0.0
    %v8095 = vadd.f32 %v8093, %v8094
    %v8096 = vsel %vm8031, %v8075, 0.0
    %v8097 = vadd.f32 %v8095, %v8096
    %v8098 = vsel %vm8031, %v8076, 0.0
    %v8099 = vadd.f32 %v8097, %v8098
    %v8100 = vsel %vm8031, %v8077, 0.0
    %v8101 = vadd.f32 %v8099, %v8100
    %v8102 = vsel %vm8031, %v8078, 0.0
    %v8103 = vadd.f32 %v8101, %v8102
    %v8104 = vsel %vm8031, %v8079, 0.0
    %v8105 = vadd.f32 %v8103, %v8104
    %v8106 = vsel %vm8031, %v8080, 0.0
    %v8107 = vadd.f32 %v8105, %v8106
    %v8108 = vsel %vm8031, %v8081, 0.0
    %v8109 = vadd.f32 %v8107, %v8108
    %v8110 = vsel %vm8031, %v8082, 0.0
    %v8111 = vadd.f32 %v8109, %v8110
    %v8112 = vsel %vm8031, %v8083, 0.0
    %v8113 = vadd.f32 %v8111, %v8112
    %v8114 = vsel %vm8031, %v8084, 0.0
    %v8115 = vadd.f32 %v8113, %v8114
    %v8116 = vrot.slane %v8115, 4
    %v8117 = vadd.f32 %v8115, %v8116
    %v8118 = vrot.slane %v8117, 2
    %v8119 = vadd.f32 %v8117, %v8118
    %v8120 = vrot.slane %v8119, 1
    %v8121 = vadd.f32 %v8119, %v8120
    %v8122 = vmul.f32 %v8068, 0.0078125
    %v8123 = vmul.f32 %v8121, 0.0078125
    %v8124 = vmul.f32 %v8122, %v8122
    %v8125 = vsub.f32 %v8123, %v8124
    %v8126 = vmax.f32 %v8125, 0.0
    %v8127 = vld [vmem:[%s6] sm:$0x3]
    %v8128 = vadd.f32 %v8126, 1e-05
    %v8129 = vrsqrt.pop %v8128
    %v8130 = vmul.f32 %v8127, %v8129
    %v8131 = vmul.f32 %v8122, %v8130
    %v8133 = vrot.slane %v8131, 7
    %v8135 = vsub.f32 %v8127, %v8133
    %v8136 = vlaneseq
    %v8137 = vshrl.u32 %v8136, 7
    %v8138 = vsub.s32 0, %v8137
    %v8139 = vrot.slane %v8130, %v8138
    %v8140 = vmul.f32 %v7969, %v8139
    %v8141 = vmul.f32 %v7972, %v8139
    %v8142 = vmul.f32 %v7977, %v8139
    %v8143 = vmul.f32 %v7980, %v8139
    %v8144 = vmul.f32 %v7985, %v8139
    %v8145 = vmul.f32 %v7988, %v8139
    %v8146 = vmul.f32 %v7993, %v8139
    %v8147 = vmul.f32 %v7996, %v8139
    %v8148 = vmul.f32 %v8001, %v8139
    %v8149 = vmul.f32 %v8004, %v8139
    %v8150 = vmul.f32 %v8009, %v8139
    %v8151 = vmul.f32 %v8012, %v8139
    %v8152 = vmul.f32 %v8017, %v8139
    %v8153 = vmul.f32 %v8020, %v8139
    %v8154 = vmul.f32 %v8025, %v8139
    %v8155 = vmul.f32 %v8028, %v8139
    %v8156 = vlaneseq
    %v8157 = vshrl.u32 %v8156, 7
    %v8158 = vsub.s32 1, %v8157
    %v8159 = vrot.slane %v8135, %v8158
    %v8160 = vadd.f32 %v8140, %v8159
    %v8161 = vadd.f32 %v8141, %v8159
    %v8162 = vadd.f32 %v8142, %v8159
    %v8163 = vadd.f32 %v8143, %v8159
    %v8164 = vadd.f32 %v8144, %v8159
    %v8165 = vadd.f32 %v8145, %v8159
    %v8166 = vadd.f32 %v8146, %v8159
    %v8167 = vadd.f32 %v8147, %v8159
    %v8168 = vadd.f32 %v8148, %v8159
    %v8169 = vadd.f32 %v8149, %v8159
    %v8170 = vadd.f32 %v8150, %v8159
    %v8171 = vadd.f32 %v8151, %v8159
    %v8172 = vadd.f32 %v8152, %v8159
    %v8173 = vadd.f32 %v8153, %v8159
    %v8174 = vadd.f32 %v8154, %v8159
    %v8175 = vadd.f32 %v8155, %v8159
    %v8176 = vmul.f32 %v8160, 0.2
    %v8177 = vmul.f32 %v8161, 0.2
    %v8178 = vmul.f32 %v8162, 0.2
    %v8179 = vmul.f32 %v8163, 0.2
    %v8180 = vmul.f32 %v8164, 0.2
    %v8181 = vmul.f32 %v8165, 0.2
    %v8182 = vmul.f32 %v8166, 0.2
    %v8183 = vmul.f32 %v8167, 0.2
    %v8184 = vmul.f32 %v8168, 0.2
    %v8185 = vmul.f32 %v8169, 0.2
    %v8186 = vmul.f32 %v8170, 0.2
    %v8187 = vmul.f32 %v8171, 0.2
    %v8188 = vmul.f32 %v8172, 0.2
    %v8189 = vmul.f32 %v8173, 0.2
    %v8190 = vmul.f32 %v8174, 0.2
    %v8191 = vmul.f32 %v8175, 0.2
    %v8192 = vmax.f32 %v8160, %v8176
    %v8193 = vmax.f32 %v8161, %v8177
    %v8194 = vmax.f32 %v8162, %v8178
    %v8195 = vmax.f32 %v8163, %v8179
    %v8196 = vmax.f32 %v8164, %v8180
    %v8197 = vmax.f32 %v8165, %v8181
    %v8198 = vmax.f32 %v8166, %v8182
    %v8199 = vmax.f32 %v8167, %v8183
    %v8200 = vmax.f32 %v8168, %v8184
    %v8201 = vmax.f32 %v8169, %v8185
    %v8202 = vmax.f32 %v8170, %v8186
    %v8203 = vmax.f32 %v8171, %v8187
    %v8204 = vmax.f32 %v8172, %v8188
    %v8205 = vmax.f32 %v8173, %v8189
    %v8206 = vmax.f32 %v8174, %v8190
    %v8207 = vmax.f32 %v8175, %v8191
    %8208 = vst.msk [vmem:[#allocation4] sm:$0xff] %vm8031, 0.0
    %8209 = vst.msk [vmem:[#allocation4 + $0x8] sm:$0xff] %vm8031, 0.0
    %8210 = vst.msk [vmem:[#allocation4 + $0x10] sm:$0xff] %vm8031, 0.0
    %8211 = vst.msk [vmem:[#allocation4 + $0x18] sm:$0xff] %vm8031, 0.0
    %8212 = vst.msk [vmem:[#allocation4 + $0x20] sm:$0xff] %vm8031, 0.0
    %8213 = vst.msk [vmem:[#allocation4 + $0x28] sm:$0xff] %vm8031, 0.0
    %s8214 = scalar_lea.vmem [#allocation4], 240
    %8215 = vst.msk [vmem:[%s8214] sm:$0xff] %vm8031, 0.0
    %8216 = vst.msk [vmem:[%s8214 + $0x8] sm:$0xff] %vm8031, 0.0
    %8217 = vst.msk [vmem:[%s8214 + $0x10] sm:$0xff] %vm8031, 0.0
    %8218 = vst.msk [vmem:[%s8214 + $0x18] sm:$0xff] %vm8031, 0.0
    %8219 = vst.msk [vmem:[%s8214 + $0x20] sm:$0xff] %vm8031, 0.0
    %8220 = vst.msk [vmem:[%s8214 + $0x28] sm:$0xff] %vm8031, 0.0
    %s8221 = scalar_lea.vmem [#allocation4], 48
    %8222 = vst.msk [vmem:[%s8221] sm:$0xff] %vm8031, 0.0
    %8223 = vst.msk [vmem:[%s8221 + $0x30] sm:$0xff] %vm8031, 0.0
    %8224 = vst.msk [vmem:[%s8221 + $0x60] sm:$0xff] %vm8031, 0.0
    %8225 = vst.msk [vmem:[%s8221 + $0x90] sm:$0xff] %vm8031, 0.0
    %s8226 = scalar_lea.vmem [#allocation4], 88
    %8227 = vst.msk [vmem:[%s8226] sm:$0xff] %vm8031, 0.0
    %8228 = vst.msk [vmem:[%s8226 + $0x30] sm:$0xff] %vm8031, 0.0
    %8229 = vst.msk [vmem:[%s8226 + $0x60] sm:$0xff] %vm8031, 0.0
    %8230 = vst.msk [vmem:[%s8226 + $0x90] sm:$0xff] %vm8031, 0.0
    %s8231 = scalar_lea.vmem [#allocation4], 56
    %8232 = vst.msk [vmem:[%s8231] sm:$0xff] %vm8031, %v8192
    %8233 = vst.msk [vmem:[%s8231 + $0x8] sm:$0xff] %vm8031, %v8193
    %8234 = vst.msk [vmem:[%s8231 + $0x10] sm:$0xff] %vm8031, %v8194
    %8235 = vst.msk [vmem:[%s8231 + $0x18] sm:$0xff] %vm8031, %v8195
    %8236 = vst.msk [vmem:[%s8231 + $0x30] sm:$0xff] %vm8031, %v8196
    %8237 = vst.msk [vmem:[%s8231 + $0x38] sm:$0xff] %vm8031, %v8197
    %8238 = vst.msk [vmem:[%s8231 + $0x40] sm:$0xff] %vm8031, %v8198
    %8239 = vst.msk [vmem:[%s8231 + $0x48] sm:$0xff] %vm8031, %v8199
    %8240 = vst.msk [vmem:[%s8231 + $0x60] sm:$0xff] %vm8031, %v8200
    %8241 = vst.msk [vmem:[%s8231 + $0x68] sm:$0xff] %vm8031, %v8201
    %8242 = vst.msk [vmem:[%s8231 + $0x70] sm:$0xff] %vm8031, %v8202
    %8243 = vst.msk [vmem:[%s8231 + $0x78] sm:$0xff] %vm8031, %v8203
    %8244 = vst.msk [vmem:[%s8231 + $0x90] sm:$0xff] %vm8031, %v8204
    %8245 = vst.msk [vmem:[%s8231 + $0x98] sm:$0xff] %vm8031, %v8205
    %8246 = vst.msk [vmem:[%s8231 + $0xa0] sm:$0xff] %vm8031, %v8206
    %8247 = vst.msk [vmem:[%s8231 + $0xa8] sm:$0xff] %vm8031, %v8207
    %v8248 = vld [vmem:[#allocation4] sm:$0xff]
    %v8249 = vld [vmem:[#allocation4 + $0x8] sm:$0xff]
    %v8250 = vld [vmem:[#allocation4 + $0x10] sm:$0xff]
    %v8251 = vld [vmem:[#allocation4 + $0x18] sm:$0xff]
    %v8252 = vld [vmem:[#allocation4 + $0x20] sm:$0xff]
    %v8253 = vld [vmem:[#allocation4 + $0x28] sm:$0xff]
    %v8254 = vld [vmem:[#allocation4 + $0x30] sm:$0xff]
    %v8255 = vld [vmem:[#allocation4 + $0x38] sm:$0xff]
    %v8256 = vld [vmem:[#allocation4 + $0x40] sm:$0xff]
    %v8257 = vld [vmem:[#allocation4 + $0x48] sm:$0xff]
    %v8258 = vld [vmem:[#allocation4 + $0x50] sm:$0xff]
    %v8259 = vld [vmem:[#allocation4 + $0x58] sm:$0xff]
    %v8260 = vld [vmem:[#allocation4 + $0x60] sm:$0xff]
    %v8261 = vld [vmem:[#allocation4 + $0x68] sm:$0xff]
    %v8262 = vld [vmem:[#allocation4 + $0x70] sm:$0xff]
    %v8263 = vld [vmem:[#allocation4 + $0x78] sm:$0xff]
    %v8264 = vld [vmem:[#allocation4 + $0x80] sm:$0xff]
    %v8265 = vld [vmem:[#allocation4 + $0x88] sm:$0xff]
    %v8266 = vld [vmem:[#allocation4 + $0x90] sm:$0xff]
    %v8267 = vld [vmem:[#allocation4 + $0x98] sm:$0xff]
    %v8268 = vld [vmem:[#allocation4 + $0xa0] sm:$0xff]
    %v8269 = vld [vmem:[#allocation4 + $0xa8] sm:$0xff]
    %v8270 = vld [vmem:[#allocation4 + $0xb0] sm:$0xff]
    %v8271 = vld [vmem:[#allocation4 + $0xb8] sm:$0xff]
    %v8272 = vld [vmem:[#allocation4 + $0xc0] sm:$0xff]
    %v8273 = vld [vmem:[#allocation4 + $0xc8] sm:$0xff]
    %v8274 = vld [vmem:[#allocation4 + $0xd0] sm:$0xff]
    %v8275 = vld [vmem:[#allocation4 + $0xd8] sm:$0xff]
    %v8276 = vld [vmem:[#allocation4 + $0xe0] sm:$0xff]
    %v8277 = vld [vmem:[#allocation4 + $0xe8] sm:$0xff]
    %v8278 = vld [vmem:[#allocation4 + $0xf0] sm:$0xff]
    %v8279 = vld [vmem:[#allocation4 + $0xf8] sm:$0xff]
    %v8280 = vld [vmem:[#allocation4 + $0x100] sm:$0xff]
    %v8281 = vld [vmem:[#allocation4 + $0x108] sm:$0xff]
    %v8282 = vld [vmem:[#allocation4 + $0x110] sm:$0xff]
    %v8283 = vld [vmem:[#allocation4 + $0x118] sm:$0xff]
    %v8284 = vpack.c.bf16 %v8250, %v8248
    %v8285 = vpack.c.bf16 %v8262, %v8260
    %8286 = vst.msk [vmem:[#allocation7] sm:$0xff] %vm8031, %v8284
    %8287 = vst.msk [vmem:[#allocation7 + $0x20] sm:$0xff] %vm8031, %v8285
    %v8288 = vpack.c.bf16 %v8251, %v8249
    %v8289 = vpack.c.bf16 %v8263, %v8261
    %8292 = vrot.lane.b32.xlu0 %v8288, 32
    %v8293 = vpop.permute.xlu0 %8292
    %8294 = vrot.lane.b32.xlu0 %v8289, 32
    %v8295 = vpop.permute.xlu0 %8294
    %vm8298 = vcmask 523520
    %8299 = vst.msk [vmem:[#allocation7] sm:$0xff] %vm8298, %v8293
    %8300 = vst.msk [vmem:[#allocation7 + $0x20] sm:$0xff] %vm8298, %v8295
    %v8301 = vpack.c.bf16 %v8252, %v8250
    %v8302 = vpack.c.bf16 %v8264, %v8262
    %8305 = vrot.lane.b32.xlu0 %v8301, 64
    %v8306 = vpop.permute.xlu0 %8305
    %8307 = vrot.lane.b32.xlu0 %v8302, 64
    %v8308 = vpop.permute.xlu0 %8307
    %vm8311 = vcmask 785920
    %8312 = vst.msk [vmem:[#allocation7] sm:$0xff] %vm8311, %v8306
    %8313 = vst.msk [vmem:[#allocation7 + $0x20] sm:$0xff] %vm8311, %v8308
    %v8314 = vpack.c.bf16 %v8253, %v8251
    %v8315 = vpack.c.bf16 %v8265, %v8263
    %8318 = vrot.lane.b32.xlu0 %v8314, 96
    %v8319 = vpop.permute.xlu0 %8318
    %8320 = vrot.lane.b32.xlu0 %v8315, 96
    %v8321 = vpop.permute.xlu0 %8320
    %vm8324 = vcmask 1048320
    %8325 = vst.msk [vmem:[#allocation7] sm:$0xff] %vm8324, %v8319
    %8326 = vst.msk [vmem:[#allocation7 + $0x20] sm:$0xff] %vm8324, %v8321
    %v8327 = vpack.c.bf16 %v8256, %v8254
    %v8328 = vpack.c.bf16 %v8268, %v8266
    %8329 = vst.msk [vmem:[#allocation7 + $0x8] sm:$0xff] %vm8031, %v8327
    %8330 = vst.msk [vmem:[#allocation7 + $0x28] sm:$0xff] %vm8031, %v8328
    %v8331 = vpack.c.bf16 %v8257, %v8255
    %v8332 = vpack.c.bf16 %v8269, %v8267
    %8335 = vrot.lane.b32.xlu0 %v8331, 32
    %v8336 = vpop.permute.xlu0 %8335
    %8337 = vrot.lane.b32.xlu0 %v8332, 32
    %v8338 = vpop.permute.xlu0 %8337
    %8341 = vst.msk [vmem:[#allocation7 + $0x8] sm:$0xff] %vm8298, %v8336
    %8342 = vst.msk [vmem:[#allocation7 + $0x28] sm:$0xff] %vm8298, %v8338
    %v8343 = vpack.c.bf16 %v8258, %v8256
    %v8344 = vpack.c.bf16 %v8270, %v8268
    %8347 = vrot.lane.b32.xlu0 %v8343, 64
    %v8348 = vpop.permute.xlu0 %8347
    %8349 = vrot.lane.b32.xlu0 %v8344, 64
    %v8350 = vpop.permute.xlu0 %8349
    %8353 = vst.msk [vmem:[#allocation7 + $0x8] sm:$0xff] %vm8311, %v8348
    %8354 = vst.msk [vmem:[#allocation7 + $0x28] sm:$0xff] %vm8311, %v8350
    %v8355 = vpack.c.bf16 %v8259, %v8257
    %v8356 = vpack.c.bf16 %v8271, %v8269
    %8359 = vrot.lane.b32.xlu0 %v8355, 96
    %v8360 = vpop.permute.xlu0 %8359
    %8361 = vrot.lane.b32.xlu0 %v8356, 96
    %v8362 = vpop.permute.xlu0 %8361
    %8365 = vst.msk [vmem:[#allocation7 + $0x8] sm:$0xff] %vm8324, %v8360
    %8366 = vst.msk [vmem:[#allocation7 + $0x28] sm:$0xff] %vm8324, %v8362
    %v8367 = vpack.c.bf16 %v8274, %v8272
    %8368 = vst.msk [vmem:[#allocation7 + $0x10] sm:$0xff] %vm8031, %v8285
    %8369 = vst.msk [vmem:[#allocation7 + $0x30] sm:$0xff] %vm8031, %v8367
    %v8370 = vpack.c.bf16 %v8275, %v8273
    %8372 = vrot.lane.b32.xlu0 %v8370, 32
    %v8373 = vpop.permute.xlu0 %8372
    %8375 = vst.msk [vmem:[#allocation7 + $0x10] sm:$0xff] %vm8298, %v8295
    %8376 = vst.msk [vmem:[#allocation7 + $0x30] sm:$0xff] %vm8298, %v8373
    %v8377 = vpack.c.bf16 %v8276, %v8274
    %8379 = vrot.lane.b32.xlu0 %v8377, 64
    %v8380 = vpop.permute.xlu0 %8379
    %8382 = vst.msk [vmem:[#allocation7 + $0x10] sm:$0xff] %vm8311, %v8308
    %8383 = vst.msk [vmem:[#allocation7 + $0x30] sm:$0xff] %vm8311, %v8380
    %v8384 = vpack.c.bf16 %v8277, %v8275
    %8386 = vrot.lane.b32.xlu0 %v8384, 96
    %v8387 = vpop.permute.xlu0 %8386
    %8389 = vst.msk [vmem:[#allocation7 + $0x10] sm:$0xff] %vm8324, %v8321
    %8390 = vst.msk [vmem:[#allocation7 + $0x30] sm:$0xff] %vm8324, %v8387
    %v8391 = vpack.c.bf16 %v8280, %v8278
    %8392 = vst.msk [vmem:[#allocation7 + $0x18] sm:$0xff] %vm8031, %v8328
    %8393 = vst.msk [vmem:[#allocation7 + $0x38] sm:$0xff] %vm8031, %v8391
    %v8394 = vpack.c.bf16 %v8281, %v8279
    %8396 = vrot.lane.b32.xlu0 %v8394, 32
    %v8397 = vpop.permute.xlu0 %8396
    %8399 = vst.msk [vmem:[#allocation7 + $0x18] sm:$0xff] %vm8298, %v8338
    %8400 = vst.msk [vmem:[#allocation7 + $0x38] sm:$0xff] %vm8298, %v8397
    %v8401 = vpack.c.bf16 %v8282, %v8280
    %8403 = vrot.lane.b32.xlu0 %v8401, 64
    %v8404 = vpop.permute.xlu0 %8403
    %8406 = vst.msk [vmem:[#allocation7 + $0x18] sm:$0xff] %vm8311, %v8350
    %8407 = vst.msk [vmem:[#allocation7 + $0x38] sm:$0xff] %vm8311, %v8404
    %v8408 = vpack.c.bf16 %v8283, %v8281
    %8410 = vrot.lane.b32.xlu0 %v8408, 96
    %v8411 = vpop.permute.xlu0 %8410
    %8413 = vst.msk [vmem:[#allocation7 + $0x18] sm:$0xff] %vm8324, %v8362
    %8414 = vst.msk [vmem:[#allocation7 + $0x38] sm:$0xff] %vm8324, %v8411
    %v8415 = vld [vmem:[#allocation7] sm:$0xff]
    %v8416 = vld [vmem:[#allocation7 + $0x8] sm:$0xff]
    %v8417 = vld [vmem:[#allocation7 + $0x10] sm:$0xff]
    %v8418 = vld [vmem:[#allocation7 + $0x18] sm:$0xff]
    %v8419 = vld [vmem:[#allocation7 + $0x20] sm:$0xff]
    %v8420 = vld [vmem:[#allocation7 + $0x28] sm:$0xff]
    %v8421 = vld [vmem:[#allocation7 + $0x30] sm:$0xff]
    %v8422 = vld [vmem:[#allocation7 + $0x38] sm:$0xff]
    %v8423 = vld [vmem:[%s4] sm:$0xf]
    %v8424 = vld [vmem:[%s4 + $0x4] sm:$0xf]
    %v8425 = vld [vmem:[%s4 + $0x8] sm:$0xf]
    %v8426 = vld [vmem:[%s4 + $0xc] sm:$0xf]
    %v8427 = vld [vmem:[%s4 + $0x10] sm:$0xf]
    %v8428 = vld [vmem:[%s4 + $0x14] sm:$0xf]
    %v8429 = vld [vmem:[%s4 + $0x18] sm:$0xf]
    %v8430 = vld [vmem:[%s4 + $0x1c] sm:$0xf]
    %v8431 = vld [vmem:[%s4 + $0x20] sm:$0xf]
    %v8432 = vld [vmem:[%s4 + $0x24] sm:$0xf]
    %v8433 = vld [vmem:[%s4 + $0x28] sm:$0xf]
    %v8434 = vld [vmem:[%s4 + $0x2c] sm:$0xf]
    %v8435 = vld [vmem:[%s4 + $0x30] sm:$0xf]
    %v8436 = vld [vmem:[%s4 + $0x34] sm:$0xf]
    %v8437 = vld [vmem:[%s4 + $0x38] sm:$0xf]
    %v8438 = vld [vmem:[%s4 + $0x3c] sm:$0xf]
    %v8439 = vld [vmem:[%s4 + $0x40] sm:$0xf]
    %v8440 = vld [vmem:[%s4 + $0x44] sm:$0xf]
    %v8441 = vld [vmem:[%s4 + $0x48] sm:$0xf]
    %v8442 = vld [vmem:[%s4 + $0x4c] sm:$0xf]
    %v8443 = vld [vmem:[%s4 + $0x50] sm:$0xf]
    %v8444 = vld [vmem:[%s4 + $0x54] sm:$0xf]
    %v8445 = vld [vmem:[%s4 + $0x58] sm:$0xf]
    %v8446 = vld [vmem:[%s4 + $0x5c] sm:$0xf]
    %v8447 = vld [vmem:[%s4 + $0x60] sm:$0xf]
    %v8448 = vld [vmem:[%s4 + $0x64] sm:$0xf]
    %v8449 = vld [vmem:[%s4 + $0x68] sm:$0xf]
    %v8450 = vld [vmem:[%s4 + $0x6c] sm:$0xf]
    %v8451 = vld [vmem:[%s4 + $0x70] sm:$0xf]
    %v8452 = vld [vmem:[%s4 + $0x74] sm:$0xf]
    %v8453 = vld [vmem:[%s4 + $0x78] sm:$0xf]
    %v8454 = vld [vmem:[%s4 + $0x7c] sm:$0xf]
    %v8455 = vld [vmem:[%s4 + $0x80] sm:$0xf]
    %v8456 = vld [vmem:[%s4 + $0x84] sm:$0xf]
    %v8457 = vld [vmem:[%s4 + $0x88] sm:$0xf]
    %v8458 = vld [vmem:[%s4 + $0x8c] sm:$0xf]
    %v8459 = vld [vmem:[%s4 + $0x90] sm:$0xf]
    %v8460 = vld [vmem:[%s4 + $0x94] sm:$0xf]
    %v8461 = vld [vmem:[%s4 + $0x98] sm:$0xf]
    %v8462 = vld [vmem:[%s4 + $0x9c] sm:$0xf]
    %v8463 = vld [vmem:[%s4 + $0xa0] sm:$0xf]
    %v8464 = vld [vmem:[%s4 + $0xa4] sm:$0xf]
    %v8465 = vld [vmem:[%s4 + $0xa8] sm:$0xf]
    %v8466 = vld [vmem:[%s4 + $0xac] sm:$0xf]
    %v8467 = vld [vmem:[%s4 + $0xb0] sm:$0xf]
    %v8468 = vld [vmem:[%s4 + $0xb4] sm:$0xf]
    %v8469 = vld [vmem:[%s4 + $0xb8] sm:$0xf]
    %v8470 = vld [vmem:[%s4 + $0xbc] sm:$0xf]
    %v8471 = vld [vmem:[%s4 + $0xc0] sm:$0xf]
    %v8472 = vld [vmem:[%s4 + $0xc4] sm:$0xf]
    %v8473 = vld [vmem:[%s4 + $0xc8] sm:$0xf]
    %v8474 = vld [vmem:[%s4 + $0xcc] sm:$0xf]
    %v8475 = vld [vmem:[%s4 + $0xd0] sm:$0xf]
    %v8476 = vld [vmem:[%s4 + $0xd4] sm:$0xf]
    %v8477 = vld [vmem:[%s4 + $0xd8] sm:$0xf]
    %v8478 = vld [vmem:[%s4 + $0xdc] sm:$0xf]
    %v8479 = vld [vmem:[%s4 + $0xe0] sm:$0xf]
    %v8480 = vld [vmem:[%s4 + $0xe4] sm:$0xf]
    %v8481 = vld [vmem:[%s4 + $0xe8] sm:$0xf]
    %v8482 = vld [vmem:[%s4 + $0xec] sm:$0xf]
    %v8483 = vld [vmem:[%s4 + $0xf0] sm:$0xf]
    %v8484 = vld [vmem:[%s4 + $0xf4] sm:$0xf]
    %v8485 = vld [vmem:[%s4 + $0xf8] sm:$0xf]
    %v8486 = vld [vmem:[%s4 + $0xfc] sm:$0xf]
    %v8551 = vunpack.c.l.b16 %v8423
    %v8552 = vunpack.c.l.b16 %v8424
    %v8553 = vunpack.c.l.b16 %v8425
    %v8554 = vunpack.c.l.b16 %v8426
    %v8555 = vunpack.c.l.b16 %v8427
    %v8556 = vunpack.c.l.b16 %v8428
    %v8557 = vunpack.c.l.b16 %v8429
    %v8558 = vunpack.c.l.b16 %v8430
    %v8559 = vunpack.c.l.b16 %v8431
    %v8560 = vunpack.c.l.b16 %v8432
    %v8561 = vunpack.c.l.b16 %v8433
    %v8562 = vunpack.c.l.b16 %v8434
    %v8563 = vunpack.c.l.b16 %v8435
    %v8564 = vunpack.c.l.b16 %v8436
    %v8565 = vunpack.c.l.b16 %v8437
    %v8566 = vunpack.c.l.b16 %v8438
    %v8567 = vunpack.c.l.b16 %v8439
    %v8568 = vunpack.c.l.b16 %v8440
    %v8569 = vunpack.c.l.b16 %v8441
    %v8570 = vunpack.c.l.b16 %v8442
    %v8571 = vunpack.c.l.b16 %v8443
    %v8572 = vunpack.c.l.b16 %v8444
    %v8573 = vunpack.c.l.b16 %v8445
    %v8574 = vunpack.c.l.b16 %v8446
    %v8575 = vunpack.c.l.b16 %v8447
    %v8576 = vunpack.c.l.b16 %v8448
    %v8577 = vunpack.c.l.b16 %v8449
    %v8578 = vunpack.c.l.b16 %v8450
    %v8579 = vunpack.c.l.b16 %v8451
    %v8580 = vunpack.c.l.b16 %v8452
    %v8581 = vunpack.c.l.b16 %v8453
    %v8582 = vunpack.c.l.b16 %v8454
    %v8583 = vunpack.c.l.b16 %v8455
    %v8584 = vunpack.c.l.b16 %v8456
    %v8585 = vunpack.c.l.b16 %v8457
    %v8586 = vunpack.c.l.b16 %v8458
    %v8587 = vunpack.c.l.b16 %v8459
    %v8588 = vunpack.c.l.b16 %v8460
    %v8589 = vunpack.c.l.b16 %v8461
    %v8590 = vunpack.c.l.b16 %v8462
    %v8591 = vunpack.c.l.b16 %v8463
    %v8592 = vunpack.c.l.b16 %v8464
    %v8593 = vunpack.c.l.b16 %v8465
    %v8594 = vunpack.c.l.b16 %v8466
    %v8595 = vunpack.c.l.b16 %v8467
    %v8596 = vunpack.c.l.b16 %v8468
    %v8597 = vunpack.c.l.b16 %v8469
    %v8598 = vunpack.c.l.b16 %v8470
    %v8599 = vunpack.c.l.b16 %v8471
    %v8600 = vunpack.c.l.b16 %v8472
    %v8601 = vunpack.c.l.b16 %v8473
    %v8602 = vunpack.c.l.b16 %v8474
    %v8603 = vunpack.c.l.b16 %v8475
    %v8604 = vunpack.c.l.b16 %v8476
    %v8605 = vunpack.c.l.b16 %v8477
    %v8606 = vunpack.c.l.b16 %v8478
    %v8607 = vunpack.c.l.b16 %v8479
    %v8608 = vunpack.c.l.b16 %v8480
    %v8609 = vunpack.c.l.b16 %v8481
    %v8610 = vunpack.c.l.b16 %v8482
    %v8611 = vunpack.c.l.b16 %v8483
    %v8612 = vunpack.c.l.b16 %v8484
    %v8613 = vunpack.c.l.b16 %v8485
    %v8614 = vunpack.c.l.b16 %v8486
    %v8615 = vpack.c.b16 %v8552, %v8551
    %v8616 = vpack.c.b16 %v8554, %v8553
    %v8617 = vpack.c.b16 %v8556, %v8555
    %v8618 = vpack.c.b16 %v8558, %v8557
    %v8619 = vpack.c.b16 %v8560, %v8559
    %v8620 = vpack.c.b16 %v8562, %v8561
    %v8621 = vpack.c.b16 %v8564, %v8563
    %v8622 = vpack.c.b16 %v8566, %v8565
    %v8623 = vpack.c.b16 %v8568, %v8567
    %v8624 = vpack.c.b16 %v8570, %v8569
    %v8625 = vpack.c.b16 %v8572, %v8571
    %v8626 = vpack.c.b16 %v8574, %v8573
    %v8627 = vpack.c.b16 %v8576, %v8575
    %v8628 = vpack.c.b16 %v8578, %v8577
    %v8629 = vpack.c.b16 %v8580, %v8579
    %v8630 = vpack.c.b16 %v8582, %v8581
    %v8631 = vpack.c.b16 %v8584, %v8583
    %v8632 = vpack.c.b16 %v8586, %v8585
    %v8633 = vpack.c.b16 %v8588, %v8587
    %v8634 = vpack.c.b16 %v8590, %v8589
    %v8635 = vpack.c.b16 %v8592, %v8591
    %v8636 = vpack.c.b16 %v8594, %v8593
    %v8637 = vpack.c.b16 %v8596, %v8595
    %v8638 = vpack.c.b16 %v8598, %v8597
    %v8639 = vpack.c.b16 %v8600, %v8599
    %v8640 = vpack.c.b16 %v8602, %v8601
    %v8641 = vpack.c.b16 %v8604, %v8603
    %v8642 = vpack.c.b16 %v8606, %v8605
    %v8643 = vpack.c.b16 %v8608, %v8607
    %v8644 = vpack.c.b16 %v8610, %v8609
    %v8645 = vpack.c.b16 %v8612, %v8611
    %v8646 = vpack.c.b16 %v8614, %v8613
    %8679 = vmatprep.subr.bf16.mxu0 0
    %8680 = vmatpush1.bf16.msra.mxu0 %v8615
    %8681 = vmatprep.subr.bf16.mxu0 0
    %8682 = vmatpush1.bf16.msra.mxu0 %v8616
    %8683 = vmatprep.subr.bf16.mxu0 0
    %8684 = vmatpush1.bf16.msra.mxu0 %v8617
    %8685 = vmatprep.subr.bf16.mxu0 0
    %8686 = vmatpush1.bf16.msra.mxu0 %v8618
    %8687 = vmatprep.subr.bf16.mxu0 0
    %8688 = vmatpush1.bf16.msra.mxu0 %v8619
    %8689 = vmatprep.subr.bf16.mxu0 0
    %8690 = vmatpush1.bf16.msra.mxu0 %v8620
    %8691 = vmatprep.subr.bf16.mxu0 0
    %8692 = vmatpush1.bf16.msra.mxu0 %v8621
    %8693 = vmatprep.subr.bf16.mxu0 0
    %8694 = vmatpush1.bf16.msra.mxu0 %v8622
    %8695 = vmatprep.subr.bf16.mxu0 0
    %8696 = vmatpush1.bf16.msra.mxu0 %v8623
    %8697 = vmatprep.subr.bf16.mxu0 0
    %8698 = vmatpush1.bf16.msra.mxu0 %v8624
    %8699 = vmatprep.subr.bf16.mxu0 0
    %8700 = vmatpush1.bf16.msra.mxu0 %v8625
    %8701 = vmatprep.subr.bf16.mxu0 0
    %8702 = vmatpush1.bf16.msra.mxu0 %v8626
    %8703 = vmatprep.subr.bf16.mxu0 0
    %8704 = vmatpush1.bf16.msra.mxu0 %v8627
    %8705 = vmatprep.subr.bf16.mxu0 0
    %8706 = vmatpush1.bf16.msra.mxu0 %v8628
    %8707 = vmatprep.subr.bf16.mxu0 0
    %8708 = vmatpush1.bf16.msra.mxu0 %v8629
    %8709 = vmatprep.subr.bf16.mxu0 0
    %8710 = vmatpush1.bf16.msra.mxu0 %v8630
    %8711 = vmatprep.mubr.bf16.mxu0 %v8416
    %8712 = vmatmul.mubr.bf16.gmra.mrb[0].mxu0 %v8415
    %v8713 = vpop.f32.mrb[0].mxu0
    %v8714 = vadd.f32 0.0, %v8713
    %v8715 = vpop.f32.mrb[0].mxu0
    %v8716 = vpop.f32.mrb[0].mxu0
    %v8717 = vadd.f32 0.0, %v8716
    %v8718 = vpop.f32.mrb[0].mxu0
    %8719 = vmatprep.mubr.bf16.mxu0 %v8420
    %8720 = vmatmul.mubr.bf16.gmra.mrb[0].mxu0 %v8419
    %v8721 = vpop.f32.mrb[0].mxu0
    %v8722 = vadd.f32 0.0, %v8721
    %v8723 = vpop.f32.mrb[0].mxu0
    %v8724 = vpop.f32.mrb[0].mxu0
    %v8725 = vadd.f32 0.0, %v8724
    %v8726 = vpop.f32.mrb[0].mxu0
    %8727 = vdwg.mxu0
    %8728 = vmatprep.subr.bf16.mxu0 0
    %8729 = vmatpush1.bf16.msra.mxu0 %v8631
    %8730 = vmatprep.subr.bf16.mxu0 0
    %8731 = vmatpush1.bf16.msra.mxu0 %v8632
    %8732 = vmatprep.subr.bf16.mxu0 0
    %8733 = vmatpush1.bf16.msra.mxu0 %v8633
    %8734 = vmatprep.subr.bf16.mxu0 0
    %8735 = vmatpush1.bf16.msra.mxu0 %v8634
    %8736 = vmatprep.subr.bf16.mxu0 0
    %8737 = vmatpush1.bf16.msra.mxu0 %v8635
    %8738 = vmatprep.subr.bf16.mxu0 0
    %8739 = vmatpush1.bf16.msra.mxu0 %v8636
    %8740 = vmatprep.subr.bf16.mxu0 0
    %8741 = vmatpush1.bf16.msra.mxu0 %v8637
    %8742 = vmatprep.subr.bf16.mxu0 0
    %8743 = vmatpush1.bf16.msra.mxu0 %v8638
    %8744 = vmatprep.subr.bf16.mxu0 0
    %8745 = vmatpush1.bf16.msra.mxu0 %v8639
    %8746 = vmatprep.subr.bf16.mxu0 0
    %8747 = vmatpush1.bf16.msra.mxu0 %v8640
    %8748 = vmatprep.subr.bf16.mxu0 0
    %8749 = vmatpush1.bf16.msra.mxu0 %v8641
    %8750 = vmatprep.subr.bf16.mxu0 0
    %8751 = vmatpush1.bf16.msra.mxu0 %v8642
    %8752 = vmatprep.subr.bf16.mxu0 0
    %8753 = vmatpush1.bf16.msra.mxu0 %v8643
    %8754 = vmatprep.subr.bf16.mxu0 0
    %8755 = vmatpush1.bf16.msra.mxu0 %v8644
    %8756 = vmatprep.subr.bf16.mxu0 0
    %8757 = vmatpush1.bf16.msra.mxu0 %v8645
    %8758 = vmatprep.subr.bf16.mxu0 0
    %8759 = vmatpush1.bf16.msra.mxu0 %v8646
    %8760 = vmatprep.mubr.bf16.mxu0 %v8418
    %8761 = vmatmul.mubr.bf16.gmra.mrb[0].mxu0 %v8417
    %v8762 = vpop.f32.mrb[0].mxu0
    %v8763 = vadd.f32 %v8714, %v8762
    %v8764 = vpop.f32.mrb[0].mxu0
    %v8765 = vpop.f32.mrb[0].mxu0
    %v8766 = vadd.f32 %v8717, %v8765
    %v8767 = vpop.f32.mrb[0].mxu0
    %8768 = vmatprep.mubr.bf16.mxu0 %v8422
    %8769 = vmatmul.mubr.bf16.gmra.mrb[0].mxu0 %v8421
    %v8770 = vpop.f32.mrb[0].mxu0
    %v8771 = vadd.f32 %v8722, %v8770
    %v8772 = vpop.f32.mrb[0].mxu0
    %v8773 = vpop.f32.mrb[0].mxu0
    %v8774 = vadd.f32 %v8725, %v8773
    %v8775 = vpop.f32.mrb[0].mxu0
    %8776 = vdwg.mxu0
    %vm8777 = vcmask 523264
    %v8778 = vsel %vm8777, %v8763, 0.0
    %v8779 = vsel %vm8777, %v8766, 0.0
    %v8780 = vadd.f32 %v8778, %v8779
    %v8781 = vsel %vm8777, %v8771, 0.0
    %v8782 = vadd.f32 %v8780, %v8781
    %v8783 = vsel %vm8777, %v8774, 0.0
    %v8784 = vadd.f32 %v8782, %v8783
    %v8785 = vrot.slane %v8784, 4
    %v8786 = vadd.f32 %v8784, %v8785
    %v8787 = vrot.slane %v8786, 2
    %v8788 = vadd.f32 %v8786, %v8787
    %v8789 = vrot.slane %v8788, 1
    %v8790 = vadd.f32 %v8788, %v8789
    %v8791 = vmul.f32 %v8763, %v8763
    %v8792 = vmul.f32 %v8766, %v8766
    %v8793 = vmul.f32 %v8771, %v8771
    %v8794 = vmul.f32 %v8774, %v8774
    %v8795 = vsel %vm8777, %v8791, 0.0
    %v8796 = vsel %vm8777, %v8792, 0.0
    %v8797 = vadd.f32 %v8795, %v8796
    %v8798 = vsel %vm8777, %v8793, 0.0
    %v8799 = vadd.f32 %v8797, %v8798
    %v8800 = vsel %vm8777, %v8794, 0.0
    %v8801 = vadd.f32 %v8799, %v8800
    %v8802 = vrot.slane %v8801, 4
    %v8803 = vadd.f32 %v8801, %v8802
    %v8804 = vrot.slane %v8803, 2
    %v8805 = vadd.f32 %v8803, %v8804
    %v8806 = vrot.slane %v8805, 1
    %v8807 = vadd.f32 %v8805, %v8806
    %v8808 = vmul.f32 %v8790, 0.03125
    %v8809 = vmul.f32 %v8807, 0.03125
    %v8810 = vmul.f32 %v8808, %v8808
    %v8811 = vsub.f32 %v8809, %v8810
    %v8812 = vmax.f32 %v8811, 0.0
    %v8813 = vld [vmem:[%s7] sm:$0x3]
    %v8814 = vadd.f32 %v8812, 1e-05
    %v8815 = vrsqrt.pop %v8814
    %v8816 = vmul.f32 %v8813, %v8815
    %v8817 = vmul.f32 %v8808, %v8816
    %v8819 = vrot.slane %v8817, 7
    %v8821 = vsub.f32 %v8813, %v8819
    %v8822 = vlaneseq
    %v8823 = vshrl.u32 %v8822, 7
    %v8824 = vsub.s32 0, %v8823
    %v8825 = vrot.slane %v8816, %v8824
    %v8826 = vmul.f32 %v8763, %v8825
    %v8827 = vmul.f32 %v8766, %v8825
    %v8828 = vmul.f32 %v8771, %v8825
    %v8829 = vmul.f32 %v8774, %v8825
    %v8830 = vlaneseq
    %v8831 = vshrl.u32 %v8830, 7
    %v8832 = vsub.s32 1, %v8831
    %v8833 = vrot.slane %v8821, %v8832
    %v8834 = vadd.f32 %v8826, %v8833
    %v8835 = vadd.f32 %v8827, %v8833
    %v8836 = vadd.f32 %v8828, %v8833
    %v8837 = vadd.f32 %v8829, %v8833
    %v8838 = vmul.f32 %v8834, 0.2
    %v8839 = vmul.f32 %v8835, 0.2
    %v8840 = vmul.f32 %v8836, 0.2
    %v8841 = vmul.f32 %v8837, 0.2
    %v8842 = vmax.f32 %v8834, %v8838
    %v8843 = vmax.f32 %v8835, %v8839
    %v8844 = vmax.f32 %v8836, %v8840
    %v8845 = vmax.f32 %v8837, %v8841
    %vm8846 = vcmask 519168
    %v8847 = vsel %vm8846, %v8842, 0.0
    %v8848 = vrot.slane %v8847, 4
    %v8849 = vadd.f32 %v8847, %v8848
    %v8850 = vrot.slane %v8849, 2
    %v8851 = vadd.f32 %v8849, %v8850
    %v8852 = vrot.slane %v8851, 1
    %v8853 = vadd.f32 %v8851, %v8852
    %v8854 = vsel %vm8846, %v8843, 0.0
    %v8855 = vrot.slane %v8854, 4
    %v8856 = vadd.f32 %v8854, %v8855
    %v8857 = vrot.slane %v8856, 2
    %v8858 = vadd.f32 %v8856, %v8857
    %v8859 = vrot.slane %v8858, 1
    %v8860 = vadd.f32 %v8858, %v8859
    %v8861 = vsel %vm8846, %v8844, 0.0
    %v8862 = vrot.slane %v8861, 4
    %v8863 = vadd.f32 %v8861, %v8862
    %v8864 = vrot.slane %v8863, 2
    %v8865 = vadd.f32 %v8863, %v8864
    %v8866 = vrot.slane %v8865, 1
    %v8867 = vadd.f32 %v8865, %v8866
    %v8868 = vsel %vm8846, %v8845, 0.0
    %v8869 = vrot.slane %v8868, 4
    %v8870 = vadd.f32 %v8868, %v8869
    %v8871 = vrot.slane %v8870, 2
    %v8872 = vadd.f32 %v8870, %v8871
    %v8873 = vrot.slane %v8872, 1
    %v8874 = vadd.f32 %v8872, %v8873
    %v8875 = vmul.f32 %v8853, 0.25
    %v8876 = vmul.f32 %v8860, 0.25
    %v8877 = vmul.f32 %v8867, 0.25
    %v8878 = vmul.f32 %v8874, 0.25
    %vm8883 = vcmask 1041409
    %v8884 = vsel %vm8883, %v8876, %v8875
    %vm8885 = vcmask 1042434
    %v8886 = vsel %vm8885, %v8877, %v8884
    %vm8887 = vcmask 1043459
    %v8888 = vsel %vm8887, %v8878, %v8886
    %8890 = vst.msk [vmem:[#allocation8] sm:$0xf] %vm8846, %v8888
    %v8895 = vrot.slane %v8842, 4
    %v8896 = vrot.slane %v8843, 4
    %v8897 = vrot.slane %v8844, 4
    %v8898 = vrot.slane %v8845, 4
    %v8903 = vsel %vm8846, %v8895, 0.0
    %v8904 = vrot.slane %v8903, 4
    %v8905 = vadd.f32 %v8903, %v8904
    %v8906 = vrot.slane %v8905, 2
    %v8907 = vadd.f32 %v8905, %v8906
    %v8908 = vrot.slane %v8907, 1
    %v8909 = vadd.f32 %v8907, %v8908
    %v8910 = vsel %vm8846, %v8896, 0.0
    %v8911 = vrot.slane %v8910, 4
    %v8912 = vadd.f32 %v8910, %v8911
    %v8913 = vrot.slane %v8912, 2
    %v8914 = vadd.f32 %v8912, %v8913
    %v8915 = vrot.slane %v8914, 1
    %v8916 = vadd.f32 %v8914, %v8915
    %v8917 = vsel %vm8846, %v8897, 0.0
    %v8918 = vrot.slane %v8917, 4
    %v8919 = vadd.f32 %v8917, %v8918
    %v8920 = vrot.slane %v8919, 2
    %v8921 = vadd.f32 %v8919, %v8920
    %v8922 = vrot.slane %v8921, 1
    %v8923 = vadd.f32 %v8921, %v8922
    %v8924 = vsel %vm8846, %v8898, 0.0
    %v8925 = vrot.slane %v8924, 4
    %v8926 = vadd.f32 %v8924, %v8925
    %v8927 = vrot.slane %v8926, 2
    %v8928 = vadd.f32 %v8926, %v8927
    %v8929 = vrot.slane %v8928, 1
    %v8930 = vadd.f32 %v8928, %v8929
    %v8931 = vmul.f32 %v8909, 0.25
    %v8932 = vmul.f32 %v8916, 0.25
    %v8933 = vmul.f32 %v8923, 0.25
    %v8934 = vmul.f32 %v8930, 0.25
    %v8939 = vsel %vm8883, %v8932, %v8931
    %v8940 = vsel %vm8885, %v8933, %v8939
    %v8941 = vsel %vm8887, %v8934, %v8940
    %s8943 = scalar_lea.vmem [#allocation8], 4
    %8944 = vst.msk [vmem:[%s8943] sm:$0xf] %vm8846, %v8941
    // Predicated region
    $region34: #{stage1_d_sty_v2_forward.1} parent=1 // pred_check
      _
    $region35: #{stage1_d_sty_v2_forward.1} parent=1 // pred_check_branch
      %8946 = sbr.rel (0) target = $region37
    $region36: #{stage1_d_sty_v2_forward.1} parent=1 // pred_region
      %s8948 = ssub.s32 128, 128
      %8949 = vsyncadd [#allocation9], %s8948
      %s8950 = sshll.u32 [#allocation8], 4
      %s8951 = int_to_ptr.vmem [resolvable:$true] %s8950
      %8956 = dma.vmem_to_hbm [thread:$0]  %s8951, 128, %s8, [#allocation9], 64, 64, 4
    $region37: #{stage1_d_sty_v2_forward.1} parent=1 // pred_fallthru
      _
    // Predicated region
    $region38: #{stage1_d_sty_v2_forward.1} parent=1 // pred_check
      _
    $region39: #{stage1_d_sty_v2_forward.1} parent=1 // pred_check_branch
      %8958 = sbr.rel (0) target = $region41
    $region40: #{stage1_d_sty_v2_forward.1} parent=1 // pred_region
      %8959 = dma.done [#allocation9], 128
    $region41: #{stage1_d_sty_v2_forward.1} parent=1 // pred_fallthru
      _
    %8960 = vsyncpa [#allocation9], 1

</llo_original>
